<compile_context>
chip_gen: v7x
topology: tpu7x:2x2x1
jax: 0.10.0
libtpu: 0.0.40
codegen_flags: <defaults>
</compile_context>

<pallas_src>
import functools
import numpy as np

import jax
import jax.numpy as jnp
from jax.experimental import pallas as pl
from jax.experimental.pallas import tpu as pltpu


# ----------------------------------------------------------------------------
# Geometry constants (input resized to 32x32; pooled output is 14x14x64).
# ----------------------------------------------------------------------------
_IMG = 32                       # resized image side
_XPAD = 36                      # x-padded width for the im2col gather
_POOL = 14                      # pooled spatial size
_N_TAPS = 18                    # 3 dy * 6 dx' taps of the conv1 im2col
_X_ROWS = 30 * 16               # 480 conv1 rows per image (y in [0,30), even x)
_C1_CHUNK = 160                 # conv1 row chunk (480 = 3 * 160)
_C1_STEPS = _X_ROWS // _C1_CHUNK
_OUT_ROWS = _POOL * 16          # 224 pooled rows per image (row = 16*py + px)
_FC_K = _OUT_ROWS * 64          # 14336 (includes 2 zero-weighted junk px rows)

# Static im2col index maps (module-level numpy constants -> folded by XLA).
#   X6[b, 16*y + p, 6*dy + dx'] = x32_padded[b, y+dy, 2*p + dx']
_qy = np.repeat(np.arange(30), 16)              # (480,)
_qx = np.tile(np.arange(16) * 2, 30)            # (480,)
_tdy = np.repeat(np.arange(3), 6)               # (18,)
_tdx = np.tile(np.arange(6), 3)                 # (18,)
_G_ROWS = (_qy[:, None] + _tdy[None, :]).astype(np.int32)   # (480, 18), <= 31
_G_COLS = (_qx[:, None] + _tdx[None, :]).astype(np.int32)   # (480, 18), <= 35


# ----------------------------------------------------------------------------
# Fused conv stack kernel: conv1 + ReLU -> conv2 + ReLU -> 2x2 maxpool
# ----------------------------------------------------------------------------
def _conv_stack_kernel(x6_ref, w1w_ref, b1w_ref, w2w_ref, b2_ref, o_ref,
                       h1_scr):
    """`group` images per grid step; h1 stays in VMEM, h2 is never formed.

    x6_ref : (G, 480, 18)  bf16 im2col taps (row = 16*y + p, x = 2*p)
    w1w_ref: (18, 128)     bf16 conv1 weights, 4 x-shifted copies, BN folded
    b1w_ref: (1, 128)      f32  conv1 bias tiled over the 4 copies
    w2w_ref: (3, 128, 128) bf16 conv2 weights per dy; lanes = (m=0/1, cout)
    b2_ref : (1, 64)       f32  conv2 bias
    o_ref  : (G, 224, 64)  bf16 pooled output, row = 16*py + px (px<14 valid)
    h1_scr : (G*480, 128)  bf16 scratch: h1[y, 2p + j, c] at row 16y+p, lane 32j+c
    """
    f32 = jnp.float32
    G = x6_ref.shape[0]
    b1w = b1w_ref[...]                       # (1, 128)
    b2 = b2_ref[...]                         # (1, 64)

    for g in range(G):
        g_h1 = g * _X_ROWS

        # -- conv1 (+BN scale) + ReLU: one (160,18)x(18,128) bf16 MXU dot per
        #    chunk; pl.loop keeps the ~30-vreg accumulator live range bounded.
        @pl.loop(0, _C1_STEPS)
        def _conv1(c, g=g, g_h1=g_h1):
            r0 = pl.multiple_of(c * _C1_CHUNK, 32)
            xs = x6_ref[g, pl.ds(r0, _C1_CHUNK), :]             # (160,18) bf16
            h = jnp.dot(xs, w1w_ref[...], preferred_element_type=f32)
            h = jnp.maximum(h + b1w, 0.0)
            h1_scr[pl.ds(g_h1 + r0, _C1_CHUNK), :] = h.astype(jnp.bfloat16)

        # -- conv2 + bias + ReLU + 2x2/stride-2 maxpool, one pooled y-row per
        #    step: 3 aligned (32,128)x(128,128) bf16 dots, then y-pair max over
        #    sublane halves, x-pair max over the two 64-lane halves.
        @pl.loop(0, _POOL)
        def _conv2(py, g=g, g_h1=g_h1):
            b0 = pl.multiple_of(g_h1 + py * 32, 32)
            acc = jnp.zeros((32, 128), f32)
            for dy in range(3):
                lhs = h1_scr[pl.ds(b0 + 16 * dy, 32), :]        # (32,128) bf16
                acc = acc + jnp.dot(lhs, w2w_ref[dy],
                                    preferred_element_type=f32)
            ym = jnp.maximum(acc[0:16, :], acc[16:32, :])       # pool over y
            xm = jnp.maximum(ym[:, 0:64], ym[:, 64:128])        # pool over x
            pooled = jnp.maximum(xm + b2, 0.0)                  # bias + ReLU
            r_out = pl.multiple_of(py * 16, 16)
            o_ref[g, pl.ds(r_out, 16), :] = pooled.astype(o_ref.dtype)


def conv_stack(x6, w1w, b1w, w2w, b2, *, group):
    """x6: (B, 480, 18) bf16 -> pooled (B, 224, 64) bf16."""
    B = x6.shape[0]
    assert B % group == 0
    return pl.pallas_call(
        _conv_stack_kernel,
        out_shape=jax.ShapeDtypeStruct((B, _OUT_ROWS, 64), jnp.bfloat16),
        grid_spec=pltpu.PrefetchScalarGridSpec(
            num_scalar_prefetch=0,
            grid=(B // group,),
            in_specs=[
                pl.BlockSpec((group, _X_ROWS, _N_TAPS), lambda i: (i, 0, 0)),
                pl.BlockSpec((_N_TAPS, 128), lambda i: (0, 0)),
                pl.BlockSpec((1, 128), lambda i: (0, 0)),
                pl.BlockSpec((3, 128, 128), lambda i: (0, 0, 0)),
                pl.BlockSpec((1, 64), lambda i: (0, 0)),
            ],
            out_specs=pl.BlockSpec((group, _OUT_ROWS, 64), lambda i: (i, 0, 0)),
            scratch_shapes=[pltpu.VMEM((group * _X_ROWS, 128), jnp.bfloat16)],
        ),
        compiler_params=pltpu.CompilerParams(
            dimension_semantics=("parallel",)),   # batch shards across TCs
    )(x6, w1w, b1w, w2w, b2)


# ----------------------------------------------------------------------------
# Fused fc1 + ReLU + fc2 kernel (dropouts are identity in eval mode)
# ----------------------------------------------------------------------------
def _fc_kernel(x_ref, w1_ref, b1_ref, w2_ref, b2_ref, o_ref):
    h = jnp.dot(x_ref[...], w1_ref[...], preferred_element_type=jnp.float32)
    h = jnp.maximum(h + b1_ref[...], 0.0)
    out = jnp.dot(h, w2_ref[...], preferred_element_type=jnp.float32) + b2_ref[...]
    o_ref[...] = out.astype(o_ref.dtype)


def _fc_tiling(M):
    """Pad M to a multiple of 8 and pick the largest multiple-of-8 divisor
    <= 256 as the M tile (no oversized full-M fallback)."""
    m8 = ((M + 7) // 8) * 8
    tm = 8
    for cand in range(8, min(256, m8) + 1, 8):
        if m8 % cand == 0:
            tm = cand
    return m8, tm


def fc_head(x, w1, b1, w2, b2, *, tm):
    """x:(M,14336) bf16, w1:(14336,128) bf16, w2:(128,128) f32 -> (M,128) f32.
    Full-K single-step bf16 weight streaming; grid only over M rows."""
    M, K = x.shape
    # NOTE: the grid-invariant fc1 weight could be single-buffered with
    # pipeline_mode=pl.Buffered(1) for extra v5e headroom; the 48 MiB budget
    # below already fits double-buffering on all generations.
    return pl.pallas_call(
        _fc_kernel,
        out_shape=jax.ShapeDtypeStruct((M, 128), jnp.float32),
        grid_spec=pltpu.PrefetchScalarGridSpec(
            num_scalar_prefetch=0,
            grid=(M // tm,),
            in_specs=[
                pl.BlockSpec((tm, K), lambda i: (i, 0)),
                pl.BlockSpec((K, 128), lambda i: (0, 0)),
                pl.BlockSpec((1, 128), lambda i: (0, 0)),
                pl.BlockSpec((128, 128), lambda i: (0, 0)),
                pl.BlockSpec((1, 128), lambda i: (0, 0)),
            ],
            out_specs=pl.BlockSpec((tm, 128), lambda i: (i, 0)),
        ),
        compiler_params=pltpu.CompilerParams(
            dimension_semantics=("parallel",),
            vmem_limit_bytes=48 * 1024 * 1024),   # safe on v5e/v6e/v7x
    )(x, w1, b1, w2, b2)


# ----------------------------------------------------------------------------
# Glue: bilinear resize matrices, parameter setup, forward wrapper
# ----------------------------------------------------------------------------
def _bilinear_resize_matrix(in_size, out_size):
    """Separable interpolation matrix matching
    F.interpolate(mode='bilinear', align_corners=False)."""
    scale = in_size / out_size
    o = np.arange(out_size)
    src = np.maximum((o + 0.5) * scale - 0.5, 0.0)
    i0 = np.minimum(np.floor(src).astype(np.int64), in_size - 1)
    i1 = np.minimum(i0 + 1, in_size - 1)
    w1 = (src - i0).astype(np.float32)
    w0 = (1.0 - w1).astype(np.float32)
    m = np.zeros((out_size, in_size), np.float32)
    np.add.at(m, (o, i0), w0)
    np.add.at(m, (o, i1), w1)
    return m


def _pick_group(B):
    """Images per conv grid step; keep the grid length >= 2 when possible so
    both v7x TensorCores stay busy."""
    for g in (4, 2):
        if B % g == 0 and B // g >= 2:
            return g
    return 1


def init_params(key, input_hw, num_label):
    assert num_label <= 128
    ks = jax.random.split(key, 6)
    eps = 1e-5
    bn_scale = 1.0 / np.sqrt(1.0 + eps)   # eval-mode BatchNorm2d(1), default stats

    w1 = np.asarray(jax.random.normal(ks[0], (3, 3, 32), jnp.float32)) / 3.0
    b1 = np.asarray(jax.random.normal(ks[1], (32,), jnp.float32)) * 0.01
    w2 = np.asarray(jax.random.normal(ks[2], (3, 3, 32, 64), jnp.float32)) / np.sqrt(288.0)
    b2 = np.asarray(jax.random.normal(ks[3], (64,), jnp.float32)) * 0.01
    fc1 = np.asarray(jax.random.normal(ks[4], (12544, 128), jnp.float32)) / np.sqrt(12544.0)
    fc2 = np.asarray(jax.random.normal(ks[5], (128, num_label), jnp.float32)) / np.sqrt(128.0)

    # conv1 weights, 4 x-shifted copies (j in [0,4)) with the BN scale folded:
    #   w1w[6*dy + dx', 32*j + c] = w1[dy, dx'-j, c] * bn_scale  (0 <= dx'-j <= 2)
    w1w = np.zeros((_N_TAPS, 128), np.float32)
    for dy in range(3):
        for dxp in range(6):
            for j in range(4):
                dx = dxp - j
                if 0 <= dx <= 2:
                    w1w[6 * dy + dxp, 32 * j:32 * (j + 1)] = w1[dy, dx, :] * bn_scale
    b1w = np.tile(b1, 4)                   # (128,)

    # conv2 weights per dy, producing both x-positions (m = 0, 1) in lanes:
    #   w2w[dy, 32*j' + c, 64*m + f] = w2[dy, j'-m, c, f]  (0 <= j'-m <= 2)
    w2w = np.zeros((3, 128, 128), np.float32)
    for dy in range(3):
        for jp in range(4):
            for m in range(2):
                j = jp - m
                if 0 <= j <= 2:
                    w2w[dy, 32 * jp:32 * (jp + 1), 64 * m:64 * (m + 1)] = w2[dy, j, :, :]

    # fc1 rows permuted once from torch NCHW flatten (c, py, px) to our
    # (16*py + px, c) pooled layout; the 2 junk px rows per py stay zero.
    py_i, px_i, f_i = np.meshgrid(np.arange(_POOL), np.arange(_POOL),
                                  np.arange(64), indexing='ij')
    ours_k = ((16 * py_i + px_i) * 64 + f_i).reshape(-1)
    torch_t = (f_i * (_POOL * _POOL) + py_i * _POOL + px_i).reshape(-1)
    fc1w = np.zeros((_FC_K, 128), np.float32)
    fc1w[ours_k] = fc1[torch_t]

    # fc2 padded to 128 output lanes (sliced back in forward).
    fc2w = np.zeros((128, 128), np.float32)
    fc2w[:, :num_label] = fc2

    return dict(
        w1w=jnp.asarray(w1w, jnp.bfloat16),
        b1w=jnp.asarray(b1w.reshape(1, 128), jnp.float32),
        w2w=jnp.asarray(w2w, jnp.bfloat16),
        b2=jnp.asarray(b2.reshape(1, 64), jnp.float32),
        fc1_w=jnp.asarray(fc1w, jnp.bfloat16),     # bf16 weight streaming
        fc1_b=jnp.zeros((1, 128), jnp.float32),
        fc2_w=jnp.asarray(fc2w, jnp.float32),
        fc2_b=jnp.zeros((1, 128), jnp.float32),
        resize_h=jnp.asarray(_bilinear_resize_matrix(input_hw[0], _IMG)),
        resize_w=jnp.asarray(_bilinear_resize_matrix(input_hw[1], _IMG)),
    )


def cnn_forward(x, params, *, num_label):
    """Forward pass of CNNClassifier (eval mode). x: (B, 1, H, W) float32."""
    B = x.shape[0]

    # F.interpolate(size=(32,32), bilinear, align_corners=False) as two tiny
    # separable matmuls, then the static 18-tap im2col gather (layout plumbing).
    x = x[:, 0, :, :]
    x32 = jnp.einsum('oi,bij,pj->bop', params['resize_h'], x, params['resize_w'],
                     precision=jax.lax.Precision.HIGHEST)        # (B,32,32)
    xp = jnp.pad(x32, ((0, 0), (0, 0), (0, _XPAD - _IMG)))       # (B,32,36)
    x6 = xp[:, _G_ROWS, _G_COLS].astype(jnp.bfloat16)            # (B,480,18)

    # Fused conv1 -> ReLU -> conv2 -> ReLU -> maxpool (BatchNorm folded in).
    pooled = conv_stack(x6, params['w1w'], params['b1w'], params['w2w'],
                        params['b2'], group=_pick_group(B))      # (B,224,64) bf16
    flat = pooled.reshape(B, _FC_K)

    # Fused fc1 + ReLU + fc2; dropout1/dropout2 are identity in eval mode.
    m_pad, tm = _fc_tiling(B)
    if m_pad != B:
        flat = jnp.pad(flat, ((0, m_pad - B), (0, 0)))
    logits = fc_head(flat, params['fc1_w'], params['fc1_b'],
                     params['fc2_w'], params['fc2_b'], tm=tm)
    return logits[:B, :num_label]


if __name__ == "__main__":
    key = jax.random.PRNGKey(0)
    k_x, k_p = jax.random.split(key)

    B, C, H, W = 2, 1, 16, 16   # module requires 1 input channel; input_shape=(16,16)
    num_label = 10

    x = jax.random.normal(k_x, (B, C, H, W), jnp.float32)
    params = init_params(k_p, (H, W), num_label)

    fwd = jax.jit(functools.partial(cnn_forward, num_label=num_label))
    out = fwd(x, params)
    jax.block_until_ready(out)

    assert out.shape == (B, num_label), out.shape
    assert out.dtype == jnp.float32
    assert bool(jnp.all(jnp.isfinite(out)))
    print("KERNEL_OK")
</pallas_src>

<mosaic_0001>
module attributes {stable_mosaic.version = 11 : i64} {
  func.func @_conv_stack_kernel(%arg0: i32, %arg1: memref<1x480x18xbf16, #tpu.memory_space<vmem>>, %arg2: memref<18x128xbf16, #tpu.memory_space<vmem>>, %arg3: memref<1x128xf32, #tpu.memory_space<vmem>>, %arg4: memref<3x128x128xbf16, #tpu.memory_space<vmem>>, %arg5: memref<1x64xf32, #tpu.memory_space<vmem>>, %arg6: memref<1x224x64xbf16, #tpu.memory_space<vmem>>, %arg7: memref<480x128xbf16, #tpu.memory_space<vmem>>) attributes {dimension_semantics = [#tpu.dimension_semantics<parallel>], iteration_bounds = array<i64: 2>, scalar_prefetch = 0 : i64, scratch_operands = 1 : i64, tpu.core_type = #tpu.core_type<tc>, window_params = [{transform_indices = @transform_0, window_bounds = array<i64: 1, 480, 18>}, {pipeline_mode = #tpu.pipeline_mode<synchronous>, transform_indices = @transform_1, window_bounds = array<i64: 18, 128>}, {pipeline_mode = #tpu.pipeline_mode<synchronous>, transform_indices = @transform_2, window_bounds = array<i64: 1, 128>}, {pipeline_mode = #tpu.pipeline_mode<synchronous>, transform_indices = @transform_3, window_bounds = array<i64: 3, 128, 128>}, {pipeline_mode = #tpu.pipeline_mode<synchronous>, transform_indices = @transform_4, window_bounds = array<i64: 1, 64>}, {transform_indices = @transform_5, window_bounds = array<i64: 1, 224, 64>}]} {
    %c0 = arith.constant 0 : index
    %c0_0 = arith.constant 0 : index
    %0 = vector.load %arg3[%c0, %c0_0] : memref<1x128xf32, #tpu.memory_space<vmem>>, vector<1x128xf32>
    %c0_1 = arith.constant 0 : index
    %c0_2 = arith.constant 0 : index
    %1 = vector.load %arg5[%c0_1, %c0_2] : memref<1x64xf32, #tpu.memory_space<vmem>>, vector<1x64xf32>
    %c0_i32 = arith.constant 0 : i32
    %c3_i32 = arith.constant 3 : i32
    %2 = arith.addi %c0_i32, %c3_i32 : i32
    %c1_i32 = arith.constant 1 : i32
    scf.for %arg8 = %c0_i32 to %2 step %c1_i32  : i32 {
      %c1_i32_7 = arith.constant 1 : i32
      %4 = arith.muli %arg8, %c1_i32_7 : i32
      %c0_i32_8 = arith.constant 0 : i32
      %5 = arith.addi %c0_i32_8, %4 : i32
      %c160_i32 = arith.constant 160 : i32
      %6 = arith.muli %5, %c160_i32 : i32
      %7 = tpu.assume_multiple %6, 32 : i32
      %c0_9 = arith.constant 0 : index
      %8 = arith.index_cast %7 : i32 to index
      %c0_10 = arith.constant 0 : index
      %9 = vector.load %arg1[%c0_9, %8, %c0_10] : memref<1x480x18xbf16, #tpu.memory_space<vmem>>, vector<1x160x18xbf16>
      %10 = vector.shape_cast %9 : vector<1x160x18xbf16> to vector<160x18xbf16>
      %c0_11 = arith.constant 0 : index
      %c0_12 = arith.constant 0 : index
      %11 = vector.load %arg2[%c0_11, %c0_12] : memref<18x128xbf16, #tpu.memory_space<vmem>>, vector<18x128xbf16>
      %cst = arith.constant dense<0.000000e+00> : vector<160x128xf32>
      %12 = tpu.matmul %10, %11, %cst {dimension_numbers = #tpu.dot_dimension_numbers<[1], [0], [0], [1], [0, 0, 1, 1], [], []>} : vector<160x18xbf16>, vector<18x128xbf16>, vector<160x128xf32> -> vector<160x128xf32>
      %13 = vector.broadcast %0 : vector<1x128xf32> to vector<160x128xf32>
      %14 = arith.addf %12, %13 : vector<160x128xf32>
      %cst_13 = arith.constant 0.000000e+00 : f32
      %15 = vector.broadcast %cst_13 : f32 to vector<160x128xf32>
      %16 = arith.maximumf %14, %15 : vector<160x128xf32>
      %17 = arith.truncf %16 : vector<160x128xf32> to vector<160x128xbf16>
      %c0_i32_14 = arith.constant 0 : i32
      %18 = arith.addi %c0_i32_14, %7 : i32
      %19 = arith.index_cast %18 : i32 to index
      %c0_15 = arith.constant 0 : index
      %20 = vector.load %arg7[%19, %c0_15] : memref<480x128xbf16, #tpu.memory_space<vmem>>, vector<160x128xbf16>
      tpu.vector_store %arg7[%19, %c0_15], %17 {strides = array<i32>} : memref<480x128xbf16, #tpu.memory_space<vmem>>, vector<160x128xbf16>,
    }
    %c3_i32_3 = arith.constant 3 : i32
    %c0_i32_4 = arith.constant 0 : i32
    %c14_i32 = arith.constant 14 : i32
    %3 = arith.addi %c0_i32_4, %c14_i32 : i32
    %c1_i32_5 = arith.constant 1 : i32
    scf.for %arg8 = %c0_i32_4 to %3 step %c1_i32_5  : i32 {
      %c1_i32_7 = arith.constant 1 : i32
      %4 = arith.muli %arg8, %c1_i32_7 : i32
      %c0_i32_8 = arith.constant 0 : i32
      %5 = arith.addi %c0_i32_8, %4 : i32
      %c32_i32 = arith.constant 32 : i32
      %6 = arith.muli %5, %c32_i32 : i32
      %c0_i32_9 = arith.constant 0 : i32
      %7 = arith.addi %c0_i32_9, %6 : i32
      %8 = tpu.assume_multiple %7, 32 : i32
      %cst = arith.constant 0.000000e+00 : f32
      %9 = vector.broadcast %cst : f32 to vector<32x128xf32>
      %c0_i32_10 = arith.constant 0 : i32
      %10 = arith.addi %8, %c0_i32_10 : i32
      %11 = arith.index_cast %10 : i32 to index
      %c0_11 = arith.constant 0 : index
      %12 = vector.load %arg7[%11, %c0_11] : memref<480x128xbf16, #tpu.memory_space<vmem>>, vector<32x128xbf16>
      %c0_12 = arith.constant 0 : index
      %c0_13 = arith.constant 0 : index
      %c0_14 = arith.constant 0 : index
      %13 = vector.load %arg4[%c0_12, %c0_13, %c0_14] : memref<3x128x128xbf16, #tpu.memory_space<vmem>>, vector<1x128x128xbf16>
      %14 = vector.shape_cast %13 : vector<1x128x128xbf16> to vector<128x128xbf16>
      %cst_15 = arith.constant dense<0.000000e+00> : vector<32x128xf32>
      %15 = tpu.matmul %12, %14, %cst_15 {dimension_numbers = #tpu.dot_dimension_numbers<[1], [0], [0], [1], [0, 0, 1, 1], [], []>} : vector<32x128xbf16>, vector<128x128xbf16>, vector<32x128xf32> -> vector<32x128xf32>
      %16 = arith.addf %9, %15 : vector<32x128xf32>
      %c16_i32 = arith.constant 16 : i32
      %17 = arith.addi %8, %c16_i32 : i32
      %18 = arith.index_cast %17 : i32 to index
      %c0_16 = arith.constant 0 : index
      %19 = vector.load %arg7[%18, %c0_16] : memref<480x128xbf16, #tpu.memory_space<vmem>>, vector<32x128xbf16>
      %c1 = arith.constant 1 : index
      %c0_17 = arith.constant 0 : index
      %c0_18 = arith.constant 0 : index
      %20 = vector.load %arg4[%c1, %c0_17, %c0_18] : memref<3x128x128xbf16, #tpu.memory_space<vmem>>, vector<1x128x128xbf16>
      %21 = vector.shape_cast %20 : vector<1x128x128xbf16> to vector<128x128xbf16>
      %cst_19 = arith.constant dense<0.000000e+00> : vector<32x128xf32>
      %22 = tpu.matmul %19, %21, %cst_19 {dimension_numbers = #tpu.dot_dimension_numbers<[1], [0], [0], [1], [0, 0, 1, 1], [], []>} : vector<32x128xbf16>, vector<128x128xbf16>, vector<32x128xf32> -> vector<32x128xf32>
      %23 = arith.addf %16, %22 : vector<32x128xf32>
      %c32_i32_20 = arith.constant 32 : i32
      %24 = arith.addi %8, %c32_i32_20 : i32
      %25 = arith.index_cast %24 : i32 to index
      %c0_21 = arith.constant 0 : index
      %26 = vector.load %arg7[%25, %c0_21] : memref<480x128xbf16, #tpu.memory_space<vmem>>, vector<32x128xbf16>
      %c2 = arith.constant 2 : index
      %c0_22 = arith.constant 0 : index
      %c0_23 = arith.constant 0 : index
      %27 = vector.load %arg4[%c2, %c0_22, %c0_23] : memref<3x128x128xbf16, #tpu.memory_space<vmem>>, vector<1x128x128xbf16>
      %28 = vector.shape_cast %27 : vector<1x128x128xbf16> to vector<128x128xbf16>
      %cst_24 = arith.constant dense<0.000000e+00> : vector<32x128xf32>
      %29 = tpu.matmul %26, %28, %cst_24 {dimension_numbers = #tpu.dot_dimension_numbers<[1], [0], [0], [1], [0, 0, 1, 1], [], []>} : vector<32x128xbf16>, vector<128x128xbf16>, vector<32x128xf32> -> vector<32x128xf32>
      %30 = arith.addf %23, %29 : vector<32x128xf32>
      %31 = vector.extract_strided_slice %30 {offsets = [0, 0], sizes = [16, 128], strides = [1, 1]} : vector<32x128xf32> to vector<16x128xf32>
      %32 = vector.extract_strided_slice %30 {offsets = [16, 0], sizes = [16, 128], strides = [1, 1]} : vector<32x128xf32> to vector<16x128xf32>
      %33 = arith.maximumf %31, %32 : vector<16x128xf32>
      %34 = vector.extract_strided_slice %33 {offsets = [0, 0], sizes = [16, 64], strides = [1, 1]} : vector<16x128xf32> to vector<16x64xf32>
      %35 = vector.extract_strided_slice %33 {offsets = [0, 64], sizes = [16, 64], strides = [1, 1]} : vector<16x128xf32> to vector<16x64xf32>
      %36 = arith.maximumf %34, %35 : vector<16x64xf32>
      %37 = vector.broadcast %1 : vector<1x64xf32> to vector<16x64xf32>
      %38 = arith.addf %36, %37 : vector<16x64xf32>
      %cst_25 = arith.constant 0.000000e+00 : f32
      %39 = vector.broadcast %cst_25 : f32 to vector<16x64xf32>
      %40 = arith.maximumf %38, %39 : vector<16x64xf32>
      %c16_i32_26 = arith.constant 16 : i32
      %41 = arith.muli %5, %c16_i32_26 : i32
      %42 = tpu.assume_multiple %41, 16 : i32
      %43 = arith.truncf %40 : vector<16x64xf32> to vector<16x64xbf16>
      %c0_27 = arith.constant 0 : index
      %44 = arith.index_cast %42 : i32 to index
      %c0_28 = arith.constant 0 : index
      %45 = vector.load %arg6[%c0_27, %44, %c0_28] : memref<1x224x64xbf16, #tpu.memory_space<vmem>>, vector<1x16x64xbf16>
      %46 = vector.shape_cast %45 : vector<1x16x64xbf16> to vector<16x64xbf16>
      %47 = vector.shape_cast %43 : vector<16x64xbf16> to vector<1x16x64xbf16>
      tpu.vector_store %arg6[%c0_27, %44, %c0_28], %47 {strides = array<i32>} : memref<1x224x64xbf16, #tpu.memory_space<vmem>>, vector<1x16x64xbf16>,
    }
    %c14_i32_6 = arith.constant 14 : i32
    return
  }
  func.func @transform_0(%arg0: i32) -> (i32, i32, i32) {
    %c0_i32 = arith.constant 0 : i32
    %c0_i32_0 = arith.constant 0 : i32
    %c0_i32_1 = arith.constant 0 : i32
    return %arg0, %c0_i32, %c0_i32_0 : i32, i32, i32
  }
  func.func @transform_1(%arg0: i32) -> (i32, i32) {
    %c0_i32 = arith.constant 0 : i32
    %c0_i32_0 = arith.constant 0 : i32
    %c0_i32_1 = arith.constant 0 : i32
    return %c0_i32, %c0_i32_0 : i32, i32
  }
  func.func @transform_2(%arg0: i32) -> (i32, i32) {
    %c0_i32 = arith.constant 0 : i32
    %c0_i32_0 = arith.constant 0 : i32
    %c0_i32_1 = arith.constant 0 : i32
    return %c0_i32, %c0_i32_0 : i32, i32
  }
  func.func @transform_3(%arg0: i32) -> (i32, i32, i32) {
    %c0_i32 = arith.constant 0 : i32
    %c0_i32_0 = arith.constant 0 : i32
    %c0_i32_1 = arith.constant 0 : i32
    %c0_i32_2 = arith.constant 0 : i32
    return %c0_i32, %c0_i32_0, %c0_i32_1 : i32, i32, i32
  }
  func.func @transform_4(%arg0: i32) -> (i32, i32) {
    %c0_i32 = arith.constant 0 : i32
    %c0_i32_0 = arith.constant 0 : i32
    %c0_i32_1 = arith.constant 0 : i32
    return %c0_i32, %c0_i32_0 : i32, i32
  }
  func.func @transform_5(%arg0: i32) -> (i32, i32, i32) {
    %c0_i32 = arith.constant 0 : i32
    %c0_i32_0 = arith.constant 0 : i32
    %c0_i32_1 = arith.constant 0 : i32
    return %arg0, %c0_i32, %c0_i32_0 : i32, i32, i32
  }
}

module attributes {stable_mosaic.version = 11 : i64} {
  func.func @_fc_kernel(%arg0: i32, %arg1: memref<8x14336xbf16, #tpu.memory_space<vmem>>, %arg2: memref<14336x128xbf16, #tpu.memory_space<vmem>>, %arg3: memref<1x128xf32, #tpu.memory_space<vmem>>, %arg4: memref<128x128xf32, #tpu.memory_space<vmem>>, %arg5: memref<1x128xf32, #tpu.memory_space<vmem>>, %arg6: memref<8x128xf32, #tpu.memory_space<vmem>>) attributes {dimension_semantics = [#tpu.dimension_semantics<parallel>], iteration_bounds = array<i64: 1>, scalar_prefetch = 0 : i64, scratch_operands = 0 : i64, tpu.core_type = #tpu.core_type<tc>, window_params = [{transform_indices = @transform_0, window_bounds = array<i64: 8, 14336>}, {pipeline_mode = #tpu.pipeline_mode<synchronous>, transform_indices = @transform_1, window_bounds = array<i64: 14336, 128>}, {pipeline_mode = #tpu.pipeline_mode<synchronous>, transform_indices = @transform_2, window_bounds = array<i64: 1, 128>}, {pipeline_mode = #tpu.pipeline_mode<synchronous>, transform_indices = @transform_3, window_bounds = array<i64: 128, 128>}, {pipeline_mode = #tpu.pipeline_mode<synchronous>, transform_indices = @transform_4, window_bounds = array<i64: 1, 128>}, {transform_indices = @transform_5, window_bounds = array<i64: 8, 128>}]} {
    %c0 = arith.constant 0 : index
    %c0_0 = arith.constant 0 : index
    %0 = vector.load %arg1[%c0, %c0_0] : memref<8x14336xbf16, #tpu.memory_space<vmem>>, vector<8x14336xbf16>
    %c0_1 = arith.constant 0 : index
    %c0_2 = arith.constant 0 : index
    %1 = vector.load %arg2[%c0_1, %c0_2] : memref<14336x128xbf16, #tpu.memory_space<vmem>>, vector<14336x128xbf16>
    %cst = arith.constant dense<0.000000e+00> : vector<8x128xf32>
    %2 = tpu.matmul %0, %1, %cst {dimension_numbers = #tpu.dot_dimension_numbers<[1], [0], [0], [1], [0, 0, 1, 1], [], []>} : vector<8x14336xbf16>, vector<14336x128xbf16>, vector<8x128xf32> -> vector<8x128xf32>
    %c0_3 = arith.constant 0 : index
    %c0_4 = arith.constant 0 : index
    %3 = vector.load %arg3[%c0_3, %c0_4] : memref<1x128xf32, #tpu.memory_space<vmem>>, vector<1x128xf32>
    %4 = vector.broadcast %3 : vector<1x128xf32> to vector<8x128xf32>
    %5 = arith.addf %2, %4 : vector<8x128xf32>
    %cst_5 = arith.constant 0.000000e+00 : f32
    %6 = vector.broadcast %cst_5 : f32 to vector<8x128xf32>
    %7 = arith.maximumf %5, %6 : vector<8x128xf32>
    %c0_6 = arith.constant 0 : index
    %c0_7 = arith.constant 0 : index
    %8 = vector.load %arg4[%c0_6, %c0_7] : memref<128x128xf32, #tpu.memory_space<vmem>>, vector<128x128xf32>
    %cst_8 = arith.constant dense<0.000000e+00> : vector<8x128xf32>
    %9 = tpu.matmul %7, %8, %cst_8 {dimension_numbers = #tpu.dot_dimension_numbers<[1], [0], [0], [1], [0, 0, 1, 1], [], []>} : vector<8x128xf32>, vector<128x128xf32>, vector<8x128xf32> -> vector<8x128xf32>
    %c0_9 = arith.constant 0 : index
    %c0_10 = arith.constant 0 : index
    %10 = vector.load %arg5[%c0_9, %c0_10] : memref<1x128xf32, #tpu.memory_space<vmem>>, vector<1x128xf32>
    %11 = vector.broadcast %10 : vector<1x128xf32> to vector<8x128xf32>
    %12 = arith.addf %9, %11 : vector<8x128xf32>
    %c0_11 = arith.constant 0 : index
    %c0_12 = arith.constant 0 : index
    %13 = vector.load %arg6[%c0_11, %c0_12] : memref<8x128xf32, #tpu.memory_space<vmem>>, vector<8x128xf32>
    tpu.vector_store %arg6[%c0_11, %c0_12], %12 {strides = array<i32>} : memref<8x128xf32, #tpu.memory_space<vmem>>, vector<8x128xf32>,
    return
  }
  func.func @transform_0(%arg0: i32) -> (i32, i32) {
    %c0_i32 = arith.constant 0 : i32
    %c0_i32_0 = arith.constant 0 : i32
    return %arg0, %c0_i32 : i32, i32
  }
  func.func @transform_1(%arg0: i32) -> (i32, i32) {
    %c0_i32 = arith.constant 0 : i32
    %c0_i32_0 = arith.constant 0 : i32
    %c0_i32_1 = arith.constant 0 : i32
    return %c0_i32, %c0_i32_0 : i32, i32
  }
  func.func @transform_2(%arg0: i32) -> (i32, i32) {
    %c0_i32 = arith.constant 0 : i32
    %c0_i32_0 = arith.constant 0 : i32
    %c0_i32_1 = arith.constant 0 : i32
    return %c0_i32, %c0_i32_0 : i32, i32
  }
  func.func @transform_3(%arg0: i32) -> (i32, i32) {
    %c0_i32 = arith.constant 0 : i32
    %c0_i32_0 = arith.constant 0 : i32
    %c0_i32_1 = arith.constant 0 : i32
    return %c0_i32, %c0_i32_0 : i32, i32
  }
  func.func @transform_4(%arg0: i32) -> (i32, i32) {
    %c0_i32 = arith.constant 0 : i32
    %c0_i32_0 = arith.constant 0 : i32
    %c0_i32_1 = arith.constant 0 : i32
    return %c0_i32, %c0_i32_0 : i32, i32
  }
  func.func @transform_5(%arg0: i32) -> (i32, i32) {
    %c0_i32 = arith.constant 0 : i32
    %c0_i32_0 = arith.constant 0 : i32
    return %arg0, %c0_i32 : i32, i32
  }
}

</mosaic_0001>

<llo_original>
// kernel: cnn_forward.2
$region0: #{cnn_forward.2}
  #allocation0 [shape = 'u32[]', space=smem, size = 0x4, offset = 0x4, fixed_abs, tag = 'smem constant byte address 0x4 - core index']
  #allocation1 [shape = 'u32[144,128]{1,0:T(1,128)}', space=vmem, size = 0x12000, scoped, tag = 'internal scratch']
  #allocation2 [shape = 'bf16[480,128]{1,0:T(16,128)(2,1)}', space=vmem, size = 0x1e000, scoped, tag = 'scratch operand']
  %s0 = inlined_call_operand.vmem [shape: bf16[2,480,18], index: 0, kind: input, shape index: {}]
  %s1 = inlined_call_operand.vmem [shape: bf16[18,128], index: 1, kind: input, shape index: {}]
  %s2 = inlined_call_operand.vmem [shape: f32[1,128], index: 2, kind: input, shape index: {}]
  %s3 = inlined_call_operand.vmem [shape: bf16[3,128,128], index: 3, kind: input, shape index: {}]
  %s4 = inlined_call_operand.vmem [shape: f32[1,64], index: 4, kind: input, shape index: {}]
  %s5 = inlined_call_operand.vmem [shape: bf16[2,224,64], index: 5, kind: output, shape index: {}]
  %s6 = sld [smem:[#allocation0]]
  $region67: #{cnn_forward.2} parent=0
    _
  %s8 = ssub.s32 1, %s6
  %s9 = scalar_select 0, %s8, %s6
  loop: start=0, step=1, limit=4
  $region2: #{cnn_forward.2} parent=0 // loop_pre_header
    _
  $region3: #{cnn_forward.2} parent=0 // loop_header
    %s11 = sphi 0, %s15
    %p12 = scmp.ge.s32.totalorder %s11, 4
    %s21 = sphi 0, %s23
    %s24 = sphi 0, %s21
    %s25 = sphi 0, %s24
    %s41 = sphi 0, %s25
    %s45 = sphi 0, %s45
    %s47 = sphi 0, %s45
    %s48 = sphi 0, %s47
    %s62 = sphi 0, %s48
    %s66 = sphi 0, %s66
    %s68 = sphi 0, %s66
    %s69 = sphi 0, %s68
    %s83 = sphi 0, %s69
    %s87 = sphi 0, %s87
    %s89 = sphi 0, %s87
    %s90 = sphi 0, %s89
    %s104 = sphi 0, %s90
    %s108 = sphi 0, %s108
    %s110 = sphi 0, %s108
    %s111 = sphi 0, %s110
    %s125 = sphi 0, %s111
    %s131 = sphi 0, %s133
    %s134 = sphi 0, %s131
    %s135 = sphi 0, %s134
    %s151 = sphi 0, %s135
  $region4: #{cnn_forward.2} parent=0 // loop_header_branch
    %14 = sbr.rel (%p12) target = $region8
  $region5: #{cnn_forward.2} parent=0 // loop_body
    %s16 = ssub.s32 %s11, 1
    %s17 = ssub.s32 %s11, 2
    %s18 = sadd.s32 %s11, 1
    %s19 = ssub.s32 %s11, %s18
    %p20 = scmp.eq.s32.totalorder %s19, 0
    %s22 = sadd.s32 %s21, 1
    %s23 = scalar_select %p20, %s21, %s22
    %p26 = pneg %p20
    %p27 = scmp.eq.s32.totalorder %s11, 1
    %p28 = por %p26, %p27
    %p29 = scmp.ne.s32.totalorder %s21, %s24
    %p30 = scmp.eq.s32.totalorder %s11, 0
    %p31 = por %p29, %p30
    %p32 = scmp.ne.s32.totalorder %s21, %s24
    %p33 = scmp.eq.s32.totalorder %s16, 1
    %p34 = por %p32, %p33
    %p35 = scmp.ne.s32.totalorder %s24, %s25
    %p36 = scmp.eq.s32.totalorder %s16, 0
    %p37 = por %p35, %p36
    %p38 = scmp.ne.s32.totalorder %s24, %s25
    %p39 = scmp.eq.s32.totalorder %s17, 1
    %p40 = por %p38, %p39
    %p42 = scmp.ne.s32.totalorder %s25, %s41
    %p43 = scmp.eq.s32.totalorder %s17, 0
    %p44 = por %p42, %p43
    %s46 = sadd.s32 %s45, 1
    %p49 = scmp.eq.s32.totalorder %s11, 1
    %p50 = scmp.ne.s32.totalorder %s45, %s47
    %p51 = scmp.eq.s32.totalorder %s11, 0
    %p52 = por %p50, %p51
    %p53 = scmp.ne.s32.totalorder %s45, %s47
    %p54 = scmp.eq.s32.totalorder %s16, 1
    %p55 = por %p53, %p54
    %p56 = scmp.ne.s32.totalorder %s47, %s48
    %p57 = scmp.eq.s32.totalorder %s16, 0
    %p58 = por %p56, %p57
    %p59 = scmp.ne.s32.totalorder %s47, %s48
    %p60 = scmp.eq.s32.totalorder %s17, 1
    %p61 = por %p59, %p60
    %p63 = scmp.ne.s32.totalorder %s48, %s62
    %p64 = scmp.eq.s32.totalorder %s17, 0
    %p65 = por %p63, %p64
    %s67 = sadd.s32 %s66, 1
    %p70 = scmp.eq.s32.totalorder %s11, 1
    %p71 = scmp.ne.s32.totalorder %s66, %s68
    %p72 = scmp.eq.s32.totalorder %s11, 0
    %p73 = por %p71, %p72
    %p74 = scmp.ne.s32.totalorder %s66, %s68
    %p75 = scmp.eq.s32.totalorder %s16, 1
    %p76 = por %p74, %p75
    %p77 = scmp.ne.s32.totalorder %s68, %s69
    %p78 = scmp.eq.s32.totalorder %s16, 0
    %p79 = por %p77, %p78
    %p80 = scmp.ne.s32.totalorder %s68, %s69
    %p81 = scmp.eq.s32.totalorder %s17, 1
    %p82 = por %p80, %p81
    %p84 = scmp.ne.s32.totalorder %s69, %s83
    %p85 = scmp.eq.s32.totalorder %s17, 0
    %p86 = por %p84, %p85
    %s88 = sadd.s32 %s87, 1
    %p91 = scmp.eq.s32.totalorder %s11, 1
    %p92 = scmp.ne.s32.totalorder %s87, %s89
    %p93 = scmp.eq.s32.totalorder %s11, 0
    %p94 = por %p92, %p93
    %p95 = scmp.ne.s32.totalorder %s87, %s89
    %p96 = scmp.eq.s32.totalorder %s16, 1
    %p97 = por %p95, %p96
    %p98 = scmp.ne.s32.totalorder %s89, %s90
    %p99 = scmp.eq.s32.totalorder %s16, 0
    %p100 = por %p98, %p99
    %p101 = scmp.ne.s32.totalorder %s89, %s90
    %p102 = scmp.eq.s32.totalorder %s17, 1
    %p103 = por %p101, %p102
    %p105 = scmp.ne.s32.totalorder %s90, %s104
    %p106 = scmp.eq.s32.totalorder %s17, 0
    %p107 = por %p105, %p106
    %s109 = sadd.s32 %s108, 1
    %p112 = scmp.eq.s32.totalorder %s11, 1
    %p113 = scmp.ne.s32.totalorder %s108, %s110
    %p114 = scmp.eq.s32.totalorder %s11, 0
    %p115 = por %p113, %p114
    %p116 = scmp.ne.s32.totalorder %s108, %s110
    %p117 = scmp.eq.s32.totalorder %s16, 1
    %p118 = por %p116, %p117
    %p119 = scmp.ne.s32.totalorder %s110, %s111
    %p120 = scmp.eq.s32.totalorder %s16, 0
    %p121 = por %p119, %p120
    %p122 = scmp.ne.s32.totalorder %s110, %s111
    %p123 = scmp.eq.s32.totalorder %s17, 1
    %p124 = por %p122, %p123
    %p126 = scmp.ne.s32.totalorder %s111, %s125
    %p127 = scmp.eq.s32.totalorder %s17, 0
    %p128 = por %p126, %p127
    %s129 = ssub.s32 %s11, %s18
    %p130 = scmp.eq.s32.totalorder %s129, 0
    %s132 = sadd.s32 %s131, 1
    %s133 = scalar_select %p130, %s131, %s132
    %p136 = pneg %p130
    %p137 = scmp.eq.s32.totalorder %s11, 1
    %p138 = por %p136, %p137
    %p139 = scmp.ne.s32.totalorder %s131, %s134
    %p140 = scmp.eq.s32.totalorder %s11, 0
    %p141 = por %p139, %p140
    %p142 = scmp.ne.s32.totalorder %s131, %s134
    %p143 = scmp.eq.s32.totalorder %s16, 1
    %p144 = por %p142, %p143
    %p145 = scmp.ne.s32.totalorder %s134, %s135
    %p146 = scmp.eq.s32.totalorder %s16, 0
    %p147 = por %p145, %p146
    %p148 = scmp.ne.s32.totalorder %s134, %s135
    %p149 = scmp.eq.s32.totalorder %s17, 1
    %p150 = por %p148, %p149
    %p152 = scmp.ne.s32.totalorder %s135, %s151
    %p153 = scmp.eq.s32.totalorder %s17, 0
    %p154 = por %p152, %p153
    %p155 = scmp.le.s32.totalorder 1, %s11
    %p156 = scmp.lt.s32.totalorder %s11, 3
    %p157 = pnand %p155, %p156
    %p158 = pneg %p157
    // Predicated region
    $region9: #{cnn_forward.2} parent=5 // pred_check
      _
    $region10: #{cnn_forward.2} parent=5 // pred_check_branch
      %160 = sbr.rel (%p157) target = $region12
    $region11: #{cnn_forward.2} parent=5 // pred_region
      %s161 = ssub.s32 %s11, 1
      // Predicated region
      $region13: #{cnn_forward.2} parent=11 // pred_check
        %p162 = pneg %p58
      $region14: #{cnn_forward.2} parent=11 // pred_check_branch
        %164 = sbr.rel (%p162) target = $region16
      $region15: #{cnn_forward.2} parent=11 // pred_region
        _
      $region16: #{cnn_forward.2} parent=11 // pred_fallthru
        _
      // Predicated region
      $region17: #{cnn_forward.2} parent=11 // pred_check
        %p165 = pneg %p79
      $region18: #{cnn_forward.2} parent=11 // pred_check_branch
        %167 = sbr.rel (%p165) target = $region20
      $region19: #{cnn_forward.2} parent=11 // pred_region
        _
      $region20: #{cnn_forward.2} parent=11 // pred_fallthru
        _
      // Predicated region
      $region21: #{cnn_forward.2} parent=11 // pred_check
        %p168 = pneg %p100
      $region22: #{cnn_forward.2} parent=11 // pred_check_branch
        %170 = sbr.rel (%p168) target = $region24
      $region23: #{cnn_forward.2} parent=11 // pred_region
        _
      $region24: #{cnn_forward.2} parent=11 // pred_fallthru
        _
      // Predicated region
      $region25: #{cnn_forward.2} parent=11 // pred_check
        %p171 = pneg %p121
      $region26: #{cnn_forward.2} parent=11 // pred_check_branch
        %173 = sbr.rel (%p171) target = $region28
      $region27: #{cnn_forward.2} parent=11 // pred_region
        _
      $region28: #{cnn_forward.2} parent=11 // pred_fallthru
        _
    $region12: #{cnn_forward.2} parent=5 // pred_fallthru
      _
    %p174 = scmp.lt.s32.totalorder %s11, 2
    // Predicated region
    $region29: #{cnn_forward.2} parent=5 // pred_check
      %p175 = pneg %p174
    $region30: #{cnn_forward.2} parent=5 // pred_check_branch
      %177 = sbr.rel (%p175) target = $region32
    $region31: #{cnn_forward.2} parent=5 // pred_region
      // Predicated region
      $region33: #{cnn_forward.2} parent=31 // pred_check
        %p178 = pneg %p31
      $region34: #{cnn_forward.2} parent=31 // pred_check_branch
        %180 = sbr.rel (%p178) target = $region36
      $region35: #{cnn_forward.2} parent=31 // pred_region
        %p181 = scmp.lt.s32.totalorder %s11, 1
        %s182 = scalar_select %p181, %s11, 1
        %s183 = smul.addr %s182, 60
        %s184 = smul.addr %s183, 4
        %s185 = scalar_lea.vmem %s0, %s184
      $region36: #{cnn_forward.2} parent=31 // pred_fallthru
        _
    $region32: #{cnn_forward.2} parent=5 // pred_fallthru
      _
    %p186 = scmp.le.s32.totalorder 1, %s11
    %p187 = scmp.lt.s32.totalorder %s11, 3
    %p188 = pnand %p186, %p187
    %p189 = pneg %p188
    // Predicated region
    $region37: #{cnn_forward.2} parent=5 // pred_check
      _
    $region38: #{cnn_forward.2} parent=5 // pred_check_branch
      %191 = sbr.rel (%p188) target = $region40
    $region39: #{cnn_forward.2} parent=5 // pred_region
      %s192 = ssub.s32 %s11, 1
      %p193 = scmp.lt.s32.totalorder %s16, 1
      %s194 = scalar_select %p193, %s16, 1
      %s195 = smul.addr %s194, 60
      %s196 = smul.addr %s195, 4
      %s197 = scalar_lea.vmem %s0, %s196
      %p198 = pneg %p37
      %p199 = pneg %p34
      %p200 = pneg %p58
      %p201 = pneg %p55
      %p202 = pneg %p79
      %p203 = pneg %p76
      %p204 = pneg %p100
      %p205 = pneg %p97
      %p206 = pneg %p121
      %p207 = pneg %p118
      %p208 = pneg %p147
      %p209 = pneg %p144
      %p210 = scmp.lt.s32.totalorder %s16, 1
      %s211 = scalar_select %p210, %s16, 1
      %s212 = smul.addr %s211, 28
      %s213 = smul.addr %s212, 4
      %s214 = scalar_lea.vmem %s5, %s213
      %p215 = scmp.lt.s32.totalorder %s16, 1
      %s216 = scalar_select %p215, %s16, 1
      %s217 = smul.addr %s216, 60
      %s218 = smul.addr %s217, 4
      %s219 = scalar_lea.vmem %s0, %s218
      %p220 = scmp.lt.s32.totalorder %s16, 1
      %s221 = scalar_select %p220, %s16, 1
      %s222 = smul.addr %s221, 28
      %s223 = smul.addr %s222, 4
      %s224 = scalar_lea.vmem %s5, %s223
      %v226 = vld [vmem:[%s2] sm:$0x1]
      %v227 = vld [vmem:[%s4] sm:$0x1]
      loop: start=0, step=1, limit=3
      $region41: #{cnn_forward.2} parent=39 // loop_pre_header
        _
      $region42: #{cnn_forward.2} parent=39 // loop_header
        %s229 = sphi 0, %s233
        %p230 = scmp.ge.s32.totalorder %s229, 3
      $region43: #{cnn_forward.2} parent=39 // loop_header_branch
        %232 = sbr.rel (%p230) target = $region47
      $region44: #{cnn_forward.2} parent=39 // loop_body
        %s234 = smul.u32 %s229, 160
        %s235 = sshra.s32 %s234, 3
        %s236 = sand.u32 %s234, 7
        %s237 = smul.addr %s235, 4
        %s238 = scalar_lea.vmem %s219, %s237
        %v239 = vld [vmem:[%s238] sm:$0xf]
        %v240 = vld [vmem:[%s238 + $0x4] sm:$0xf]
        %v241 = vld [vmem:[%s238 + $0x8] sm:$0xf]
        %v242 = vld [vmem:[%s238 + $0xc] sm:$0xf]
        %v243 = vld [vmem:[%s238 + $0x10] sm:$0xf]
        %v244 = vld [vmem:[%s238 + $0x14] sm:$0xf]
        %v245 = vld [vmem:[%s238 + $0x18] sm:$0xf]
        %v246 = vld [vmem:[%s238 + $0x1c] sm:$0xf]
        %v247 = vld [vmem:[%s238 + $0x20] sm:$0xf]
        %v248 = vld [vmem:[%s238 + $0x24] sm:$0xf]
        %v249 = vld [vmem:[%s238 + $0x28] sm:$0xf]
        %v250 = vld [vmem:[%s238 + $0x2c] sm:$0xf]
        %v251 = vld [vmem:[%s238 + $0x30] sm:$0xf]
        %v252 = vld [vmem:[%s238 + $0x34] sm:$0xf]
        %v253 = vld [vmem:[%s238 + $0x38] sm:$0xf]
        %v254 = vld [vmem:[%s238 + $0x3c] sm:$0xf]
        %v255 = vld [vmem:[%s238 + $0x40] sm:$0xf]
        %v256 = vld [vmem:[%s238 + $0x44] sm:$0xf]
        %v257 = vld [vmem:[%s238 + $0x48] sm:$0xf]
        %v258 = vld [vmem:[%s238 + $0x4c] sm:$0xf]
        %v259 = vld [vmem:[%s1] sm:$0xf]
        %v260 = vld [vmem:[%s1 + $0x4] sm:$0xf]
        %v261 = vld [vmem:[%s1 + $0x8] sm:$0x1]
        %v263 = vlaneseq
        %v264 = vshrl.u32 %v263, 7
        %v265 = vsub.s32 0, %v264
        %v266 = vrot.slane %v226, %v265
        %v288 = vunpack.c.l.b16 %v239
        %v289 = vunpack.c.l.b16 %v240
        %v290 = vunpack.c.l.b16 %v241
        %v291 = vunpack.c.l.b16 %v242
        %v292 = vunpack.c.l.b16 %v243
        %v293 = vunpack.c.l.b16 %v244
        %v294 = vunpack.c.l.b16 %v245
        %v295 = vunpack.c.l.b16 %v246
        %v296 = vunpack.c.l.b16 %v247
        %v297 = vunpack.c.l.b16 %v248
        %v298 = vunpack.c.l.b16 %v249
        %v299 = vunpack.c.l.b16 %v250
        %v300 = vunpack.c.l.b16 %v251
        %v301 = vunpack.c.l.b16 %v252
        %v302 = vunpack.c.l.b16 %v253
        %v303 = vunpack.c.l.b16 %v254
        %v304 = vunpack.c.l.b16 %v255
        %v305 = vunpack.c.l.b16 %v256
        %v306 = vunpack.c.l.b16 %v257
        %v307 = vunpack.c.l.b16 %v258
        %v308 = vpack.c.b16 %v289, %v288
        %v309 = vpack.c.b16 %v291, %v290
        %v310 = vpack.c.b16 %v293, %v292
        %v311 = vpack.c.b16 %v295, %v294
        %v312 = vpack.c.b16 %v297, %v296
        %v313 = vpack.c.b16 %v299, %v298
        %v314 = vpack.c.b16 %v301, %v300
        %v315 = vpack.c.b16 %v303, %v302
        %v316 = vpack.c.b16 %v305, %v304
        %v317 = vpack.c.b16 %v307, %v306
        %v321 = vunpack.c.l.b16 %v259
        %v322 = vunpack.c.l.b16 %v260
        %v323 = vunpack.c.l.b16 %v261
        %v324 = vpack.c.b16 %v322, %v321
        %v325 = vpack.c.b16 %v323, %v323
        %vm327 = vcmask 146432
        %v329 = vsel %vm327, %v308, 0
        %v332 = vsel %vm327, %v309, 0
        %v335 = vsel %vm327, %v310, 0
        %v338 = vsel %vm327, %v311, 0
        %v341 = vsel %vm327, %v312, 0
        %v344 = vsel %vm327, %v313, 0
        %v347 = vsel %vm327, %v314, 0
        %v350 = vsel %vm327, %v315, 0
        %v353 = vsel %vm327, %v316, 0
        %v356 = vsel %vm327, %v317, 0
        %vm358 = vcmask 1040384
        %v360 = vsel %vm358, %v325, 0
        %362 = vmatprep.subr.bf16.mxu0 0
        %363 = vmatpush1.bf16.msra.mxu0 %v324
        %364 = vmatprep.subr.bf16.mxu0 0
        %365 = vmatpush1.bf16.msra.mxu0 %v360
        %366 = vmatprep.subr.bf16.mxu0 0
        %367 = vmatpush1.bf16.msra.mxu0 0
        %368 = vmatprep.subr.bf16.mxu0 0
        %369 = vmatpush1.bf16.msra.mxu0 0
        %370 = vmatprep.subr.bf16.mxu0 0
        %371 = vmatpush1.bf16.msra.mxu0 0
        %372 = vmatprep.subr.bf16.mxu0 0
        %373 = vmatpush1.bf16.msra.mxu0 0
        %374 = vmatprep.subr.bf16.mxu0 0
        %375 = vmatpush1.bf16.msra.mxu0 0
        %376 = vmatprep.subr.bf16.mxu0 0
        %377 = vmatpush1.bf16.msra.mxu0 0
        %378 = vmatprep.subr.bf16.mxu0 0
        %379 = vmatpush1.bf16.msra.mxu0 0
        %380 = vmatprep.subr.bf16.mxu0 0
        %381 = vmatpush1.bf16.msra.mxu0 0
        %382 = vmatprep.subr.bf16.mxu0 0
        %383 = vmatpush1.bf16.msra.mxu0 0
        %384 = vmatprep.subr.bf16.mxu0 0
        %385 = vmatpush1.bf16.msra.mxu0 0
        %386 = vmatprep.subr.bf16.mxu0 0
        %387 = vmatpush1.bf16.msra.mxu0 0
        %388 = vmatprep.subr.bf16.mxu0 0
        %389 = vmatpush1.bf16.msra.mxu0 0
        %390 = vmatprep.subr.bf16.mxu0 0
        %391 = vmatpush1.bf16.msra.mxu0 0
        %392 = vmatprep.subr.bf16.mxu0 0
        %393 = vmatpush1.bf16.msra.mxu0 0
        %394 = vmatprep.mubr.bf16.mxu0 0
        %395 = vmatmul.mubr.bf16.gmra.mrb[0].mxu0 %v329
        %v396 = vpop.f32.mrb[0].mxu0
        %v397 = vadd.f32 %v266, %v396
        %v398 = vpop.f32.mrb[0].mxu0
        %v399 = vpop.f32.mrb[0].mxu0
        %v400 = vadd.f32 %v266, %v399
        %v401 = vpop.f32.mrb[0].mxu0
        %402 = vmatprep.mubr.bf16.mxu0 0
        %403 = vmatmul.mubr.bf16.gmra.mrb[0].mxu0 %v332
        %v404 = vpop.f32.mrb[0].mxu0
        %v405 = vadd.f32 %v266, %v404
        %v406 = vpop.f32.mrb[0].mxu0
        %v407 = vpop.f32.mrb[0].mxu0
        %v408 = vadd.f32 %v266, %v407
        %v409 = vpop.f32.mrb[0].mxu0
        %410 = vmatprep.mubr.bf16.mxu0 0
        %411 = vmatmul.mubr.bf16.gmra.mrb[0].mxu0 %v335
        %v412 = vpop.f32.mrb[0].mxu0
        %v413 = vadd.f32 %v266, %v412
        %v414 = vpop.f32.mrb[0].mxu0
        %v415 = vpop.f32.mrb[0].mxu0
        %v416 = vadd.f32 %v266, %v415
        %v417 = vpop.f32.mrb[0].mxu0
        %418 = vmatprep.mubr.bf16.mxu0 0
        %419 = vmatmul.mubr.bf16.gmra.mrb[0].mxu0 %v338
        %v420 = vpop.f32.mrb[0].mxu0
        %v421 = vadd.f32 %v266, %v420
        %v422 = vpop.f32.mrb[0].mxu0
        %v423 = vpop.f32.mrb[0].mxu0
        %v424 = vadd.f32 %v266, %v423
        %v425 = vpop.f32.mrb[0].mxu0
        %426 = vmatprep.mubr.bf16.mxu0 0
        %427 = vmatmul.mubr.bf16.gmra.mrb[0].mxu0 %v341
        %v428 = vpop.f32.mrb[0].mxu0
        %v429 = vadd.f32 %v266, %v428
        %v430 = vpop.f32.mrb[0].mxu0
        %v431 = vpop.f32.mrb[0].mxu0
        %v432 = vadd.f32 %v266, %v431
        %v433 = vpop.f32.mrb[0].mxu0
        %434 = vmatprep.mubr.bf16.mxu0 0
        %435 = vmatmul.mubr.bf16.gmra.mrb[0].mxu0 %v344
        %v436 = vpop.f32.mrb[0].mxu0
        %v437 = vadd.f32 %v266, %v436
        %v438 = vpop.f32.mrb[0].mxu0
        %v439 = vpop.f32.mrb[0].mxu0
        %v440 = vadd.f32 %v266, %v439
        %v441 = vpop.f32.mrb[0].mxu0
        %442 = vmatprep.mubr.bf16.mxu0 0
        %443 = vmatmul.mubr.bf16.gmra.mrb[0].mxu0 %v347
        %v444 = vpop.f32.mrb[0].mxu0
        %v445 = vadd.f32 %v266, %v444
        %v446 = vpop.f32.mrb[0].mxu0
        %v447 = vpop.f32.mrb[0].mxu0
        %v448 = vadd.f32 %v266, %v447
        %v449 = vpop.f32.mrb[0].mxu0
        %450 = vmatprep.mubr.bf16.mxu0 0
        %451 = vmatmul.mubr.bf16.gmra.mrb[0].mxu0 %v350
        %v452 = vpop.f32.mrb[0].mxu0
        %v453 = vadd.f32 %v266, %v452
        %v454 = vpop.f32.mrb[0].mxu0
        %v455 = vpop.f32.mrb[0].mxu0
        %v456 = vadd.f32 %v266, %v455
        %v457 = vpop.f32.mrb[0].mxu0
        %458 = vmatprep.mubr.bf16.mxu0 0
        %459 = vmatmul.mubr.bf16.gmra.mrb[0].mxu0 %v353
        %v460 = vpop.f32.mrb[0].mxu0
        %v461 = vadd.f32 %v266, %v460
        %v462 = vpop.f32.mrb[0].mxu0
        %v463 = vpop.f32.mrb[0].mxu0
        %v464 = vadd.f32 %v266, %v463
        %v465 = vpop.f32.mrb[0].mxu0
        %466 = vmatprep.mubr.bf16.mxu0 0
        %467 = vmatmul.mubr.bf16.gmra.mrb[0].mxu0 %v356
        %v468 = vpop.f32.mrb[0].mxu0
        %v469 = vadd.f32 %v266, %v468
        %v470 = vpop.f32.mrb[0].mxu0
        %v471 = vpop.f32.mrb[0].mxu0
        %v472 = vadd.f32 %v266, %v471
        %v473 = vpop.f32.mrb[0].mxu0
        %474 = vdwg.mxu0
        %v475 = vmax.f32 %v397, 0.0
        %v476 = vmax.f32 %v400, 0.0
        %v477 = vmax.f32 %v405, 0.0
        %v478 = vmax.f32 %v408, 0.0
        %v479 = vmax.f32 %v413, 0.0
        %v480 = vmax.f32 %v416, 0.0
        %v481 = vmax.f32 %v421, 0.0
        %v482 = vmax.f32 %v424, 0.0
        %v483 = vmax.f32 %v429, 0.0
        %v484 = vmax.f32 %v432, 0.0
        %v485 = vmax.f32 %v437, 0.0
        %v486 = vmax.f32 %v440, 0.0
        %v487 = vmax.f32 %v445, 0.0
        %v488 = vmax.f32 %v448, 0.0
        %v489 = vmax.f32 %v453, 0.0
        %v490 = vmax.f32 %v456, 0.0
        %v491 = vmax.f32 %v461, 0.0
        %v492 = vmax.f32 %v464, 0.0
        %v493 = vmax.f32 %v469, 0.0
        %v494 = vmax.f32 %v472, 0.0
        %v495 = vpack.c.bf16 %v476, %v475
        %v496 = vpack.c.bf16 %v478, %v477
        %v497 = vpack.c.bf16 %v480, %v479
        %v498 = vpack.c.bf16 %v482, %v481
        %v499 = vpack.c.bf16 %v484, %v483
        %v500 = vpack.c.bf16 %v486, %v485
        %v501 = vpack.c.bf16 %v488, %v487
        %v502 = vpack.c.bf16 %v490, %v489
        %v503 = vpack.c.bf16 %v492, %v491
        %v504 = vpack.c.bf16 %v494, %v493
        %s505 = sshra.s32 %s234, 4
        %s506 = sand.u32 %s234, 15
        %s507 = smul.addr %s505, 8
        %s508 = scalar_lea.vmem [#allocation2], %s507
        %509 = vst [vmem:[%s508] sm:$0xff] %v495
        %510 = vst [vmem:[%s508 + $0x8] sm:$0xff] %v496
        %511 = vst [vmem:[%s508 + $0x10] sm:$0xff] %v497
        %512 = vst [vmem:[%s508 + $0x18] sm:$0xff] %v498
        %513 = vst [vmem:[%s508 + $0x20] sm:$0xff] %v499
        %514 = vst [vmem:[%s508 + $0x28] sm:$0xff] %v500
        %515 = vst [vmem:[%s508 + $0x30] sm:$0xff] %v501
        %516 = vst [vmem:[%s508 + $0x38] sm:$0xff] %v502
        %517 = vst [vmem:[%s508 + $0x40] sm:$0xff] %v503
        %518 = vst [vmem:[%s508 + $0x48] sm:$0xff] %v504
      $region45: #{cnn_forward.2} parent=39 // loop_footer
        %s233 = sadd.s32 1, %s229
      $region46: #{cnn_forward.2} parent=39 // loop_footer_branch
        %228 = sbr.rel target = $region42
      $region47: #{cnn_forward.2} parent=39 // loop_exit
        _
      loop: start=0, step=1, limit=14
      $region48: #{cnn_forward.2} parent=39 // loop_pre_header
        _
      $region49: #{cnn_forward.2} parent=39 // loop_header
        %s520 = sphi 0, %s524
        %p521 = scmp.ge.s32.totalorder %s520, 14
      $region50: #{cnn_forward.2} parent=39 // loop_header_branch
        %523 = sbr.rel (%p521) target = $region54
      $region51: #{cnn_forward.2} parent=39 // loop_body
        %s525 = smul.u32 %s520, 32
        %s526 = sshra.s32 %s525, 4
        %s527 = sand.u32 %s525, 15
        %s528 = smul.addr %s526, 8
        %s529 = scalar_lea.vmem [#allocation2], %s528
        %v530 = vld [vmem:[%s529] sm:$0xff]
        %v531 = vld [vmem:[%s529 + $0x8] sm:$0xff]
        %v532 = vld [vmem:[%s3] sm:$0xf]
        %v533 = vld [vmem:[%s3 + $0x4] sm:$0xf]
        %v534 = vld [vmem:[%s3 + $0x8] sm:$0xf]
        %v535 = vld [vmem:[%s3 + $0xc] sm:$0xf]
        %v536 = vld [vmem:[%s3 + $0x10] sm:$0xf]
        %v537 = vld [vmem:[%s3 + $0x14] sm:$0xf]
        %v538 = vld [vmem:[%s3 + $0x18] sm:$0xf]
        %v539 = vld [vmem:[%s3 + $0x1c] sm:$0xf]
        %v540 = vld [vmem:[%s3 + $0x20] sm:$0xf]
        %v541 = vld [vmem:[%s3 + $0x24] sm:$0xf]
        %v542 = vld [vmem:[%s3 + $0x28] sm:$0xf]
        %v543 = vld [vmem:[%s3 + $0x2c] sm:$0xf]
        %v544 = vld [vmem:[%s3 + $0x30] sm:$0xf]
        %v545 = vld [vmem:[%s3 + $0x34] sm:$0xf]
        %v546 = vld [vmem:[%s3 + $0x38] sm:$0xf]
        %v547 = vld [vmem:[%s3 + $0x3c] sm:$0xf]
        %s548 = sadd.s32 %s525, 16
        %s549 = sshra.s32 %s548, 4
        %s550 = sand.u32 %s548, 15
        %s551 = smul.addr %s549, 8
        %s552 = scalar_lea.vmem [#allocation2], %s551
        %v553 = vld [vmem:[%s552] sm:$0xff]
        %v554 = vld [vmem:[%s552 + $0x8] sm:$0xff]
        %s555 = scalar_lea.vmem %s3, 64
        %v556 = vld [vmem:[%s555] sm:$0xf]
        %v557 = vld [vmem:[%s555 + $0x4] sm:$0xf]
        %v558 = vld [vmem:[%s555 + $0x8] sm:$0xf]
        %v559 = vld [vmem:[%s555 + $0xc] sm:$0xf]
        %v560 = vld [vmem:[%s555 + $0x10] sm:$0xf]
        %v561 = vld [vmem:[%s555 + $0x14] sm:$0xf]
        %v562 = vld [vmem:[%s555 + $0x18] sm:$0xf]
        %v563 = vld [vmem:[%s555 + $0x1c] sm:$0xf]
        %v564 = vld [vmem:[%s555 + $0x20] sm:$0xf]
        %v565 = vld [vmem:[%s555 + $0x24] sm:$0xf]
        %v566 = vld [vmem:[%s555 + $0x28] sm:$0xf]
        %v567 = vld [vmem:[%s555 + $0x2c] sm:$0xf]
        %v568 = vld [vmem:[%s555 + $0x30] sm:$0xf]
        %v569 = vld [vmem:[%s555 + $0x34] sm:$0xf]
        %v570 = vld [vmem:[%s555 + $0x38] sm:$0xf]
        %v571 = vld [vmem:[%s555 + $0x3c] sm:$0xf]
        %v588 = vunpack.c.l.b16 %v556
        %v589 = vunpack.c.l.b16 %v557
        %v590 = vunpack.c.l.b16 %v558
        %v591 = vunpack.c.l.b16 %v559
        %v592 = vunpack.c.l.b16 %v560
        %v593 = vunpack.c.l.b16 %v561
        %v594 = vunpack.c.l.b16 %v562
        %v595 = vunpack.c.l.b16 %v563
        %v596 = vunpack.c.l.b16 %v564
        %v597 = vunpack.c.l.b16 %v565
        %v598 = vunpack.c.l.b16 %v566
        %v599 = vunpack.c.l.b16 %v567
        %v600 = vunpack.c.l.b16 %v568
        %v601 = vunpack.c.l.b16 %v569
        %v602 = vunpack.c.l.b16 %v570
        %v603 = vunpack.c.l.b16 %v571
        %v604 = vpack.c.b16 %v589, %v588
        %v605 = vpack.c.b16 %v591, %v590
        %v606 = vpack.c.b16 %v593, %v592
        %v607 = vpack.c.b16 %v595, %v594
        %v608 = vpack.c.b16 %v597, %v596
        %v609 = vpack.c.b16 %v599, %v598
        %v610 = vpack.c.b16 %v601, %v600
        %v611 = vpack.c.b16 %v603, %v602
        %620 = vmatprep.subr.bf16.mxu0 0
        %621 = vmatpush1.bf16.msra.mxu0 %v604
        %622 = vmatprep.subr.bf16.mxu0 0
        %623 = vmatpush1.bf16.msra.mxu0 %v605
        %624 = vmatprep.subr.bf16.mxu0 0
        %625 = vmatpush1.bf16.msra.mxu0 %v606
        %626 = vmatprep.subr.bf16.mxu0 0
        %627 = vmatpush1.bf16.msra.mxu0 %v607
        %628 = vmatprep.subr.bf16.mxu0 0
        %629 = vmatpush1.bf16.msra.mxu0 %v608
        %630 = vmatprep.subr.bf16.mxu0 0
        %631 = vmatpush1.bf16.msra.mxu0 %v609
        %632 = vmatprep.subr.bf16.mxu0 0
        %633 = vmatpush1.bf16.msra.mxu0 %v610
        %634 = vmatprep.subr.bf16.mxu0 0
        %635 = vmatpush1.bf16.msra.mxu0 %v611
        %636 = vmatprep.subr.bf16.mxu0 0
        %637 = vmatpush1.bf16.msra.mxu0 0
        %638 = vmatprep.subr.bf16.mxu0 0
        %639 = vmatpush1.bf16.msra.mxu0 0
        %640 = vmatprep.subr.bf16.mxu0 0
        %641 = vmatpush1.bf16.msra.mxu0 0
        %642 = vmatprep.subr.bf16.mxu0 0
        %643 = vmatpush1.bf16.msra.mxu0 0
        %644 = vmatprep.subr.bf16.mxu0 0
        %645 = vmatpush1.bf16.msra.mxu0 0
        %646 = vmatprep.subr.bf16.mxu0 0
        %647 = vmatpush1.bf16.msra.mxu0 0
        %648 = vmatprep.subr.bf16.mxu0 0
        %649 = vmatpush1.bf16.msra.mxu0 0
        %650 = vmatprep.subr.bf16.mxu0 0
        %651 = vmatpush1.bf16.msra.mxu0 0
        %652 = vmatprep.mubr.bf16.mxu0 0
        %653 = vmatmul.mubr.bf16.gmra.mrb[0].mxu0 %v553
        %v654 = vpop.f32.mrb[0].mxu0
        %v655 = vadd.f32 0.0, %v654
        %v656 = vpop.f32.mrb[0].mxu0
        %v657 = vpop.f32.mrb[0].mxu0
        %v658 = vadd.f32 0.0, %v657
        %v659 = vpop.f32.mrb[0].mxu0
        %660 = vmatprep.mubr.bf16.mxu0 0
        %661 = vmatmul.mubr.bf16.gmra.mrb[0].mxu0 %v554
        %v662 = vpop.f32.mrb[0].mxu0
        %v663 = vadd.f32 0.0, %v662
        %v664 = vpop.f32.mrb[0].mxu0
        %v665 = vpop.f32.mrb[0].mxu0
        %v666 = vadd.f32 0.0, %v665
        %v667 = vpop.f32.mrb[0].mxu0
        %668 = vdwg.mxu0
        %v685 = vunpack.c.l.b16 %v532
        %v686 = vunpack.c.l.b16 %v533
        %v687 = vunpack.c.l.b16 %v534
        %v688 = vunpack.c.l.b16 %v535
        %v689 = vunpack.c.l.b16 %v536
        %v690 = vunpack.c.l.b16 %v537
        %v691 = vunpack.c.l.b16 %v538
        %v692 = vunpack.c.l.b16 %v539
        %v693 = vunpack.c.l.b16 %v540
        %v694 = vunpack.c.l.b16 %v541
        %v695 = vunpack.c.l.b16 %v542
        %v696 = vunpack.c.l.b16 %v543
        %v697 = vunpack.c.l.b16 %v544
        %v698 = vunpack.c.l.b16 %v545
        %v699 = vunpack.c.l.b16 %v546
        %v700 = vunpack.c.l.b16 %v547
        %v701 = vpack.c.b16 %v686, %v685
        %v702 = vpack.c.b16 %v688, %v687
        %v703 = vpack.c.b16 %v690, %v689
        %v704 = vpack.c.b16 %v692, %v691
        %v705 = vpack.c.b16 %v694, %v693
        %v706 = vpack.c.b16 %v696, %v695
        %v707 = vpack.c.b16 %v698, %v697
        %v708 = vpack.c.b16 %v700, %v699
        %717 = vmatprep.subr.bf16.mxu0 0
        %718 = vmatpush1.bf16.msra.mxu0 %v701
        %719 = vmatprep.subr.bf16.mxu0 0
        %720 = vmatpush1.bf16.msra.mxu0 %v702
        %721 = vmatprep.subr.bf16.mxu0 0
        %722 = vmatpush1.bf16.msra.mxu0 %v703
        %723 = vmatprep.subr.bf16.mxu0 0
        %724 = vmatpush1.bf16.msra.mxu0 %v704
        %725 = vmatprep.subr.bf16.mxu0 0
        %726 = vmatpush1.bf16.msra.mxu0 %v705
        %727 = vmatprep.subr.bf16.mxu0 0
        %728 = vmatpush1.bf16.msra.mxu0 %v706
        %729 = vmatprep.subr.bf16.mxu0 0
        %730 = vmatpush1.bf16.msra.mxu0 %v707
        %731 = vmatprep.subr.bf16.mxu0 0
        %732 = vmatpush1.bf16.msra.mxu0 %v708
        %733 = vmatprep.subr.bf16.mxu0 0
        %734 = vmatpush1.bf16.msra.mxu0 0
        %735 = vmatprep.subr.bf16.mxu0 0
        %736 = vmatpush1.bf16.msra.mxu0 0
        %737 = vmatprep.subr.bf16.mxu0 0
        %738 = vmatpush1.bf16.msra.mxu0 0
        %739 = vmatprep.subr.bf16.mxu0 0
        %740 = vmatpush1.bf16.msra.mxu0 0
        %741 = vmatprep.subr.bf16.mxu0 0
        %742 = vmatpush1.bf16.msra.mxu0 0
        %743 = vmatprep.subr.bf16.mxu0 0
        %744 = vmatpush1.bf16.msra.mxu0 0
        %745 = vmatprep.subr.bf16.mxu0 0
        %746 = vmatpush1.bf16.msra.mxu0 0
        %747 = vmatprep.subr.bf16.mxu0 0
        %748 = vmatpush1.bf16.msra.mxu0 0
        %749 = vmatprep.mubr.bf16.mxu0 0
        %750 = vmatmul.mubr.bf16.gmra.mrb[0].mxu0 %v530
        %v751 = vpop.f32.mrb[0].mxu0
        %v752 = vadd.f32 %v655, %v751
        %v753 = vpop.f32.mrb[0].mxu0
        %v754 = vpop.f32.mrb[0].mxu0
        %v755 = vadd.f32 %v658, %v754
        %v756 = vpop.f32.mrb[0].mxu0
        %757 = vmatprep.mubr.bf16.mxu0 0
        %758 = vmatmul.mubr.bf16.gmra.mrb[0].mxu0 %v531
        %v759 = vpop.f32.mrb[0].mxu0
        %v760 = vadd.f32 %v663, %v759
        %v761 = vpop.f32.mrb[0].mxu0
        %v762 = vpop.f32.mrb[0].mxu0
        %v763 = vadd.f32 %v666, %v762
        %v764 = vpop.f32.mrb[0].mxu0
        %765 = vdwg.mxu0
        %s766 = sadd.s32 %s525, 32
        %s767 = sshra.s32 %s766, 4
        %s768 = sand.u32 %s766, 15
        %s769 = smul.addr %s767, 8
        %s770 = scalar_lea.vmem [#allocation2], %s769
        %v771 = vld [vmem:[%s770] sm:$0xff]
        %v772 = vld [vmem:[%s770 + $0x8] sm:$0xff]
        %s773 = scalar_lea.vmem %s3, 128
        %v774 = vld [vmem:[%s773] sm:$0xf]
        %v775 = vld [vmem:[%s773 + $0x4] sm:$0xf]
        %v776 = vld [vmem:[%s773 + $0x8] sm:$0xf]
        %v777 = vld [vmem:[%s773 + $0xc] sm:$0xf]
        %v778 = vld [vmem:[%s773 + $0x10] sm:$0xf]
        %v779 = vld [vmem:[%s773 + $0x14] sm:$0xf]
        %v780 = vld [vmem:[%s773 + $0x18] sm:$0xf]
        %v781 = vld [vmem:[%s773 + $0x1c] sm:$0xf]
        %v782 = vld [vmem:[%s773 + $0x20] sm:$0xf]
        %v783 = vld [vmem:[%s773 + $0x24] sm:$0xf]
        %v784 = vld [vmem:[%s773 + $0x28] sm:$0xf]
        %v785 = vld [vmem:[%s773 + $0x2c] sm:$0xf]
        %v786 = vld [vmem:[%s773 + $0x30] sm:$0xf]
        %v787 = vld [vmem:[%s773 + $0x34] sm:$0xf]
        %v788 = vld [vmem:[%s773 + $0x38] sm:$0xf]
        %v789 = vld [vmem:[%s773 + $0x3c] sm:$0xf]
        %v806 = vunpack.c.l.b16 %v774
        %v807 = vunpack.c.l.b16 %v775
        %v808 = vunpack.c.l.b16 %v776
        %v809 = vunpack.c.l.b16 %v777
        %v810 = vunpack.c.l.b16 %v778
        %v811 = vunpack.c.l.b16 %v779
        %v812 = vunpack.c.l.b16 %v780
        %v813 = vunpack.c.l.b16 %v781
        %v814 = vunpack.c.l.b16 %v782
        %v815 = vunpack.c.l.b16 %v783
        %v816 = vunpack.c.l.b16 %v784
        %v817 = vunpack.c.l.b16 %v785
        %v818 = vunpack.c.l.b16 %v786
        %v819 = vunpack.c.l.b16 %v787
        %v820 = vunpack.c.l.b16 %v788
        %v821 = vunpack.c.l.b16 %v789
        %v822 = vpack.c.b16 %v807, %v806
        %v823 = vpack.c.b16 %v809, %v808
        %v824 = vpack.c.b16 %v811, %v810
        %v825 = vpack.c.b16 %v813, %v812
        %v826 = vpack.c.b16 %v815, %v814
        %v827 = vpack.c.b16 %v817, %v816
        %v828 = vpack.c.b16 %v819, %v818
        %v829 = vpack.c.b16 %v821, %v820
        %838 = vmatprep.subr.bf16.mxu0 0
        %839 = vmatpush1.bf16.msra.mxu0 %v822
        %840 = vmatprep.subr.bf16.mxu0 0
        %841 = vmatpush1.bf16.msra.mxu0 %v823
        %842 = vmatprep.subr.bf16.mxu0 0
        %843 = vmatpush1.bf16.msra.mxu0 %v824
        %844 = vmatprep.subr.bf16.mxu0 0
        %845 = vmatpush1.bf16.msra.mxu0 %v825
        %846 = vmatprep.subr.bf16.mxu0 0
        %847 = vmatpush1.bf16.msra.mxu0 %v826
        %848 = vmatprep.subr.bf16.mxu0 0
        %849 = vmatpush1.bf16.msra.mxu0 %v827
        %850 = vmatprep.subr.bf16.mxu0 0
        %851 = vmatpush1.bf16.msra.mxu0 %v828
        %852 = vmatprep.subr.bf16.mxu0 0
        %853 = vmatpush1.bf16.msra.mxu0 %v829
        %854 = vmatprep.subr.bf16.mxu0 0
        %855 = vmatpush1.bf16.msra.mxu0 0
        %856 = vmatprep.subr.bf16.mxu0 0
        %857 = vmatpush1.bf16.msra.mxu0 0
        %858 = vmatprep.subr.bf16.mxu0 0
        %859 = vmatpush1.bf16.msra.mxu0 0
        %860 = vmatprep.subr.bf16.mxu0 0
        %861 = vmatpush1.bf16.msra.mxu0 0
        %862 = vmatprep.subr.bf16.mxu0 0
        %863 = vmatpush1.bf16.msra.mxu0 0
        %864 = vmatprep.subr.bf16.mxu0 0
        %865 = vmatpush1.bf16.msra.mxu0 0
        %866 = vmatprep.subr.bf16.mxu0 0
        %867 = vmatpush1.bf16.msra.mxu0 0
        %868 = vmatprep.subr.bf16.mxu0 0
        %869 = vmatpush1.bf16.msra.mxu0 0
        %870 = vmatprep.mubr.bf16.mxu0 0
        %871 = vmatmul.mubr.bf16.gmra.mrb[0].mxu0 %v771
        %v872 = vpop.f32.mrb[0].mxu0
        %v873 = vadd.f32 0.0, %v872
        %v874 = vpop.f32.mrb[0].mxu0
        %v875 = vpop.f32.mrb[0].mxu0
        %v876 = vadd.f32 0.0, %v875
        %v877 = vpop.f32.mrb[0].mxu0
        %878 = vmatprep.mubr.bf16.mxu0 0
        %879 = vmatmul.mubr.bf16.gmra.mrb[0].mxu0 %v772
        %v880 = vpop.f32.mrb[0].mxu0
        %v881 = vadd.f32 0.0, %v880
        %v882 = vpop.f32.mrb[0].mxu0
        %v883 = vpop.f32.mrb[0].mxu0
        %v884 = vadd.f32 0.0, %v883
        %v885 = vpop.f32.mrb[0].mxu0
        %886 = vdwg.mxu0
        %v887 = vadd.f32 %v752, %v873
        %v888 = vadd.f32 %v755, %v876
        %v889 = vadd.f32 %v760, %v881
        %v890 = vadd.f32 %v763, %v884
        %v891 = vmax.f32 %v887, %v889
        %v892 = vmax.f32 %v888, %v890
        %895 = vrot.lane.b32.xlu0 %v891, 64
        %v896 = vpop.permute.xlu0 %895
        %897 = vrot.lane.b32.xlu0 %v892, 64
        %v898 = vpop.permute.xlu0 %897
        %v901 = vmax.f32 %v891, %v896
        %v902 = vmax.f32 %v892, %v898
        %v904 = vlaneseq
        %v905 = vshrl.u32 %v904, 7
        %v906 = vsub.s32 0, %v905
        %v907 = vrot.slane %v227, %v906
        %v909 = vadd.f32 %v901, %v907
        %v910 = vadd.f32 %v902, %v907
        %v911 = vmax.f32 %v909, 0.0
        %v912 = vmax.f32 %v910, 0.0
        %s913 = smul.u32 %s520, 16
        %v914 = vpack.c.bf16 %v912, %v911
        %v916 = vunpack.c.l.b16 %v914
        %v917 = vunpack.c.h.b16 %v914
        %v918 = vpack.c.b16 %v916, %v916
        %v919 = vpack.c.b16 %v917, %v917
        %s922 = sshra.s32 %s913, 3
        %s923 = sand.u32 %s913, 7
        %s924 = smul.addr %s922, 4
        %s925 = scalar_lea.vmem %s224, %s924
        %vm926 = vcmask 519168
        %927 = vst.msk [vmem:[%s925] sm:$0xf] %vm926, %v918
        %928 = vst.msk [vmem:[%s925 + $0x4] sm:$0xf] %vm926, %v919
      $region52: #{cnn_forward.2} parent=39 // loop_footer
        %s524 = sadd.s32 1, %s520
      $region53: #{cnn_forward.2} parent=39 // loop_footer_branch
        %519 = sbr.rel target = $region49
      $region54: #{cnn_forward.2} parent=39 // loop_exit
        _
      %p929 = scmp.lt.s32.totalorder %s16, 1
      %s930 = scalar_select %p929, %s16, 1
      %s931 = smul.addr %s930, 28
      %s932 = smul.addr %s931, 4
      %s933 = scalar_lea.vmem %s5, %s932
      // Predicated region
      $region55: #{cnn_forward.2} parent=39 // pred_check
        %p934 = pneg %p144
      $region56: #{cnn_forward.2} parent=39 // pred_check_branch
        %936 = sbr.rel (%p934) target = $region58
      $region57: #{cnn_forward.2} parent=39 // pred_region
        _
      $region58: #{cnn_forward.2} parent=39 // pred_fallthru
        _
    $region40: #{cnn_forward.2} parent=5 // pred_fallthru
      _
    %p937 = scmp.le.s32.totalorder 2, %s11
    // Predicated region
    $region59: #{cnn_forward.2} parent=5 // pred_check
      %p938 = pneg %p937
    $region60: #{cnn_forward.2} parent=5 // pred_check_branch
      %940 = sbr.rel (%p938) target = $region62
    $region61: #{cnn_forward.2} parent=5 // pred_region
      %s941 = ssub.s32 %s11, 2
      // Predicated region
      $region63: #{cnn_forward.2} parent=61 // pred_check
        %p942 = pneg %p150
      $region64: #{cnn_forward.2} parent=61 // pred_check_branch
        %944 = sbr.rel (%p942) target = $region66
      $region65: #{cnn_forward.2} parent=61 // pred_region
        %p945 = scmp.lt.s32.totalorder %s17, 1
        %s946 = scalar_select %p945, %s17, 1
        %s947 = smul.addr %s946, 28
        %s948 = smul.addr %s947, 4
        %s949 = scalar_lea.vmem %s5, %s948
      $region66: #{cnn_forward.2} parent=61 // pred_fallthru
        _
    $region62: #{cnn_forward.2} parent=5 // pred_fallthru
      _
  $region6: #{cnn_forward.2} parent=0 // loop_footer
    %s15 = sadd.s32 1, %s11
  $region7: #{cnn_forward.2} parent=0 // loop_footer_branch
    %10 = sbr.rel target = $region3
  $region8: #{cnn_forward.2} parent=0 // loop_exit
    _

// kernel: cnn_forward.3
$region0: #{cnn_forward.3}
  #allocation0 [shape = 'u32[]', space=smem, size = 0x4, offset = 0x4, fixed_abs, tag = 'smem constant byte address 0x4 - core index']
  #allocation1 [shape = 'u32[144,128]{1,0:T(1,128)}', space=vmem, size = 0x12000, scoped, tag = 'internal scratch']
  %s0 = inlined_call_operand.vmem [shape: bf16[8,14336], index: 0, kind: input, shape index: {}]
  %s1 = inlined_call_operand.vmem [shape: bf16[14336,128], index: 1, kind: input, shape index: {}]
  %s2 = inlined_call_operand.vmem [shape: f32[1,128], index: 2, kind: input, shape index: {}]
  %s3 = inlined_call_operand.vmem [shape: f32[128,128], index: 3, kind: input, shape index: {}]
  %s4 = inlined_call_operand.vmem [shape: f32[1,128], index: 4, kind: input, shape index: {}]
  %s5 = inlined_call_operand.vmem [shape: f32[8,128], index: 5, kind: output, shape index: {}]
  %s6 = sld [smem:[#allocation0]]
  $region30: #{cnn_forward.3} parent=0
    _
  %s8 = ssub.s32 1, %s6
  %s9 = scalar_select 0, %s8, %s6
  // Predicated region
  $region2: #{cnn_forward.3} parent=0 // pred_check
    _
  $region3: #{cnn_forward.3} parent=0 // pred_check_branch
    %11 = sbr.rel (0) target = $region5
  $region4: #{cnn_forward.3} parent=0 // pred_region
    _
  $region5: #{cnn_forward.3} parent=0 // pred_fallthru
    _
  // Predicated region
  $region6: #{cnn_forward.3} parent=0 // pred_check
    _
  $region7: #{cnn_forward.3} parent=0 // pred_check_branch
    %13 = sbr.rel (0) target = $region9
  $region8: #{cnn_forward.3} parent=0 // pred_region
    _
  $region9: #{cnn_forward.3} parent=0 // pred_fallthru
    _
  // Predicated region
  $region10: #{cnn_forward.3} parent=0 // pred_check
    _
  $region11: #{cnn_forward.3} parent=0 // pred_check_branch
    %15 = sbr.rel (0) target = $region13
  $region12: #{cnn_forward.3} parent=0 // pred_region
    _
  $region13: #{cnn_forward.3} parent=0 // pred_fallthru
    _
  // Predicated region
  $region14: #{cnn_forward.3} parent=0 // pred_check
    _
  $region15: #{cnn_forward.3} parent=0 // pred_check_branch
    %17 = sbr.rel (0) target = $region17
  $region16: #{cnn_forward.3} parent=0 // pred_region
    _
  $region17: #{cnn_forward.3} parent=0 // pred_fallthru
    _
  // Predicated region
  $region18: #{cnn_forward.3} parent=0 // pred_check
    _
  $region19: #{cnn_forward.3} parent=0 // pred_check_branch
    %19 = sbr.rel (0) target = $region21
  $region20: #{cnn_forward.3} parent=0 // pred_region
    _
  $region21: #{cnn_forward.3} parent=0 // pred_fallthru
    _
  %v21 = vld [vmem:[%s0] sm:$0xff]
  %v22 = vld [vmem:[%s0 + $0x8] sm:$0xff]
  %v23 = vld [vmem:[%s0 + $0x10] sm:$0xff]
  %v24 = vld [vmem:[%s0 + $0x18] sm:$0xff]
  %v25 = vld [vmem:[%s0 + $0x20] sm:$0xff]
  %v26 = vld [vmem:[%s0 + $0x28] sm:$0xff]
  %v27 = vld [vmem:[%s0 + $0x30] sm:$0xff]
  %v28 = vld [vmem:[%s0 + $0x38] sm:$0xff]
  %v29 = vld [vmem:[%s0 + $0x40] sm:$0xff]
  %v30 = vld [vmem:[%s0 + $0x48] sm:$0xff]
  %v31 = vld [vmem:[%s0 + $0x50] sm:$0xff]
  %v32 = vld [vmem:[%s0 + $0x58] sm:$0xff]
  %v33 = vld [vmem:[%s0 + $0x60] sm:$0xff]
  %v34 = vld [vmem:[%s0 + $0x68] sm:$0xff]
  %v35 = vld [vmem:[%s0 + $0x70] sm:$0xff]
  %v36 = vld [vmem:[%s0 + $0x78] sm:$0xff]
  %v37 = vld [vmem:[%s0 + $0x80] sm:$0xff]
  %v38 = vld [vmem:[%s0 + $0x88] sm:$0xff]
  %v39 = vld [vmem:[%s0 + $0x90] sm:$0xff]
  %v40 = vld [vmem:[%s0 + $0x98] sm:$0xff]
  %v41 = vld [vmem:[%s0 + $0xa0] sm:$0xff]
  %v42 = vld [vmem:[%s0 + $0xa8] sm:$0xff]
  %v43 = vld [vmem:[%s0 + $0xb0] sm:$0xff]
  %v44 = vld [vmem:[%s0 + $0xb8] sm:$0xff]
  %v45 = vld [vmem:[%s0 + $0xc0] sm:$0xff]
  %v46 = vld [vmem:[%s0 + $0xc8] sm:$0xff]
  %v47 = vld [vmem:[%s0 + $0xd0] sm:$0xff]
  %v48 = vld [vmem:[%s0 + $0xd8] sm:$0xff]
  %v49 = vld [vmem:[%s0 + $0xe0] sm:$0xff]
  %v50 = vld [vmem:[%s0 + $0xe8] sm:$0xff]
  %v51 = vld [vmem:[%s0 + $0xf0] sm:$0xff]
  %v52 = vld [vmem:[%s0 + $0xf8] sm:$0xff]
  %v53 = vld [vmem:[%s0 + $0x100] sm:$0xff]
  %v54 = vld [vmem:[%s0 + $0x108] sm:$0xff]
  %v55 = vld [vmem:[%s0 + $0x110] sm:$0xff]
  %v56 = vld [vmem:[%s0 + $0x118] sm:$0xff]
  %v57 = vld [vmem:[%s0 + $0x120] sm:$0xff]
  %v58 = vld [vmem:[%s0 + $0x128] sm:$0xff]
  %v59 = vld [vmem:[%s0 + $0x130] sm:$0xff]
  %v60 = vld [vmem:[%s0 + $0x138] sm:$0xff]
  %v61 = vld [vmem:[%s0 + $0x140] sm:$0xff]
  %v62 = vld [vmem:[%s0 + $0x148] sm:$0xff]
  %v63 = vld [vmem:[%s0 + $0x150] sm:$0xff]
  %v64 = vld [vmem:[%s0 + $0x158] sm:$0xff]
  %v65 = vld [vmem:[%s0 + $0x160] sm:$0xff]
  %v66 = vld [vmem:[%s0 + $0x168] sm:$0xff]
  %v67 = vld [vmem:[%s0 + $0x170] sm:$0xff]
  %v68 = vld [vmem:[%s0 + $0x178] sm:$0xff]
  %v69 = vld [vmem:[%s0 + $0x180] sm:$0xff]
  %v70 = vld [vmem:[%s0 + $0x188] sm:$0xff]
  %v71 = vld [vmem:[%s0 + $0x190] sm:$0xff]
  %v72 = vld [vmem:[%s0 + $0x198] sm:$0xff]
  %v73 = vld [vmem:[%s0 + $0x1a0] sm:$0xff]
  %v74 = vld [vmem:[%s0 + $0x1a8] sm:$0xff]
  %v75 = vld [vmem:[%s0 + $0x1b0] sm:$0xff]
  %v76 = vld [vmem:[%s0 + $0x1b8] sm:$0xff]
  %v77 = vld [vmem:[%s1] sm:$0xf]
  %v78 = vld [vmem:[%s1 + $0x4] sm:$0xf]
  %v79 = vld [vmem:[%s1 + $0x8] sm:$0xf]
  %v80 = vld [vmem:[%s1 + $0xc] sm:$0xf]
  %v81 = vld [vmem:[%s1 + $0x10] sm:$0xf]
  %v82 = vld [vmem:[%s1 + $0x14] sm:$0xf]
  %v83 = vld [vmem:[%s1 + $0x18] sm:$0xf]
  %v84 = vld [vmem:[%s1 + $0x1c] sm:$0xf]
  %v85 = vld [vmem:[%s1 + $0x20] sm:$0xf]
  %v86 = vld [vmem:[%s1 + $0x24] sm:$0xf]
  %v87 = vld [vmem:[%s1 + $0x28] sm:$0xf]
  %v88 = vld [vmem:[%s1 + $0x2c] sm:$0xf]
  %v89 = vld [vmem:[%s1 + $0x30] sm:$0xf]
  %v90 = vld [vmem:[%s1 + $0x34] sm:$0xf]
  %v91 = vld [vmem:[%s1 + $0x38] sm:$0xf]
  %v92 = vld [vmem:[%s1 + $0x3c] sm:$0xf]
  %v93 = vld [vmem:[%s1 + $0x40] sm:$0xf]
  %v94 = vld [vmem:[%s1 + $0x44] sm:$0xf]
  %v95 = vld [vmem:[%s1 + $0x48] sm:$0xf]
  %v96 = vld [vmem:[%s1 + $0x4c] sm:$0xf]
  %v97 = vld [vmem:[%s1 + $0x50] sm:$0xf]
  %v98 = vld [vmem:[%s1 + $0x54] sm:$0xf]
  %v99 = vld [vmem:[%s1 + $0x58] sm:$0xf]
  %v100 = vld [vmem:[%s1 + $0x5c] sm:$0xf]
  %v101 = vld [vmem:[%s1 + $0x60] sm:$0xf]
  %v102 = vld [vmem:[%s1 + $0x64] sm:$0xf]
  %v103 = vld [vmem:[%s1 + $0x68] sm:$0xf]
  %v104 = vld [vmem:[%s1 + $0x6c] sm:$0xf]
  %v105 = vld [vmem:[%s1 + $0x70] sm:$0xf]
  %v106 = vld [vmem:[%s1 + $0x74] sm:$0xf]
  %v107 = vld [vmem:[%s1 + $0x78] sm:$0xf]
  %v108 = vld [vmem:[%s1 + $0x7c] sm:$0xf]
  %v109 = vld [vmem:[%s1 + $0x80] sm:$0xf]
  %v110 = vld [vmem:[%s1 + $0x84] sm:$0xf]
  %v111 = vld [vmem:[%s1 + $0x88] sm:$0xf]
  %v112 = vld [vmem:[%s1 + $0x8c] sm:$0xf]
  %v113 = vld [vmem:[%s1 + $0x90] sm:$0xf]
  %v114 = vld [vmem:[%s1 + $0x94] sm:$0xf]
  %v115 = vld [vmem:[%s1 + $0x98] sm:$0xf]
  %v116 = vld [vmem:[%s1 + $0x9c] sm:$0xf]
  %v117 = vld [vmem:[%s1 + $0xa0] sm:$0xf]
  %v118 = vld [vmem:[%s1 + $0xa4] sm:$0xf]
  %v119 = vld [vmem:[%s1 + $0xa8] sm:$0xf]
  %v120 = vld [vmem:[%s1 + $0xac] sm:$0xf]
  %v121 = vld [vmem:[%s1 + $0xb0] sm:$0xf]
  %v122 = vld [vmem:[%s1 + $0xb4] sm:$0xf]
  %v123 = vld [vmem:[%s1 + $0xb8] sm:$0xf]
  %v124 = vld [vmem:[%s1 + $0xbc] sm:$0xf]
  %v125 = vld [vmem:[%s1 + $0xc0] sm:$0xf]
  %v126 = vld [vmem:[%s1 + $0xc4] sm:$0xf]
  %v127 = vld [vmem:[%s1 + $0xc8] sm:$0xf]
  %v128 = vld [vmem:[%s1 + $0xcc] sm:$0xf]
  %v129 = vld [vmem:[%s1 + $0xd0] sm:$0xf]
  %v130 = vld [vmem:[%s1 + $0xd4] sm:$0xf]
  %v131 = vld [vmem:[%s1 + $0xd8] sm:$0xf]
  %v132 = vld [vmem:[%s1 + $0xdc] sm:$0xf]
  %v133 = vld [vmem:[%s1 + $0xe0] sm:$0xf]
  %v134 = vld [vmem:[%s1 + $0xe4] sm:$0xf]
  %v135 = vld [vmem:[%s1 + $0xe8] sm:$0xf]
  %v136 = vld [vmem:[%s1 + $0xec] sm:$0xf]
  %v137 = vld [vmem:[%s1 + $0xf0] sm:$0xf]
  %v138 = vld [vmem:[%s1 + $0xf4] sm:$0xf]
  %v139 = vld [vmem:[%s1 + $0xf8] sm:$0xf]
  %v140 = vld [vmem:[%s1 + $0xfc] sm:$0xf]
  %v141 = vld [vmem:[%s1 + $0x100] sm:$0xf]
  %v142 = vld [vmem:[%s1 + $0x104] sm:$0xf]
  %v143 = vld [vmem:[%s1 + $0x108] sm:$0xf]
  %v144 = vld [vmem:[%s1 + $0x10c] sm:$0xf]
  %v145 = vld [vmem:[%s1 + $0x110] sm:$0xf]
  %v146 = vld [vmem:[%s1 + $0x114] sm:$0xf]
  %v147 = vld [vmem:[%s1 + $0x118] sm:$0xf]
  %v148 = vld [vmem:[%s1 + $0x11c] sm:$0xf]
  %v149 = vld [vmem:[%s1 + $0x120] sm:$0xf]
  %v150 = vld [vmem:[%s1 + $0x124] sm:$0xf]
  %v151 = vld [vmem:[%s1 + $0x128] sm:$0xf]
  %v152 = vld [vmem:[%s1 + $0x12c] sm:$0xf]
  %v153 = vld [vmem:[%s1 + $0x130] sm:$0xf]
  %v154 = vld [vmem:[%s1 + $0x134] sm:$0xf]
  %v155 = vld [vmem:[%s1 + $0x138] sm:$0xf]
  %v156 = vld [vmem:[%s1 + $0x13c] sm:$0xf]
  %v157 = vld [vmem:[%s1 + $0x140] sm:$0xf]
  %v158 = vld [vmem:[%s1 + $0x144] sm:$0xf]
  %v159 = vld [vmem:[%s1 + $0x148] sm:$0xf]
  %v160 = vld [vmem:[%s1 + $0x14c] sm:$0xf]
  %v161 = vld [vmem:[%s1 + $0x150] sm:$0xf]
  %v162 = vld [vmem:[%s1 + $0x154] sm:$0xf]
  %v163 = vld [vmem:[%s1 + $0x158] sm:$0xf]
  %v164 = vld [vmem:[%s1 + $0x15c] sm:$0xf]
  %v165 = vld [vmem:[%s1 + $0x160] sm:$0xf]
  %v166 = vld [vmem:[%s1 + $0x164] sm:$0xf]
  %v167 = vld [vmem:[%s1 + $0x168] sm:$0xf]
  %v168 = vld [vmem:[%s1 + $0x16c] sm:$0xf]
  %v169 = vld [vmem:[%s1 + $0x170] sm:$0xf]
  %v170 = vld [vmem:[%s1 + $0x174] sm:$0xf]
  %v171 = vld [vmem:[%s1 + $0x178] sm:$0xf]
  %v172 = vld [vmem:[%s1 + $0x17c] sm:$0xf]
  %v173 = vld [vmem:[%s1 + $0x180] sm:$0xf]
  %v174 = vld [vmem:[%s1 + $0x184] sm:$0xf]
  %v175 = vld [vmem:[%s1 + $0x188] sm:$0xf]
  %v176 = vld [vmem:[%s1 + $0x18c] sm:$0xf]
  %v177 = vld [vmem:[%s1 + $0x190] sm:$0xf]
  %v178 = vld [vmem:[%s1 + $0x194] sm:$0xf]
  %v179 = vld [vmem:[%s1 + $0x198] sm:$0xf]
  %v180 = vld [vmem:[%s1 + $0x19c] sm:$0xf]
  %v181 = vld [vmem:[%s1 + $0x1a0] sm:$0xf]
  %v182 = vld [vmem:[%s1 + $0x1a4] sm:$0xf]
  %v183 = vld [vmem:[%s1 + $0x1a8] sm:$0xf]
  %v184 = vld [vmem:[%s1 + $0x1ac] sm:$0xf]
  %v185 = vld [vmem:[%s1 + $0x1b0] sm:$0xf]
  %v186 = vld [vmem:[%s1 + $0x1b4] sm:$0xf]
  %v187 = vld [vmem:[%s1 + $0x1b8] sm:$0xf]
  %v188 = vld [vmem:[%s1 + $0x1bc] sm:$0xf]
  %v189 = vld [vmem:[%s1 + $0x1c0] sm:$0xf]
  %v190 = vld [vmem:[%s1 + $0x1c4] sm:$0xf]
  %v191 = vld [vmem:[%s1 + $0x1c8] sm:$0xf]
  %v192 = vld [vmem:[%s1 + $0x1cc] sm:$0xf]
  %v193 = vld [vmem:[%s1 + $0x1d0] sm:$0xf]
  %v194 = vld [vmem:[%s1 + $0x1d4] sm:$0xf]
  %v195 = vld [vmem:[%s1 + $0x1d8] sm:$0xf]
  %v196 = vld [vmem:[%s1 + $0x1dc] sm:$0xf]
  %v197 = vld [vmem:[%s1 + $0x1e0] sm:$0xf]
  %v198 = vld [vmem:[%s1 + $0x1e4] sm:$0xf]
  %v199 = vld [vmem:[%s1 + $0x1e8] sm:$0xf]
  %v200 = vld [vmem:[%s1 + $0x1ec] sm:$0xf]
  %v201 = vld [vmem:[%s1 + $0x1f0] sm:$0xf]
  %v202 = vld [vmem:[%s1 + $0x1f4] sm:$0xf]
  %v203 = vld [vmem:[%s1 + $0x1f8] sm:$0xf]
  %v204 = vld [vmem:[%s1 + $0x1fc] sm:$0xf]
  %v205 = vld [vmem:[%s1 + $0x200] sm:$0xf]
  %v206 = vld [vmem:[%s1 + $0x204] sm:$0xf]
  %v207 = vld [vmem:[%s1 + $0x208] sm:$0xf]
  %v208 = vld [vmem:[%s1 + $0x20c] sm:$0xf]
  %v209 = vld [vmem:[%s1 + $0x210] sm:$0xf]
  %v210 = vld [vmem:[%s1 + $0x214] sm:$0xf]
  %v211 = vld [vmem:[%s1 + $0x218] sm:$0xf]
  %v212 = vld [vmem:[%s1 + $0x21c] sm:$0xf]
  %v213 = vld [vmem:[%s1 + $0x220] sm:$0xf]
  %v214 = vld [vmem:[%s1 + $0x224] sm:$0xf]
  %v215 = vld [vmem:[%s1 + $0x228] sm:$0xf]
  %v216 = vld [vmem:[%s1 + $0x22c] sm:$0xf]
  %v217 = vld [vmem:[%s1 + $0x230] sm:$0xf]
  %v218 = vld [vmem:[%s1 + $0x234] sm:$0xf]
  %v219 = vld [vmem:[%s1 + $0x238] sm:$0xf]
  %v220 = vld [vmem:[%s1 + $0x23c] sm:$0xf]
  %v221 = vld [vmem:[%s1 + $0x240] sm:$0xf]
  %v222 = vld [vmem:[%s1 + $0x244] sm:$0xf]
  %v223 = vld [vmem:[%s1 + $0x248] sm:$0xf]
  %v224 = vld [vmem:[%s1 + $0x24c] sm:$0xf]
  %v225 = vld [vmem:[%s1 + $0x250] sm:$0xf]
  %v226 = vld [vmem:[%s1 + $0x254] sm:$0xf]
  %v227 = vld [vmem:[%s1 + $0x258] sm:$0xf]
  %v228 = vld [vmem:[%s1 + $0x25c] sm:$0xf]
  %v229 = vld [vmem:[%s1 + $0x260] sm:$0xf]
  %v230 = vld [vmem:[%s1 + $0x264] sm:$0xf]
  %v231 = vld [vmem:[%s1 + $0x268] sm:$0xf]
  %v232 = vld [vmem:[%s1 + $0x26c] sm:$0xf]
  %v233 = vld [vmem:[%s1 + $0x270] sm:$0xf]
  %v234 = vld [vmem:[%s1 + $0x274] sm:$0xf]
  %v235 = vld [vmem:[%s1 + $0x278] sm:$0xf]
  %v236 = vld [vmem:[%s1 + $0x27c] sm:$0xf]
  %v237 = vld [vmem:[%s1 + $0x280] sm:$0xf]
  %v238 = vld [vmem:[%s1 + $0x284] sm:$0xf]
  %v239 = vld [vmem:[%s1 + $0x288] sm:$0xf]
  %v240 = vld [vmem:[%s1 + $0x28c] sm:$0xf]
  %v241 = vld [vmem:[%s1 + $0x290] sm:$0xf]
  %v242 = vld [vmem:[%s1 + $0x294] sm:$0xf]
  %v243 = vld [vmem:[%s1 + $0x298] sm:$0xf]
  %v244 = vld [vmem:[%s1 + $0x29c] sm:$0xf]
  %v245 = vld [vmem:[%s1 + $0x2a0] sm:$0xf]
  %v246 = vld [vmem:[%s1 + $0x2a4] sm:$0xf]
  %v247 = vld [vmem:[%s1 + $0x2a8] sm:$0xf]
  %v248 = vld [vmem:[%s1 + $0x2ac] sm:$0xf]
  %v249 = vld [vmem:[%s1 + $0x2b0] sm:$0xf]
  %v250 = vld [vmem:[%s1 + $0x2b4] sm:$0xf]
  %v251 = vld [vmem:[%s1 + $0x2b8] sm:$0xf]
  %v252 = vld [vmem:[%s1 + $0x2bc] sm:$0xf]
  %v253 = vld [vmem:[%s1 + $0x2c0] sm:$0xf]
  %v254 = vld [vmem:[%s1 + $0x2c4] sm:$0xf]
  %v255 = vld [vmem:[%s1 + $0x2c8] sm:$0xf]
  %v256 = vld [vmem:[%s1 + $0x2cc] sm:$0xf]
  %v257 = vld [vmem:[%s1 + $0x2d0] sm:$0xf]
  %v258 = vld [vmem:[%s1 + $0x2d4] sm:$0xf]
  %v259 = vld [vmem:[%s1 + $0x2d8] sm:$0xf]
  %v260 = vld [vmem:[%s1 + $0x2dc] sm:$0xf]
  %v261 = vld [vmem:[%s1 + $0x2e0] sm:$0xf]
  %v262 = vld [vmem:[%s1 + $0x2e4] sm:$0xf]
  %v263 = vld [vmem:[%s1 + $0x2e8] sm:$0xf]
  %v264 = vld [vmem:[%s1 + $0x2ec] sm:$0xf]
  %v265 = vld [vmem:[%s1 + $0x2f0] sm:$0xf]
  %v266 = vld [vmem:[%s1 + $0x2f4] sm:$0xf]
  %v267 = vld [vmem:[%s1 + $0x2f8] sm:$0xf]
  %v268 = vld [vmem:[%s1 + $0x2fc] sm:$0xf]
  %v269 = vld [vmem:[%s1 + $0x300] sm:$0xf]
  %v270 = vld [vmem:[%s1 + $0x304] sm:$0xf]
  %v271 = vld [vmem:[%s1 + $0x308] sm:$0xf]
  %v272 = vld [vmem:[%s1 + $0x30c] sm:$0xf]
  %v273 = vld [vmem:[%s1 + $0x310] sm:$0xf]
  %v274 = vld [vmem:[%s1 + $0x314] sm:$0xf]
  %v275 = vld [vmem:[%s1 + $0x318] sm:$0xf]
  %v276 = vld [vmem:[%s1 + $0x31c] sm:$0xf]
  %v277 = vld [vmem:[%s1 + $0x320] sm:$0xf]
  %v278 = vld [vmem:[%s1 + $0x324] sm:$0xf]
  %v279 = vld [vmem:[%s1 + $0x328] sm:$0xf]
  %v280 = vld [vmem:[%s1 + $0x32c] sm:$0xf]
  %v281 = vld [vmem:[%s1 + $0x330] sm:$0xf]
  %v282 = vld [vmem:[%s1 + $0x334] sm:$0xf]
  %v283 = vld [vmem:[%s1 + $0x338] sm:$0xf]
  %v284 = vld [vmem:[%s1 + $0x33c] sm:$0xf]
  %v285 = vld [vmem:[%s1 + $0x340] sm:$0xf]
  %v286 = vld [vmem:[%s1 + $0x344] sm:$0xf]
  %v287 = vld [vmem:[%s1 + $0x348] sm:$0xf]
  %v288 = vld [vmem:[%s1 + $0x34c] sm:$0xf]
  %v289 = vld [vmem:[%s1 + $0x350] sm:$0xf]
  %v290 = vld [vmem:[%s1 + $0x354] sm:$0xf]
  %v291 = vld [vmem:[%s1 + $0x358] sm:$0xf]
  %v292 = vld [vmem:[%s1 + $0x35c] sm:$0xf]
  %v293 = vld [vmem:[%s1 + $0x360] sm:$0xf]
  %v294 = vld [vmem:[%s1 + $0x364] sm:$0xf]
  %v295 = vld [vmem:[%s1 + $0x368] sm:$0xf]
  %v296 = vld [vmem:[%s1 + $0x36c] sm:$0xf]
  %v297 = vld [vmem:[%s1 + $0x370] sm:$0xf]
  %v298 = vld [vmem:[%s1 + $0x374] sm:$0xf]
  %v299 = vld [vmem:[%s1 + $0x378] sm:$0xf]
  %v300 = vld [vmem:[%s1 + $0x37c] sm:$0xf]
  %v301 = vld [vmem:[%s1 + $0x380] sm:$0xf]
  %v302 = vld [vmem:[%s1 + $0x384] sm:$0xf]
  %v303 = vld [vmem:[%s1 + $0x388] sm:$0xf]
  %v304 = vld [vmem:[%s1 + $0x38c] sm:$0xf]
  %v305 = vld [vmem:[%s1 + $0x390] sm:$0xf]
  %v306 = vld [vmem:[%s1 + $0x394] sm:$0xf]
  %v307 = vld [vmem:[%s1 + $0x398] sm:$0xf]
  %v308 = vld [vmem:[%s1 + $0x39c] sm:$0xf]
  %v309 = vld [vmem:[%s1 + $0x3a0] sm:$0xf]
  %v310 = vld [vmem:[%s1 + $0x3a4] sm:$0xf]
  %v311 = vld [vmem:[%s1 + $0x3a8] sm:$0xf]
  %v312 = vld [vmem:[%s1 + $0x3ac] sm:$0xf]
  %v313 = vld [vmem:[%s1 + $0x3b0] sm:$0xf]
  %v314 = vld [vmem:[%s1 + $0x3b4] sm:$0xf]
  %v315 = vld [vmem:[%s1 + $0x3b8] sm:$0xf]
  %v316 = vld [vmem:[%s1 + $0x3bc] sm:$0xf]
  %v317 = vld [vmem:[%s1 + $0x3c0] sm:$0xf]
  %v318 = vld [vmem:[%s1 + $0x3c4] sm:$0xf]
  %v319 = vld [vmem:[%s1 + $0x3c8] sm:$0xf]
  %v320 = vld [vmem:[%s1 + $0x3cc] sm:$0xf]
  %v321 = vld [vmem:[%s1 + $0x3d0] sm:$0xf]
  %v322 = vld [vmem:[%s1 + $0x3d4] sm:$0xf]
  %v323 = vld [vmem:[%s1 + $0x3d8] sm:$0xf]
  %v324 = vld [vmem:[%s1 + $0x3dc] sm:$0xf]
  %v325 = vld [vmem:[%s1 + $0x3e0] sm:$0xf]
  %v326 = vld [vmem:[%s1 + $0x3e4] sm:$0xf]
  %v327 = vld [vmem:[%s1 + $0x3e8] sm:$0xf]
  %v328 = vld [vmem:[%s1 + $0x3ec] sm:$0xf]
  %v329 = vld [vmem:[%s1 + $0x3f0] sm:$0xf]
  %v330 = vld [vmem:[%s1 + $0x3f4] sm:$0xf]
  %v331 = vld [vmem:[%s1 + $0x3f8] sm:$0xf]
  %v332 = vld [vmem:[%s1 + $0x3fc] sm:$0xf]
  %v333 = vld [vmem:[%s1 + $0x400] sm:$0xf]
  %v334 = vld [vmem:[%s1 + $0x404] sm:$0xf]
  %v335 = vld [vmem:[%s1 + $0x408] sm:$0xf]
  %v336 = vld [vmem:[%s1 + $0x40c] sm:$0xf]
  %v337 = vld [vmem:[%s1 + $0x410] sm:$0xf]
  %v338 = vld [vmem:[%s1 + $0x414] sm:$0xf]
  %v339 = vld [vmem:[%s1 + $0x418] sm:$0xf]
  %v340 = vld [vmem:[%s1 + $0x41c] sm:$0xf]
  %v341 = vld [vmem:[%s1 + $0x420] sm:$0xf]
  %v342 = vld [vmem:[%s1 + $0x424] sm:$0xf]
  %v343 = vld [vmem:[%s1 + $0x428] sm:$0xf]
  %v344 = vld [vmem:[%s1 + $0x42c] sm:$0xf]
  %v345 = vld [vmem:[%s1 + $0x430] sm:$0xf]
  %v346 = vld [vmem:[%s1 + $0x434] sm:$0xf]
  %v347 = vld [vmem:[%s1 + $0x438] sm:$0xf]
  %v348 = vld [vmem:[%s1 + $0x43c] sm:$0xf]
  %v349 = vld [vmem:[%s1 + $0x440] sm:$0xf]
  %v350 = vld [vmem:[%s1 + $0x444] sm:$0xf]
  %v351 = vld [vmem:[%s1 + $0x448] sm:$0xf]
  %v352 = vld [vmem:[%s1 + $0x44c] sm:$0xf]
  %v353 = vld [vmem:[%s1 + $0x450] sm:$0xf]
  %v354 = vld [vmem:[%s1 + $0x454] sm:$0xf]
  %v355 = vld [vmem:[%s1 + $0x458] sm:$0xf]
  %v356 = vld [vmem:[%s1 + $0x45c] sm:$0xf]
  %v357 = vld [vmem:[%s1 + $0x460] sm:$0xf]
  %v358 = vld [vmem:[%s1 + $0x464] sm:$0xf]
  %v359 = vld [vmem:[%s1 + $0x468] sm:$0xf]
  %v360 = vld [vmem:[%s1 + $0x46c] sm:$0xf]
  %v361 = vld [vmem:[%s1 + $0x470] sm:$0xf]
  %v362 = vld [vmem:[%s1 + $0x474] sm:$0xf]
  %v363 = vld [vmem:[%s1 + $0x478] sm:$0xf]
  %v364 = vld [vmem:[%s1 + $0x47c] sm:$0xf]
  %v365 = vld [vmem:[%s1 + $0x480] sm:$0xf]
  %v366 = vld [vmem:[%s1 + $0x484] sm:$0xf]
  %v367 = vld [vmem:[%s1 + $0x488] sm:$0xf]
  %v368 = vld [vmem:[%s1 + $0x48c] sm:$0xf]
  %v369 = vld [vmem:[%s1 + $0x490] sm:$0xf]
  %v370 = vld [vmem:[%s1 + $0x494] sm:$0xf]
  %v371 = vld [vmem:[%s1 + $0x498] sm:$0xf]
  %v372 = vld [vmem:[%s1 + $0x49c] sm:$0xf]
  %v373 = vld [vmem:[%s1 + $0x4a0] sm:$0xf]
  %v374 = vld [vmem:[%s1 + $0x4a4] sm:$0xf]
  %v375 = vld [vmem:[%s1 + $0x4a8] sm:$0xf]
  %v376 = vld [vmem:[%s1 + $0x4ac] sm:$0xf]
  %v377 = vld [vmem:[%s1 + $0x4b0] sm:$0xf]
  %v378 = vld [vmem:[%s1 + $0x4b4] sm:$0xf]
  %v379 = vld [vmem:[%s1 + $0x4b8] sm:$0xf]
  %v380 = vld [vmem:[%s1 + $0x4bc] sm:$0xf]
  %v381 = vld [vmem:[%s1 + $0x4c0] sm:$0xf]
  %v382 = vld [vmem:[%s1 + $0x4c4] sm:$0xf]
  %v383 = vld [vmem:[%s1 + $0x4c8] sm:$0xf]
  %v384 = vld [vmem:[%s1 + $0x4cc] sm:$0xf]
  %v385 = vld [vmem:[%s1 + $0x4d0] sm:$0xf]
  %v386 = vld [vmem:[%s1 + $0x4d4] sm:$0xf]
  %v387 = vld [vmem:[%s1 + $0x4d8] sm:$0xf]
  %v388 = vld [vmem:[%s1 + $0x4dc] sm:$0xf]
  %v389 = vld [vmem:[%s1 + $0x4e0] sm:$0xf]
  %v390 = vld [vmem:[%s1 + $0x4e4] sm:$0xf]
  %v391 = vld [vmem:[%s1 + $0x4e8] sm:$0xf]
  %v392 = vld [vmem:[%s1 + $0x4ec] sm:$0xf]
  %v393 = vld [vmem:[%s1 + $0x4f0] sm:$0xf]
  %v394 = vld [vmem:[%s1 + $0x4f4] sm:$0xf]
  %v395 = vld [vmem:[%s1 + $0x4f8] sm:$0xf]
  %v396 = vld [vmem:[%s1 + $0x4fc] sm:$0xf]
  %v397 = vld [vmem:[%s1 + $0x500] sm:$0xf]
  %v398 = vld [vmem:[%s1 + $0x504] sm:$0xf]
  %v399 = vld [vmem:[%s1 + $0x508] sm:$0xf]
  %v400 = vld [vmem:[%s1 + $0x50c] sm:$0xf]
  %v401 = vld [vmem:[%s1 + $0x510] sm:$0xf]
  %v402 = vld [vmem:[%s1 + $0x514] sm:$0xf]
  %v403 = vld [vmem:[%s1 + $0x518] sm:$0xf]
  %v404 = vld [vmem:[%s1 + $0x51c] sm:$0xf]
  %v405 = vld [vmem:[%s1 + $0x520] sm:$0xf]
  %v406 = vld [vmem:[%s1 + $0x524] sm:$0xf]
  %v407 = vld [vmem:[%s1 + $0x528] sm:$0xf]
  %v408 = vld [vmem:[%s1 + $0x52c] sm:$0xf]
  %v409 = vld [vmem:[%s1 + $0x530] sm:$0xf]
  %v410 = vld [vmem:[%s1 + $0x534] sm:$0xf]
  %v411 = vld [vmem:[%s1 + $0x538] sm:$0xf]
  %v412 = vld [vmem:[%s1 + $0x53c] sm:$0xf]
  %v413 = vld [vmem:[%s1 + $0x540] sm:$0xf]
  %v414 = vld [vmem:[%s1 + $0x544] sm:$0xf]
  %v415 = vld [vmem:[%s1 + $0x548] sm:$0xf]
  %v416 = vld [vmem:[%s1 + $0x54c] sm:$0xf]
  %v417 = vld [vmem:[%s1 + $0x550] sm:$0xf]
  %v418 = vld [vmem:[%s1 + $0x554] sm:$0xf]
  %v419 = vld [vmem:[%s1 + $0x558] sm:$0xf]
  %v420 = vld [vmem:[%s1 + $0x55c] sm:$0xf]
  %v421 = vld [vmem:[%s1 + $0x560] sm:$0xf]
  %v422 = vld [vmem:[%s1 + $0x564] sm:$0xf]
  %v423 = vld [vmem:[%s1 + $0x568] sm:$0xf]
  %v424 = vld [vmem:[%s1 + $0x56c] sm:$0xf]
  %v425 = vld [vmem:[%s1 + $0x570] sm:$0xf]
  %v426 = vld [vmem:[%s1 + $0x574] sm:$0xf]
  %v427 = vld [vmem:[%s1 + $0x578] sm:$0xf]
  %v428 = vld [vmem:[%s1 + $0x57c] sm:$0xf]
  %v429 = vld [vmem:[%s1 + $0x580] sm:$0xf]
  %v430 = vld [vmem:[%s1 + $0x584] sm:$0xf]
  %v431 = vld [vmem:[%s1 + $0x588] sm:$0xf]
  %v432 = vld [vmem:[%s1 + $0x58c] sm:$0xf]
  %v433 = vld [vmem:[%s1 + $0x590] sm:$0xf]
  %v434 = vld [vmem:[%s1 + $0x594] sm:$0xf]
  %v435 = vld [vmem:[%s1 + $0x598] sm:$0xf]
  %v436 = vld [vmem:[%s1 + $0x59c] sm:$0xf]
  %v437 = vld [vmem:[%s1 + $0x5a0] sm:$0xf]
  %v438 = vld [vmem:[%s1 + $0x5a4] sm:$0xf]
  %v439 = vld [vmem:[%s1 + $0x5a8] sm:$0xf]
  %v440 = vld [vmem:[%s1 + $0x5ac] sm:$0xf]
  %v441 = vld [vmem:[%s1 + $0x5b0] sm:$0xf]
  %v442 = vld [vmem:[%s1 + $0x5b4] sm:$0xf]
  %v443 = vld [vmem:[%s1 + $0x5b8] sm:$0xf]
  %v444 = vld [vmem:[%s1 + $0x5bc] sm:$0xf]
  %v445 = vld [vmem:[%s1 + $0x5c0] sm:$0xf]
  %v446 = vld [vmem:[%s1 + $0x5c4] sm:$0xf]
  %v447 = vld [vmem:[%s1 + $0x5c8] sm:$0xf]
  %v448 = vld [vmem:[%s1 + $0x5cc] sm:$0xf]
  %v449 = vld [vmem:[%s1 + $0x5d0] sm:$0xf]
  %v450 = vld [vmem:[%s1 + $0x5d4] sm:$0xf]
  %v451 = vld [vmem:[%s1 + $0x5d8] sm:$0xf]
  %v452 = vld [vmem:[%s1 + $0x5dc] sm:$0xf]
  %v453 = vld [vmem:[%s1 + $0x5e0] sm:$0xf]
  %v454 = vld [vmem:[%s1 + $0x5e4] sm:$0xf]
  %v455 = vld [vmem:[%s1 + $0x5e8] sm:$0xf]
  %v456 = vld [vmem:[%s1 + $0x5ec] sm:$0xf]
  %v457 = vld [vmem:[%s1 + $0x5f0] sm:$0xf]
  %v458 = vld [vmem:[%s1 + $0x5f4] sm:$0xf]
  %v459 = vld [vmem:[%s1 + $0x5f8] sm:$0xf]
  %v460 = vld [vmem:[%s1 + $0x5fc] sm:$0xf]
  %v461 = vld [vmem:[%s1 + $0x600] sm:$0xf]
  %v462 = vld [vmem:[%s1 + $0x604] sm:$0xf]
  %v463 = vld [vmem:[%s1 + $0x608] sm:$0xf]
  %v464 = vld [vmem:[%s1 + $0x60c] sm:$0xf]
  %v465 = vld [vmem:[%s1 + $0x610] sm:$0xf]
  %v466 = vld [vmem:[%s1 + $0x614] sm:$0xf]
  %v467 = vld [vmem:[%s1 + $0x618] sm:$0xf]
  %v468 = vld [vmem:[%s1 + $0x61c] sm:$0xf]
  %v469 = vld [vmem:[%s1 + $0x620] sm:$0xf]
  %v470 = vld [vmem:[%s1 + $0x624] sm:$0xf]
  %v471 = vld [vmem:[%s1 + $0x628] sm:$0xf]
  %v472 = vld [vmem:[%s1 + $0x62c] sm:$0xf]
  %v473 = vld [vmem:[%s1 + $0x630] sm:$0xf]
  %v474 = vld [vmem:[%s1 + $0x634] sm:$0xf]
  %v475 = vld [vmem:[%s1 + $0x638] sm:$0xf]
  %v476 = vld [vmem:[%s1 + $0x63c] sm:$0xf]
  %v477 = vld [vmem:[%s1 + $0x640] sm:$0xf]
  %v478 = vld [vmem:[%s1 + $0x644] sm:$0xf]
  %v479 = vld [vmem:[%s1 + $0x648] sm:$0xf]
  %v480 = vld [vmem:[%s1 + $0x64c] sm:$0xf]
  %v481 = vld [vmem:[%s1 + $0x650] sm:$0xf]
  %v482 = vld [vmem:[%s1 + $0x654] sm:$0xf]
  %v483 = vld [vmem:[%s1 + $0x658] sm:$0xf]
  %v484 = vld [vmem:[%s1 + $0x65c] sm:$0xf]
  %v485 = vld [vmem:[%s1 + $0x660] sm:$0xf]
  %v486 = vld [vmem:[%s1 + $0x664] sm:$0xf]
  %v487 = vld [vmem:[%s1 + $0x668] sm:$0xf]
  %v488 = vld [vmem:[%s1 + $0x66c] sm:$0xf]
  %v489 = vld [vmem:[%s1 + $0x670] sm:$0xf]
  %v490 = vld [vmem:[%s1 + $0x674] sm:$0xf]
  %v491 = vld [vmem:[%s1 + $0x678] sm:$0xf]
  %v492 = vld [vmem:[%s1 + $0x67c] sm:$0xf]
  %v493 = vld [vmem:[%s1 + $0x680] sm:$0xf]
  %v494 = vld [vmem:[%s1 + $0x684] sm:$0xf]
  %v495 = vld [vmem:[%s1 + $0x688] sm:$0xf]
  %v496 = vld [vmem:[%s1 + $0x68c] sm:$0xf]
  %v497 = vld [vmem:[%s1 + $0x690] sm:$0xf]
  %v498 = vld [vmem:[%s1 + $0x694] sm:$0xf]
  %v499 = vld [vmem:[%s1 + $0x698] sm:$0xf]
  %v500 = vld [vmem:[%s1 + $0x69c] sm:$0xf]
  %v501 = vld [vmem:[%s1 + $0x6a0] sm:$0xf]
  %v502 = vld [vmem:[%s1 + $0x6a4] sm:$0xf]
  %v503 = vld [vmem:[%s1 + $0x6a8] sm:$0xf]
  %v504 = vld [vmem:[%s1 + $0x6ac] sm:$0xf]
  %v505 = vld [vmem:[%s1 + $0x6b0] sm:$0xf]
  %v506 = vld [vmem:[%s1 + $0x6b4] sm:$0xf]
  %v507 = vld [vmem:[%s1 + $0x6b8] sm:$0xf]
  %v508 = vld [vmem:[%s1 + $0x6bc] sm:$0xf]
  %v509 = vld [vmem:[%s1 + $0x6c0] sm:$0xf]
  %v510 = vld [vmem:[%s1 + $0x6c4] sm:$0xf]
  %v511 = vld [vmem:[%s1 + $0x6c8] sm:$0xf]
  %v512 = vld [vmem:[%s1 + $0x6cc] sm:$0xf]
  %v513 = vld [vmem:[%s1 + $0x6d0] sm:$0xf]
  %v514 = vld [vmem:[%s1 + $0x6d4] sm:$0xf]
  %v515 = vld [vmem:[%s1 + $0x6d8] sm:$0xf]
  %v516 = vld [vmem:[%s1 + $0x6dc] sm:$0xf]
  %v517 = vld [vmem:[%s1 + $0x6e0] sm:$0xf]
  %v518 = vld [vmem:[%s1 + $0x6e4] sm:$0xf]
  %v519 = vld [vmem:[%s1 + $0x6e8] sm:$0xf]
  %v520 = vld [vmem:[%s1 + $0x6ec] sm:$0xf]
  %v521 = vld [vmem:[%s1 + $0x6f0] sm:$0xf]
  %v522 = vld [vmem:[%s1 + $0x6f4] sm:$0xf]
  %v523 = vld [vmem:[%s1 + $0x6f8] sm:$0xf]
  %v524 = vld [vmem:[%s1 + $0x6fc] sm:$0xf]
  %v525 = vld [vmem:[%s1 + $0x700] sm:$0xf]
  %v526 = vld [vmem:[%s1 + $0x704] sm:$0xf]
  %v527 = vld [vmem:[%s1 + $0x708] sm:$0xf]
  %v528 = vld [vmem:[%s1 + $0x70c] sm:$0xf]
  %v529 = vld [vmem:[%s1 + $0x710] sm:$0xf]
  %v530 = vld [vmem:[%s1 + $0x714] sm:$0xf]
  %v531 = vld [vmem:[%s1 + $0x718] sm:$0xf]
  %v532 = vld [vmem:[%s1 + $0x71c] sm:$0xf]
  %v533 = vld [vmem:[%s1 + $0x720] sm:$0xf]
  %v534 = vld [vmem:[%s1 + $0x724] sm:$0xf]
  %v535 = vld [vmem:[%s1 + $0x728] sm:$0xf]
  %v536 = vld [vmem:[%s1 + $0x72c] sm:$0xf]
  %v537 = vld [vmem:[%s1 + $0x730] sm:$0xf]
  %v538 = vld [vmem:[%s1 + $0x734] sm:$0xf]
  %v539 = vld [vmem:[%s1 + $0x738] sm:$0xf]
  %v540 = vld [vmem:[%s1 + $0x73c] sm:$0xf]
  %v541 = vld [vmem:[%s1 + $0x740] sm:$0xf]
  %v542 = vld [vmem:[%s1 + $0x744] sm:$0xf]
  %v543 = vld [vmem:[%s1 + $0x748] sm:$0xf]
  %v544 = vld [vmem:[%s1 + $0x74c] sm:$0xf]
  %v545 = vld [vmem:[%s1 + $0x750] sm:$0xf]
  %v546 = vld [vmem:[%s1 + $0x754] sm:$0xf]
  %v547 = vld [vmem:[%s1 + $0x758] sm:$0xf]
  %v548 = vld [vmem:[%s1 + $0x75c] sm:$0xf]
  %v549 = vld [vmem:[%s1 + $0x760] sm:$0xf]
  %v550 = vld [vmem:[%s1 + $0x764] sm:$0xf]
  %v551 = vld [vmem:[%s1 + $0x768] sm:$0xf]
  %v552 = vld [vmem:[%s1 + $0x76c] sm:$0xf]
  %v553 = vld [vmem:[%s1 + $0x770] sm:$0xf]
  %v554 = vld [vmem:[%s1 + $0x774] sm:$0xf]
  %v555 = vld [vmem:[%s1 + $0x778] sm:$0xf]
  %v556 = vld [vmem:[%s1 + $0x77c] sm:$0xf]
  %v557 = vld [vmem:[%s1 + $0x780] sm:$0xf]
  %v558 = vld [vmem:[%s1 + $0x784] sm:$0xf]
  %v559 = vld [vmem:[%s1 + $0x788] sm:$0xf]
  %v560 = vld [vmem:[%s1 + $0x78c] sm:$0xf]
  %v561 = vld [vmem:[%s1 + $0x790] sm:$0xf]
  %v562 = vld [vmem:[%s1 + $0x794] sm:$0xf]
  %v563 = vld [vmem:[%s1 + $0x798] sm:$0xf]
  %v564 = vld [vmem:[%s1 + $0x79c] sm:$0xf]
  %v565 = vld [vmem:[%s1 + $0x7a0] sm:$0xf]
  %v566 = vld [vmem:[%s1 + $0x7a4] sm:$0xf]
  %v567 = vld [vmem:[%s1 + $0x7a8] sm:$0xf]
  %v568 = vld [vmem:[%s1 + $0x7ac] sm:$0xf]
  %v569 = vld [vmem:[%s1 + $0x7b0] sm:$0xf]
  %v570 = vld [vmem:[%s1 + $0x7b4] sm:$0xf]
  %v571 = vld [vmem:[%s1 + $0x7b8] sm:$0xf]
  %v572 = vld [vmem:[%s1 + $0x7bc] sm:$0xf]
  %v573 = vld [vmem:[%s1 + $0x7c0] sm:$0xf]
  %v574 = vld [vmem:[%s1 + $0x7c4] sm:$0xf]
  %v575 = vld [vmem:[%s1 + $0x7c8] sm:$0xf]
  %v576 = vld [vmem:[%s1 + $0x7cc] sm:$0xf]
  %v577 = vld [vmem:[%s1 + $0x7d0] sm:$0xf]
  %v578 = vld [vmem:[%s1 + $0x7d4] sm:$0xf]
  %v579 = vld [vmem:[%s1 + $0x7d8] sm:$0xf]
  %v580 = vld [vmem:[%s1 + $0x7dc] sm:$0xf]
  %v581 = vld [vmem:[%s1 + $0x7e0] sm:$0xf]
  %v582 = vld [vmem:[%s1 + $0x7e4] sm:$0xf]
  %v583 = vld [vmem:[%s1 + $0x7e8] sm:$0xf]
  %v584 = vld [vmem:[%s1 + $0x7ec] sm:$0xf]
  %v585 = vld [vmem:[%s1 + $0x7f0] sm:$0xf]
  %v586 = vld [vmem:[%s1 + $0x7f4] sm:$0xf]
  %v587 = vld [vmem:[%s1 + $0x7f8] sm:$0xf]
  %v588 = vld [vmem:[%s1 + $0x7fc] sm:$0xf]
  %v589 = vld [vmem:[%s1 + $0x800] sm:$0xf]
  %v590 = vld [vmem:[%s1 + $0x804] sm:$0xf]
  %v591 = vld [vmem:[%s1 + $0x808] sm:$0xf]
  %v592 = vld [vmem:[%s1 + $0x80c] sm:$0xf]
  %v593 = vld [vmem:[%s1 + $0x810] sm:$0xf]
  %v594 = vld [vmem:[%s1 + $0x814] sm:$0xf]
  %v595 = vld [vmem:[%s1 + $0x818] sm:$0xf]
  %v596 = vld [vmem:[%s1 + $0x81c] sm:$0xf]
  %v597 = vld [vmem:[%s1 + $0x820] sm:$0xf]
  %v598 = vld [vmem:[%s1 + $0x824] sm:$0xf]
  %v599 = vld [vmem:[%s1 + $0x828] sm:$0xf]
  %v600 = vld [vmem:[%s1 + $0x82c] sm:$0xf]
  %v601 = vld [vmem:[%s1 + $0x830] sm:$0xf]
  %v602 = vld [vmem:[%s1 + $0x834] sm:$0xf]
  %v603 = vld [vmem:[%s1 + $0x838] sm:$0xf]
  %v604 = vld [vmem:[%s1 + $0x83c] sm:$0xf]
  %v605 = vld [vmem:[%s1 + $0x840] sm:$0xf]
  %v606 = vld [vmem:[%s1 + $0x844] sm:$0xf]
  %v607 = vld [vmem:[%s1 + $0x848] sm:$0xf]
  %v608 = vld [vmem:[%s1 + $0x84c] sm:$0xf]
  %v609 = vld [vmem:[%s1 + $0x850] sm:$0xf]
  %v610 = vld [vmem:[%s1 + $0x854] sm:$0xf]
  %v611 = vld [vmem:[%s1 + $0x858] sm:$0xf]
  %v612 = vld [vmem:[%s1 + $0x85c] sm:$0xf]
  %v613 = vld [vmem:[%s1 + $0x860] sm:$0xf]
  %v614 = vld [vmem:[%s1 + $0x864] sm:$0xf]
  %v615 = vld [vmem:[%s1 + $0x868] sm:$0xf]
  %v616 = vld [vmem:[%s1 + $0x86c] sm:$0xf]
  %v617 = vld [vmem:[%s1 + $0x870] sm:$0xf]
  %v618 = vld [vmem:[%s1 + $0x874] sm:$0xf]
  %v619 = vld [vmem:[%s1 + $0x878] sm:$0xf]
  %v620 = vld [vmem:[%s1 + $0x87c] sm:$0xf]
  %v621 = vld [vmem:[%s1 + $0x880] sm:$0xf]
  %v622 = vld [vmem:[%s1 + $0x884] sm:$0xf]
  %v623 = vld [vmem:[%s1 + $0x888] sm:$0xf]
  %v624 = vld [vmem:[%s1 + $0x88c] sm:$0xf]
  %v625 = vld [vmem:[%s1 + $0x890] sm:$0xf]
  %v626 = vld [vmem:[%s1 + $0x894] sm:$0xf]
  %v627 = vld [vmem:[%s1 + $0x898] sm:$0xf]
  %v628 = vld [vmem:[%s1 + $0x89c] sm:$0xf]
  %v629 = vld [vmem:[%s1 + $0x8a0] sm:$0xf]
  %v630 = vld [vmem:[%s1 + $0x8a4] sm:$0xf]
  %v631 = vld [vmem:[%s1 + $0x8a8] sm:$0xf]
  %v632 = vld [vmem:[%s1 + $0x8ac] sm:$0xf]
  %v633 = vld [vmem:[%s1 + $0x8b0] sm:$0xf]
  %v634 = vld [vmem:[%s1 + $0x8b4] sm:$0xf]
  %v635 = vld [vmem:[%s1 + $0x8b8] sm:$0xf]
  %v636 = vld [vmem:[%s1 + $0x8bc] sm:$0xf]
  %v637 = vld [vmem:[%s1 + $0x8c0] sm:$0xf]
  %v638 = vld [vmem:[%s1 + $0x8c4] sm:$0xf]
  %v639 = vld [vmem:[%s1 + $0x8c8] sm:$0xf]
  %v640 = vld [vmem:[%s1 + $0x8cc] sm:$0xf]
  %v641 = vld [vmem:[%s1 + $0x8d0] sm:$0xf]
  %v642 = vld [vmem:[%s1 + $0x8d4] sm:$0xf]
  %v643 = vld [vmem:[%s1 + $0x8d8] sm:$0xf]
  %v644 = vld [vmem:[%s1 + $0x8dc] sm:$0xf]
  %v645 = vld [vmem:[%s1 + $0x8e0] sm:$0xf]
  %v646 = vld [vmem:[%s1 + $0x8e4] sm:$0xf]
  %v647 = vld [vmem:[%s1 + $0x8e8] sm:$0xf]
  %v648 = vld [vmem:[%s1 + $0x8ec] sm:$0xf]
  %v649 = vld [vmem:[%s1 + $0x8f0] sm:$0xf]
  %v650 = vld [vmem:[%s1 + $0x8f4] sm:$0xf]
  %v651 = vld [vmem:[%s1 + $0x8f8] sm:$0xf]
  %v652 = vld [vmem:[%s1 + $0x8fc] sm:$0xf]
  %v653 = vld [vmem:[%s1 + $0x900] sm:$0xf]
  %v654 = vld [vmem:[%s1 + $0x904] sm:$0xf]
  %v655 = vld [vmem:[%s1 + $0x908] sm:$0xf]
  %v656 = vld [vmem:[%s1 + $0x90c] sm:$0xf]
  %v657 = vld [vmem:[%s1 + $0x910] sm:$0xf]
  %v658 = vld [vmem:[%s1 + $0x914] sm:$0xf]
  %v659 = vld [vmem:[%s1 + $0x918] sm:$0xf]
  %v660 = vld [vmem:[%s1 + $0x91c] sm:$0xf]
  %v661 = vld [vmem:[%s1 + $0x920] sm:$0xf]
  %v662 = vld [vmem:[%s1 + $0x924] sm:$0xf]
  %v663 = vld [vmem:[%s1 + $0x928] sm:$0xf]
  %v664 = vld [vmem:[%s1 + $0x92c] sm:$0xf]
  %v665 = vld [vmem:[%s1 + $0x930] sm:$0xf]
  %v666 = vld [vmem:[%s1 + $0x934] sm:$0xf]
  %v667 = vld [vmem:[%s1 + $0x938] sm:$0xf]
  %v668 = vld [vmem:[%s1 + $0x93c] sm:$0xf]
  %v669 = vld [vmem:[%s1 + $0x940] sm:$0xf]
  %v670 = vld [vmem:[%s1 + $0x944] sm:$0xf]
  %v671 = vld [vmem:[%s1 + $0x948] sm:$0xf]
  %v672 = vld [vmem:[%s1 + $0x94c] sm:$0xf]
  %v673 = vld [vmem:[%s1 + $0x950] sm:$0xf]
  %v674 = vld [vmem:[%s1 + $0x954] sm:$0xf]
  %v675 = vld [vmem:[%s1 + $0x958] sm:$0xf]
  %v676 = vld [vmem:[%s1 + $0x95c] sm:$0xf]
  %v677 = vld [vmem:[%s1 + $0x960] sm:$0xf]
  %v678 = vld [vmem:[%s1 + $0x964] sm:$0xf]
  %v679 = vld [vmem:[%s1 + $0x968] sm:$0xf]
  %v680 = vld [vmem:[%s1 + $0x96c] sm:$0xf]
  %v681 = vld [vmem:[%s1 + $0x970] sm:$0xf]
  %v682 = vld [vmem:[%s1 + $0x974] sm:$0xf]
  %v683 = vld [vmem:[%s1 + $0x978] sm:$0xf]
  %v684 = vld [vmem:[%s1 + $0x97c] sm:$0xf]
  %v685 = vld [vmem:[%s1 + $0x980] sm:$0xf]
  %v686 = vld [vmem:[%s1 + $0x984] sm:$0xf]
  %v687 = vld [vmem:[%s1 + $0x988] sm:$0xf]
  %v688 = vld [vmem:[%s1 + $0x98c] sm:$0xf]
  %v689 = vld [vmem:[%s1 + $0x990] sm:$0xf]
  %v690 = vld [vmem:[%s1 + $0x994] sm:$0xf]
  %v691 = vld [vmem:[%s1 + $0x998] sm:$0xf]
  %v692 = vld [vmem:[%s1 + $0x99c] sm:$0xf]
  %v693 = vld [vmem:[%s1 + $0x9a0] sm:$0xf]
  %v694 = vld [vmem:[%s1 + $0x9a4] sm:$0xf]
  %v695 = vld [vmem:[%s1 + $0x9a8] sm:$0xf]
  %v696 = vld [vmem:[%s1 + $0x9ac] sm:$0xf]
  %v697 = vld [vmem:[%s1 + $0x9b0] sm:$0xf]
  %v698 = vld [vmem:[%s1 + $0x9b4] sm:$0xf]
  %v699 = vld [vmem:[%s1 + $0x9b8] sm:$0xf]
  %v700 = vld [vmem:[%s1 + $0x9bc] sm:$0xf]
  %v701 = vld [vmem:[%s1 + $0x9c0] sm:$0xf]
  %v702 = vld [vmem:[%s1 + $0x9c4] sm:$0xf]
  %v703 = vld [vmem:[%s1 + $0x9c8] sm:$0xf]
  %v704 = vld [vmem:[%s1 + $0x9cc] sm:$0xf]
  %v705 = vld [vmem:[%s1 + $0x9d0] sm:$0xf]
  %v706 = vld [vmem:[%s1 + $0x9d4] sm:$0xf]
  %v707 = vld [vmem:[%s1 + $0x9d8] sm:$0xf]
  %v708 = vld [vmem:[%s1 + $0x9dc] sm:$0xf]
  %v709 = vld [vmem:[%s1 + $0x9e0] sm:$0xf]
  %v710 = vld [vmem:[%s1 + $0x9e4] sm:$0xf]
  %v711 = vld [vmem:[%s1 + $0x9e8] sm:$0xf]
  %v712 = vld [vmem:[%s1 + $0x9ec] sm:$0xf]
  %v713 = vld [vmem:[%s1 + $0x9f0] sm:$0xf]
  %v714 = vld [vmem:[%s1 + $0x9f4] sm:$0xf]
  %v715 = vld [vmem:[%s1 + $0x9f8] sm:$0xf]
  %v716 = vld [vmem:[%s1 + $0x9fc] sm:$0xf]
  %v717 = vld [vmem:[%s1 + $0xa00] sm:$0xf]
  %v718 = vld [vmem:[%s1 + $0xa04] sm:$0xf]
  %v719 = vld [vmem:[%s1 + $0xa08] sm:$0xf]
  %v720 = vld [vmem:[%s1 + $0xa0c] sm:$0xf]
  %v721 = vld [vmem:[%s1 + $0xa10] sm:$0xf]
  %v722 = vld [vmem:[%s1 + $0xa14] sm:$0xf]
  %v723 = vld [vmem:[%s1 + $0xa18] sm:$0xf]
  %v724 = vld [vmem:[%s1 + $0xa1c] sm:$0xf]
  %v725 = vld [vmem:[%s1 + $0xa20] sm:$0xf]
  %v726 = vld [vmem:[%s1 + $0xa24] sm:$0xf]
  %v727 = vld [vmem:[%s1 + $0xa28] sm:$0xf]
  %v728 = vld [vmem:[%s1 + $0xa2c] sm:$0xf]
  %v729 = vld [vmem:[%s1 + $0xa30] sm:$0xf]
  %v730 = vld [vmem:[%s1 + $0xa34] sm:$0xf]
  %v731 = vld [vmem:[%s1 + $0xa38] sm:$0xf]
  %v732 = vld [vmem:[%s1 + $0xa3c] sm:$0xf]
  %v733 = vld [vmem:[%s1 + $0xa40] sm:$0xf]
  %v734 = vld [vmem:[%s1 + $0xa44] sm:$0xf]
  %v735 = vld [vmem:[%s1 + $0xa48] sm:$0xf]
  %v736 = vld [vmem:[%s1 + $0xa4c] sm:$0xf]
  %v737 = vld [vmem:[%s1 + $0xa50] sm:$0xf]
  %v738 = vld [vmem:[%s1 + $0xa54] sm:$0xf]
  %v739 = vld [vmem:[%s1 + $0xa58] sm:$0xf]
  %v740 = vld [vmem:[%s1 + $0xa5c] sm:$0xf]
  %v741 = vld [vmem:[%s1 + $0xa60] sm:$0xf]
  %v742 = vld [vmem:[%s1 + $0xa64] sm:$0xf]
  %v743 = vld [vmem:[%s1 + $0xa68] sm:$0xf]
  %v744 = vld [vmem:[%s1 + $0xa6c] sm:$0xf]
  %v745 = vld [vmem:[%s1 + $0xa70] sm:$0xf]
  %v746 = vld [vmem:[%s1 + $0xa74] sm:$0xf]
  %v747 = vld [vmem:[%s1 + $0xa78] sm:$0xf]
  %v748 = vld [vmem:[%s1 + $0xa7c] sm:$0xf]
  %v749 = vld [vmem:[%s1 + $0xa80] sm:$0xf]
  %v750 = vld [vmem:[%s1 + $0xa84] sm:$0xf]
  %v751 = vld [vmem:[%s1 + $0xa88] sm:$0xf]
  %v752 = vld [vmem:[%s1 + $0xa8c] sm:$0xf]
  %v753 = vld [vmem:[%s1 + $0xa90] sm:$0xf]
  %v754 = vld [vmem:[%s1 + $0xa94] sm:$0xf]
  %v755 = vld [vmem:[%s1 + $0xa98] sm:$0xf]
  %v756 = vld [vmem:[%s1 + $0xa9c] sm:$0xf]
  %v757 = vld [vmem:[%s1 + $0xaa0] sm:$0xf]
  %v758 = vld [vmem:[%s1 + $0xaa4] sm:$0xf]
  %v759 = vld [vmem:[%s1 + $0xaa8] sm:$0xf]
  %v760 = vld [vmem:[%s1 + $0xaac] sm:$0xf]
  %v761 = vld [vmem:[%s1 + $0xab0] sm:$0xf]
  %v762 = vld [vmem:[%s1 + $0xab4] sm:$0xf]
  %v763 = vld [vmem:[%s1 + $0xab8] sm:$0xf]
  %v764 = vld [vmem:[%s1 + $0xabc] sm:$0xf]
  %v765 = vld [vmem:[%s1 + $0xac0] sm:$0xf]
  %v766 = vld [vmem:[%s1 + $0xac4] sm:$0xf]
  %v767 = vld [vmem:[%s1 + $0xac8] sm:$0xf]
  %v768 = vld [vmem:[%s1 + $0xacc] sm:$0xf]
  %v769 = vld [vmem:[%s1 + $0xad0] sm:$0xf]
  %v770 = vld [vmem:[%s1 + $0xad4] sm:$0xf]
  %v771 = vld [vmem:[%s1 + $0xad8] sm:$0xf]
  %v772 = vld [vmem:[%s1 + $0xadc] sm:$0xf]
  %v773 = vld [vmem:[%s1 + $0xae0] sm:$0xf]
  %v774 = vld [vmem:[%s1 + $0xae4] sm:$0xf]
  %v775 = vld [vmem:[%s1 + $0xae8] sm:$0xf]
  %v776 = vld [vmem:[%s1 + $0xaec] sm:$0xf]
  %v777 = vld [vmem:[%s1 + $0xaf0] sm:$0xf]
  %v778 = vld [vmem:[%s1 + $0xaf4] sm:$0xf]
  %v779 = vld [vmem:[%s1 + $0xaf8] sm:$0xf]
  %v780 = vld [vmem:[%s1 + $0xafc] sm:$0xf]
  %v781 = vld [vmem:[%s1 + $0xb00] sm:$0xf]
  %v782 = vld [vmem:[%s1 + $0xb04] sm:$0xf]
  %v783 = vld [vmem:[%s1 + $0xb08] sm:$0xf]
  %v784 = vld [vmem:[%s1 + $0xb0c] sm:$0xf]
  %v785 = vld [vmem:[%s1 + $0xb10] sm:$0xf]
  %v786 = vld [vmem:[%s1 + $0xb14] sm:$0xf]
  %v787 = vld [vmem:[%s1 + $0xb18] sm:$0xf]
  %v788 = vld [vmem:[%s1 + $0xb1c] sm:$0xf]
  %v789 = vld [vmem:[%s1 + $0xb20] sm:$0xf]
  %v790 = vld [vmem:[%s1 + $0xb24] sm:$0xf]
  %v791 = vld [vmem:[%s1 + $0xb28] sm:$0xf]
  %v792 = vld [vmem:[%s1 + $0xb2c] sm:$0xf]
  %v793 = vld [vmem:[%s1 + $0xb30] sm:$0xf]
  %v794 = vld [vmem:[%s1 + $0xb34] sm:$0xf]
  %v795 = vld [vmem:[%s1 + $0xb38] sm:$0xf]
  %v796 = vld [vmem:[%s1 + $0xb3c] sm:$0xf]
  %v797 = vld [vmem:[%s1 + $0xb40] sm:$0xf]
  %v798 = vld [vmem:[%s1 + $0xb44] sm:$0xf]
  %v799 = vld [vmem:[%s1 + $0xb48] sm:$0xf]
  %v800 = vld [vmem:[%s1 + $0xb4c] sm:$0xf]
  %v801 = vld [vmem:[%s1 + $0xb50] sm:$0xf]
  %v802 = vld [vmem:[%s1 + $0xb54] sm:$0xf]
  %v803 = vld [vmem:[%s1 + $0xb58] sm:$0xf]
  %v804 = vld [vmem:[%s1 + $0xb5c] sm:$0xf]
  %v805 = vld [vmem:[%s1 + $0xb60] sm:$0xf]
  %v806 = vld [vmem:[%s1 + $0xb64] sm:$0xf]
  %v807 = vld [vmem:[%s1 + $0xb68] sm:$0xf]
  %v808 = vld [vmem:[%s1 + $0xb6c] sm:$0xf]
  %v809 = vld [vmem:[%s1 + $0xb70] sm:$0xf]
  %v810 = vld [vmem:[%s1 + $0xb74] sm:$0xf]
  %v811 = vld [vmem:[%s1 + $0xb78] sm:$0xf]
  %v812 = vld [vmem:[%s1 + $0xb7c] sm:$0xf]
  %v813 = vld [vmem:[%s1 + $0xb80] sm:$0xf]
  %v814 = vld [vmem:[%s1 + $0xb84] sm:$0xf]
  %v815 = vld [vmem:[%s1 + $0xb88] sm:$0xf]
  %v816 = vld [vmem:[%s1 + $0xb8c] sm:$0xf]
  %v817 = vld [vmem:[%s1 + $0xb90] sm:$0xf]
  %v818 = vld [vmem:[%s1 + $0xb94] sm:$0xf]
  %v819 = vld [vmem:[%s1 + $0xb98] sm:$0xf]
  %v820 = vld [vmem:[%s1 + $0xb9c] sm:$0xf]
  %v821 = vld [vmem:[%s1 + $0xba0] sm:$0xf]
  %v822 = vld [vmem:[%s1 + $0xba4] sm:$0xf]
  %v823 = vld [vmem:[%s1 + $0xba8] sm:$0xf]
  %v824 = vld [vmem:[%s1 + $0xbac] sm:$0xf]
  %v825 = vld [vmem:[%s1 + $0xbb0] sm:$0xf]
  %v826 = vld [vmem:[%s1 + $0xbb4] sm:$0xf]
  %v827 = vld [vmem:[%s1 + $0xbb8] sm:$0xf]
  %v828 = vld [vmem:[%s1 + $0xbbc] sm:$0xf]
  %v829 = vld [vmem:[%s1 + $0xbc0] sm:$0xf]
  %v830 = vld [vmem:[%s1 + $0xbc4] sm:$0xf]
  %v831 = vld [vmem:[%s1 + $0xbc8] sm:$0xf]
  %v832 = vld [vmem:[%s1 + $0xbcc] sm:$0xf]
  %v833 = vld [vmem:[%s1 + $0xbd0] sm:$0xf]
  %v834 = vld [vmem:[%s1 + $0xbd4] sm:$0xf]
  %v835 = vld [vmem:[%s1 + $0xbd8] sm:$0xf]
  %v836 = vld [vmem:[%s1 + $0xbdc] sm:$0xf]
  %v837 = vld [vmem:[%s1 + $0xbe0] sm:$0xf]
  %v838 = vld [vmem:[%s1 + $0xbe4] sm:$0xf]
  %v839 = vld [vmem:[%s1 + $0xbe8] sm:$0xf]
  %v840 = vld [vmem:[%s1 + $0xbec] sm:$0xf]
  %v841 = vld [vmem:[%s1 + $0xbf0] sm:$0xf]
  %v842 = vld [vmem:[%s1 + $0xbf4] sm:$0xf]
  %v843 = vld [vmem:[%s1 + $0xbf8] sm:$0xf]
  %v844 = vld [vmem:[%s1 + $0xbfc] sm:$0xf]
  %v845 = vld [vmem:[%s1 + $0xc00] sm:$0xf]
  %v846 = vld [vmem:[%s1 + $0xc04] sm:$0xf]
  %v847 = vld [vmem:[%s1 + $0xc08] sm:$0xf]
  %v848 = vld [vmem:[%s1 + $0xc0c] sm:$0xf]
  %v849 = vld [vmem:[%s1 + $0xc10] sm:$0xf]
  %v850 = vld [vmem:[%s1 + $0xc14] sm:$0xf]
  %v851 = vld [vmem:[%s1 + $0xc18] sm:$0xf]
  %v852 = vld [vmem:[%s1 + $0xc1c] sm:$0xf]
  %v853 = vld [vmem:[%s1 + $0xc20] sm:$0xf]
  %v854 = vld [vmem:[%s1 + $0xc24] sm:$0xf]
  %v855 = vld [vmem:[%s1 + $0xc28] sm:$0xf]
  %v856 = vld [vmem:[%s1 + $0xc2c] sm:$0xf]
  %v857 = vld [vmem:[%s1 + $0xc30] sm:$0xf]
  %v858 = vld [vmem:[%s1 + $0xc34] sm:$0xf]
  %v859 = vld [vmem:[%s1 + $0xc38] sm:$0xf]
  %v860 = vld [vmem:[%s1 + $0xc3c] sm:$0xf]
  %v861 = vld [vmem:[%s1 + $0xc40] sm:$0xf]
  %v862 = vld [vmem:[%s1 + $0xc44] sm:$0xf]
  %v863 = vld [vmem:[%s1 + $0xc48] sm:$0xf]
  %v864 = vld [vmem:[%s1 + $0xc4c] sm:$0xf]
  %v865 = vld [vmem:[%s1 + $0xc50] sm:$0xf]
  %v866 = vld [vmem:[%s1 + $0xc54] sm:$0xf]
  %v867 = vld [vmem:[%s1 + $0xc58] sm:$0xf]
  %v868 = vld [vmem:[%s1 + $0xc5c] sm:$0xf]
  %v869 = vld [vmem:[%s1 + $0xc60] sm:$0xf]
  %v870 = vld [vmem:[%s1 + $0xc64] sm:$0xf]
  %v871 = vld [vmem:[%s1 + $0xc68] sm:$0xf]
  %v872 = vld [vmem:[%s1 + $0xc6c] sm:$0xf]
  %v873 = vld [vmem:[%s1 + $0xc70] sm:$0xf]
  %v874 = vld [vmem:[%s1 + $0xc74] sm:$0xf]
  %v875 = vld [vmem:[%s1 + $0xc78] sm:$0xf]
  %v876 = vld [vmem:[%s1 + $0xc7c] sm:$0xf]
  %v877 = vld [vmem:[%s1 + $0xc80] sm:$0xf]
  %v878 = vld [vmem:[%s1 + $0xc84] sm:$0xf]
  %v879 = vld [vmem:[%s1 + $0xc88] sm:$0xf]
  %v880 = vld [vmem:[%s1 + $0xc8c] sm:$0xf]
  %v881 = vld [vmem:[%s1 + $0xc90] sm:$0xf]
  %v882 = vld [vmem:[%s1 + $0xc94] sm:$0xf]
  %v883 = vld [vmem:[%s1 + $0xc98] sm:$0xf]
  %v884 = vld [vmem:[%s1 + $0xc9c] sm:$0xf]
  %v885 = vld [vmem:[%s1 + $0xca0] sm:$0xf]
  %v886 = vld [vmem:[%s1 + $0xca4] sm:$0xf]
  %v887 = vld [vmem:[%s1 + $0xca8] sm:$0xf]
  %v888 = vld [vmem:[%s1 + $0xcac] sm:$0xf]
  %v889 = vld [vmem:[%s1 + $0xcb0] sm:$0xf]
  %v890 = vld [vmem:[%s1 + $0xcb4] sm:$0xf]
  %v891 = vld [vmem:[%s1 + $0xcb8] sm:$0xf]
  %v892 = vld [vmem:[%s1 + $0xcbc] sm:$0xf]
  %v893 = vld [vmem:[%s1 + $0xcc0] sm:$0xf]
  %v894 = vld [vmem:[%s1 + $0xcc4] sm:$0xf]
  %v895 = vld [vmem:[%s1 + $0xcc8] sm:$0xf]
  %v896 = vld [vmem:[%s1 + $0xccc] sm:$0xf]
  %v897 = vld [vmem:[%s1 + $0xcd0] sm:$0xf]
  %v898 = vld [vmem:[%s1 + $0xcd4] sm:$0xf]
  %v899 = vld [vmem:[%s1 + $0xcd8] sm:$0xf]
  %v900 = vld [vmem:[%s1 + $0xcdc] sm:$0xf]
  %v901 = vld [vmem:[%s1 + $0xce0] sm:$0xf]
  %v902 = vld [vmem:[%s1 + $0xce4] sm:$0xf]
  %v903 = vld [vmem:[%s1 + $0xce8] sm:$0xf]
  %v904 = vld [vmem:[%s1 + $0xcec] sm:$0xf]
  %v905 = vld [vmem:[%s1 + $0xcf0] sm:$0xf]
  %v906 = vld [vmem:[%s1 + $0xcf4] sm:$0xf]
  %v907 = vld [vmem:[%s1 + $0xcf8] sm:$0xf]
  %v908 = vld [vmem:[%s1 + $0xcfc] sm:$0xf]
  %v909 = vld [vmem:[%s1 + $0xd00] sm:$0xf]
  %v910 = vld [vmem:[%s1 + $0xd04] sm:$0xf]
  %v911 = vld [vmem:[%s1 + $0xd08] sm:$0xf]
  %v912 = vld [vmem:[%s1 + $0xd0c] sm:$0xf]
  %v913 = vld [vmem:[%s1 + $0xd10] sm:$0xf]
  %v914 = vld [vmem:[%s1 + $0xd14] sm:$0xf]
  %v915 = vld [vmem:[%s1 + $0xd18] sm:$0xf]
  %v916 = vld [vmem:[%s1 + $0xd1c] sm:$0xf]
  %v917 = vld [vmem:[%s1 + $0xd20] sm:$0xf]
  %v918 = vld [vmem:[%s1 + $0xd24] sm:$0xf]
  %v919 = vld [vmem:[%s1 + $0xd28] sm:$0xf]
  %v920 = vld [vmem:[%s1 + $0xd2c] sm:$0xf]
  %v921 = vld [vmem:[%s1 + $0xd30] sm:$0xf]
  %v922 = vld [vmem:[%s1 + $0xd34] sm:$0xf]
  %v923 = vld [vmem:[%s1 + $0xd38] sm:$0xf]
  %v924 = vld [vmem:[%s1 + $0xd3c] sm:$0xf]
  %v925 = vld [vmem:[%s1 + $0xd40] sm:$0xf]
  %v926 = vld [vmem:[%s1 + $0xd44] sm:$0xf]
  %v927 = vld [vmem:[%s1 + $0xd48] sm:$0xf]
  %v928 = vld [vmem:[%s1 + $0xd4c] sm:$0xf]
  %v929 = vld [vmem:[%s1 + $0xd50] sm:$0xf]
  %v930 = vld [vmem:[%s1 + $0xd54] sm:$0xf]
  %v931 = vld [vmem:[%s1 + $0xd58] sm:$0xf]
  %v932 = vld [vmem:[%s1 + $0xd5c] sm:$0xf]
  %v933 = vld [vmem:[%s1 + $0xd60] sm:$0xf]
  %v934 = vld [vmem:[%s1 + $0xd64] sm:$0xf]
  %v935 = vld [vmem:[%s1 + $0xd68] sm:$0xf]
  %v936 = vld [vmem:[%s1 + $0xd6c] sm:$0xf]
  %v937 = vld [vmem:[%s1 + $0xd70] sm:$0xf]
  %v938 = vld [vmem:[%s1 + $0xd74] sm:$0xf]
  %v939 = vld [vmem:[%s1 + $0xd78] sm:$0xf]
  %v940 = vld [vmem:[%s1 + $0xd7c] sm:$0xf]
  %v941 = vld [vmem:[%s1 + $0xd80] sm:$0xf]
  %v942 = vld [vmem:[%s1 + $0xd84] sm:$0xf]
  %v943 = vld [vmem:[%s1 + $0xd88] sm:$0xf]
  %v944 = vld [vmem:[%s1 + $0xd8c] sm:$0xf]
  %v945 = vld [vmem:[%s1 + $0xd90] sm:$0xf]
  %v946 = vld [vmem:[%s1 + $0xd94] sm:$0xf]
  %v947 = vld [vmem:[%s1 + $0xd98] sm:$0xf]
  %v948 = vld [vmem:[%s1 + $0xd9c] sm:$0xf]
  %v949 = vld [vmem:[%s1 + $0xda0] sm:$0xf]
  %v950 = vld [vmem:[%s1 + $0xda4] sm:$0xf]
  %v951 = vld [vmem:[%s1 + $0xda8] sm:$0xf]
  %v952 = vld [vmem:[%s1 + $0xdac] sm:$0xf]
  %v953 = vld [vmem:[%s1 + $0xdb0] sm:$0xf]
  %v954 = vld [vmem:[%s1 + $0xdb4] sm:$0xf]
  %v955 = vld [vmem:[%s1 + $0xdb8] sm:$0xf]
  %v956 = vld [vmem:[%s1 + $0xdbc] sm:$0xf]
  %v957 = vld [vmem:[%s1 + $0xdc0] sm:$0xf]
  %v958 = vld [vmem:[%s1 + $0xdc4] sm:$0xf]
  %v959 = vld [vmem:[%s1 + $0xdc8] sm:$0xf]
  %v960 = vld [vmem:[%s1 + $0xdcc] sm:$0xf]
  %v961 = vld [vmem:[%s1 + $0xdd0] sm:$0xf]
  %v962 = vld [vmem:[%s1 + $0xdd4] sm:$0xf]
  %v963 = vld [vmem:[%s1 + $0xdd8] sm:$0xf]
  %v964 = vld [vmem:[%s1 + $0xddc] sm:$0xf]
  %v965 = vld [vmem:[%s1 + $0xde0] sm:$0xf]
  %v966 = vld [vmem:[%s1 + $0xde4] sm:$0xf]
  %v967 = vld [vmem:[%s1 + $0xde8] sm:$0xf]
  %v968 = vld [vmem:[%s1 + $0xdec] sm:$0xf]
  %v969 = vld [vmem:[%s1 + $0xdf0] sm:$0xf]
  %v970 = vld [vmem:[%s1 + $0xdf4] sm:$0xf]
  %v971 = vld [vmem:[%s1 + $0xdf8] sm:$0xf]
  %v972 = vld [vmem:[%s1 + $0xdfc] sm:$0xf]
  %v973 = vld [vmem:[%s1 + $0xe00] sm:$0xf]
  %v974 = vld [vmem:[%s1 + $0xe04] sm:$0xf]
  %v975 = vld [vmem:[%s1 + $0xe08] sm:$0xf]
  %v976 = vld [vmem:[%s1 + $0xe0c] sm:$0xf]
  %v977 = vld [vmem:[%s1 + $0xe10] sm:$0xf]
  %v978 = vld [vmem:[%s1 + $0xe14] sm:$0xf]
  %v979 = vld [vmem:[%s1 + $0xe18] sm:$0xf]
  %v980 = vld [vmem:[%s1 + $0xe1c] sm:$0xf]
  %v981 = vld [vmem:[%s1 + $0xe20] sm:$0xf]
  %v982 = vld [vmem:[%s1 + $0xe24] sm:$0xf]
  %v983 = vld [vmem:[%s1 + $0xe28] sm:$0xf]
  %v984 = vld [vmem:[%s1 + $0xe2c] sm:$0xf]
  %v985 = vld [vmem:[%s1 + $0xe30] sm:$0xf]
  %v986 = vld [vmem:[%s1 + $0xe34] sm:$0xf]
  %v987 = vld [vmem:[%s1 + $0xe38] sm:$0xf]
  %v988 = vld [vmem:[%s1 + $0xe3c] sm:$0xf]
  %v989 = vld [vmem:[%s1 + $0xe40] sm:$0xf]
  %v990 = vld [vmem:[%s1 + $0xe44] sm:$0xf]
  %v991 = vld [vmem:[%s1 + $0xe48] sm:$0xf]
  %v992 = vld [vmem:[%s1 + $0xe4c] sm:$0xf]
  %v993 = vld [vmem:[%s1 + $0xe50] sm:$0xf]
  %v994 = vld [vmem:[%s1 + $0xe54] sm:$0xf]
  %v995 = vld [vmem:[%s1 + $0xe58] sm:$0xf]
  %v996 = vld [vmem:[%s1 + $0xe5c] sm:$0xf]
  %v997 = vld [vmem:[%s1 + $0xe60] sm:$0xf]
  %v998 = vld [vmem:[%s1 + $0xe64] sm:$0xf]
  %v999 = vld [vmem:[%s1 + $0xe68] sm:$0xf]
  %v1000 = vld [vmem:[%s1 + $0xe6c] sm:$0xf]
  %v1001 = vld [vmem:[%s1 + $0xe70] sm:$0xf]
  %v1002 = vld [vmem:[%s1 + $0xe74] sm:$0xf]
  %v1003 = vld [vmem:[%s1 + $0xe78] sm:$0xf]
  %v1004 = vld [vmem:[%s1 + $0xe7c] sm:$0xf]
  %v1005 = vld [vmem:[%s1 + $0xe80] sm:$0xf]
  %v1006 = vld [vmem:[%s1 + $0xe84] sm:$0xf]
  %v1007 = vld [vmem:[%s1 + $0xe88] sm:$0xf]
  %v1008 = vld [vmem:[%s1 + $0xe8c] sm:$0xf]
  %v1009 = vld [vmem:[%s1 + $0xe90] sm:$0xf]
  %v1010 = vld [vmem:[%s1 + $0xe94] sm:$0xf]
  %v1011 = vld [vmem:[%s1 + $0xe98] sm:$0xf]
  %v1012 = vld [vmem:[%s1 + $0xe9c] sm:$0xf]
  %v1013 = vld [vmem:[%s1 + $0xea0] sm:$0xf]
  %v1014 = vld [vmem:[%s1 + $0xea4] sm:$0xf]
  %v1015 = vld [vmem:[%s1 + $0xea8] sm:$0xf]
  %v1016 = vld [vmem:[%s1 + $0xeac] sm:$0xf]
  %v1017 = vld [vmem:[%s1 + $0xeb0] sm:$0xf]
  %v1018 = vld [vmem:[%s1 + $0xeb4] sm:$0xf]
  %v1019 = vld [vmem:[%s1 + $0xeb8] sm:$0xf]
  %v1020 = vld [vmem:[%s1 + $0xebc] sm:$0xf]
  %v1021 = vld [vmem:[%s1 + $0xec0] sm:$0xf]
  %v1022 = vld [vmem:[%s1 + $0xec4] sm:$0xf]
  %v1023 = vld [vmem:[%s1 + $0xec8] sm:$0xf]
  %v1024 = vld [vmem:[%s1 + $0xecc] sm:$0xf]
  %v1025 = vld [vmem:[%s1 + $0xed0] sm:$0xf]
  %v1026 = vld [vmem:[%s1 + $0xed4] sm:$0xf]
  %v1027 = vld [vmem:[%s1 + $0xed8] sm:$0xf]
  %v1028 = vld [vmem:[%s1 + $0xedc] sm:$0xf]
  %v1029 = vld [vmem:[%s1 + $0xee0] sm:$0xf]
  %v1030 = vld [vmem:[%s1 + $0xee4] sm:$0xf]
  %v1031 = vld [vmem:[%s1 + $0xee8] sm:$0xf]
  %v1032 = vld [vmem:[%s1 + $0xeec] sm:$0xf]
  %v1033 = vld [vmem:[%s1 + $0xef0] sm:$0xf]
  %v1034 = vld [vmem:[%s1 + $0xef4] sm:$0xf]
  %v1035 = vld [vmem:[%s1 + $0xef8] sm:$0xf]
  %v1036 = vld [vmem:[%s1 + $0xefc] sm:$0xf]
  %v1037 = vld [vmem:[%s1 + $0xf00] sm:$0xf]
  %v1038 = vld [vmem:[%s1 + $0xf04] sm:$0xf]
  %v1039 = vld [vmem:[%s1 + $0xf08] sm:$0xf]
  %v1040 = vld [vmem:[%s1 + $0xf0c] sm:$0xf]
  %v1041 = vld [vmem:[%s1 + $0xf10] sm:$0xf]
  %v1042 = vld [vmem:[%s1 + $0xf14] sm:$0xf]
  %v1043 = vld [vmem:[%s1 + $0xf18] sm:$0xf]
  %v1044 = vld [vmem:[%s1 + $0xf1c] sm:$0xf]
  %v1045 = vld [vmem:[%s1 + $0xf20] sm:$0xf]
  %v1046 = vld [vmem:[%s1 + $0xf24] sm:$0xf]
  %v1047 = vld [vmem:[%s1 + $0xf28] sm:$0xf]
  %v1048 = vld [vmem:[%s1 + $0xf2c] sm:$0xf]
  %v1049 = vld [vmem:[%s1 + $0xf30] sm:$0xf]
  %v1050 = vld [vmem:[%s1 + $0xf34] sm:$0xf]
  %v1051 = vld [vmem:[%s1 + $0xf38] sm:$0xf]
  %v1052 = vld [vmem:[%s1 + $0xf3c] sm:$0xf]
  %v1053 = vld [vmem:[%s1 + $0xf40] sm:$0xf]
  %v1054 = vld [vmem:[%s1 + $0xf44] sm:$0xf]
  %v1055 = vld [vmem:[%s1 + $0xf48] sm:$0xf]
  %v1056 = vld [vmem:[%s1 + $0xf4c] sm:$0xf]
  %v1057 = vld [vmem:[%s1 + $0xf50] sm:$0xf]
  %v1058 = vld [vmem:[%s1 + $0xf54] sm:$0xf]
  %v1059 = vld [vmem:[%s1 + $0xf58] sm:$0xf]
  %v1060 = vld [vmem:[%s1 + $0xf5c] sm:$0xf]
  %v1061 = vld [vmem:[%s1 + $0xf60] sm:$0xf]
  %v1062 = vld [vmem:[%s1 + $0xf64] sm:$0xf]
  %v1063 = vld [vmem:[%s1 + $0xf68] sm:$0xf]
  %v1064 = vld [vmem:[%s1 + $0xf6c] sm:$0xf]
  %v1065 = vld [vmem:[%s1 + $0xf70] sm:$0xf]
  %v1066 = vld [vmem:[%s1 + $0xf74] sm:$0xf]
  %v1067 = vld [vmem:[%s1 + $0xf78] sm:$0xf]
  %v1068 = vld [vmem:[%s1 + $0xf7c] sm:$0xf]
  %v1069 = vld [vmem:[%s1 + $0xf80] sm:$0xf]
  %v1070 = vld [vmem:[%s1 + $0xf84] sm:$0xf]
  %v1071 = vld [vmem:[%s1 + $0xf88] sm:$0xf]
  %v1072 = vld [vmem:[%s1 + $0xf8c] sm:$0xf]
  %v1073 = vld [vmem:[%s1 + $0xf90] sm:$0xf]
  %v1074 = vld [vmem:[%s1 + $0xf94] sm:$0xf]
  %v1075 = vld [vmem:[%s1 + $0xf98] sm:$0xf]
  %v1076 = vld [vmem:[%s1 + $0xf9c] sm:$0xf]
  %v1077 = vld [vmem:[%s1 + $0xfa0] sm:$0xf]
  %v1078 = vld [vmem:[%s1 + $0xfa4] sm:$0xf]
  %v1079 = vld [vmem:[%s1 + $0xfa8] sm:$0xf]
  %v1080 = vld [vmem:[%s1 + $0xfac] sm:$0xf]
  %v1081 = vld [vmem:[%s1 + $0xfb0] sm:$0xf]
  %v1082 = vld [vmem:[%s1 + $0xfb4] sm:$0xf]
  %v1083 = vld [vmem:[%s1 + $0xfb8] sm:$0xf]
  %v1084 = vld [vmem:[%s1 + $0xfbc] sm:$0xf]
  %v1085 = vld [vmem:[%s1 + $0xfc0] sm:$0xf]
  %v1086 = vld [vmem:[%s1 + $0xfc4] sm:$0xf]
  %v1087 = vld [vmem:[%s1 + $0xfc8] sm:$0xf]
  %v1088 = vld [vmem:[%s1 + $0xfcc] sm:$0xf]
  %v1089 = vld [vmem:[%s1 + $0xfd0] sm:$0xf]
  %v1090 = vld [vmem:[%s1 + $0xfd4] sm:$0xf]
  %v1091 = vld [vmem:[%s1 + $0xfd8] sm:$0xf]
  %v1092 = vld [vmem:[%s1 + $0xfdc] sm:$0xf]
  %v1093 = vld [vmem:[%s1 + $0xfe0] sm:$0xf]
  %v1094 = vld [vmem:[%s1 + $0xfe4] sm:$0xf]
  %v1095 = vld [vmem:[%s1 + $0xfe8] sm:$0xf]
  %v1096 = vld [vmem:[%s1 + $0xfec] sm:$0xf]
  %v1097 = vld [vmem:[%s1 + $0xff0] sm:$0xf]
  %v1098 = vld [vmem:[%s1 + $0xff4] sm:$0xf]
  %v1099 = vld [vmem:[%s1 + $0xff8] sm:$0xf]
  %v1100 = vld [vmem:[%s1 + $0xffc] sm:$0xf]
  %v1101 = vld [vmem:[%s1 + $0x1000] sm:$0xf]
  %v1102 = vld [vmem:[%s1 + $0x1004] sm:$0xf]
  %v1103 = vld [vmem:[%s1 + $0x1008] sm:$0xf]
  %v1104 = vld [vmem:[%s1 + $0x100c] sm:$0xf]
  %v1105 = vld [vmem:[%s1 + $0x1010] sm:$0xf]
  %v1106 = vld [vmem:[%s1 + $0x1014] sm:$0xf]
  %v1107 = vld [vmem:[%s1 + $0x1018] sm:$0xf]
  %v1108 = vld [vmem:[%s1 + $0x101c] sm:$0xf]
  %v1109 = vld [vmem:[%s1 + $0x1020] sm:$0xf]
  %v1110 = vld [vmem:[%s1 + $0x1024] sm:$0xf]
  %v1111 = vld [vmem:[%s1 + $0x1028] sm:$0xf]
  %v1112 = vld [vmem:[%s1 + $0x102c] sm:$0xf]
  %v1113 = vld [vmem:[%s1 + $0x1030] sm:$0xf]
  %v1114 = vld [vmem:[%s1 + $0x1034] sm:$0xf]
  %v1115 = vld [vmem:[%s1 + $0x1038] sm:$0xf]
  %v1116 = vld [vmem:[%s1 + $0x103c] sm:$0xf]
  %v1117 = vld [vmem:[%s1 + $0x1040] sm:$0xf]
  %v1118 = vld [vmem:[%s1 + $0x1044] sm:$0xf]
  %v1119 = vld [vmem:[%s1 + $0x1048] sm:$0xf]
  %v1120 = vld [vmem:[%s1 + $0x104c] sm:$0xf]
  %v1121 = vld [vmem:[%s1 + $0x1050] sm:$0xf]
  %v1122 = vld [vmem:[%s1 + $0x1054] sm:$0xf]
  %v1123 = vld [vmem:[%s1 + $0x1058] sm:$0xf]
  %v1124 = vld [vmem:[%s1 + $0x105c] sm:$0xf]
  %v1125 = vld [vmem:[%s1 + $0x1060] sm:$0xf]
  %v1126 = vld [vmem:[%s1 + $0x1064] sm:$0xf]
  %v1127 = vld [vmem:[%s1 + $0x1068] sm:$0xf]
  %v1128 = vld [vmem:[%s1 + $0x106c] sm:$0xf]
  %v1129 = vld [vmem:[%s1 + $0x1070] sm:$0xf]
  %v1130 = vld [vmem:[%s1 + $0x1074] sm:$0xf]
  %v1131 = vld [vmem:[%s1 + $0x1078] sm:$0xf]
  %v1132 = vld [vmem:[%s1 + $0x107c] sm:$0xf]
  %v1133 = vld [vmem:[%s1 + $0x1080] sm:$0xf]
  %v1134 = vld [vmem:[%s1 + $0x1084] sm:$0xf]
  %v1135 = vld [vmem:[%s1 + $0x1088] sm:$0xf]
  %v1136 = vld [vmem:[%s1 + $0x108c] sm:$0xf]
  %v1137 = vld [vmem:[%s1 + $0x1090] sm:$0xf]
  %v1138 = vld [vmem:[%s1 + $0x1094] sm:$0xf]
  %v1139 = vld [vmem:[%s1 + $0x1098] sm:$0xf]
  %v1140 = vld [vmem:[%s1 + $0x109c] sm:$0xf]
  %v1141 = vld [vmem:[%s1 + $0x10a0] sm:$0xf]
  %v1142 = vld [vmem:[%s1 + $0x10a4] sm:$0xf]
  %v1143 = vld [vmem:[%s1 + $0x10a8] sm:$0xf]
  %v1144 = vld [vmem:[%s1 + $0x10ac] sm:$0xf]
  %v1145 = vld [vmem:[%s1 + $0x10b0] sm:$0xf]
  %v1146 = vld [vmem:[%s1 + $0x10b4] sm:$0xf]
  %v1147 = vld [vmem:[%s1 + $0x10b8] sm:$0xf]
  %v1148 = vld [vmem:[%s1 + $0x10bc] sm:$0xf]
  %v1149 = vld [vmem:[%s1 + $0x10c0] sm:$0xf]
  %v1150 = vld [vmem:[%s1 + $0x10c4] sm:$0xf]
  %v1151 = vld [vmem:[%s1 + $0x10c8] sm:$0xf]
  %v1152 = vld [vmem:[%s1 + $0x10cc] sm:$0xf]
  %v1153 = vld [vmem:[%s1 + $0x10d0] sm:$0xf]
  %v1154 = vld [vmem:[%s1 + $0x10d4] sm:$0xf]
  %v1155 = vld [vmem:[%s1 + $0x10d8] sm:$0xf]
  %v1156 = vld [vmem:[%s1 + $0x10dc] sm:$0xf]
  %v1157 = vld [vmem:[%s1 + $0x10e0] sm:$0xf]
  %v1158 = vld [vmem:[%s1 + $0x10e4] sm:$0xf]
  %v1159 = vld [vmem:[%s1 + $0x10e8] sm:$0xf]
  %v1160 = vld [vmem:[%s1 + $0x10ec] sm:$0xf]
  %v1161 = vld [vmem:[%s1 + $0x10f0] sm:$0xf]
  %v1162 = vld [vmem:[%s1 + $0x10f4] sm:$0xf]
  %v1163 = vld [vmem:[%s1 + $0x10f8] sm:$0xf]
  %v1164 = vld [vmem:[%s1 + $0x10fc] sm:$0xf]
  %v1165 = vld [vmem:[%s1 + $0x1100] sm:$0xf]
  %v1166 = vld [vmem:[%s1 + $0x1104] sm:$0xf]
  %v1167 = vld [vmem:[%s1 + $0x1108] sm:$0xf]
  %v1168 = vld [vmem:[%s1 + $0x110c] sm:$0xf]
  %v1169 = vld [vmem:[%s1 + $0x1110] sm:$0xf]
  %v1170 = vld [vmem:[%s1 + $0x1114] sm:$0xf]
  %v1171 = vld [vmem:[%s1 + $0x1118] sm:$0xf]
  %v1172 = vld [vmem:[%s1 + $0x111c] sm:$0xf]
  %v1173 = vld [vmem:[%s1 + $0x1120] sm:$0xf]
  %v1174 = vld [vmem:[%s1 + $0x1124] sm:$0xf]
  %v1175 = vld [vmem:[%s1 + $0x1128] sm:$0xf]
  %v1176 = vld [vmem:[%s1 + $0x112c] sm:$0xf]
  %v1177 = vld [vmem:[%s1 + $0x1130] sm:$0xf]
  %v1178 = vld [vmem:[%s1 + $0x1134] sm:$0xf]
  %v1179 = vld [vmem:[%s1 + $0x1138] sm:$0xf]
  %v1180 = vld [vmem:[%s1 + $0x113c] sm:$0xf]
  %v1181 = vld [vmem:[%s1 + $0x1140] sm:$0xf]
  %v1182 = vld [vmem:[%s1 + $0x1144] sm:$0xf]
  %v1183 = vld [vmem:[%s1 + $0x1148] sm:$0xf]
  %v1184 = vld [vmem:[%s1 + $0x114c] sm:$0xf]
  %v1185 = vld [vmem:[%s1 + $0x1150] sm:$0xf]
  %v1186 = vld [vmem:[%s1 + $0x1154] sm:$0xf]
  %v1187 = vld [vmem:[%s1 + $0x1158] sm:$0xf]
  %v1188 = vld [vmem:[%s1 + $0x115c] sm:$0xf]
  %v1189 = vld [vmem:[%s1 + $0x1160] sm:$0xf]
  %v1190 = vld [vmem:[%s1 + $0x1164] sm:$0xf]
  %v1191 = vld [vmem:[%s1 + $0x1168] sm:$0xf]
  %v1192 = vld [vmem:[%s1 + $0x116c] sm:$0xf]
  %v1193 = vld [vmem:[%s1 + $0x1170] sm:$0xf]
  %v1194 = vld [vmem:[%s1 + $0x1174] sm:$0xf]
  %v1195 = vld [vmem:[%s1 + $0x1178] sm:$0xf]
  %v1196 = vld [vmem:[%s1 + $0x117c] sm:$0xf]
  %v1197 = vld [vmem:[%s1 + $0x1180] sm:$0xf]
  %v1198 = vld [vmem:[%s1 + $0x1184] sm:$0xf]
  %v1199 = vld [vmem:[%s1 + $0x1188] sm:$0xf]
  %v1200 = vld [vmem:[%s1 + $0x118c] sm:$0xf]
  %v1201 = vld [vmem:[%s1 + $0x1190] sm:$0xf]
  %v1202 = vld [vmem:[%s1 + $0x1194] sm:$0xf]
  %v1203 = vld [vmem:[%s1 + $0x1198] sm:$0xf]
  %v1204 = vld [vmem:[%s1 + $0x119c] sm:$0xf]
  %v1205 = vld [vmem:[%s1 + $0x11a0] sm:$0xf]
  %v1206 = vld [vmem:[%s1 + $0x11a4] sm:$0xf]
  %v1207 = vld [vmem:[%s1 + $0x11a8] sm:$0xf]
  %v1208 = vld [vmem:[%s1 + $0x11ac] sm:$0xf]
  %v1209 = vld [vmem:[%s1 + $0x11b0] sm:$0xf]
  %v1210 = vld [vmem:[%s1 + $0x11b4] sm:$0xf]
  %v1211 = vld [vmem:[%s1 + $0x11b8] sm:$0xf]
  %v1212 = vld [vmem:[%s1 + $0x11bc] sm:$0xf]
  %v1213 = vld [vmem:[%s1 + $0x11c0] sm:$0xf]
  %v1214 = vld [vmem:[%s1 + $0x11c4] sm:$0xf]
  %v1215 = vld [vmem:[%s1 + $0x11c8] sm:$0xf]
  %v1216 = vld [vmem:[%s1 + $0x11cc] sm:$0xf]
  %v1217 = vld [vmem:[%s1 + $0x11d0] sm:$0xf]
  %v1218 = vld [vmem:[%s1 + $0x11d4] sm:$0xf]
  %v1219 = vld [vmem:[%s1 + $0x11d8] sm:$0xf]
  %v1220 = vld [vmem:[%s1 + $0x11dc] sm:$0xf]
  %v1221 = vld [vmem:[%s1 + $0x11e0] sm:$0xf]
  %v1222 = vld [vmem:[%s1 + $0x11e4] sm:$0xf]
  %v1223 = vld [vmem:[%s1 + $0x11e8] sm:$0xf]
  %v1224 = vld [vmem:[%s1 + $0x11ec] sm:$0xf]
  %v1225 = vld [vmem:[%s1 + $0x11f0] sm:$0xf]
  %v1226 = vld [vmem:[%s1 + $0x11f4] sm:$0xf]
  %v1227 = vld [vmem:[%s1 + $0x11f8] sm:$0xf]
  %v1228 = vld [vmem:[%s1 + $0x11fc] sm:$0xf]
  %v1229 = vld [vmem:[%s1 + $0x1200] sm:$0xf]
  %v1230 = vld [vmem:[%s1 + $0x1204] sm:$0xf]
  %v1231 = vld [vmem:[%s1 + $0x1208] sm:$0xf]
  %v1232 = vld [vmem:[%s1 + $0x120c] sm:$0xf]
  %v1233 = vld [vmem:[%s1 + $0x1210] sm:$0xf]
  %v1234 = vld [vmem:[%s1 + $0x1214] sm:$0xf]
  %v1235 = vld [vmem:[%s1 + $0x1218] sm:$0xf]
  %v1236 = vld [vmem:[%s1 + $0x121c] sm:$0xf]
  %v1237 = vld [vmem:[%s1 + $0x1220] sm:$0xf]
  %v1238 = vld [vmem:[%s1 + $0x1224] sm:$0xf]
  %v1239 = vld [vmem:[%s1 + $0x1228] sm:$0xf]
  %v1240 = vld [vmem:[%s1 + $0x122c] sm:$0xf]
  %v1241 = vld [vmem:[%s1 + $0x1230] sm:$0xf]
  %v1242 = vld [vmem:[%s1 + $0x1234] sm:$0xf]
  %v1243 = vld [vmem:[%s1 + $0x1238] sm:$0xf]
  %v1244 = vld [vmem:[%s1 + $0x123c] sm:$0xf]
  %v1245 = vld [vmem:[%s1 + $0x1240] sm:$0xf]
  %v1246 = vld [vmem:[%s1 + $0x1244] sm:$0xf]
  %v1247 = vld [vmem:[%s1 + $0x1248] sm:$0xf]
  %v1248 = vld [vmem:[%s1 + $0x124c] sm:$0xf]
  %v1249 = vld [vmem:[%s1 + $0x1250] sm:$0xf]
  %v1250 = vld [vmem:[%s1 + $0x1254] sm:$0xf]
  %v1251 = vld [vmem:[%s1 + $0x1258] sm:$0xf]
  %v1252 = vld [vmem:[%s1 + $0x125c] sm:$0xf]
  %v1253 = vld [vmem:[%s1 + $0x1260] sm:$0xf]
  %v1254 = vld [vmem:[%s1 + $0x1264] sm:$0xf]
  %v1255 = vld [vmem:[%s1 + $0x1268] sm:$0xf]
  %v1256 = vld [vmem:[%s1 + $0x126c] sm:$0xf]
  %v1257 = vld [vmem:[%s1 + $0x1270] sm:$0xf]
  %v1258 = vld [vmem:[%s1 + $0x1274] sm:$0xf]
  %v1259 = vld [vmem:[%s1 + $0x1278] sm:$0xf]
  %v1260 = vld [vmem:[%s1 + $0x127c] sm:$0xf]
  %v1261 = vld [vmem:[%s1 + $0x1280] sm:$0xf]
  %v1262 = vld [vmem:[%s1 + $0x1284] sm:$0xf]
  %v1263 = vld [vmem:[%s1 + $0x1288] sm:$0xf]
  %v1264 = vld [vmem:[%s1 + $0x128c] sm:$0xf]
  %v1265 = vld [vmem:[%s1 + $0x1290] sm:$0xf]
  %v1266 = vld [vmem:[%s1 + $0x1294] sm:$0xf]
  %v1267 = vld [vmem:[%s1 + $0x1298] sm:$0xf]
  %v1268 = vld [vmem:[%s1 + $0x129c] sm:$0xf]
  %v1269 = vld [vmem:[%s1 + $0x12a0] sm:$0xf]
  %v1270 = vld [vmem:[%s1 + $0x12a4] sm:$0xf]
  %v1271 = vld [vmem:[%s1 + $0x12a8] sm:$0xf]
  %v1272 = vld [vmem:[%s1 + $0x12ac] sm:$0xf]
  %v1273 = vld [vmem:[%s1 + $0x12b0] sm:$0xf]
  %v1274 = vld [vmem:[%s1 + $0x12b4] sm:$0xf]
  %v1275 = vld [vmem:[%s1 + $0x12b8] sm:$0xf]
  %v1276 = vld [vmem:[%s1 + $0x12bc] sm:$0xf]
  %v1277 = vld [vmem:[%s1 + $0x12c0] sm:$0xf]
  %v1278 = vld [vmem:[%s1 + $0x12c4] sm:$0xf]
  %v1279 = vld [vmem:[%s1 + $0x12c8] sm:$0xf]
  %v1280 = vld [vmem:[%s1 + $0x12cc] sm:$0xf]
  %v1281 = vld [vmem:[%s1 + $0x12d0] sm:$0xf]
  %v1282 = vld [vmem:[%s1 + $0x12d4] sm:$0xf]
  %v1283 = vld [vmem:[%s1 + $0x12d8] sm:$0xf]
  %v1284 = vld [vmem:[%s1 + $0x12dc] sm:$0xf]
  %v1285 = vld [vmem:[%s1 + $0x12e0] sm:$0xf]
  %v1286 = vld [vmem:[%s1 + $0x12e4] sm:$0xf]
  %v1287 = vld [vmem:[%s1 + $0x12e8] sm:$0xf]
  %v1288 = vld [vmem:[%s1 + $0x12ec] sm:$0xf]
  %v1289 = vld [vmem:[%s1 + $0x12f0] sm:$0xf]
  %v1290 = vld [vmem:[%s1 + $0x12f4] sm:$0xf]
  %v1291 = vld [vmem:[%s1 + $0x12f8] sm:$0xf]
  %v1292 = vld [vmem:[%s1 + $0x12fc] sm:$0xf]
  %v1293 = vld [vmem:[%s1 + $0x1300] sm:$0xf]
  %v1294 = vld [vmem:[%s1 + $0x1304] sm:$0xf]
  %v1295 = vld [vmem:[%s1 + $0x1308] sm:$0xf]
  %v1296 = vld [vmem:[%s1 + $0x130c] sm:$0xf]
  %v1297 = vld [vmem:[%s1 + $0x1310] sm:$0xf]
  %v1298 = vld [vmem:[%s1 + $0x1314] sm:$0xf]
  %v1299 = vld [vmem:[%s1 + $0x1318] sm:$0xf]
  %v1300 = vld [vmem:[%s1 + $0x131c] sm:$0xf]
  %v1301 = vld [vmem:[%s1 + $0x1320] sm:$0xf]
  %v1302 = vld [vmem:[%s1 + $0x1324] sm:$0xf]
  %v1303 = vld [vmem:[%s1 + $0x1328] sm:$0xf]
  %v1304 = vld [vmem:[%s1 + $0x132c] sm:$0xf]
  %v1305 = vld [vmem:[%s1 + $0x1330] sm:$0xf]
  %v1306 = vld [vmem:[%s1 + $0x1334] sm:$0xf]
  %v1307 = vld [vmem:[%s1 + $0x1338] sm:$0xf]
  %v1308 = vld [vmem:[%s1 + $0x133c] sm:$0xf]
  %v1309 = vld [vmem:[%s1 + $0x1340] sm:$0xf]
  %v1310 = vld [vmem:[%s1 + $0x1344] sm:$0xf]
  %v1311 = vld [vmem:[%s1 + $0x1348] sm:$0xf]
  %v1312 = vld [vmem:[%s1 + $0x134c] sm:$0xf]
  %v1313 = vld [vmem:[%s1 + $0x1350] sm:$0xf]
  %v1314 = vld [vmem:[%s1 + $0x1354] sm:$0xf]
  %v1315 = vld [vmem:[%s1 + $0x1358] sm:$0xf]
  %v1316 = vld [vmem:[%s1 + $0x135c] sm:$0xf]
  %v1317 = vld [vmem:[%s1 + $0x1360] sm:$0xf]
  %v1318 = vld [vmem:[%s1 + $0x1364] sm:$0xf]
  %v1319 = vld [vmem:[%s1 + $0x1368] sm:$0xf]
  %v1320 = vld [vmem:[%s1 + $0x136c] sm:$0xf]
  %v1321 = vld [vmem:[%s1 + $0x1370] sm:$0xf]
  %v1322 = vld [vmem:[%s1 + $0x1374] sm:$0xf]
  %v1323 = vld [vmem:[%s1 + $0x1378] sm:$0xf]
  %v1324 = vld [vmem:[%s1 + $0x137c] sm:$0xf]
  %v1325 = vld [vmem:[%s1 + $0x1380] sm:$0xf]
  %v1326 = vld [vmem:[%s1 + $0x1384] sm:$0xf]
  %v1327 = vld [vmem:[%s1 + $0x1388] sm:$0xf]
  %v1328 = vld [vmem:[%s1 + $0x138c] sm:$0xf]
  %v1329 = vld [vmem:[%s1 + $0x1390] sm:$0xf]
  %v1330 = vld [vmem:[%s1 + $0x1394] sm:$0xf]
  %v1331 = vld [vmem:[%s1 + $0x1398] sm:$0xf]
  %v1332 = vld [vmem:[%s1 + $0x139c] sm:$0xf]
  %v1333 = vld [vmem:[%s1 + $0x13a0] sm:$0xf]
  %v1334 = vld [vmem:[%s1 + $0x13a4] sm:$0xf]
  %v1335 = vld [vmem:[%s1 + $0x13a8] sm:$0xf]
  %v1336 = vld [vmem:[%s1 + $0x13ac] sm:$0xf]
  %v1337 = vld [vmem:[%s1 + $0x13b0] sm:$0xf]
  %v1338 = vld [vmem:[%s1 + $0x13b4] sm:$0xf]
  %v1339 = vld [vmem:[%s1 + $0x13b8] sm:$0xf]
  %v1340 = vld [vmem:[%s1 + $0x13bc] sm:$0xf]
  %v1341 = vld [vmem:[%s1 + $0x13c0] sm:$0xf]
  %v1342 = vld [vmem:[%s1 + $0x13c4] sm:$0xf]
  %v1343 = vld [vmem:[%s1 + $0x13c8] sm:$0xf]
  %v1344 = vld [vmem:[%s1 + $0x13cc] sm:$0xf]
  %v1345 = vld [vmem:[%s1 + $0x13d0] sm:$0xf]
  %v1346 = vld [vmem:[%s1 + $0x13d4] sm:$0xf]
  %v1347 = vld [vmem:[%s1 + $0x13d8] sm:$0xf]
  %v1348 = vld [vmem:[%s1 + $0x13dc] sm:$0xf]
  %v1349 = vld [vmem:[%s1 + $0x13e0] sm:$0xf]
  %v1350 = vld [vmem:[%s1 + $0x13e4] sm:$0xf]
  %v1351 = vld [vmem:[%s1 + $0x13e8] sm:$0xf]
  %v1352 = vld [vmem:[%s1 + $0x13ec] sm:$0xf]
  %v1353 = vld [vmem:[%s1 + $0x13f0] sm:$0xf]
  %v1354 = vld [vmem:[%s1 + $0x13f4] sm:$0xf]
  %v1355 = vld [vmem:[%s1 + $0x13f8] sm:$0xf]
  %v1356 = vld [vmem:[%s1 + $0x13fc] sm:$0xf]
  %v1357 = vld [vmem:[%s1 + $0x1400] sm:$0xf]
  %v1358 = vld [vmem:[%s1 + $0x1404] sm:$0xf]
  %v1359 = vld [vmem:[%s1 + $0x1408] sm:$0xf]
  %v1360 = vld [vmem:[%s1 + $0x140c] sm:$0xf]
  %v1361 = vld [vmem:[%s1 + $0x1410] sm:$0xf]
  %v1362 = vld [vmem:[%s1 + $0x1414] sm:$0xf]
  %v1363 = vld [vmem:[%s1 + $0x1418] sm:$0xf]
  %v1364 = vld [vmem:[%s1 + $0x141c] sm:$0xf]
  %v1365 = vld [vmem:[%s1 + $0x1420] sm:$0xf]
  %v1366 = vld [vmem:[%s1 + $0x1424] sm:$0xf]
  %v1367 = vld [vmem:[%s1 + $0x1428] sm:$0xf]
  %v1368 = vld [vmem:[%s1 + $0x142c] sm:$0xf]
  %v1369 = vld [vmem:[%s1 + $0x1430] sm:$0xf]
  %v1370 = vld [vmem:[%s1 + $0x1434] sm:$0xf]
  %v1371 = vld [vmem:[%s1 + $0x1438] sm:$0xf]
  %v1372 = vld [vmem:[%s1 + $0x143c] sm:$0xf]
  %v1373 = vld [vmem:[%s1 + $0x1440] sm:$0xf]
  %v1374 = vld [vmem:[%s1 + $0x1444] sm:$0xf]
  %v1375 = vld [vmem:[%s1 + $0x1448] sm:$0xf]
  %v1376 = vld [vmem:[%s1 + $0x144c] sm:$0xf]
  %v1377 = vld [vmem:[%s1 + $0x1450] sm:$0xf]
  %v1378 = vld [vmem:[%s1 + $0x1454] sm:$0xf]
  %v1379 = vld [vmem:[%s1 + $0x1458] sm:$0xf]
  %v1380 = vld [vmem:[%s1 + $0x145c] sm:$0xf]
  %v1381 = vld [vmem:[%s1 + $0x1460] sm:$0xf]
  %v1382 = vld [vmem:[%s1 + $0x1464] sm:$0xf]
  %v1383 = vld [vmem:[%s1 + $0x1468] sm:$0xf]
  %v1384 = vld [vmem:[%s1 + $0x146c] sm:$0xf]
  %v1385 = vld [vmem:[%s1 + $0x1470] sm:$0xf]
  %v1386 = vld [vmem:[%s1 + $0x1474] sm:$0xf]
  %v1387 = vld [vmem:[%s1 + $0x1478] sm:$0xf]
  %v1388 = vld [vmem:[%s1 + $0x147c] sm:$0xf]
  %v1389 = vld [vmem:[%s1 + $0x1480] sm:$0xf]
  %v1390 = vld [vmem:[%s1 + $0x1484] sm:$0xf]
  %v1391 = vld [vmem:[%s1 + $0x1488] sm:$0xf]
  %v1392 = vld [vmem:[%s1 + $0x148c] sm:$0xf]
  %v1393 = vld [vmem:[%s1 + $0x1490] sm:$0xf]
  %v1394 = vld [vmem:[%s1 + $0x1494] sm:$0xf]
  %v1395 = vld [vmem:[%s1 + $0x1498] sm:$0xf]
  %v1396 = vld [vmem:[%s1 + $0x149c] sm:$0xf]
  %v1397 = vld [vmem:[%s1 + $0x14a0] sm:$0xf]
  %v1398 = vld [vmem:[%s1 + $0x14a4] sm:$0xf]
  %v1399 = vld [vmem:[%s1 + $0x14a8] sm:$0xf]
  %v1400 = vld [vmem:[%s1 + $0x14ac] sm:$0xf]
  %v1401 = vld [vmem:[%s1 + $0x14b0] sm:$0xf]
  %v1402 = vld [vmem:[%s1 + $0x14b4] sm:$0xf]
  %v1403 = vld [vmem:[%s1 + $0x14b8] sm:$0xf]
  %v1404 = vld [vmem:[%s1 + $0x14bc] sm:$0xf]
  %v1405 = vld [vmem:[%s1 + $0x14c0] sm:$0xf]
  %v1406 = vld [vmem:[%s1 + $0x14c4] sm:$0xf]
  %v1407 = vld [vmem:[%s1 + $0x14c8] sm:$0xf]
  %v1408 = vld [vmem:[%s1 + $0x14cc] sm:$0xf]
  %v1409 = vld [vmem:[%s1 + $0x14d0] sm:$0xf]
  %v1410 = vld [vmem:[%s1 + $0x14d4] sm:$0xf]
  %v1411 = vld [vmem:[%s1 + $0x14d8] sm:$0xf]
  %v1412 = vld [vmem:[%s1 + $0x14dc] sm:$0xf]
  %v1413 = vld [vmem:[%s1 + $0x14e0] sm:$0xf]
  %v1414 = vld [vmem:[%s1 + $0x14e4] sm:$0xf]
  %v1415 = vld [vmem:[%s1 + $0x14e8] sm:$0xf]
  %v1416 = vld [vmem:[%s1 + $0x14ec] sm:$0xf]
  %v1417 = vld [vmem:[%s1 + $0x14f0] sm:$0xf]
  %v1418 = vld [vmem:[%s1 + $0x14f4] sm:$0xf]
  %v1419 = vld [vmem:[%s1 + $0x14f8] sm:$0xf]
  %v1420 = vld [vmem:[%s1 + $0x14fc] sm:$0xf]
  %v1421 = vld [vmem:[%s1 + $0x1500] sm:$0xf]
  %v1422 = vld [vmem:[%s1 + $0x1504] sm:$0xf]
  %v1423 = vld [vmem:[%s1 + $0x1508] sm:$0xf]
  %v1424 = vld [vmem:[%s1 + $0x150c] sm:$0xf]
  %v1425 = vld [vmem:[%s1 + $0x1510] sm:$0xf]
  %v1426 = vld [vmem:[%s1 + $0x1514] sm:$0xf]
  %v1427 = vld [vmem:[%s1 + $0x1518] sm:$0xf]
  %v1428 = vld [vmem:[%s1 + $0x151c] sm:$0xf]
  %v1429 = vld [vmem:[%s1 + $0x1520] sm:$0xf]
  %v1430 = vld [vmem:[%s1 + $0x1524] sm:$0xf]
  %v1431 = vld [vmem:[%s1 + $0x1528] sm:$0xf]
  %v1432 = vld [vmem:[%s1 + $0x152c] sm:$0xf]
  %v1433 = vld [vmem:[%s1 + $0x1530] sm:$0xf]
  %v1434 = vld [vmem:[%s1 + $0x1534] sm:$0xf]
  %v1435 = vld [vmem:[%s1 + $0x1538] sm:$0xf]
  %v1436 = vld [vmem:[%s1 + $0x153c] sm:$0xf]
  %v1437 = vld [vmem:[%s1 + $0x1540] sm:$0xf]
  %v1438 = vld [vmem:[%s1 + $0x1544] sm:$0xf]
  %v1439 = vld [vmem:[%s1 + $0x1548] sm:$0xf]
  %v1440 = vld [vmem:[%s1 + $0x154c] sm:$0xf]
  %v1441 = vld [vmem:[%s1 + $0x1550] sm:$0xf]
  %v1442 = vld [vmem:[%s1 + $0x1554] sm:$0xf]
  %v1443 = vld [vmem:[%s1 + $0x1558] sm:$0xf]
  %v1444 = vld [vmem:[%s1 + $0x155c] sm:$0xf]
  %v1445 = vld [vmem:[%s1 + $0x1560] sm:$0xf]
  %v1446 = vld [vmem:[%s1 + $0x1564] sm:$0xf]
  %v1447 = vld [vmem:[%s1 + $0x1568] sm:$0xf]
  %v1448 = vld [vmem:[%s1 + $0x156c] sm:$0xf]
  %v1449 = vld [vmem:[%s1 + $0x1570] sm:$0xf]
  %v1450 = vld [vmem:[%s1 + $0x1574] sm:$0xf]
  %v1451 = vld [vmem:[%s1 + $0x1578] sm:$0xf]
  %v1452 = vld [vmem:[%s1 + $0x157c] sm:$0xf]
  %v1453 = vld [vmem:[%s1 + $0x1580] sm:$0xf]
  %v1454 = vld [vmem:[%s1 + $0x1584] sm:$0xf]
  %v1455 = vld [vmem:[%s1 + $0x1588] sm:$0xf]
  %v1456 = vld [vmem:[%s1 + $0x158c] sm:$0xf]
  %v1457 = vld [vmem:[%s1 + $0x1590] sm:$0xf]
  %v1458 = vld [vmem:[%s1 + $0x1594] sm:$0xf]
  %v1459 = vld [vmem:[%s1 + $0x1598] sm:$0xf]
  %v1460 = vld [vmem:[%s1 + $0x159c] sm:$0xf]
  %v1461 = vld [vmem:[%s1 + $0x15a0] sm:$0xf]
  %v1462 = vld [vmem:[%s1 + $0x15a4] sm:$0xf]
  %v1463 = vld [vmem:[%s1 + $0x15a8] sm:$0xf]
  %v1464 = vld [vmem:[%s1 + $0x15ac] sm:$0xf]
  %v1465 = vld [vmem:[%s1 + $0x15b0] sm:$0xf]
  %v1466 = vld [vmem:[%s1 + $0x15b4] sm:$0xf]
  %v1467 = vld [vmem:[%s1 + $0x15b8] sm:$0xf]
  %v1468 = vld [vmem:[%s1 + $0x15bc] sm:$0xf]
  %v1469 = vld [vmem:[%s1 + $0x15c0] sm:$0xf]
  %v1470 = vld [vmem:[%s1 + $0x15c4] sm:$0xf]
  %v1471 = vld [vmem:[%s1 + $0x15c8] sm:$0xf]
  %v1472 = vld [vmem:[%s1 + $0x15cc] sm:$0xf]
  %v1473 = vld [vmem:[%s1 + $0x15d0] sm:$0xf]
  %v1474 = vld [vmem:[%s1 + $0x15d4] sm:$0xf]
  %v1475 = vld [vmem:[%s1 + $0x15d8] sm:$0xf]
  %v1476 = vld [vmem:[%s1 + $0x15dc] sm:$0xf]
  %v1477 = vld [vmem:[%s1 + $0x15e0] sm:$0xf]
  %v1478 = vld [vmem:[%s1 + $0x15e4] sm:$0xf]
  %v1479 = vld [vmem:[%s1 + $0x15e8] sm:$0xf]
  %v1480 = vld [vmem:[%s1 + $0x15ec] sm:$0xf]
  %v1481 = vld [vmem:[%s1 + $0x15f0] sm:$0xf]
  %v1482 = vld [vmem:[%s1 + $0x15f4] sm:$0xf]
  %v1483 = vld [vmem:[%s1 + $0x15f8] sm:$0xf]
  %v1484 = vld [vmem:[%s1 + $0x15fc] sm:$0xf]
  %v1485 = vld [vmem:[%s1 + $0x1600] sm:$0xf]
  %v1486 = vld [vmem:[%s1 + $0x1604] sm:$0xf]
  %v1487 = vld [vmem:[%s1 + $0x1608] sm:$0xf]
  %v1488 = vld [vmem:[%s1 + $0x160c] sm:$0xf]
  %v1489 = vld [vmem:[%s1 + $0x1610] sm:$0xf]
  %v1490 = vld [vmem:[%s1 + $0x1614] sm:$0xf]
  %v1491 = vld [vmem:[%s1 + $0x1618] sm:$0xf]
  %v1492 = vld [vmem:[%s1 + $0x161c] sm:$0xf]
  %v1493 = vld [vmem:[%s1 + $0x1620] sm:$0xf]
  %v1494 = vld [vmem:[%s1 + $0x1624] sm:$0xf]
  %v1495 = vld [vmem:[%s1 + $0x1628] sm:$0xf]
  %v1496 = vld [vmem:[%s1 + $0x162c] sm:$0xf]
  %v1497 = vld [vmem:[%s1 + $0x1630] sm:$0xf]
  %v1498 = vld [vmem:[%s1 + $0x1634] sm:$0xf]
  %v1499 = vld [vmem:[%s1 + $0x1638] sm:$0xf]
  %v1500 = vld [vmem:[%s1 + $0x163c] sm:$0xf]
  %v1501 = vld [vmem:[%s1 + $0x1640] sm:$0xf]
  %v1502 = vld [vmem:[%s1 + $0x1644] sm:$0xf]
  %v1503 = vld [vmem:[%s1 + $0x1648] sm:$0xf]
  %v1504 = vld [vmem:[%s1 + $0x164c] sm:$0xf]
  %v1505 = vld [vmem:[%s1 + $0x1650] sm:$0xf]
  %v1506 = vld [vmem:[%s1 + $0x1654] sm:$0xf]
  %v1507 = vld [vmem:[%s1 + $0x1658] sm:$0xf]
  %v1508 = vld [vmem:[%s1 + $0x165c] sm:$0xf]
  %v1509 = vld [vmem:[%s1 + $0x1660] sm:$0xf]
  %v1510 = vld [vmem:[%s1 + $0x1664] sm:$0xf]
  %v1511 = vld [vmem:[%s1 + $0x1668] sm:$0xf]
  %v1512 = vld [vmem:[%s1 + $0x166c] sm:$0xf]
  %v1513 = vld [vmem:[%s1 + $0x1670] sm:$0xf]
  %v1514 = vld [vmem:[%s1 + $0x1674] sm:$0xf]
  %v1515 = vld [vmem:[%s1 + $0x1678] sm:$0xf]
  %v1516 = vld [vmem:[%s1 + $0x167c] sm:$0xf]
  %v1517 = vld [vmem:[%s1 + $0x1680] sm:$0xf]
  %v1518 = vld [vmem:[%s1 + $0x1684] sm:$0xf]
  %v1519 = vld [vmem:[%s1 + $0x1688] sm:$0xf]
  %v1520 = vld [vmem:[%s1 + $0x168c] sm:$0xf]
  %v1521 = vld [vmem:[%s1 + $0x1690] sm:$0xf]
  %v1522 = vld [vmem:[%s1 + $0x1694] sm:$0xf]
  %v1523 = vld [vmem:[%s1 + $0x1698] sm:$0xf]
  %v1524 = vld [vmem:[%s1 + $0x169c] sm:$0xf]
  %v1525 = vld [vmem:[%s1 + $0x16a0] sm:$0xf]
  %v1526 = vld [vmem:[%s1 + $0x16a4] sm:$0xf]
  %v1527 = vld [vmem:[%s1 + $0x16a8] sm:$0xf]
  %v1528 = vld [vmem:[%s1 + $0x16ac] sm:$0xf]
  %v1529 = vld [vmem:[%s1 + $0x16b0] sm:$0xf]
  %v1530 = vld [vmem:[%s1 + $0x16b4] sm:$0xf]
  %v1531 = vld [vmem:[%s1 + $0x16b8] sm:$0xf]
  %v1532 = vld [vmem:[%s1 + $0x16bc] sm:$0xf]
  %v1533 = vld [vmem:[%s1 + $0x16c0] sm:$0xf]
  %v1534 = vld [vmem:[%s1 + $0x16c4] sm:$0xf]
  %v1535 = vld [vmem:[%s1 + $0x16c8] sm:$0xf]
  %v1536 = vld [vmem:[%s1 + $0x16cc] sm:$0xf]
  %v1537 = vld [vmem:[%s1 + $0x16d0] sm:$0xf]
  %v1538 = vld [vmem:[%s1 + $0x16d4] sm:$0xf]
  %v1539 = vld [vmem:[%s1 + $0x16d8] sm:$0xf]
  %v1540 = vld [vmem:[%s1 + $0x16dc] sm:$0xf]
  %v1541 = vld [vmem:[%s1 + $0x16e0] sm:$0xf]
  %v1542 = vld [vmem:[%s1 + $0x16e4] sm:$0xf]
  %v1543 = vld [vmem:[%s1 + $0x16e8] sm:$0xf]
  %v1544 = vld [vmem:[%s1 + $0x16ec] sm:$0xf]
  %v1545 = vld [vmem:[%s1 + $0x16f0] sm:$0xf]
  %v1546 = vld [vmem:[%s1 + $0x16f4] sm:$0xf]
  %v1547 = vld [vmem:[%s1 + $0x16f8] sm:$0xf]
  %v1548 = vld [vmem:[%s1 + $0x16fc] sm:$0xf]
  %v1549 = vld [vmem:[%s1 + $0x1700] sm:$0xf]
  %v1550 = vld [vmem:[%s1 + $0x1704] sm:$0xf]
  %v1551 = vld [vmem:[%s1 + $0x1708] sm:$0xf]
  %v1552 = vld [vmem:[%s1 + $0x170c] sm:$0xf]
  %v1553 = vld [vmem:[%s1 + $0x1710] sm:$0xf]
  %v1554 = vld [vmem:[%s1 + $0x1714] sm:$0xf]
  %v1555 = vld [vmem:[%s1 + $0x1718] sm:$0xf]
  %v1556 = vld [vmem:[%s1 + $0x171c] sm:$0xf]
  %v1557 = vld [vmem:[%s1 + $0x1720] sm:$0xf]
  %v1558 = vld [vmem:[%s1 + $0x1724] sm:$0xf]
  %v1559 = vld [vmem:[%s1 + $0x1728] sm:$0xf]
  %v1560 = vld [vmem:[%s1 + $0x172c] sm:$0xf]
  %v1561 = vld [vmem:[%s1 + $0x1730] sm:$0xf]
  %v1562 = vld [vmem:[%s1 + $0x1734] sm:$0xf]
  %v1563 = vld [vmem:[%s1 + $0x1738] sm:$0xf]
  %v1564 = vld [vmem:[%s1 + $0x173c] sm:$0xf]
  %v1565 = vld [vmem:[%s1 + $0x1740] sm:$0xf]
  %v1566 = vld [vmem:[%s1 + $0x1744] sm:$0xf]
  %v1567 = vld [vmem:[%s1 + $0x1748] sm:$0xf]
  %v1568 = vld [vmem:[%s1 + $0x174c] sm:$0xf]
  %v1569 = vld [vmem:[%s1 + $0x1750] sm:$0xf]
  %v1570 = vld [vmem:[%s1 + $0x1754] sm:$0xf]
  %v1571 = vld [vmem:[%s1 + $0x1758] sm:$0xf]
  %v1572 = vld [vmem:[%s1 + $0x175c] sm:$0xf]
  %v1573 = vld [vmem:[%s1 + $0x1760] sm:$0xf]
  %v1574 = vld [vmem:[%s1 + $0x1764] sm:$0xf]
  %v1575 = vld [vmem:[%s1 + $0x1768] sm:$0xf]
  %v1576 = vld [vmem:[%s1 + $0x176c] sm:$0xf]
  %v1577 = vld [vmem:[%s1 + $0x1770] sm:$0xf]
  %v1578 = vld [vmem:[%s1 + $0x1774] sm:$0xf]
  %v1579 = vld [vmem:[%s1 + $0x1778] sm:$0xf]
  %v1580 = vld [vmem:[%s1 + $0x177c] sm:$0xf]
  %v1581 = vld [vmem:[%s1 + $0x1780] sm:$0xf]
  %v1582 = vld [vmem:[%s1 + $0x1784] sm:$0xf]
  %v1583 = vld [vmem:[%s1 + $0x1788] sm:$0xf]
  %v1584 = vld [vmem:[%s1 + $0x178c] sm:$0xf]
  %v1585 = vld [vmem:[%s1 + $0x1790] sm:$0xf]
  %v1586 = vld [vmem:[%s1 + $0x1794] sm:$0xf]
  %v1587 = vld [vmem:[%s1 + $0x1798] sm:$0xf]
  %v1588 = vld [vmem:[%s1 + $0x179c] sm:$0xf]
  %v1589 = vld [vmem:[%s1 + $0x17a0] sm:$0xf]
  %v1590 = vld [vmem:[%s1 + $0x17a4] sm:$0xf]
  %v1591 = vld [vmem:[%s1 + $0x17a8] sm:$0xf]
  %v1592 = vld [vmem:[%s1 + $0x17ac] sm:$0xf]
  %v1593 = vld [vmem:[%s1 + $0x17b0] sm:$0xf]
  %v1594 = vld [vmem:[%s1 + $0x17b4] sm:$0xf]
  %v1595 = vld [vmem:[%s1 + $0x17b8] sm:$0xf]
  %v1596 = vld [vmem:[%s1 + $0x17bc] sm:$0xf]
  %v1597 = vld [vmem:[%s1 + $0x17c0] sm:$0xf]
  %v1598 = vld [vmem:[%s1 + $0x17c4] sm:$0xf]
  %v1599 = vld [vmem:[%s1 + $0x17c8] sm:$0xf]
  %v1600 = vld [vmem:[%s1 + $0x17cc] sm:$0xf]
  %v1601 = vld [vmem:[%s1 + $0x17d0] sm:$0xf]
  %v1602 = vld [vmem:[%s1 + $0x17d4] sm:$0xf]
  %v1603 = vld [vmem:[%s1 + $0x17d8] sm:$0xf]
  %v1604 = vld [vmem:[%s1 + $0x17dc] sm:$0xf]
  %v1605 = vld [vmem:[%s1 + $0x17e0] sm:$0xf]
  %v1606 = vld [vmem:[%s1 + $0x17e4] sm:$0xf]
  %v1607 = vld [vmem:[%s1 + $0x17e8] sm:$0xf]
  %v1608 = vld [vmem:[%s1 + $0x17ec] sm:$0xf]
  %v1609 = vld [vmem:[%s1 + $0x17f0] sm:$0xf]
  %v1610 = vld [vmem:[%s1 + $0x17f4] sm:$0xf]
  %v1611 = vld [vmem:[%s1 + $0x17f8] sm:$0xf]
  %v1612 = vld [vmem:[%s1 + $0x17fc] sm:$0xf]
  %v1613 = vld [vmem:[%s1 + $0x1800] sm:$0xf]
  %v1614 = vld [vmem:[%s1 + $0x1804] sm:$0xf]
  %v1615 = vld [vmem:[%s1 + $0x1808] sm:$0xf]
  %v1616 = vld [vmem:[%s1 + $0x180c] sm:$0xf]
  %v1617 = vld [vmem:[%s1 + $0x1810] sm:$0xf]
  %v1618 = vld [vmem:[%s1 + $0x1814] sm:$0xf]
  %v1619 = vld [vmem:[%s1 + $0x1818] sm:$0xf]
  %v1620 = vld [vmem:[%s1 + $0x181c] sm:$0xf]
  %v1621 = vld [vmem:[%s1 + $0x1820] sm:$0xf]
  %v1622 = vld [vmem:[%s1 + $0x1824] sm:$0xf]
  %v1623 = vld [vmem:[%s1 + $0x1828] sm:$0xf]
  %v1624 = vld [vmem:[%s1 + $0x182c] sm:$0xf]
  %v1625 = vld [vmem:[%s1 + $0x1830] sm:$0xf]
  %v1626 = vld [vmem:[%s1 + $0x1834] sm:$0xf]
  %v1627 = vld [vmem:[%s1 + $0x1838] sm:$0xf]
  %v1628 = vld [vmem:[%s1 + $0x183c] sm:$0xf]
  %v1629 = vld [vmem:[%s1 + $0x1840] sm:$0xf]
  %v1630 = vld [vmem:[%s1 + $0x1844] sm:$0xf]
  %v1631 = vld [vmem:[%s1 + $0x1848] sm:$0xf]
  %v1632 = vld [vmem:[%s1 + $0x184c] sm:$0xf]
  %v1633 = vld [vmem:[%s1 + $0x1850] sm:$0xf]
  %v1634 = vld [vmem:[%s1 + $0x1854] sm:$0xf]
  %v1635 = vld [vmem:[%s1 + $0x1858] sm:$0xf]
  %v1636 = vld [vmem:[%s1 + $0x185c] sm:$0xf]
  %v1637 = vld [vmem:[%s1 + $0x1860] sm:$0xf]
  %v1638 = vld [vmem:[%s1 + $0x1864] sm:$0xf]
  %v1639 = vld [vmem:[%s1 + $0x1868] sm:$0xf]
  %v1640 = vld [vmem:[%s1 + $0x186c] sm:$0xf]
  %v1641 = vld [vmem:[%s1 + $0x1870] sm:$0xf]
  %v1642 = vld [vmem:[%s1 + $0x1874] sm:$0xf]
  %v1643 = vld [vmem:[%s1 + $0x1878] sm:$0xf]
  %v1644 = vld [vmem:[%s1 + $0x187c] sm:$0xf]
  %v1645 = vld [vmem:[%s1 + $0x1880] sm:$0xf]
  %v1646 = vld [vmem:[%s1 + $0x1884] sm:$0xf]
  %v1647 = vld [vmem:[%s1 + $0x1888] sm:$0xf]
  %v1648 = vld [vmem:[%s1 + $0x188c] sm:$0xf]
  %v1649 = vld [vmem:[%s1 + $0x1890] sm:$0xf]
  %v1650 = vld [vmem:[%s1 + $0x1894] sm:$0xf]
  %v1651 = vld [vmem:[%s1 + $0x1898] sm:$0xf]
  %v1652 = vld [vmem:[%s1 + $0x189c] sm:$0xf]
  %v1653 = vld [vmem:[%s1 + $0x18a0] sm:$0xf]
  %v1654 = vld [vmem:[%s1 + $0x18a4] sm:$0xf]
  %v1655 = vld [vmem:[%s1 + $0x18a8] sm:$0xf]
  %v1656 = vld [vmem:[%s1 + $0x18ac] sm:$0xf]
  %v1657 = vld [vmem:[%s1 + $0x18b0] sm:$0xf]
  %v1658 = vld [vmem:[%s1 + $0x18b4] sm:$0xf]
  %v1659 = vld [vmem:[%s1 + $0x18b8] sm:$0xf]
  %v1660 = vld [vmem:[%s1 + $0x18bc] sm:$0xf]
  %v1661 = vld [vmem:[%s1 + $0x18c0] sm:$0xf]
  %v1662 = vld [vmem:[%s1 + $0x18c4] sm:$0xf]
  %v1663 = vld [vmem:[%s1 + $0x18c8] sm:$0xf]
  %v1664 = vld [vmem:[%s1 + $0x18cc] sm:$0xf]
  %v1665 = vld [vmem:[%s1 + $0x18d0] sm:$0xf]
  %v1666 = vld [vmem:[%s1 + $0x18d4] sm:$0xf]
  %v1667 = vld [vmem:[%s1 + $0x18d8] sm:$0xf]
  %v1668 = vld [vmem:[%s1 + $0x18dc] sm:$0xf]
  %v1669 = vld [vmem:[%s1 + $0x18e0] sm:$0xf]
  %v1670 = vld [vmem:[%s1 + $0x18e4] sm:$0xf]
  %v1671 = vld [vmem:[%s1 + $0x18e8] sm:$0xf]
  %v1672 = vld [vmem:[%s1 + $0x18ec] sm:$0xf]
  %v1673 = vld [vmem:[%s1 + $0x18f0] sm:$0xf]
  %v1674 = vld [vmem:[%s1 + $0x18f4] sm:$0xf]
  %v1675 = vld [vmem:[%s1 + $0x18f8] sm:$0xf]
  %v1676 = vld [vmem:[%s1 + $0x18fc] sm:$0xf]
  %v1677 = vld [vmem:[%s1 + $0x1900] sm:$0xf]
  %v1678 = vld [vmem:[%s1 + $0x1904] sm:$0xf]
  %v1679 = vld [vmem:[%s1 + $0x1908] sm:$0xf]
  %v1680 = vld [vmem:[%s1 + $0x190c] sm:$0xf]
  %v1681 = vld [vmem:[%s1 + $0x1910] sm:$0xf]
  %v1682 = vld [vmem:[%s1 + $0x1914] sm:$0xf]
  %v1683 = vld [vmem:[%s1 + $0x1918] sm:$0xf]
  %v1684 = vld [vmem:[%s1 + $0x191c] sm:$0xf]
  %v1685 = vld [vmem:[%s1 + $0x1920] sm:$0xf]
  %v1686 = vld [vmem:[%s1 + $0x1924] sm:$0xf]
  %v1687 = vld [vmem:[%s1 + $0x1928] sm:$0xf]
  %v1688 = vld [vmem:[%s1 + $0x192c] sm:$0xf]
  %v1689 = vld [vmem:[%s1 + $0x1930] sm:$0xf]
  %v1690 = vld [vmem:[%s1 + $0x1934] sm:$0xf]
  %v1691 = vld [vmem:[%s1 + $0x1938] sm:$0xf]
  %v1692 = vld [vmem:[%s1 + $0x193c] sm:$0xf]
  %v1693 = vld [vmem:[%s1 + $0x1940] sm:$0xf]
  %v1694 = vld [vmem:[%s1 + $0x1944] sm:$0xf]
  %v1695 = vld [vmem:[%s1 + $0x1948] sm:$0xf]
  %v1696 = vld [vmem:[%s1 + $0x194c] sm:$0xf]
  %v1697 = vld [vmem:[%s1 + $0x1950] sm:$0xf]
  %v1698 = vld [vmem:[%s1 + $0x1954] sm:$0xf]
  %v1699 = vld [vmem:[%s1 + $0x1958] sm:$0xf]
  %v1700 = vld [vmem:[%s1 + $0x195c] sm:$0xf]
  %v1701 = vld [vmem:[%s1 + $0x1960] sm:$0xf]
  %v1702 = vld [vmem:[%s1 + $0x1964] sm:$0xf]
  %v1703 = vld [vmem:[%s1 + $0x1968] sm:$0xf]
  %v1704 = vld [vmem:[%s1 + $0x196c] sm:$0xf]
  %v1705 = vld [vmem:[%s1 + $0x1970] sm:$0xf]
  %v1706 = vld [vmem:[%s1 + $0x1974] sm:$0xf]
  %v1707 = vld [vmem:[%s1 + $0x1978] sm:$0xf]
  %v1708 = vld [vmem:[%s1 + $0x197c] sm:$0xf]
  %v1709 = vld [vmem:[%s1 + $0x1980] sm:$0xf]
  %v1710 = vld [vmem:[%s1 + $0x1984] sm:$0xf]
  %v1711 = vld [vmem:[%s1 + $0x1988] sm:$0xf]
  %v1712 = vld [vmem:[%s1 + $0x198c] sm:$0xf]
  %v1713 = vld [vmem:[%s1 + $0x1990] sm:$0xf]
  %v1714 = vld [vmem:[%s1 + $0x1994] sm:$0xf]
  %v1715 = vld [vmem:[%s1 + $0x1998] sm:$0xf]
  %v1716 = vld [vmem:[%s1 + $0x199c] sm:$0xf]
  %v1717 = vld [vmem:[%s1 + $0x19a0] sm:$0xf]
  %v1718 = vld [vmem:[%s1 + $0x19a4] sm:$0xf]
  %v1719 = vld [vmem:[%s1 + $0x19a8] sm:$0xf]
  %v1720 = vld [vmem:[%s1 + $0x19ac] sm:$0xf]
  %v1721 = vld [vmem:[%s1 + $0x19b0] sm:$0xf]
  %v1722 = vld [vmem:[%s1 + $0x19b4] sm:$0xf]
  %v1723 = vld [vmem:[%s1 + $0x19b8] sm:$0xf]
  %v1724 = vld [vmem:[%s1 + $0x19bc] sm:$0xf]
  %v1725 = vld [vmem:[%s1 + $0x19c0] sm:$0xf]
  %v1726 = vld [vmem:[%s1 + $0x19c4] sm:$0xf]
  %v1727 = vld [vmem:[%s1 + $0x19c8] sm:$0xf]
  %v1728 = vld [vmem:[%s1 + $0x19cc] sm:$0xf]
  %v1729 = vld [vmem:[%s1 + $0x19d0] sm:$0xf]
  %v1730 = vld [vmem:[%s1 + $0x19d4] sm:$0xf]
  %v1731 = vld [vmem:[%s1 + $0x19d8] sm:$0xf]
  %v1732 = vld [vmem:[%s1 + $0x19dc] sm:$0xf]
  %v1733 = vld [vmem:[%s1 + $0x19e0] sm:$0xf]
  %v1734 = vld [vmem:[%s1 + $0x19e4] sm:$0xf]
  %v1735 = vld [vmem:[%s1 + $0x19e8] sm:$0xf]
  %v1736 = vld [vmem:[%s1 + $0x19ec] sm:$0xf]
  %v1737 = vld [vmem:[%s1 + $0x19f0] sm:$0xf]
  %v1738 = vld [vmem:[%s1 + $0x19f4] sm:$0xf]
  %v1739 = vld [vmem:[%s1 + $0x19f8] sm:$0xf]
  %v1740 = vld [vmem:[%s1 + $0x19fc] sm:$0xf]
  %v1741 = vld [vmem:[%s1 + $0x1a00] sm:$0xf]
  %v1742 = vld [vmem:[%s1 + $0x1a04] sm:$0xf]
  %v1743 = vld [vmem:[%s1 + $0x1a08] sm:$0xf]
  %v1744 = vld [vmem:[%s1 + $0x1a0c] sm:$0xf]
  %v1745 = vld [vmem:[%s1 + $0x1a10] sm:$0xf]
  %v1746 = vld [vmem:[%s1 + $0x1a14] sm:$0xf]
  %v1747 = vld [vmem:[%s1 + $0x1a18] sm:$0xf]
  %v1748 = vld [vmem:[%s1 + $0x1a1c] sm:$0xf]
  %v1749 = vld [vmem:[%s1 + $0x1a20] sm:$0xf]
  %v1750 = vld [vmem:[%s1 + $0x1a24] sm:$0xf]
  %v1751 = vld [vmem:[%s1 + $0x1a28] sm:$0xf]
  %v1752 = vld [vmem:[%s1 + $0x1a2c] sm:$0xf]
  %v1753 = vld [vmem:[%s1 + $0x1a30] sm:$0xf]
  %v1754 = vld [vmem:[%s1 + $0x1a34] sm:$0xf]
  %v1755 = vld [vmem:[%s1 + $0x1a38] sm:$0xf]
  %v1756 = vld [vmem:[%s1 + $0x1a3c] sm:$0xf]
  %v1757 = vld [vmem:[%s1 + $0x1a40] sm:$0xf]
  %v1758 = vld [vmem:[%s1 + $0x1a44] sm:$0xf]
  %v1759 = vld [vmem:[%s1 + $0x1a48] sm:$0xf]
  %v1760 = vld [vmem:[%s1 + $0x1a4c] sm:$0xf]
  %v1761 = vld [vmem:[%s1 + $0x1a50] sm:$0xf]
  %v1762 = vld [vmem:[%s1 + $0x1a54] sm:$0xf]
  %v1763 = vld [vmem:[%s1 + $0x1a58] sm:$0xf]
  %v1764 = vld [vmem:[%s1 + $0x1a5c] sm:$0xf]
  %v1765 = vld [vmem:[%s1 + $0x1a60] sm:$0xf]
  %v1766 = vld [vmem:[%s1 + $0x1a64] sm:$0xf]
  %v1767 = vld [vmem:[%s1 + $0x1a68] sm:$0xf]
  %v1768 = vld [vmem:[%s1 + $0x1a6c] sm:$0xf]
  %v1769 = vld [vmem:[%s1 + $0x1a70] sm:$0xf]
  %v1770 = vld [vmem:[%s1 + $0x1a74] sm:$0xf]
  %v1771 = vld [vmem:[%s1 + $0x1a78] sm:$0xf]
  %v1772 = vld [vmem:[%s1 + $0x1a7c] sm:$0xf]
  %v1773 = vld [vmem:[%s1 + $0x1a80] sm:$0xf]
  %v1774 = vld [vmem:[%s1 + $0x1a84] sm:$0xf]
  %v1775 = vld [vmem:[%s1 + $0x1a88] sm:$0xf]
  %v1776 = vld [vmem:[%s1 + $0x1a8c] sm:$0xf]
  %v1777 = vld [vmem:[%s1 + $0x1a90] sm:$0xf]
  %v1778 = vld [vmem:[%s1 + $0x1a94] sm:$0xf]
  %v1779 = vld [vmem:[%s1 + $0x1a98] sm:$0xf]
  %v1780 = vld [vmem:[%s1 + $0x1a9c] sm:$0xf]
  %v1781 = vld [vmem:[%s1 + $0x1aa0] sm:$0xf]
  %v1782 = vld [vmem:[%s1 + $0x1aa4] sm:$0xf]
  %v1783 = vld [vmem:[%s1 + $0x1aa8] sm:$0xf]
  %v1784 = vld [vmem:[%s1 + $0x1aac] sm:$0xf]
  %v1785 = vld [vmem:[%s1 + $0x1ab0] sm:$0xf]
  %v1786 = vld [vmem:[%s1 + $0x1ab4] sm:$0xf]
  %v1787 = vld [vmem:[%s1 + $0x1ab8] sm:$0xf]
  %v1788 = vld [vmem:[%s1 + $0x1abc] sm:$0xf]
  %v1789 = vld [vmem:[%s1 + $0x1ac0] sm:$0xf]
  %v1790 = vld [vmem:[%s1 + $0x1ac4] sm:$0xf]
  %v1791 = vld [vmem:[%s1 + $0x1ac8] sm:$0xf]
  %v1792 = vld [vmem:[%s1 + $0x1acc] sm:$0xf]
  %v1793 = vld [vmem:[%s1 + $0x1ad0] sm:$0xf]
  %v1794 = vld [vmem:[%s1 + $0x1ad4] sm:$0xf]
  %v1795 = vld [vmem:[%s1 + $0x1ad8] sm:$0xf]
  %v1796 = vld [vmem:[%s1 + $0x1adc] sm:$0xf]
  %v1797 = vld [vmem:[%s1 + $0x1ae0] sm:$0xf]
  %v1798 = vld [vmem:[%s1 + $0x1ae4] sm:$0xf]
  %v1799 = vld [vmem:[%s1 + $0x1ae8] sm:$0xf]
  %v1800 = vld [vmem:[%s1 + $0x1aec] sm:$0xf]
  %v1801 = vld [vmem:[%s1 + $0x1af0] sm:$0xf]
  %v1802 = vld [vmem:[%s1 + $0x1af4] sm:$0xf]
  %v1803 = vld [vmem:[%s1 + $0x1af8] sm:$0xf]
  %v1804 = vld [vmem:[%s1 + $0x1afc] sm:$0xf]
  %v1805 = vld [vmem:[%s1 + $0x1b00] sm:$0xf]
  %v1806 = vld [vmem:[%s1 + $0x1b04] sm:$0xf]
  %v1807 = vld [vmem:[%s1 + $0x1b08] sm:$0xf]
  %v1808 = vld [vmem:[%s1 + $0x1b0c] sm:$0xf]
  %v1809 = vld [vmem:[%s1 + $0x1b10] sm:$0xf]
  %v1810 = vld [vmem:[%s1 + $0x1b14] sm:$0xf]
  %v1811 = vld [vmem:[%s1 + $0x1b18] sm:$0xf]
  %v1812 = vld [vmem:[%s1 + $0x1b1c] sm:$0xf]
  %v1813 = vld [vmem:[%s1 + $0x1b20] sm:$0xf]
  %v1814 = vld [vmem:[%s1 + $0x1b24] sm:$0xf]
  %v1815 = vld [vmem:[%s1 + $0x1b28] sm:$0xf]
  %v1816 = vld [vmem:[%s1 + $0x1b2c] sm:$0xf]
  %v1817 = vld [vmem:[%s1 + $0x1b30] sm:$0xf]
  %v1818 = vld [vmem:[%s1 + $0x1b34] sm:$0xf]
  %v1819 = vld [vmem:[%s1 + $0x1b38] sm:$0xf]
  %v1820 = vld [vmem:[%s1 + $0x1b3c] sm:$0xf]
  %v1821 = vld [vmem:[%s1 + $0x1b40] sm:$0xf]
  %v1822 = vld [vmem:[%s1 + $0x1b44] sm:$0xf]
  %v1823 = vld [vmem:[%s1 + $0x1b48] sm:$0xf]
  %v1824 = vld [vmem:[%s1 + $0x1b4c] sm:$0xf]
  %v1825 = vld [vmem:[%s1 + $0x1b50] sm:$0xf]
  %v1826 = vld [vmem:[%s1 + $0x1b54] sm:$0xf]
  %v1827 = vld [vmem:[%s1 + $0x1b58] sm:$0xf]
  %v1828 = vld [vmem:[%s1 + $0x1b5c] sm:$0xf]
  %v1829 = vld [vmem:[%s1 + $0x1b60] sm:$0xf]
  %v1830 = vld [vmem:[%s1 + $0x1b64] sm:$0xf]
  %v1831 = vld [vmem:[%s1 + $0x1b68] sm:$0xf]
  %v1832 = vld [vmem:[%s1 + $0x1b6c] sm:$0xf]
  %v1833 = vld [vmem:[%s1 + $0x1b70] sm:$0xf]
  %v1834 = vld [vmem:[%s1 + $0x1b74] sm:$0xf]
  %v1835 = vld [vmem:[%s1 + $0x1b78] sm:$0xf]
  %v1836 = vld [vmem:[%s1 + $0x1b7c] sm:$0xf]
  %v1837 = vld [vmem:[%s1 + $0x1b80] sm:$0xf]
  %v1838 = vld [vmem:[%s1 + $0x1b84] sm:$0xf]
  %v1839 = vld [vmem:[%s1 + $0x1b88] sm:$0xf]
  %v1840 = vld [vmem:[%s1 + $0x1b8c] sm:$0xf]
  %v1841 = vld [vmem:[%s1 + $0x1b90] sm:$0xf]
  %v1842 = vld [vmem:[%s1 + $0x1b94] sm:$0xf]
  %v1843 = vld [vmem:[%s1 + $0x1b98] sm:$0xf]
  %v1844 = vld [vmem:[%s1 + $0x1b9c] sm:$0xf]
  %v1845 = vld [vmem:[%s1 + $0x1ba0] sm:$0xf]
  %v1846 = vld [vmem:[%s1 + $0x1ba4] sm:$0xf]
  %v1847 = vld [vmem:[%s1 + $0x1ba8] sm:$0xf]
  %v1848 = vld [vmem:[%s1 + $0x1bac] sm:$0xf]
  %v1849 = vld [vmem:[%s1 + $0x1bb0] sm:$0xf]
  %v1850 = vld [vmem:[%s1 + $0x1bb4] sm:$0xf]
  %v1851 = vld [vmem:[%s1 + $0x1bb8] sm:$0xf]
  %v1852 = vld [vmem:[%s1 + $0x1bbc] sm:$0xf]
  %v1853 = vld [vmem:[%s1 + $0x1bc0] sm:$0xf]
  %v1854 = vld [vmem:[%s1 + $0x1bc4] sm:$0xf]
  %v1855 = vld [vmem:[%s1 + $0x1bc8] sm:$0xf]
  %v1856 = vld [vmem:[%s1 + $0x1bcc] sm:$0xf]
  %v1857 = vld [vmem:[%s1 + $0x1bd0] sm:$0xf]
  %v1858 = vld [vmem:[%s1 + $0x1bd4] sm:$0xf]
  %v1859 = vld [vmem:[%s1 + $0x1bd8] sm:$0xf]
  %v1860 = vld [vmem:[%s1 + $0x1bdc] sm:$0xf]
  %v1861 = vld [vmem:[%s1 + $0x1be0] sm:$0xf]
  %v1862 = vld [vmem:[%s1 + $0x1be4] sm:$0xf]
  %v1863 = vld [vmem:[%s1 + $0x1be8] sm:$0xf]
  %v1864 = vld [vmem:[%s1 + $0x1bec] sm:$0xf]
  %v1865 = vld [vmem:[%s1 + $0x1bf0] sm:$0xf]
  %v1866 = vld [vmem:[%s1 + $0x1bf4] sm:$0xf]
  %v1867 = vld [vmem:[%s1 + $0x1bf8] sm:$0xf]
  %v1868 = vld [vmem:[%s1 + $0x1bfc] sm:$0xf]
  %v1869 = vld [vmem:[%s2] sm:$0x1]
  %v1871 = vlaneseq
  %v1872 = vshrl.u32 %v1871, 7
  %v1873 = vsub.s32 0, %v1872
  %v1874 = vrot.slane %v1869, %v1873
  %v1932 = vunpack.c.l.b16 %v21
  %v1933 = vunpack.c.h.b16 %v21
  %v1934 = vunpack.c.l.b16 %v22
  %v1935 = vunpack.c.h.b16 %v22
  %v1936 = vunpack.c.l.b16 %v23
  %v1937 = vunpack.c.h.b16 %v23
  %v1938 = vunpack.c.l.b16 %v24
  %v1939 = vunpack.c.h.b16 %v24
  %v1940 = vunpack.c.l.b16 %v25
  %v1941 = vunpack.c.h.b16 %v25
  %v1942 = vunpack.c.l.b16 %v26
  %v1943 = vunpack.c.h.b16 %v26
  %v1944 = vunpack.c.l.b16 %v27
  %v1945 = vunpack.c.h.b16 %v27
  %v1946 = vunpack.c.l.b16 %v28
  %v1947 = vunpack.c.h.b16 %v28
  %v1948 = vunpack.c.l.b16 %v29
  %v1949 = vunpack.c.h.b16 %v29
  %v1950 = vunpack.c.l.b16 %v30
  %v1951 = vunpack.c.h.b16 %v30
  %v1952 = vunpack.c.l.b16 %v31
  %v1953 = vunpack.c.h.b16 %v31
  %v1954 = vunpack.c.l.b16 %v32
  %v1955 = vunpack.c.h.b16 %v32
  %v1956 = vunpack.c.l.b16 %v33
  %v1957 = vunpack.c.h.b16 %v33
  %v1958 = vunpack.c.l.b16 %v34
  %v1959 = vunpack.c.h.b16 %v34
  %v1960 = vunpack.c.l.b16 %v35
  %v1961 = vunpack.c.h.b16 %v35
  %v1962 = vunpack.c.l.b16 %v36
  %v1963 = vunpack.c.h.b16 %v36
  %v1964 = vunpack.c.l.b16 %v37
  %v1965 = vunpack.c.h.b16 %v37
  %v1966 = vunpack.c.l.b16 %v38
  %v1967 = vunpack.c.h.b16 %v38
  %v1968 = vunpack.c.l.b16 %v39
  %v1969 = vunpack.c.h.b16 %v39
  %v1970 = vunpack.c.l.b16 %v40
  %v1971 = vunpack.c.h.b16 %v40
  %v1972 = vunpack.c.l.b16 %v41
  %v1973 = vunpack.c.h.b16 %v41
  %v1974 = vunpack.c.l.b16 %v42
  %v1975 = vunpack.c.h.b16 %v42
  %v1976 = vunpack.c.l.b16 %v43
  %v1977 = vunpack.c.h.b16 %v43
  %v1978 = vunpack.c.l.b16 %v44
  %v1979 = vunpack.c.h.b16 %v44
  %v1980 = vunpack.c.l.b16 %v45
  %v1981 = vunpack.c.h.b16 %v45
  %v1982 = vunpack.c.l.b16 %v46
  %v1983 = vunpack.c.h.b16 %v46
  %v1984 = vunpack.c.l.b16 %v47
  %v1985 = vunpack.c.h.b16 %v47
  %v1986 = vunpack.c.l.b16 %v48
  %v1987 = vunpack.c.h.b16 %v48
  %v1988 = vunpack.c.l.b16 %v49
  %v1989 = vunpack.c.h.b16 %v49
  %v1990 = vunpack.c.l.b16 %v50
  %v1991 = vunpack.c.h.b16 %v50
  %v1992 = vunpack.c.l.b16 %v51
  %v1993 = vunpack.c.h.b16 %v51
  %v1994 = vunpack.c.l.b16 %v52
  %v1995 = vunpack.c.h.b16 %v52
  %v1996 = vunpack.c.l.b16 %v53
  %v1997 = vunpack.c.h.b16 %v53
  %v1998 = vunpack.c.l.b16 %v54
  %v1999 = vunpack.c.h.b16 %v54
  %v2000 = vunpack.c.l.b16 %v55
  %v2001 = vunpack.c.h.b16 %v55
  %v2002 = vunpack.c.l.b16 %v56
  %v2003 = vunpack.c.h.b16 %v56
  %v2004 = vunpack.c.l.b16 %v57
  %v2005 = vunpack.c.h.b16 %v57
  %v2006 = vunpack.c.l.b16 %v58
  %v2007 = vunpack.c.h.b16 %v58
  %v2008 = vunpack.c.l.b16 %v59
  %v2009 = vunpack.c.h.b16 %v59
  %v2010 = vunpack.c.l.b16 %v60
  %v2011 = vunpack.c.h.b16 %v60
  %v2012 = vunpack.c.l.b16 %v61
  %v2013 = vunpack.c.h.b16 %v61
  %v2014 = vunpack.c.l.b16 %v62
  %v2015 = vunpack.c.h.b16 %v62
  %v2016 = vunpack.c.l.b16 %v63
  %v2017 = vunpack.c.h.b16 %v63
  %v2018 = vunpack.c.l.b16 %v64
  %v2019 = vunpack.c.h.b16 %v64
  %v2020 = vunpack.c.l.b16 %v65
  %v2021 = vunpack.c.h.b16 %v65
  %v2022 = vunpack.c.l.b16 %v66
  %v2023 = vunpack.c.h.b16 %v66
  %v2024 = vunpack.c.l.b16 %v67
  %v2025 = vunpack.c.h.b16 %v67
  %v2026 = vunpack.c.l.b16 %v68
  %v2027 = vunpack.c.h.b16 %v68
  %v2028 = vunpack.c.l.b16 %v69
  %v2029 = vunpack.c.h.b16 %v69
  %v2030 = vunpack.c.l.b16 %v70
  %v2031 = vunpack.c.h.b16 %v70
  %v2032 = vunpack.c.l.b16 %v71
  %v2033 = vunpack.c.h.b16 %v71
  %v2034 = vunpack.c.l.b16 %v72
  %v2035 = vunpack.c.h.b16 %v72
  %v2036 = vunpack.c.l.b16 %v73
  %v2037 = vunpack.c.h.b16 %v73
  %v2038 = vunpack.c.l.b16 %v74
  %v2039 = vunpack.c.h.b16 %v74
  %v2040 = vunpack.c.l.b16 %v75
  %v2041 = vunpack.c.h.b16 %v75
  %v2042 = vunpack.c.l.b16 %v76
  %v2043 = vunpack.c.h.b16 %v76
  %v2044 = vpack.c.b16 %v1932, %v1932
  %v2045 = vpack.c.b16 %v1933, %v1933
  %v2046 = vpack.c.b16 %v1934, %v1934
  %v2047 = vpack.c.b16 %v1935, %v1935
  %v2048 = vpack.c.b16 %v1936, %v1936
  %v2049 = vpack.c.b16 %v1937, %v1937
  %v2050 = vpack.c.b16 %v1938, %v1938
  %v2051 = vpack.c.b16 %v1939, %v1939
  %v2052 = vpack.c.b16 %v1940, %v1940
  %v2053 = vpack.c.b16 %v1941, %v1941
  %v2054 = vpack.c.b16 %v1942, %v1942
  %v2055 = vpack.c.b16 %v1943, %v1943
  %v2056 = vpack.c.b16 %v1944, %v1944
  %v2057 = vpack.c.b16 %v1945, %v1945
  %v2058 = vpack.c.b16 %v1946, %v1946
  %v2059 = vpack.c.b16 %v1947, %v1947
  %v2060 = vpack.c.b16 %v1948, %v1948
  %v2061 = vpack.c.b16 %v1949, %v1949
  %v2062 = vpack.c.b16 %v1950, %v1950
  %v2063 = vpack.c.b16 %v1951, %v1951
  %v2064 = vpack.c.b16 %v1952, %v1952
  %v2065 = vpack.c.b16 %v1953, %v1953
  %v2066 = vpack.c.b16 %v1954, %v1954
  %v2067 = vpack.c.b16 %v1955, %v1955
  %v2068 = vpack.c.b16 %v1956, %v1956
  %v2069 = vpack.c.b16 %v1957, %v1957
  %v2070 = vpack.c.b16 %v1958, %v1958
  %v2071 = vpack.c.b16 %v1959, %v1959
  %v2072 = vpack.c.b16 %v1960, %v1960
  %v2073 = vpack.c.b16 %v1961, %v1961
  %v2074 = vpack.c.b16 %v1962, %v1962
  %v2075 = vpack.c.b16 %v1963, %v1963
  %v2076 = vpack.c.b16 %v1964, %v1964
  %v2077 = vpack.c.b16 %v1965, %v1965
  %v2078 = vpack.c.b16 %v1966, %v1966
  %v2079 = vpack.c.b16 %v1967, %v1967
  %v2080 = vpack.c.b16 %v1968, %v1968
  %v2081 = vpack.c.b16 %v1969, %v1969
  %v2082 = vpack.c.b16 %v1970, %v1970
  %v2083 = vpack.c.b16 %v1971, %v1971
  %v2084 = vpack.c.b16 %v1972, %v1972
  %v2085 = vpack.c.b16 %v1973, %v1973
  %v2086 = vpack.c.b16 %v1974, %v1974
  %v2087 = vpack.c.b16 %v1975, %v1975
  %v2088 = vpack.c.b16 %v1976, %v1976
  %v2089 = vpack.c.b16 %v1977, %v1977
  %v2090 = vpack.c.b16 %v1978, %v1978
  %v2091 = vpack.c.b16 %v1979, %v1979
  %v2092 = vpack.c.b16 %v1980, %v1980
  %v2093 = vpack.c.b16 %v1981, %v1981
  %v2094 = vpack.c.b16 %v1982, %v1982
  %v2095 = vpack.c.b16 %v1983, %v1983
  %v2096 = vpack.c.b16 %v1984, %v1984
  %v2097 = vpack.c.b16 %v1985, %v1985
  %v2098 = vpack.c.b16 %v1986, %v1986
  %v2099 = vpack.c.b16 %v1987, %v1987
  %v2100 = vpack.c.b16 %v1988, %v1988
  %v2101 = vpack.c.b16 %v1989, %v1989
  %v2102 = vpack.c.b16 %v1990, %v1990
  %v2103 = vpack.c.b16 %v1991, %v1991
  %v2104 = vpack.c.b16 %v1992, %v1992
  %v2105 = vpack.c.b16 %v1993, %v1993
  %v2106 = vpack.c.b16 %v1994, %v1994
  %v2107 = vpack.c.b16 %v1995, %v1995
  %v2108 = vpack.c.b16 %v1996, %v1996
  %v2109 = vpack.c.b16 %v1997, %v1997
  %v2110 = vpack.c.b16 %v1998, %v1998
  %v2111 = vpack.c.b16 %v1999, %v1999
  %v2112 = vpack.c.b16 %v2000, %v2000
  %v2113 = vpack.c.b16 %v2001, %v2001
  %v2114 = vpack.c.b16 %v2002, %v2002
  %v2115 = vpack.c.b16 %v2003, %v2003
  %v2116 = vpack.c.b16 %v2004, %v2004
  %v2117 = vpack.c.b16 %v2005, %v2005
  %v2118 = vpack.c.b16 %v2006, %v2006
  %v2119 = vpack.c.b16 %v2007, %v2007
  %v2120 = vpack.c.b16 %v2008, %v2008
  %v2121 = vpack.c.b16 %v2009, %v2009
  %v2122 = vpack.c.b16 %v2010, %v2010
  %v2123 = vpack.c.b16 %v2011, %v2011
  %v2124 = vpack.c.b16 %v2012, %v2012
  %v2125 = vpack.c.b16 %v2013, %v2013
  %v2126 = vpack.c.b16 %v2014, %v2014
  %v2127 = vpack.c.b16 %v2015, %v2015
  %v2128 = vpack.c.b16 %v2016, %v2016
  %v2129 = vpack.c.b16 %v2017, %v2017
  %v2130 = vpack.c.b16 %v2018, %v2018
  %v2131 = vpack.c.b16 %v2019, %v2019
  %v2132 = vpack.c.b16 %v2020, %v2020
  %v2133 = vpack.c.b16 %v2021, %v2021
  %v2134 = vpack.c.b16 %v2022, %v2022
  %v2135 = vpack.c.b16 %v2023, %v2023
  %v2136 = vpack.c.b16 %v2024, %v2024
  %v2137 = vpack.c.b16 %v2025, %v2025
  %v2138 = vpack.c.b16 %v2026, %v2026
  %v2139 = vpack.c.b16 %v2027, %v2027
  %v2140 = vpack.c.b16 %v2028, %v2028
  %v2141 = vpack.c.b16 %v2029, %v2029
  %v2142 = vpack.c.b16 %v2030, %v2030
  %v2143 = vpack.c.b16 %v2031, %v2031
  %v2144 = vpack.c.b16 %v2032, %v2032
  %v2145 = vpack.c.b16 %v2033, %v2033
  %v2146 = vpack.c.b16 %v2034, %v2034
  %v2147 = vpack.c.b16 %v2035, %v2035
  %v2148 = vpack.c.b16 %v2036, %v2036
  %v2149 = vpack.c.b16 %v2037, %v2037
  %v2150 = vpack.c.b16 %v2038, %v2038
  %v2151 = vpack.c.b16 %v2039, %v2039
  %v2152 = vpack.c.b16 %v2040, %v2040
  %v2153 = vpack.c.b16 %v2041, %v2041
  %v2154 = vpack.c.b16 %v2042, %v2042
  %v2155 = vpack.c.b16 %v2043, %v2043
  %v4060 = vunpack.c.l.b16 %v77
  %v4061 = vunpack.c.l.b16 %v78
  %v4062 = vunpack.c.l.b16 %v79
  %v4063 = vunpack.c.l.b16 %v80
  %v4064 = vunpack.c.l.b16 %v81
  %v4065 = vunpack.c.l.b16 %v82
  %v4066 = vunpack.c.l.b16 %v83
  %v4067 = vunpack.c.l.b16 %v84
  %v4068 = vunpack.c.l.b16 %v85
  %v4069 = vunpack.c.l.b16 %v86
  %v4070 = vunpack.c.l.b16 %v87
  %v4071 = vunpack.c.l.b16 %v88
  %v4072 = vunpack.c.l.b16 %v89
  %v4073 = vunpack.c.l.b16 %v90
  %v4074 = vunpack.c.l.b16 %v91
  %v4075 = vunpack.c.l.b16 %v92
  %v4076 = vunpack.c.l.b16 %v93
  %v4077 = vunpack.c.l.b16 %v94
  %v4078 = vunpack.c.l.b16 %v95
  %v4079 = vunpack.c.l.b16 %v96
  %v4080 = vunpack.c.l.b16 %v97
  %v4081 = vunpack.c.l.b16 %v98
  %v4082 = vunpack.c.l.b16 %v99
  %v4083 = vunpack.c.l.b16 %v100
  %v4084 = vunpack.c.l.b16 %v101
  %v4085 = vunpack.c.l.b16 %v102
  %v4086 = vunpack.c.l.b16 %v103
  %v4087 = vunpack.c.l.b16 %v104
  %v4088 = vunpack.c.l.b16 %v105
  %v4089 = vunpack.c.l.b16 %v106
  %v4090 = vunpack.c.l.b16 %v107
  %v4091 = vunpack.c.l.b16 %v108
  %v4092 = vunpack.c.l.b16 %v109
  %v4093 = vunpack.c.l.b16 %v110
  %v4094 = vunpack.c.l.b16 %v111
  %v4095 = vunpack.c.l.b16 %v112
  %v4096 = vunpack.c.l.b16 %v113
  %v4097 = vunpack.c.l.b16 %v114
  %v4098 = vunpack.c.l.b16 %v115
  %v4099 = vunpack.c.l.b16 %v116
  %v4100 = vunpack.c.l.b16 %v117
  %v4101 = vunpack.c.l.b16 %v118
  %v4102 = vunpack.c.l.b16 %v119
  %v4103 = vunpack.c.l.b16 %v120
  %v4104 = vunpack.c.l.b16 %v121
  %v4105 = vunpack.c.l.b16 %v122
  %v4106 = vunpack.c.l.b16 %v123
  %v4107 = vunpack.c.l.b16 %v124
  %v4108 = vunpack.c.l.b16 %v125
  %v4109 = vunpack.c.l.b16 %v126
  %v4110 = vunpack.c.l.b16 %v127
  %v4111 = vunpack.c.l.b16 %v128
  %v4112 = vunpack.c.l.b16 %v129
  %v4113 = vunpack.c.l.b16 %v130
  %v4114 = vunpack.c.l.b16 %v131
  %v4115 = vunpack.c.l.b16 %v132
  %v4116 = vunpack.c.l.b16 %v133
  %v4117 = vunpack.c.l.b16 %v134
  %v4118 = vunpack.c.l.b16 %v135
  %v4119 = vunpack.c.l.b16 %v136
  %v4120 = vunpack.c.l.b16 %v137
  %v4121 = vunpack.c.l.b16 %v138
  %v4122 = vunpack.c.l.b16 %v139
  %v4123 = vunpack.c.l.b16 %v140
  %v4124 = vunpack.c.l.b16 %v141
  %v4125 = vunpack.c.l.b16 %v142
  %v4126 = vunpack.c.l.b16 %v143
  %v4127 = vunpack.c.l.b16 %v144
  %v4128 = vunpack.c.l.b16 %v145
  %v4129 = vunpack.c.l.b16 %v146
  %v4130 = vunpack.c.l.b16 %v147
  %v4131 = vunpack.c.l.b16 %v148
  %v4132 = vunpack.c.l.b16 %v149
  %v4133 = vunpack.c.l.b16 %v150
  %v4134 = vunpack.c.l.b16 %v151
  %v4135 = vunpack.c.l.b16 %v152
  %v4136 = vunpack.c.l.b16 %v153
  %v4137 = vunpack.c.l.b16 %v154
  %v4138 = vunpack.c.l.b16 %v155
  %v4139 = vunpack.c.l.b16 %v156
  %v4140 = vunpack.c.l.b16 %v157
  %v4141 = vunpack.c.l.b16 %v158
  %v4142 = vunpack.c.l.b16 %v159
  %v4143 = vunpack.c.l.b16 %v160
  %v4144 = vunpack.c.l.b16 %v161
  %v4145 = vunpack.c.l.b16 %v162
  %v4146 = vunpack.c.l.b16 %v163
  %v4147 = vunpack.c.l.b16 %v164
  %v4148 = vunpack.c.l.b16 %v165
  %v4149 = vunpack.c.l.b16 %v166
  %v4150 = vunpack.c.l.b16 %v167
  %v4151 = vunpack.c.l.b16 %v168
  %v4152 = vunpack.c.l.b16 %v169
  %v4153 = vunpack.c.l.b16 %v170
  %v4154 = vunpack.c.l.b16 %v171
  %v4155 = vunpack.c.l.b16 %v172
  %v4156 = vunpack.c.l.b16 %v173
  %v4157 = vunpack.c.l.b16 %v174
  %v4158 = vunpack.c.l.b16 %v175
  %v4159 = vunpack.c.l.b16 %v176
  %v4160 = vunpack.c.l.b16 %v177
  %v4161 = vunpack.c.l.b16 %v178
  %v4162 = vunpack.c.l.b16 %v179
  %v4163 = vunpack.c.l.b16 %v180
  %v4164 = vunpack.c.l.b16 %v181
  %v4165 = vunpack.c.l.b16 %v182
  %v4166 = vunpack.c.l.b16 %v183
  %v4167 = vunpack.c.l.b16 %v184
  %v4168 = vunpack.c.l.b16 %v185
  %v4169 = vunpack.c.l.b16 %v186
  %v4170 = vunpack.c.l.b16 %v187
  %v4171 = vunpack.c.l.b16 %v188
  %v4172 = vunpack.c.l.b16 %v189
  %v4173 = vunpack.c.l.b16 %v190
  %v4174 = vunpack.c.l.b16 %v191
  %v4175 = vunpack.c.l.b16 %v192
  %v4176 = vunpack.c.l.b16 %v193
  %v4177 = vunpack.c.l.b16 %v194
  %v4178 = vunpack.c.l.b16 %v195
  %v4179 = vunpack.c.l.b16 %v196
  %v4180 = vunpack.c.l.b16 %v197
  %v4181 = vunpack.c.l.b16 %v198
  %v4182 = vunpack.c.l.b16 %v199
  %v4183 = vunpack.c.l.b16 %v200
  %v4184 = vunpack.c.l.b16 %v201
  %v4185 = vunpack.c.l.b16 %v202
  %v4186 = vunpack.c.l.b16 %v203
  %v4187 = vunpack.c.l.b16 %v204
  %v4188 = vunpack.c.l.b16 %v205
  %v4189 = vunpack.c.l.b16 %v206
  %v4190 = vunpack.c.l.b16 %v207
  %v4191 = vunpack.c.l.b16 %v208
  %v4192 = vunpack.c.l.b16 %v209
  %v4193 = vunpack.c.l.b16 %v210
  %v4194 = vunpack.c.l.b16 %v211
  %v4195 = vunpack.c.l.b16 %v212
  %v4196 = vunpack.c.l.b16 %v213
  %v4197 = vunpack.c.l.b16 %v214
  %v4198 = vunpack.c.l.b16 %v215
  %v4199 = vunpack.c.l.b16 %v216
  %v4200 = vunpack.c.l.b16 %v217
  %v4201 = vunpack.c.l.b16 %v218
  %v4202 = vunpack.c.l.b16 %v219
  %v4203 = vunpack.c.l.b16 %v220
  %v4204 = vunpack.c.l.b16 %v221
  %v4205 = vunpack.c.l.b16 %v222
  %v4206 = vunpack.c.l.b16 %v223
  %v4207 = vunpack.c.l.b16 %v224
  %v4208 = vunpack.c.l.b16 %v225
  %v4209 = vunpack.c.l.b16 %v226
  %v4210 = vunpack.c.l.b16 %v227
  %v4211 = vunpack.c.l.b16 %v228
  %v4212 = vunpack.c.l.b16 %v229
  %v4213 = vunpack.c.l.b16 %v230
  %v4214 = vunpack.c.l.b16 %v231
  %v4215 = vunpack.c.l.b16 %v232
  %v4216 = vunpack.c.l.b16 %v233
  %v4217 = vunpack.c.l.b16 %v234
  %v4218 = vunpack.c.l.b16 %v235
  %v4219 = vunpack.c.l.b16 %v236
  %v4220 = vunpack.c.l.b16 %v237
  %v4221 = vunpack.c.l.b16 %v238
  %v4222 = vunpack.c.l.b16 %v239
  %v4223 = vunpack.c.l.b16 %v240
  %v4224 = vunpack.c.l.b16 %v241
  %v4225 = vunpack.c.l.b16 %v242
  %v4226 = vunpack.c.l.b16 %v243
  %v4227 = vunpack.c.l.b16 %v244
  %v4228 = vunpack.c.l.b16 %v245
  %v4229 = vunpack.c.l.b16 %v246
  %v4230 = vunpack.c.l.b16 %v247
  %v4231 = vunpack.c.l.b16 %v248
  %v4232 = vunpack.c.l.b16 %v249
  %v4233 = vunpack.c.l.b16 %v250
  %v4234 = vunpack.c.l.b16 %v251
  %v4235 = vunpack.c.l.b16 %v252
  %v4236 = vunpack.c.l.b16 %v253
  %v4237 = vunpack.c.l.b16 %v254
  %v4238 = vunpack.c.l.b16 %v255
  %v4239 = vunpack.c.l.b16 %v256
  %v4240 = vunpack.c.l.b16 %v257
  %v4241 = vunpack.c.l.b16 %v258
  %v4242 = vunpack.c.l.b16 %v259
  %v4243 = vunpack.c.l.b16 %v260
  %v4244 = vunpack.c.l.b16 %v261
  %v4245 = vunpack.c.l.b16 %v262
  %v4246 = vunpack.c.l.b16 %v263
  %v4247 = vunpack.c.l.b16 %v264
  %v4248 = vunpack.c.l.b16 %v265
  %v4249 = vunpack.c.l.b16 %v266
  %v4250 = vunpack.c.l.b16 %v267
  %v4251 = vunpack.c.l.b16 %v268
  %v4252 = vunpack.c.l.b16 %v269
  %v4253 = vunpack.c.l.b16 %v270
  %v4254 = vunpack.c.l.b16 %v271
  %v4255 = vunpack.c.l.b16 %v272
  %v4256 = vunpack.c.l.b16 %v273
  %v4257 = vunpack.c.l.b16 %v274
  %v4258 = vunpack.c.l.b16 %v275
  %v4259 = vunpack.c.l.b16 %v276
  %v4260 = vunpack.c.l.b16 %v277
  %v4261 = vunpack.c.l.b16 %v278
  %v4262 = vunpack.c.l.b16 %v279
  %v4263 = vunpack.c.l.b16 %v280
  %v4264 = vunpack.c.l.b16 %v281
  %v4265 = vunpack.c.l.b16 %v282
  %v4266 = vunpack.c.l.b16 %v283
  %v4267 = vunpack.c.l.b16 %v284
  %v4268 = vunpack.c.l.b16 %v285
  %v4269 = vunpack.c.l.b16 %v286
  %v4270 = vunpack.c.l.b16 %v287
  %v4271 = vunpack.c.l.b16 %v288
  %v4272 = vunpack.c.l.b16 %v289
  %v4273 = vunpack.c.l.b16 %v290
  %v4274 = vunpack.c.l.b16 %v291
  %v4275 = vunpack.c.l.b16 %v292
  %v4276 = vunpack.c.l.b16 %v293
  %v4277 = vunpack.c.l.b16 %v294
  %v4278 = vunpack.c.l.b16 %v295
  %v4279 = vunpack.c.l.b16 %v296
  %v4280 = vunpack.c.l.b16 %v297
  %v4281 = vunpack.c.l.b16 %v298
  %v4282 = vunpack.c.l.b16 %v299
  %v4283 = vunpack.c.l.b16 %v300
  %v4284 = vunpack.c.l.b16 %v301
  %v4285 = vunpack.c.l.b16 %v302
  %v4286 = vunpack.c.l.b16 %v303
  %v4287 = vunpack.c.l.b16 %v304
  %v4288 = vunpack.c.l.b16 %v305
  %v4289 = vunpack.c.l.b16 %v306
  %v4290 = vunpack.c.l.b16 %v307
  %v4291 = vunpack.c.l.b16 %v308
  %v4292 = vunpack.c.l.b16 %v309
  %v4293 = vunpack.c.l.b16 %v310
  %v4294 = vunpack.c.l.b16 %v311
  %v4295 = vunpack.c.l.b16 %v312
  %v4296 = vunpack.c.l.b16 %v313
  %v4297 = vunpack.c.l.b16 %v314
  %v4298 = vunpack.c.l.b16 %v315
  %v4299 = vunpack.c.l.b16 %v316
  %v4300 = vunpack.c.l.b16 %v317
  %v4301 = vunpack.c.l.b16 %v318
  %v4302 = vunpack.c.l.b16 %v319
  %v4303 = vunpack.c.l.b16 %v320
  %v4304 = vunpack.c.l.b16 %v321
  %v4305 = vunpack.c.l.b16 %v322
  %v4306 = vunpack.c.l.b16 %v323
  %v4307 = vunpack.c.l.b16 %v324
  %v4308 = vunpack.c.l.b16 %v325
  %v4309 = vunpack.c.l.b16 %v326
  %v4310 = vunpack.c.l.b16 %v327
  %v4311 = vunpack.c.l.b16 %v328
  %v4312 = vunpack.c.l.b16 %v329
  %v4313 = vunpack.c.l.b16 %v330
  %v4314 = vunpack.c.l.b16 %v331
  %v4315 = vunpack.c.l.b16 %v332
  %v4316 = vunpack.c.l.b16 %v333
  %v4317 = vunpack.c.l.b16 %v334
  %v4318 = vunpack.c.l.b16 %v335
  %v4319 = vunpack.c.l.b16 %v336
  %v4320 = vunpack.c.l.b16 %v337
  %v4321 = vunpack.c.l.b16 %v338
  %v4322 = vunpack.c.l.b16 %v339
  %v4323 = vunpack.c.l.b16 %v340
  %v4324 = vunpack.c.l.b16 %v341
  %v4325 = vunpack.c.l.b16 %v342
  %v4326 = vunpack.c.l.b16 %v343
  %v4327 = vunpack.c.l.b16 %v344
  %v4328 = vunpack.c.l.b16 %v345
  %v4329 = vunpack.c.l.b16 %v346
  %v4330 = vunpack.c.l.b16 %v347
  %v4331 = vunpack.c.l.b16 %v348
  %v4332 = vunpack.c.l.b16 %v349
  %v4333 = vunpack.c.l.b16 %v350
  %v4334 = vunpack.c.l.b16 %v351
  %v4335 = vunpack.c.l.b16 %v352
  %v4336 = vunpack.c.l.b16 %v353
  %v4337 = vunpack.c.l.b16 %v354
  %v4338 = vunpack.c.l.b16 %v355
  %v4339 = vunpack.c.l.b16 %v356
  %v4340 = vunpack.c.l.b16 %v357
  %v4341 = vunpack.c.l.b16 %v358
  %v4342 = vunpack.c.l.b16 %v359
  %v4343 = vunpack.c.l.b16 %v360
  %v4344 = vunpack.c.l.b16 %v361
  %v4345 = vunpack.c.l.b16 %v362
  %v4346 = vunpack.c.l.b16 %v363
  %v4347 = vunpack.c.l.b16 %v364
  %v4348 = vunpack.c.l.b16 %v365
  %v4349 = vunpack.c.l.b16 %v366
  %v4350 = vunpack.c.l.b16 %v367
  %v4351 = vunpack.c.l.b16 %v368
  %v4352 = vunpack.c.l.b16 %v369
  %v4353 = vunpack.c.l.b16 %v370
  %v4354 = vunpack.c.l.b16 %v371
  %v4355 = vunpack.c.l.b16 %v372
  %v4356 = vunpack.c.l.b16 %v373
  %v4357 = vunpack.c.l.b16 %v374
  %v4358 = vunpack.c.l.b16 %v375
  %v4359 = vunpack.c.l.b16 %v376
  %v4360 = vunpack.c.l.b16 %v377
  %v4361 = vunpack.c.l.b16 %v378
  %v4362 = vunpack.c.l.b16 %v379
  %v4363 = vunpack.c.l.b16 %v380
  %v4364 = vunpack.c.l.b16 %v381
  %v4365 = vunpack.c.l.b16 %v382
  %v4366 = vunpack.c.l.b16 %v383
  %v4367 = vunpack.c.l.b16 %v384
  %v4368 = vunpack.c.l.b16 %v385
  %v4369 = vunpack.c.l.b16 %v386
  %v4370 = vunpack.c.l.b16 %v387
  %v4371 = vunpack.c.l.b16 %v388
  %v4372 = vunpack.c.l.b16 %v389
  %v4373 = vunpack.c.l.b16 %v390
  %v4374 = vunpack.c.l.b16 %v391
  %v4375 = vunpack.c.l.b16 %v392
  %v4376 = vunpack.c.l.b16 %v393
  %v4377 = vunpack.c.l.b16 %v394
  %v4378 = vunpack.c.l.b16 %v395
  %v4379 = vunpack.c.l.b16 %v396
  %v4380 = vunpack.c.l.b16 %v397
  %v4381 = vunpack.c.l.b16 %v398
  %v4382 = vunpack.c.l.b16 %v399
  %v4383 = vunpack.c.l.b16 %v400
  %v4384 = vunpack.c.l.b16 %v401
  %v4385 = vunpack.c.l.b16 %v402
  %v4386 = vunpack.c.l.b16 %v403
  %v4387 = vunpack.c.l.b16 %v404
  %v4388 = vunpack.c.l.b16 %v405
  %v4389 = vunpack.c.l.b16 %v406
  %v4390 = vunpack.c.l.b16 %v407
  %v4391 = vunpack.c.l.b16 %v408
  %v4392 = vunpack.c.l.b16 %v409
  %v4393 = vunpack.c.l.b16 %v410
  %v4394 = vunpack.c.l.b16 %v411
  %v4395 = vunpack.c.l.b16 %v412
  %v4396 = vunpack.c.l.b16 %v413
  %v4397 = vunpack.c.l.b16 %v414
  %v4398 = vunpack.c.l.b16 %v415
  %v4399 = vunpack.c.l.b16 %v416
  %v4400 = vunpack.c.l.b16 %v417
  %v4401 = vunpack.c.l.b16 %v418
  %v4402 = vunpack.c.l.b16 %v419
  %v4403 = vunpack.c.l.b16 %v420
  %v4404 = vunpack.c.l.b16 %v421
  %v4405 = vunpack.c.l.b16 %v422
  %v4406 = vunpack.c.l.b16 %v423
  %v4407 = vunpack.c.l.b16 %v424
  %v4408 = vunpack.c.l.b16 %v425
  %v4409 = vunpack.c.l.b16 %v426
  %v4410 = vunpack.c.l.b16 %v427
  %v4411 = vunpack.c.l.b16 %v428
  %v4412 = vunpack.c.l.b16 %v429
  %v4413 = vunpack.c.l.b16 %v430
  %v4414 = vunpack.c.l.b16 %v431
  %v4415 = vunpack.c.l.b16 %v432
  %v4416 = vunpack.c.l.b16 %v433
  %v4417 = vunpack.c.l.b16 %v434
  %v4418 = vunpack.c.l.b16 %v435
  %v4419 = vunpack.c.l.b16 %v436
  %v4420 = vunpack.c.l.b16 %v437
  %v4421 = vunpack.c.l.b16 %v438
  %v4422 = vunpack.c.l.b16 %v439
  %v4423 = vunpack.c.l.b16 %v440
  %v4424 = vunpack.c.l.b16 %v441
  %v4425 = vunpack.c.l.b16 %v442
  %v4426 = vunpack.c.l.b16 %v443
  %v4427 = vunpack.c.l.b16 %v444
  %v4428 = vunpack.c.l.b16 %v445
  %v4429 = vunpack.c.l.b16 %v446
  %v4430 = vunpack.c.l.b16 %v447
  %v4431 = vunpack.c.l.b16 %v448
  %v4432 = vunpack.c.l.b16 %v449
  %v4433 = vunpack.c.l.b16 %v450
  %v4434 = vunpack.c.l.b16 %v451
  %v4435 = vunpack.c.l.b16 %v452
  %v4436 = vunpack.c.l.b16 %v453
  %v4437 = vunpack.c.l.b16 %v454
  %v4438 = vunpack.c.l.b16 %v455
  %v4439 = vunpack.c.l.b16 %v456
  %v4440 = vunpack.c.l.b16 %v457
  %v4441 = vunpack.c.l.b16 %v458
  %v4442 = vunpack.c.l.b16 %v459
  %v4443 = vunpack.c.l.b16 %v460
  %v4444 = vunpack.c.l.b16 %v461
  %v4445 = vunpack.c.l.b16 %v462
  %v4446 = vunpack.c.l.b16 %v463
  %v4447 = vunpack.c.l.b16 %v464
  %v4448 = vunpack.c.l.b16 %v465
  %v4449 = vunpack.c.l.b16 %v466
  %v4450 = vunpack.c.l.b16 %v467
  %v4451 = vunpack.c.l.b16 %v468
  %v4452 = vunpack.c.l.b16 %v469
  %v4453 = vunpack.c.l.b16 %v470
  %v4454 = vunpack.c.l.b16 %v471
  %v4455 = vunpack.c.l.b16 %v472
  %v4456 = vunpack.c.l.b16 %v473
  %v4457 = vunpack.c.l.b16 %v474
  %v4458 = vunpack.c.l.b16 %v475
  %v4459 = vunpack.c.l.b16 %v476
  %v4460 = vunpack.c.l.b16 %v477
  %v4461 = vunpack.c.l.b16 %v478
  %v4462 = vunpack.c.l.b16 %v479
  %v4463 = vunpack.c.l.b16 %v480
  %v4464 = vunpack.c.l.b16 %v481
  %v4465 = vunpack.c.l.b16 %v482
  %v4466 = vunpack.c.l.b16 %v483
  %v4467 = vunpack.c.l.b16 %v484
  %v4468 = vunpack.c.l.b16 %v485
  %v4469 = vunpack.c.l.b16 %v486
  %v4470 = vunpack.c.l.b16 %v487
  %v4471 = vunpack.c.l.b16 %v488
  %v4472 = vunpack.c.l.b16 %v489
  %v4473 = vunpack.c.l.b16 %v490
  %v4474 = vunpack.c.l.b16 %v491
  %v4475 = vunpack.c.l.b16 %v492
  %v4476 = vunpack.c.l.b16 %v493
  %v4477 = vunpack.c.l.b16 %v494
  %v4478 = vunpack.c.l.b16 %v495
  %v4479 = vunpack.c.l.b16 %v496
  %v4480 = vunpack.c.l.b16 %v497
  %v4481 = vunpack.c.l.b16 %v498
  %v4482 = vunpack.c.l.b16 %v499
  %v4483 = vunpack.c.l.b16 %v500
  %v4484 = vunpack.c.l.b16 %v501
  %v4485 = vunpack.c.l.b16 %v502
  %v4486 = vunpack.c.l.b16 %v503
  %v4487 = vunpack.c.l.b16 %v504
  %v4488 = vunpack.c.l.b16 %v505
  %v4489 = vunpack.c.l.b16 %v506
  %v4490 = vunpack.c.l.b16 %v507
  %v4491 = vunpack.c.l.b16 %v508
  %v4492 = vunpack.c.l.b16 %v509
  %v4493 = vunpack.c.l.b16 %v510
  %v4494 = vunpack.c.l.b16 %v511
  %v4495 = vunpack.c.l.b16 %v512
  %v4496 = vunpack.c.l.b16 %v513
  %v4497 = vunpack.c.l.b16 %v514
  %v4498 = vunpack.c.l.b16 %v515
  %v4499 = vunpack.c.l.b16 %v516
  %v4500 = vunpack.c.l.b16 %v517
  %v4501 = vunpack.c.l.b16 %v518
  %v4502 = vunpack.c.l.b16 %v519
  %v4503 = vunpack.c.l.b16 %v520
  %v4504 = vunpack.c.l.b16 %v521
  %v4505 = vunpack.c.l.b16 %v522
  %v4506 = vunpack.c.l.b16 %v523
  %v4507 = vunpack.c.l.b16 %v524
  %v4508 = vunpack.c.l.b16 %v525
  %v4509 = vunpack.c.l.b16 %v526
  %v4510 = vunpack.c.l.b16 %v527
  %v4511 = vunpack.c.l.b16 %v528
  %v4512 = vunpack.c.l.b16 %v529
  %v4513 = vunpack.c.l.b16 %v530
  %v4514 = vunpack.c.l.b16 %v531
  %v4515 = vunpack.c.l.b16 %v532
  %v4516 = vunpack.c.l.b16 %v533
  %v4517 = vunpack.c.l.b16 %v534
  %v4518 = vunpack.c.l.b16 %v535
  %v4519 = vunpack.c.l.b16 %v536
  %v4520 = vunpack.c.l.b16 %v537
  %v4521 = vunpack.c.l.b16 %v538
  %v4522 = vunpack.c.l.b16 %v539
  %v4523 = vunpack.c.l.b16 %v540
  %v4524 = vunpack.c.l.b16 %v541
  %v4525 = vunpack.c.l.b16 %v542
  %v4526 = vunpack.c.l.b16 %v543
  %v4527 = vunpack.c.l.b16 %v544
  %v4528 = vunpack.c.l.b16 %v545
  %v4529 = vunpack.c.l.b16 %v546
  %v4530 = vunpack.c.l.b16 %v547
  %v4531 = vunpack.c.l.b16 %v548
  %v4532 = vunpack.c.l.b16 %v549
  %v4533 = vunpack.c.l.b16 %v550
  %v4534 = vunpack.c.l.b16 %v551
  %v4535 = vunpack.c.l.b16 %v552
  %v4536 = vunpack.c.l.b16 %v553
  %v4537 = vunpack.c.l.b16 %v554
  %v4538 = vunpack.c.l.b16 %v555
  %v4539 = vunpack.c.l.b16 %v556
  %v4540 = vunpack.c.l.b16 %v557
  %v4541 = vunpack.c.l.b16 %v558
  %v4542 = vunpack.c.l.b16 %v559
  %v4543 = vunpack.c.l.b16 %v560
  %v4544 = vunpack.c.l.b16 %v561
  %v4545 = vunpack.c.l.b16 %v562
  %v4546 = vunpack.c.l.b16 %v563
  %v4547 = vunpack.c.l.b16 %v564
  %v4548 = vunpack.c.l.b16 %v565
  %v4549 = vunpack.c.l.b16 %v566
  %v4550 = vunpack.c.l.b16 %v567
  %v4551 = vunpack.c.l.b16 %v568
  %v4552 = vunpack.c.l.b16 %v569
  %v4553 = vunpack.c.l.b16 %v570
  %v4554 = vunpack.c.l.b16 %v571
  %v4555 = vunpack.c.l.b16 %v572
  %v4556 = vunpack.c.l.b16 %v573
  %v4557 = vunpack.c.l.b16 %v574
  %v4558 = vunpack.c.l.b16 %v575
  %v4559 = vunpack.c.l.b16 %v576
  %v4560 = vunpack.c.l.b16 %v577
  %v4561 = vunpack.c.l.b16 %v578
  %v4562 = vunpack.c.l.b16 %v579
  %v4563 = vunpack.c.l.b16 %v580
  %v4564 = vunpack.c.l.b16 %v581
  %v4565 = vunpack.c.l.b16 %v582
  %v4566 = vunpack.c.l.b16 %v583
  %v4567 = vunpack.c.l.b16 %v584
  %v4568 = vunpack.c.l.b16 %v585
  %v4569 = vunpack.c.l.b16 %v586
  %v4570 = vunpack.c.l.b16 %v587
  %v4571 = vunpack.c.l.b16 %v588
  %v4572 = vunpack.c.l.b16 %v589
  %v4573 = vunpack.c.l.b16 %v590
  %v4574 = vunpack.c.l.b16 %v591
  %v4575 = vunpack.c.l.b16 %v592
  %v4576 = vunpack.c.l.b16 %v593
  %v4577 = vunpack.c.l.b16 %v594
  %v4578 = vunpack.c.l.b16 %v595
  %v4579 = vunpack.c.l.b16 %v596
  %v4580 = vunpack.c.l.b16 %v597
  %v4581 = vunpack.c.l.b16 %v598
  %v4582 = vunpack.c.l.b16 %v599
  %v4583 = vunpack.c.l.b16 %v600
  %v4584 = vunpack.c.l.b16 %v601
  %v4585 = vunpack.c.l.b16 %v602
  %v4586 = vunpack.c.l.b16 %v603
  %v4587 = vunpack.c.l.b16 %v604
  %v4588 = vunpack.c.l.b16 %v605
  %v4589 = vunpack.c.l.b16 %v606
  %v4590 = vunpack.c.l.b16 %v607
  %v4591 = vunpack.c.l.b16 %v608
  %v4592 = vunpack.c.l.b16 %v609
  %v4593 = vunpack.c.l.b16 %v610
  %v4594 = vunpack.c.l.b16 %v611
  %v4595 = vunpack.c.l.b16 %v612
  %v4596 = vunpack.c.l.b16 %v613
  %v4597 = vunpack.c.l.b16 %v614
  %v4598 = vunpack.c.l.b16 %v615
  %v4599 = vunpack.c.l.b16 %v616
  %v4600 = vunpack.c.l.b16 %v617
  %v4601 = vunpack.c.l.b16 %v618
  %v4602 = vunpack.c.l.b16 %v619
  %v4603 = vunpack.c.l.b16 %v620
  %v4604 = vunpack.c.l.b16 %v621
  %v4605 = vunpack.c.l.b16 %v622
  %v4606 = vunpack.c.l.b16 %v623
  %v4607 = vunpack.c.l.b16 %v624
  %v4608 = vunpack.c.l.b16 %v625
  %v4609 = vunpack.c.l.b16 %v626
  %v4610 = vunpack.c.l.b16 %v627
  %v4611 = vunpack.c.l.b16 %v628
  %v4612 = vunpack.c.l.b16 %v629
  %v4613 = vunpack.c.l.b16 %v630
  %v4614 = vunpack.c.l.b16 %v631
  %v4615 = vunpack.c.l.b16 %v632
  %v4616 = vunpack.c.l.b16 %v633
  %v4617 = vunpack.c.l.b16 %v634
  %v4618 = vunpack.c.l.b16 %v635
  %v4619 = vunpack.c.l.b16 %v636
  %v4620 = vunpack.c.l.b16 %v637
  %v4621 = vunpack.c.l.b16 %v638
  %v4622 = vunpack.c.l.b16 %v639
  %v4623 = vunpack.c.l.b16 %v640
  %v4624 = vunpack.c.l.b16 %v641
  %v4625 = vunpack.c.l.b16 %v642
  %v4626 = vunpack.c.l.b16 %v643
  %v4627 = vunpack.c.l.b16 %v644
  %v4628 = vunpack.c.l.b16 %v645
  %v4629 = vunpack.c.l.b16 %v646
  %v4630 = vunpack.c.l.b16 %v647
  %v4631 = vunpack.c.l.b16 %v648
  %v4632 = vunpack.c.l.b16 %v649
  %v4633 = vunpack.c.l.b16 %v650
  %v4634 = vunpack.c.l.b16 %v651
  %v4635 = vunpack.c.l.b16 %v652
  %v4636 = vunpack.c.l.b16 %v653
  %v4637 = vunpack.c.l.b16 %v654
  %v4638 = vunpack.c.l.b16 %v655
  %v4639 = vunpack.c.l.b16 %v656
  %v4640 = vunpack.c.l.b16 %v657
  %v4641 = vunpack.c.l.b16 %v658
  %v4642 = vunpack.c.l.b16 %v659
  %v4643 = vunpack.c.l.b16 %v660
  %v4644 = vunpack.c.l.b16 %v661
  %v4645 = vunpack.c.l.b16 %v662
  %v4646 = vunpack.c.l.b16 %v663
  %v4647 = vunpack.c.l.b16 %v664
  %v4648 = vunpack.c.l.b16 %v665
  %v4649 = vunpack.c.l.b16 %v666
  %v4650 = vunpack.c.l.b16 %v667
  %v4651 = vunpack.c.l.b16 %v668
  %v4652 = vunpack.c.l.b16 %v669
  %v4653 = vunpack.c.l.b16 %v670
  %v4654 = vunpack.c.l.b16 %v671
  %v4655 = vunpack.c.l.b16 %v672
  %v4656 = vunpack.c.l.b16 %v673
  %v4657 = vunpack.c.l.b16 %v674
  %v4658 = vunpack.c.l.b16 %v675
  %v4659 = vunpack.c.l.b16 %v676
  %v4660 = vunpack.c.l.b16 %v677
  %v4661 = vunpack.c.l.b16 %v678
  %v4662 = vunpack.c.l.b16 %v679
  %v4663 = vunpack.c.l.b16 %v680
  %v4664 = vunpack.c.l.b16 %v681
  %v4665 = vunpack.c.l.b16 %v682
  %v4666 = vunpack.c.l.b16 %v683
  %v4667 = vunpack.c.l.b16 %v684
  %v4668 = vunpack.c.l.b16 %v685
  %v4669 = vunpack.c.l.b16 %v686
  %v4670 = vunpack.c.l.b16 %v687
  %v4671 = vunpack.c.l.b16 %v688
  %v4672 = vunpack.c.l.b16 %v689
  %v4673 = vunpack.c.l.b16 %v690
  %v4674 = vunpack.c.l.b16 %v691
  %v4675 = vunpack.c.l.b16 %v692
  %v4676 = vunpack.c.l.b16 %v693
  %v4677 = vunpack.c.l.b16 %v694
  %v4678 = vunpack.c.l.b16 %v695
  %v4679 = vunpack.c.l.b16 %v696
  %v4680 = vunpack.c.l.b16 %v697
  %v4681 = vunpack.c.l.b16 %v698
  %v4682 = vunpack.c.l.b16 %v699
  %v4683 = vunpack.c.l.b16 %v700
  %v4684 = vunpack.c.l.b16 %v701
  %v4685 = vunpack.c.l.b16 %v702
  %v4686 = vunpack.c.l.b16 %v703
  %v4687 = vunpack.c.l.b16 %v704
  %v4688 = vunpack.c.l.b16 %v705
  %v4689 = vunpack.c.l.b16 %v706
  %v4690 = vunpack.c.l.b16 %v707
  %v4691 = vunpack.c.l.b16 %v708
  %v4692 = vunpack.c.l.b16 %v709
  %v4693 = vunpack.c.l.b16 %v710
  %v4694 = vunpack.c.l.b16 %v711
  %v4695 = vunpack.c.l.b16 %v712
  %v4696 = vunpack.c.l.b16 %v713
  %v4697 = vunpack.c.l.b16 %v714
  %v4698 = vunpack.c.l.b16 %v715
  %v4699 = vunpack.c.l.b16 %v716
  %v4700 = vunpack.c.l.b16 %v717
  %v4701 = vunpack.c.l.b16 %v718
  %v4702 = vunpack.c.l.b16 %v719
  %v4703 = vunpack.c.l.b16 %v720
  %v4704 = vunpack.c.l.b16 %v721
  %v4705 = vunpack.c.l.b16 %v722
  %v4706 = vunpack.c.l.b16 %v723
  %v4707 = vunpack.c.l.b16 %v724
  %v4708 = vunpack.c.l.b16 %v725
  %v4709 = vunpack.c.l.b16 %v726
  %v4710 = vunpack.c.l.b16 %v727
  %v4711 = vunpack.c.l.b16 %v728
  %v4712 = vunpack.c.l.b16 %v729
  %v4713 = vunpack.c.l.b16 %v730
  %v4714 = vunpack.c.l.b16 %v731
  %v4715 = vunpack.c.l.b16 %v732
  %v4716 = vunpack.c.l.b16 %v733
  %v4717 = vunpack.c.l.b16 %v734
  %v4718 = vunpack.c.l.b16 %v735
  %v4719 = vunpack.c.l.b16 %v736
  %v4720 = vunpack.c.l.b16 %v737
  %v4721 = vunpack.c.l.b16 %v738
  %v4722 = vunpack.c.l.b16 %v739
  %v4723 = vunpack.c.l.b16 %v740
  %v4724 = vunpack.c.l.b16 %v741
  %v4725 = vunpack.c.l.b16 %v742
  %v4726 = vunpack.c.l.b16 %v743
  %v4727 = vunpack.c.l.b16 %v744
  %v4728 = vunpack.c.l.b16 %v745
  %v4729 = vunpack.c.l.b16 %v746
  %v4730 = vunpack.c.l.b16 %v747
  %v4731 = vunpack.c.l.b16 %v748
  %v4732 = vunpack.c.l.b16 %v749
  %v4733 = vunpack.c.l.b16 %v750
  %v4734 = vunpack.c.l.b16 %v751
  %v4735 = vunpack.c.l.b16 %v752
  %v4736 = vunpack.c.l.b16 %v753
  %v4737 = vunpack.c.l.b16 %v754
  %v4738 = vunpack.c.l.b16 %v755
  %v4739 = vunpack.c.l.b16 %v756
  %v4740 = vunpack.c.l.b16 %v757
  %v4741 = vunpack.c.l.b16 %v758
  %v4742 = vunpack.c.l.b16 %v759
  %v4743 = vunpack.c.l.b16 %v760
  %v4744 = vunpack.c.l.b16 %v761
  %v4745 = vunpack.c.l.b16 %v762
  %v4746 = vunpack.c.l.b16 %v763
  %v4747 = vunpack.c.l.b16 %v764
  %v4748 = vunpack.c.l.b16 %v765
  %v4749 = vunpack.c.l.b16 %v766
  %v4750 = vunpack.c.l.b16 %v767
  %v4751 = vunpack.c.l.b16 %v768
  %v4752 = vunpack.c.l.b16 %v769
  %v4753 = vunpack.c.l.b16 %v770
  %v4754 = vunpack.c.l.b16 %v771
  %v4755 = vunpack.c.l.b16 %v772
  %v4756 = vunpack.c.l.b16 %v773
  %v4757 = vunpack.c.l.b16 %v774
  %v4758 = vunpack.c.l.b16 %v775
  %v4759 = vunpack.c.l.b16 %v776
  %v4760 = vunpack.c.l.b16 %v777
  %v4761 = vunpack.c.l.b16 %v778
  %v4762 = vunpack.c.l.b16 %v779
  %v4763 = vunpack.c.l.b16 %v780
  %v4764 = vunpack.c.l.b16 %v781
  %v4765 = vunpack.c.l.b16 %v782
  %v4766 = vunpack.c.l.b16 %v783
  %v4767 = vunpack.c.l.b16 %v784
  %v4768 = vunpack.c.l.b16 %v785
  %v4769 = vunpack.c.l.b16 %v786
  %v4770 = vunpack.c.l.b16 %v787
  %v4771 = vunpack.c.l.b16 %v788
  %v4772 = vunpack.c.l.b16 %v789
  %v4773 = vunpack.c.l.b16 %v790
  %v4774 = vunpack.c.l.b16 %v791
  %v4775 = vunpack.c.l.b16 %v792
  %v4776 = vunpack.c.l.b16 %v793
  %v4777 = vunpack.c.l.b16 %v794
  %v4778 = vunpack.c.l.b16 %v795
  %v4779 = vunpack.c.l.b16 %v796
  %v4780 = vunpack.c.l.b16 %v797
  %v4781 = vunpack.c.l.b16 %v798
  %v4782 = vunpack.c.l.b16 %v799
  %v4783 = vunpack.c.l.b16 %v800
  %v4784 = vunpack.c.l.b16 %v801
  %v4785 = vunpack.c.l.b16 %v802
  %v4786 = vunpack.c.l.b16 %v803
  %v4787 = vunpack.c.l.b16 %v804
  %v4788 = vunpack.c.l.b16 %v805
  %v4789 = vunpack.c.l.b16 %v806
  %v4790 = vunpack.c.l.b16 %v807
  %v4791 = vunpack.c.l.b16 %v808
  %v4792 = vunpack.c.l.b16 %v809
  %v4793 = vunpack.c.l.b16 %v810
  %v4794 = vunpack.c.l.b16 %v811
  %v4795 = vunpack.c.l.b16 %v812
  %v4796 = vunpack.c.l.b16 %v813
  %v4797 = vunpack.c.l.b16 %v814
  %v4798 = vunpack.c.l.b16 %v815
  %v4799 = vunpack.c.l.b16 %v816
  %v4800 = vunpack.c.l.b16 %v817
  %v4801 = vunpack.c.l.b16 %v818
  %v4802 = vunpack.c.l.b16 %v819
  %v4803 = vunpack.c.l.b16 %v820
  %v4804 = vunpack.c.l.b16 %v821
  %v4805 = vunpack.c.l.b16 %v822
  %v4806 = vunpack.c.l.b16 %v823
  %v4807 = vunpack.c.l.b16 %v824
  %v4808 = vunpack.c.l.b16 %v825
  %v4809 = vunpack.c.l.b16 %v826
  %v4810 = vunpack.c.l.b16 %v827
  %v4811 = vunpack.c.l.b16 %v828
  %v4812 = vunpack.c.l.b16 %v829
  %v4813 = vunpack.c.l.b16 %v830
  %v4814 = vunpack.c.l.b16 %v831
  %v4815 = vunpack.c.l.b16 %v832
  %v4816 = vunpack.c.l.b16 %v833
  %v4817 = vunpack.c.l.b16 %v834
  %v4818 = vunpack.c.l.b16 %v835
  %v4819 = vunpack.c.l.b16 %v836
  %v4820 = vunpack.c.l.b16 %v837
  %v4821 = vunpack.c.l.b16 %v838
  %v4822 = vunpack.c.l.b16 %v839
  %v4823 = vunpack.c.l.b16 %v840
  %v4824 = vunpack.c.l.b16 %v841
  %v4825 = vunpack.c.l.b16 %v842
  %v4826 = vunpack.c.l.b16 %v843
  %v4827 = vunpack.c.l.b16 %v844
  %v4828 = vunpack.c.l.b16 %v845
  %v4829 = vunpack.c.l.b16 %v846
  %v4830 = vunpack.c.l.b16 %v847
  %v4831 = vunpack.c.l.b16 %v848
  %v4832 = vunpack.c.l.b16 %v849
  %v4833 = vunpack.c.l.b16 %v850
  %v4834 = vunpack.c.l.b16 %v851
  %v4835 = vunpack.c.l.b16 %v852
  %v4836 = vunpack.c.l.b16 %v853
  %v4837 = vunpack.c.l.b16 %v854
  %v4838 = vunpack.c.l.b16 %v855
  %v4839 = vunpack.c.l.b16 %v856
  %v4840 = vunpack.c.l.b16 %v857
  %v4841 = vunpack.c.l.b16 %v858
  %v4842 = vunpack.c.l.b16 %v859
  %v4843 = vunpack.c.l.b16 %v860
  %v4844 = vunpack.c.l.b16 %v861
  %v4845 = vunpack.c.l.b16 %v862
  %v4846 = vunpack.c.l.b16 %v863
  %v4847 = vunpack.c.l.b16 %v864
  %v4848 = vunpack.c.l.b16 %v865
  %v4849 = vunpack.c.l.b16 %v866
  %v4850 = vunpack.c.l.b16 %v867
  %v4851 = vunpack.c.l.b16 %v868
  %v4852 = vunpack.c.l.b16 %v869
  %v4853 = vunpack.c.l.b16 %v870
  %v4854 = vunpack.c.l.b16 %v871
  %v4855 = vunpack.c.l.b16 %v872
  %v4856 = vunpack.c.l.b16 %v873
  %v4857 = vunpack.c.l.b16 %v874
  %v4858 = vunpack.c.l.b16 %v875
  %v4859 = vunpack.c.l.b16 %v876
  %v4860 = vunpack.c.l.b16 %v877
  %v4861 = vunpack.c.l.b16 %v878
  %v4862 = vunpack.c.l.b16 %v879
  %v4863 = vunpack.c.l.b16 %v880
  %v4864 = vunpack.c.l.b16 %v881
  %v4865 = vunpack.c.l.b16 %v882
  %v4866 = vunpack.c.l.b16 %v883
  %v4867 = vunpack.c.l.b16 %v884
  %v4868 = vunpack.c.l.b16 %v885
  %v4869 = vunpack.c.l.b16 %v886
  %v4870 = vunpack.c.l.b16 %v887
  %v4871 = vunpack.c.l.b16 %v888
  %v4872 = vunpack.c.l.b16 %v889
  %v4873 = vunpack.c.l.b16 %v890
  %v4874 = vunpack.c.l.b16 %v891
  %v4875 = vunpack.c.l.b16 %v892
  %v4876 = vunpack.c.l.b16 %v893
  %v4877 = vunpack.c.l.b16 %v894
  %v4878 = vunpack.c.l.b16 %v895
  %v4879 = vunpack.c.l.b16 %v896
  %v4880 = vunpack.c.l.b16 %v897
  %v4881 = vunpack.c.l.b16 %v898
  %v4882 = vunpack.c.l.b16 %v899
  %v4883 = vunpack.c.l.b16 %v900
  %v4884 = vunpack.c.l.b16 %v901
  %v4885 = vunpack.c.l.b16 %v902
  %v4886 = vunpack.c.l.b16 %v903
  %v4887 = vunpack.c.l.b16 %v904
  %v4888 = vunpack.c.l.b16 %v905
  %v4889 = vunpack.c.l.b16 %v906
  %v4890 = vunpack.c.l.b16 %v907
  %v4891 = vunpack.c.l.b16 %v908
  %v4892 = vunpack.c.l.b16 %v909
  %v4893 = vunpack.c.l.b16 %v910
  %v4894 = vunpack.c.l.b16 %v911
  %v4895 = vunpack.c.l.b16 %v912
  %v4896 = vunpack.c.l.b16 %v913
  %v4897 = vunpack.c.l.b16 %v914
  %v4898 = vunpack.c.l.b16 %v915
  %v4899 = vunpack.c.l.b16 %v916
  %v4900 = vunpack.c.l.b16 %v917
  %v4901 = vunpack.c.l.b16 %v918
  %v4902 = vunpack.c.l.b16 %v919
  %v4903 = vunpack.c.l.b16 %v920
  %v4904 = vunpack.c.l.b16 %v921
  %v4905 = vunpack.c.l.b16 %v922
  %v4906 = vunpack.c.l.b16 %v923
  %v4907 = vunpack.c.l.b16 %v924
  %v4908 = vunpack.c.l.b16 %v925
  %v4909 = vunpack.c.l.b16 %v926
  %v4910 = vunpack.c.l.b16 %v927
  %v4911 = vunpack.c.l.b16 %v928
  %v4912 = vunpack.c.l.b16 %v929
  %v4913 = vunpack.c.l.b16 %v930
  %v4914 = vunpack.c.l.b16 %v931
  %v4915 = vunpack.c.l.b16 %v932
  %v4916 = vunpack.c.l.b16 %v933
  %v4917 = vunpack.c.l.b16 %v934
  %v4918 = vunpack.c.l.b16 %v935
  %v4919 = vunpack.c.l.b16 %v936
  %v4920 = vunpack.c.l.b16 %v937
  %v4921 = vunpack.c.l.b16 %v938
  %v4922 = vunpack.c.l.b16 %v939
  %v4923 = vunpack.c.l.b16 %v940
  %v4924 = vunpack.c.l.b16 %v941
  %v4925 = vunpack.c.l.b16 %v942
  %v4926 = vunpack.c.l.b16 %v943
  %v4927 = vunpack.c.l.b16 %v944
  %v4928 = vunpack.c.l.b16 %v945
  %v4929 = vunpack.c.l.b16 %v946
  %v4930 = vunpack.c.l.b16 %v947
  %v4931 = vunpack.c.l.b16 %v948
  %v4932 = vunpack.c.l.b16 %v949
  %v4933 = vunpack.c.l.b16 %v950
  %v4934 = vunpack.c.l.b16 %v951
  %v4935 = vunpack.c.l.b16 %v952
  %v4936 = vunpack.c.l.b16 %v953
  %v4937 = vunpack.c.l.b16 %v954
  %v4938 = vunpack.c.l.b16 %v955
  %v4939 = vunpack.c.l.b16 %v956
  %v4940 = vunpack.c.l.b16 %v957
  %v4941 = vunpack.c.l.b16 %v958
  %v4942 = vunpack.c.l.b16 %v959
  %v4943 = vunpack.c.l.b16 %v960
  %v4944 = vunpack.c.l.b16 %v961
  %v4945 = vunpack.c.l.b16 %v962
  %v4946 = vunpack.c.l.b16 %v963
  %v4947 = vunpack.c.l.b16 %v964
  %v4948 = vunpack.c.l.b16 %v965
  %v4949 = vunpack.c.l.b16 %v966
  %v4950 = vunpack.c.l.b16 %v967
  %v4951 = vunpack.c.l.b16 %v968
  %v4952 = vunpack.c.l.b16 %v969
  %v4953 = vunpack.c.l.b16 %v970
  %v4954 = vunpack.c.l.b16 %v971
  %v4955 = vunpack.c.l.b16 %v972
  %v4956 = vunpack.c.l.b16 %v973
  %v4957 = vunpack.c.l.b16 %v974
  %v4958 = vunpack.c.l.b16 %v975
  %v4959 = vunpack.c.l.b16 %v976
  %v4960 = vunpack.c.l.b16 %v977
  %v4961 = vunpack.c.l.b16 %v978
  %v4962 = vunpack.c.l.b16 %v979
  %v4963 = vunpack.c.l.b16 %v980
  %v4964 = vunpack.c.l.b16 %v981
  %v4965 = vunpack.c.l.b16 %v982
  %v4966 = vunpack.c.l.b16 %v983
  %v4967 = vunpack.c.l.b16 %v984
  %v4968 = vunpack.c.l.b16 %v985
  %v4969 = vunpack.c.l.b16 %v986
  %v4970 = vunpack.c.l.b16 %v987
  %v4971 = vunpack.c.l.b16 %v988
  %v4972 = vunpack.c.l.b16 %v989
  %v4973 = vunpack.c.l.b16 %v990
  %v4974 = vunpack.c.l.b16 %v991
  %v4975 = vunpack.c.l.b16 %v992
  %v4976 = vunpack.c.l.b16 %v993
  %v4977 = vunpack.c.l.b16 %v994
  %v4978 = vunpack.c.l.b16 %v995
  %v4979 = vunpack.c.l.b16 %v996
  %v4980 = vunpack.c.l.b16 %v997
  %v4981 = vunpack.c.l.b16 %v998
  %v4982 = vunpack.c.l.b16 %v999
  %v4983 = vunpack.c.l.b16 %v1000
  %v4984 = vunpack.c.l.b16 %v1001
  %v4985 = vunpack.c.l.b16 %v1002
  %v4986 = vunpack.c.l.b16 %v1003
  %v4987 = vunpack.c.l.b16 %v1004
  %v4988 = vunpack.c.l.b16 %v1005
  %v4989 = vunpack.c.l.b16 %v1006
  %v4990 = vunpack.c.l.b16 %v1007
  %v4991 = vunpack.c.l.b16 %v1008
  %v4992 = vunpack.c.l.b16 %v1009
  %v4993 = vunpack.c.l.b16 %v1010
  %v4994 = vunpack.c.l.b16 %v1011
  %v4995 = vunpack.c.l.b16 %v1012
  %v4996 = vunpack.c.l.b16 %v1013
  %v4997 = vunpack.c.l.b16 %v1014
  %v4998 = vunpack.c.l.b16 %v1015
  %v4999 = vunpack.c.l.b16 %v1016
  %v5000 = vunpack.c.l.b16 %v1017
  %v5001 = vunpack.c.l.b16 %v1018
  %v5002 = vunpack.c.l.b16 %v1019
  %v5003 = vunpack.c.l.b16 %v1020
  %v5004 = vunpack.c.l.b16 %v1021
  %v5005 = vunpack.c.l.b16 %v1022
  %v5006 = vunpack.c.l.b16 %v1023
  %v5007 = vunpack.c.l.b16 %v1024
  %v5008 = vunpack.c.l.b16 %v1025
  %v5009 = vunpack.c.l.b16 %v1026
  %v5010 = vunpack.c.l.b16 %v1027
  %v5011 = vunpack.c.l.b16 %v1028
  %v5012 = vunpack.c.l.b16 %v1029
  %v5013 = vunpack.c.l.b16 %v1030
  %v5014 = vunpack.c.l.b16 %v1031
  %v5015 = vunpack.c.l.b16 %v1032
  %v5016 = vunpack.c.l.b16 %v1033
  %v5017 = vunpack.c.l.b16 %v1034
  %v5018 = vunpack.c.l.b16 %v1035
  %v5019 = vunpack.c.l.b16 %v1036
  %v5020 = vunpack.c.l.b16 %v1037
  %v5021 = vunpack.c.l.b16 %v1038
  %v5022 = vunpack.c.l.b16 %v1039
  %v5023 = vunpack.c.l.b16 %v1040
  %v5024 = vunpack.c.l.b16 %v1041
  %v5025 = vunpack.c.l.b16 %v1042
  %v5026 = vunpack.c.l.b16 %v1043
  %v5027 = vunpack.c.l.b16 %v1044
  %v5028 = vunpack.c.l.b16 %v1045
  %v5029 = vunpack.c.l.b16 %v1046
  %v5030 = vunpack.c.l.b16 %v1047
  %v5031 = vunpack.c.l.b16 %v1048
  %v5032 = vunpack.c.l.b16 %v1049
  %v5033 = vunpack.c.l.b16 %v1050
  %v5034 = vunpack.c.l.b16 %v1051
  %v5035 = vunpack.c.l.b16 %v1052
  %v5036 = vunpack.c.l.b16 %v1053
  %v5037 = vunpack.c.l.b16 %v1054
  %v5038 = vunpack.c.l.b16 %v1055
  %v5039 = vunpack.c.l.b16 %v1056
  %v5040 = vunpack.c.l.b16 %v1057
  %v5041 = vunpack.c.l.b16 %v1058
  %v5042 = vunpack.c.l.b16 %v1059
  %v5043 = vunpack.c.l.b16 %v1060
  %v5044 = vunpack.c.l.b16 %v1061
  %v5045 = vunpack.c.l.b16 %v1062
  %v5046 = vunpack.c.l.b16 %v1063
  %v5047 = vunpack.c.l.b16 %v1064
  %v5048 = vunpack.c.l.b16 %v1065
  %v5049 = vunpack.c.l.b16 %v1066
  %v5050 = vunpack.c.l.b16 %v1067
  %v5051 = vunpack.c.l.b16 %v1068
  %v5052 = vunpack.c.l.b16 %v1069
  %v5053 = vunpack.c.l.b16 %v1070
  %v5054 = vunpack.c.l.b16 %v1071
  %v5055 = vunpack.c.l.b16 %v1072
  %v5056 = vunpack.c.l.b16 %v1073
  %v5057 = vunpack.c.l.b16 %v1074
  %v5058 = vunpack.c.l.b16 %v1075
  %v5059 = vunpack.c.l.b16 %v1076
  %v5060 = vunpack.c.l.b16 %v1077
  %v5061 = vunpack.c.l.b16 %v1078
  %v5062 = vunpack.c.l.b16 %v1079
  %v5063 = vunpack.c.l.b16 %v1080
  %v5064 = vunpack.c.l.b16 %v1081
  %v5065 = vunpack.c.l.b16 %v1082
  %v5066 = vunpack.c.l.b16 %v1083
  %v5067 = vunpack.c.l.b16 %v1084
  %v5068 = vunpack.c.l.b16 %v1085
  %v5069 = vunpack.c.l.b16 %v1086
  %v5070 = vunpack.c.l.b16 %v1087
  %v5071 = vunpack.c.l.b16 %v1088
  %v5072 = vunpack.c.l.b16 %v1089
  %v5073 = vunpack.c.l.b16 %v1090
  %v5074 = vunpack.c.l.b16 %v1091
  %v5075 = vunpack.c.l.b16 %v1092
  %v5076 = vunpack.c.l.b16 %v1093
  %v5077 = vunpack.c.l.b16 %v1094
  %v5078 = vunpack.c.l.b16 %v1095
  %v5079 = vunpack.c.l.b16 %v1096
  %v5080 = vunpack.c.l.b16 %v1097
  %v5081 = vunpack.c.l.b16 %v1098
  %v5082 = vunpack.c.l.b16 %v1099
  %v5083 = vunpack.c.l.b16 %v1100
  %v5084 = vunpack.c.l.b16 %v1101
  %v5085 = vunpack.c.l.b16 %v1102
  %v5086 = vunpack.c.l.b16 %v1103
  %v5087 = vunpack.c.l.b16 %v1104
  %v5088 = vunpack.c.l.b16 %v1105
  %v5089 = vunpack.c.l.b16 %v1106
  %v5090 = vunpack.c.l.b16 %v1107
  %v5091 = vunpack.c.l.b16 %v1108
  %v5092 = vunpack.c.l.b16 %v1109
  %v5093 = vunpack.c.l.b16 %v1110
  %v5094 = vunpack.c.l.b16 %v1111
  %v5095 = vunpack.c.l.b16 %v1112
  %v5096 = vunpack.c.l.b16 %v1113
  %v5097 = vunpack.c.l.b16 %v1114
  %v5098 = vunpack.c.l.b16 %v1115
  %v5099 = vunpack.c.l.b16 %v1116
  %v5100 = vunpack.c.l.b16 %v1117
  %v5101 = vunpack.c.l.b16 %v1118
  %v5102 = vunpack.c.l.b16 %v1119
  %v5103 = vunpack.c.l.b16 %v1120
  %v5104 = vunpack.c.l.b16 %v1121
  %v5105 = vunpack.c.l.b16 %v1122
  %v5106 = vunpack.c.l.b16 %v1123
  %v5107 = vunpack.c.l.b16 %v1124
  %v5108 = vunpack.c.l.b16 %v1125
  %v5109 = vunpack.c.l.b16 %v1126
  %v5110 = vunpack.c.l.b16 %v1127
  %v5111 = vunpack.c.l.b16 %v1128
  %v5112 = vunpack.c.l.b16 %v1129
  %v5113 = vunpack.c.l.b16 %v1130
  %v5114 = vunpack.c.l.b16 %v1131
  %v5115 = vunpack.c.l.b16 %v1132
  %v5116 = vunpack.c.l.b16 %v1133
  %v5117 = vunpack.c.l.b16 %v1134
  %v5118 = vunpack.c.l.b16 %v1135
  %v5119 = vunpack.c.l.b16 %v1136
  %v5120 = vunpack.c.l.b16 %v1137
  %v5121 = vunpack.c.l.b16 %v1138
  %v5122 = vunpack.c.l.b16 %v1139
  %v5123 = vunpack.c.l.b16 %v1140
  %v5124 = vunpack.c.l.b16 %v1141
  %v5125 = vunpack.c.l.b16 %v1142
  %v5126 = vunpack.c.l.b16 %v1143
  %v5127 = vunpack.c.l.b16 %v1144
  %v5128 = vunpack.c.l.b16 %v1145
  %v5129 = vunpack.c.l.b16 %v1146
  %v5130 = vunpack.c.l.b16 %v1147
  %v5131 = vunpack.c.l.b16 %v1148
  %v5132 = vunpack.c.l.b16 %v1149
  %v5133 = vunpack.c.l.b16 %v1150
  %v5134 = vunpack.c.l.b16 %v1151
  %v5135 = vunpack.c.l.b16 %v1152
  %v5136 = vunpack.c.l.b16 %v1153
  %v5137 = vunpack.c.l.b16 %v1154
  %v5138 = vunpack.c.l.b16 %v1155
  %v5139 = vunpack.c.l.b16 %v1156
  %v5140 = vunpack.c.l.b16 %v1157
  %v5141 = vunpack.c.l.b16 %v1158
  %v5142 = vunpack.c.l.b16 %v1159
  %v5143 = vunpack.c.l.b16 %v1160
  %v5144 = vunpack.c.l.b16 %v1161
  %v5145 = vunpack.c.l.b16 %v1162
  %v5146 = vunpack.c.l.b16 %v1163
  %v5147 = vunpack.c.l.b16 %v1164
  %v5148 = vunpack.c.l.b16 %v1165
  %v5149 = vunpack.c.l.b16 %v1166
  %v5150 = vunpack.c.l.b16 %v1167
  %v5151 = vunpack.c.l.b16 %v1168
  %v5152 = vunpack.c.l.b16 %v1169
  %v5153 = vunpack.c.l.b16 %v1170
  %v5154 = vunpack.c.l.b16 %v1171
  %v5155 = vunpack.c.l.b16 %v1172
  %v5156 = vunpack.c.l.b16 %v1173
  %v5157 = vunpack.c.l.b16 %v1174
  %v5158 = vunpack.c.l.b16 %v1175
  %v5159 = vunpack.c.l.b16 %v1176
  %v5160 = vunpack.c.l.b16 %v1177
  %v5161 = vunpack.c.l.b16 %v1178
  %v5162 = vunpack.c.l.b16 %v1179
  %v5163 = vunpack.c.l.b16 %v1180
  %v5164 = vunpack.c.l.b16 %v1181
  %v5165 = vunpack.c.l.b16 %v1182
  %v5166 = vunpack.c.l.b16 %v1183
  %v5167 = vunpack.c.l.b16 %v1184
  %v5168 = vunpack.c.l.b16 %v1185
  %v5169 = vunpack.c.l.b16 %v1186
  %v5170 = vunpack.c.l.b16 %v1187
  %v5171 = vunpack.c.l.b16 %v1188
  %v5172 = vunpack.c.l.b16 %v1189
  %v5173 = vunpack.c.l.b16 %v1190
  %v5174 = vunpack.c.l.b16 %v1191
  %v5175 = vunpack.c.l.b16 %v1192
  %v5176 = vunpack.c.l.b16 %v1193
  %v5177 = vunpack.c.l.b16 %v1194
  %v5178 = vunpack.c.l.b16 %v1195
  %v5179 = vunpack.c.l.b16 %v1196
  %v5180 = vunpack.c.l.b16 %v1197
  %v5181 = vunpack.c.l.b16 %v1198
  %v5182 = vunpack.c.l.b16 %v1199
  %v5183 = vunpack.c.l.b16 %v1200
  %v5184 = vunpack.c.l.b16 %v1201
  %v5185 = vunpack.c.l.b16 %v1202
  %v5186 = vunpack.c.l.b16 %v1203
  %v5187 = vunpack.c.l.b16 %v1204
  %v5188 = vunpack.c.l.b16 %v1205
  %v5189 = vunpack.c.l.b16 %v1206
  %v5190 = vunpack.c.l.b16 %v1207
  %v5191 = vunpack.c.l.b16 %v1208
  %v5192 = vunpack.c.l.b16 %v1209
  %v5193 = vunpack.c.l.b16 %v1210
  %v5194 = vunpack.c.l.b16 %v1211
  %v5195 = vunpack.c.l.b16 %v1212
  %v5196 = vunpack.c.l.b16 %v1213
  %v5197 = vunpack.c.l.b16 %v1214
  %v5198 = vunpack.c.l.b16 %v1215
  %v5199 = vunpack.c.l.b16 %v1216
  %v5200 = vunpack.c.l.b16 %v1217
  %v5201 = vunpack.c.l.b16 %v1218
  %v5202 = vunpack.c.l.b16 %v1219
  %v5203 = vunpack.c.l.b16 %v1220
  %v5204 = vunpack.c.l.b16 %v1221
  %v5205 = vunpack.c.l.b16 %v1222
  %v5206 = vunpack.c.l.b16 %v1223
  %v5207 = vunpack.c.l.b16 %v1224
  %v5208 = vunpack.c.l.b16 %v1225
  %v5209 = vunpack.c.l.b16 %v1226
  %v5210 = vunpack.c.l.b16 %v1227
  %v5211 = vunpack.c.l.b16 %v1228
  %v5212 = vunpack.c.l.b16 %v1229
  %v5213 = vunpack.c.l.b16 %v1230
  %v5214 = vunpack.c.l.b16 %v1231
  %v5215 = vunpack.c.l.b16 %v1232
  %v5216 = vunpack.c.l.b16 %v1233
  %v5217 = vunpack.c.l.b16 %v1234
  %v5218 = vunpack.c.l.b16 %v1235
  %v5219 = vunpack.c.l.b16 %v1236
  %v5220 = vunpack.c.l.b16 %v1237
  %v5221 = vunpack.c.l.b16 %v1238
  %v5222 = vunpack.c.l.b16 %v1239
  %v5223 = vunpack.c.l.b16 %v1240
  %v5224 = vunpack.c.l.b16 %v1241
  %v5225 = vunpack.c.l.b16 %v1242
  %v5226 = vunpack.c.l.b16 %v1243
  %v5227 = vunpack.c.l.b16 %v1244
  %v5228 = vunpack.c.l.b16 %v1245
  %v5229 = vunpack.c.l.b16 %v1246
  %v5230 = vunpack.c.l.b16 %v1247
  %v5231 = vunpack.c.l.b16 %v1248
  %v5232 = vunpack.c.l.b16 %v1249
  %v5233 = vunpack.c.l.b16 %v1250
  %v5234 = vunpack.c.l.b16 %v1251
  %v5235 = vunpack.c.l.b16 %v1252
  %v5236 = vunpack.c.l.b16 %v1253
  %v5237 = vunpack.c.l.b16 %v1254
  %v5238 = vunpack.c.l.b16 %v1255
  %v5239 = vunpack.c.l.b16 %v1256
  %v5240 = vunpack.c.l.b16 %v1257
  %v5241 = vunpack.c.l.b16 %v1258
  %v5242 = vunpack.c.l.b16 %v1259
  %v5243 = vunpack.c.l.b16 %v1260
  %v5244 = vunpack.c.l.b16 %v1261
  %v5245 = vunpack.c.l.b16 %v1262
  %v5246 = vunpack.c.l.b16 %v1263
  %v5247 = vunpack.c.l.b16 %v1264
  %v5248 = vunpack.c.l.b16 %v1265
  %v5249 = vunpack.c.l.b16 %v1266
  %v5250 = vunpack.c.l.b16 %v1267
  %v5251 = vunpack.c.l.b16 %v1268
  %v5252 = vunpack.c.l.b16 %v1269
  %v5253 = vunpack.c.l.b16 %v1270
  %v5254 = vunpack.c.l.b16 %v1271
  %v5255 = vunpack.c.l.b16 %v1272
  %v5256 = vunpack.c.l.b16 %v1273
  %v5257 = vunpack.c.l.b16 %v1274
  %v5258 = vunpack.c.l.b16 %v1275
  %v5259 = vunpack.c.l.b16 %v1276
  %v5260 = vunpack.c.l.b16 %v1277
  %v5261 = vunpack.c.l.b16 %v1278
  %v5262 = vunpack.c.l.b16 %v1279
  %v5263 = vunpack.c.l.b16 %v1280
  %v5264 = vunpack.c.l.b16 %v1281
  %v5265 = vunpack.c.l.b16 %v1282
  %v5266 = vunpack.c.l.b16 %v1283
  %v5267 = vunpack.c.l.b16 %v1284
  %v5268 = vunpack.c.l.b16 %v1285
  %v5269 = vunpack.c.l.b16 %v1286
  %v5270 = vunpack.c.l.b16 %v1287
  %v5271 = vunpack.c.l.b16 %v1288
  %v5272 = vunpack.c.l.b16 %v1289
  %v5273 = vunpack.c.l.b16 %v1290
  %v5274 = vunpack.c.l.b16 %v1291
  %v5275 = vunpack.c.l.b16 %v1292
  %v5276 = vunpack.c.l.b16 %v1293
  %v5277 = vunpack.c.l.b16 %v1294
  %v5278 = vunpack.c.l.b16 %v1295
  %v5279 = vunpack.c.l.b16 %v1296
  %v5280 = vunpack.c.l.b16 %v1297
  %v5281 = vunpack.c.l.b16 %v1298
  %v5282 = vunpack.c.l.b16 %v1299
  %v5283 = vunpack.c.l.b16 %v1300
  %v5284 = vunpack.c.l.b16 %v1301
  %v5285 = vunpack.c.l.b16 %v1302
  %v5286 = vunpack.c.l.b16 %v1303
  %v5287 = vunpack.c.l.b16 %v1304
  %v5288 = vunpack.c.l.b16 %v1305
  %v5289 = vunpack.c.l.b16 %v1306
  %v5290 = vunpack.c.l.b16 %v1307
  %v5291 = vunpack.c.l.b16 %v1308
  %v5292 = vunpack.c.l.b16 %v1309
  %v5293 = vunpack.c.l.b16 %v1310
  %v5294 = vunpack.c.l.b16 %v1311
  %v5295 = vunpack.c.l.b16 %v1312
  %v5296 = vunpack.c.l.b16 %v1313
  %v5297 = vunpack.c.l.b16 %v1314
  %v5298 = vunpack.c.l.b16 %v1315
  %v5299 = vunpack.c.l.b16 %v1316
  %v5300 = vunpack.c.l.b16 %v1317
  %v5301 = vunpack.c.l.b16 %v1318
  %v5302 = vunpack.c.l.b16 %v1319
  %v5303 = vunpack.c.l.b16 %v1320
  %v5304 = vunpack.c.l.b16 %v1321
  %v5305 = vunpack.c.l.b16 %v1322
  %v5306 = vunpack.c.l.b16 %v1323
  %v5307 = vunpack.c.l.b16 %v1324
  %v5308 = vunpack.c.l.b16 %v1325
  %v5309 = vunpack.c.l.b16 %v1326
  %v5310 = vunpack.c.l.b16 %v1327
  %v5311 = vunpack.c.l.b16 %v1328
  %v5312 = vunpack.c.l.b16 %v1329
  %v5313 = vunpack.c.l.b16 %v1330
  %v5314 = vunpack.c.l.b16 %v1331
  %v5315 = vunpack.c.l.b16 %v1332
  %v5316 = vunpack.c.l.b16 %v1333
  %v5317 = vunpack.c.l.b16 %v1334
  %v5318 = vunpack.c.l.b16 %v1335
  %v5319 = vunpack.c.l.b16 %v1336
  %v5320 = vunpack.c.l.b16 %v1337
  %v5321 = vunpack.c.l.b16 %v1338
  %v5322 = vunpack.c.l.b16 %v1339
  %v5323 = vunpack.c.l.b16 %v1340
  %v5324 = vunpack.c.l.b16 %v1341
  %v5325 = vunpack.c.l.b16 %v1342
  %v5326 = vunpack.c.l.b16 %v1343
  %v5327 = vunpack.c.l.b16 %v1344
  %v5328 = vunpack.c.l.b16 %v1345
  %v5329 = vunpack.c.l.b16 %v1346
  %v5330 = vunpack.c.l.b16 %v1347
  %v5331 = vunpack.c.l.b16 %v1348
  %v5332 = vunpack.c.l.b16 %v1349
  %v5333 = vunpack.c.l.b16 %v1350
  %v5334 = vunpack.c.l.b16 %v1351
  %v5335 = vunpack.c.l.b16 %v1352
  %v5336 = vunpack.c.l.b16 %v1353
  %v5337 = vunpack.c.l.b16 %v1354
  %v5338 = vunpack.c.l.b16 %v1355
  %v5339 = vunpack.c.l.b16 %v1356
  %v5340 = vunpack.c.l.b16 %v1357
  %v5341 = vunpack.c.l.b16 %v1358
  %v5342 = vunpack.c.l.b16 %v1359
  %v5343 = vunpack.c.l.b16 %v1360
  %v5344 = vunpack.c.l.b16 %v1361
  %v5345 = vunpack.c.l.b16 %v1362
  %v5346 = vunpack.c.l.b16 %v1363
  %v5347 = vunpack.c.l.b16 %v1364
  %v5348 = vunpack.c.l.b16 %v1365
  %v5349 = vunpack.c.l.b16 %v1366
  %v5350 = vunpack.c.l.b16 %v1367
  %v5351 = vunpack.c.l.b16 %v1368
  %v5352 = vunpack.c.l.b16 %v1369
  %v5353 = vunpack.c.l.b16 %v1370
  %v5354 = vunpack.c.l.b16 %v1371
  %v5355 = vunpack.c.l.b16 %v1372
  %v5356 = vunpack.c.l.b16 %v1373
  %v5357 = vunpack.c.l.b16 %v1374
  %v5358 = vunpack.c.l.b16 %v1375
  %v5359 = vunpack.c.l.b16 %v1376
  %v5360 = vunpack.c.l.b16 %v1377
  %v5361 = vunpack.c.l.b16 %v1378
  %v5362 = vunpack.c.l.b16 %v1379
  %v5363 = vunpack.c.l.b16 %v1380
  %v5364 = vunpack.c.l.b16 %v1381
  %v5365 = vunpack.c.l.b16 %v1382
  %v5366 = vunpack.c.l.b16 %v1383
  %v5367 = vunpack.c.l.b16 %v1384
  %v5368 = vunpack.c.l.b16 %v1385
  %v5369 = vunpack.c.l.b16 %v1386
  %v5370 = vunpack.c.l.b16 %v1387
  %v5371 = vunpack.c.l.b16 %v1388
  %v5372 = vunpack.c.l.b16 %v1389
  %v5373 = vunpack.c.l.b16 %v1390
  %v5374 = vunpack.c.l.b16 %v1391
  %v5375 = vunpack.c.l.b16 %v1392
  %v5376 = vunpack.c.l.b16 %v1393
  %v5377 = vunpack.c.l.b16 %v1394
  %v5378 = vunpack.c.l.b16 %v1395
  %v5379 = vunpack.c.l.b16 %v1396
  %v5380 = vunpack.c.l.b16 %v1397
  %v5381 = vunpack.c.l.b16 %v1398
  %v5382 = vunpack.c.l.b16 %v1399
  %v5383 = vunpack.c.l.b16 %v1400
  %v5384 = vunpack.c.l.b16 %v1401
  %v5385 = vunpack.c.l.b16 %v1402
  %v5386 = vunpack.c.l.b16 %v1403
  %v5387 = vunpack.c.l.b16 %v1404
  %v5388 = vunpack.c.l.b16 %v1405
  %v5389 = vunpack.c.l.b16 %v1406
  %v5390 = vunpack.c.l.b16 %v1407
  %v5391 = vunpack.c.l.b16 %v1408
  %v5392 = vunpack.c.l.b16 %v1409
  %v5393 = vunpack.c.l.b16 %v1410
  %v5394 = vunpack.c.l.b16 %v1411
  %v5395 = vunpack.c.l.b16 %v1412
  %v5396 = vunpack.c.l.b16 %v1413
  %v5397 = vunpack.c.l.b16 %v1414
  %v5398 = vunpack.c.l.b16 %v1415
  %v5399 = vunpack.c.l.b16 %v1416
  %v5400 = vunpack.c.l.b16 %v1417
  %v5401 = vunpack.c.l.b16 %v1418
  %v5402 = vunpack.c.l.b16 %v1419
  %v5403 = vunpack.c.l.b16 %v1420
  %v5404 = vunpack.c.l.b16 %v1421
  %v5405 = vunpack.c.l.b16 %v1422
  %v5406 = vunpack.c.l.b16 %v1423
  %v5407 = vunpack.c.l.b16 %v1424
  %v5408 = vunpack.c.l.b16 %v1425
  %v5409 = vunpack.c.l.b16 %v1426
  %v5410 = vunpack.c.l.b16 %v1427
  %v5411 = vunpack.c.l.b16 %v1428
  %v5412 = vunpack.c.l.b16 %v1429
  %v5413 = vunpack.c.l.b16 %v1430
  %v5414 = vunpack.c.l.b16 %v1431
  %v5415 = vunpack.c.l.b16 %v1432
  %v5416 = vunpack.c.l.b16 %v1433
  %v5417 = vunpack.c.l.b16 %v1434
  %v5418 = vunpack.c.l.b16 %v1435
  %v5419 = vunpack.c.l.b16 %v1436
  %v5420 = vunpack.c.l.b16 %v1437
  %v5421 = vunpack.c.l.b16 %v1438
  %v5422 = vunpack.c.l.b16 %v1439
  %v5423 = vunpack.c.l.b16 %v1440
  %v5424 = vunpack.c.l.b16 %v1441
  %v5425 = vunpack.c.l.b16 %v1442
  %v5426 = vunpack.c.l.b16 %v1443
  %v5427 = vunpack.c.l.b16 %v1444
  %v5428 = vunpack.c.l.b16 %v1445
  %v5429 = vunpack.c.l.b16 %v1446
  %v5430 = vunpack.c.l.b16 %v1447
  %v5431 = vunpack.c.l.b16 %v1448
  %v5432 = vunpack.c.l.b16 %v1449
  %v5433 = vunpack.c.l.b16 %v1450
  %v5434 = vunpack.c.l.b16 %v1451
  %v5435 = vunpack.c.l.b16 %v1452
  %v5436 = vunpack.c.l.b16 %v1453
  %v5437 = vunpack.c.l.b16 %v1454
  %v5438 = vunpack.c.l.b16 %v1455
  %v5439 = vunpack.c.l.b16 %v1456
  %v5440 = vunpack.c.l.b16 %v1457
  %v5441 = vunpack.c.l.b16 %v1458
  %v5442 = vunpack.c.l.b16 %v1459
  %v5443 = vunpack.c.l.b16 %v1460
  %v5444 = vunpack.c.l.b16 %v1461
  %v5445 = vunpack.c.l.b16 %v1462
  %v5446 = vunpack.c.l.b16 %v1463
  %v5447 = vunpack.c.l.b16 %v1464
  %v5448 = vunpack.c.l.b16 %v1465
  %v5449 = vunpack.c.l.b16 %v1466
  %v5450 = vunpack.c.l.b16 %v1467
  %v5451 = vunpack.c.l.b16 %v1468
  %v5452 = vunpack.c.l.b16 %v1469
  %v5453 = vunpack.c.l.b16 %v1470
  %v5454 = vunpack.c.l.b16 %v1471
  %v5455 = vunpack.c.l.b16 %v1472
  %v5456 = vunpack.c.l.b16 %v1473
  %v5457 = vunpack.c.l.b16 %v1474
  %v5458 = vunpack.c.l.b16 %v1475
  %v5459 = vunpack.c.l.b16 %v1476
  %v5460 = vunpack.c.l.b16 %v1477
  %v5461 = vunpack.c.l.b16 %v1478
  %v5462 = vunpack.c.l.b16 %v1479
  %v5463 = vunpack.c.l.b16 %v1480
  %v5464 = vunpack.c.l.b16 %v1481
  %v5465 = vunpack.c.l.b16 %v1482
  %v5466 = vunpack.c.l.b16 %v1483
  %v5467 = vunpack.c.l.b16 %v1484
  %v5468 = vunpack.c.l.b16 %v1485
  %v5469 = vunpack.c.l.b16 %v1486
  %v5470 = vunpack.c.l.b16 %v1487
  %v5471 = vunpack.c.l.b16 %v1488
  %v5472 = vunpack.c.l.b16 %v1489
  %v5473 = vunpack.c.l.b16 %v1490
  %v5474 = vunpack.c.l.b16 %v1491
  %v5475 = vunpack.c.l.b16 %v1492
  %v5476 = vunpack.c.l.b16 %v1493
  %v5477 = vunpack.c.l.b16 %v1494
  %v5478 = vunpack.c.l.b16 %v1495
  %v5479 = vunpack.c.l.b16 %v1496
  %v5480 = vunpack.c.l.b16 %v1497
  %v5481 = vunpack.c.l.b16 %v1498
  %v5482 = vunpack.c.l.b16 %v1499
  %v5483 = vunpack.c.l.b16 %v1500
  %v5484 = vunpack.c.l.b16 %v1501
  %v5485 = vunpack.c.l.b16 %v1502
  %v5486 = vunpack.c.l.b16 %v1503
  %v5487 = vunpack.c.l.b16 %v1504
  %v5488 = vunpack.c.l.b16 %v1505
  %v5489 = vunpack.c.l.b16 %v1506
  %v5490 = vunpack.c.l.b16 %v1507
  %v5491 = vunpack.c.l.b16 %v1508
  %v5492 = vunpack.c.l.b16 %v1509
  %v5493 = vunpack.c.l.b16 %v1510
  %v5494 = vunpack.c.l.b16 %v1511
  %v5495 = vunpack.c.l.b16 %v1512
  %v5496 = vunpack.c.l.b16 %v1513
  %v5497 = vunpack.c.l.b16 %v1514
  %v5498 = vunpack.c.l.b16 %v1515
  %v5499 = vunpack.c.l.b16 %v1516
  %v5500 = vunpack.c.l.b16 %v1517
  %v5501 = vunpack.c.l.b16 %v1518
  %v5502 = vunpack.c.l.b16 %v1519
  %v5503 = vunpack.c.l.b16 %v1520
  %v5504 = vunpack.c.l.b16 %v1521
  %v5505 = vunpack.c.l.b16 %v1522
  %v5506 = vunpack.c.l.b16 %v1523
  %v5507 = vunpack.c.l.b16 %v1524
  %v5508 = vunpack.c.l.b16 %v1525
  %v5509 = vunpack.c.l.b16 %v1526
  %v5510 = vunpack.c.l.b16 %v1527
  %v5511 = vunpack.c.l.b16 %v1528
  %v5512 = vunpack.c.l.b16 %v1529
  %v5513 = vunpack.c.l.b16 %v1530
  %v5514 = vunpack.c.l.b16 %v1531
  %v5515 = vunpack.c.l.b16 %v1532
  %v5516 = vunpack.c.l.b16 %v1533
  %v5517 = vunpack.c.l.b16 %v1534
  %v5518 = vunpack.c.l.b16 %v1535
  %v5519 = vunpack.c.l.b16 %v1536
  %v5520 = vunpack.c.l.b16 %v1537
  %v5521 = vunpack.c.l.b16 %v1538
  %v5522 = vunpack.c.l.b16 %v1539
  %v5523 = vunpack.c.l.b16 %v1540
  %v5524 = vunpack.c.l.b16 %v1541
  %v5525 = vunpack.c.l.b16 %v1542
  %v5526 = vunpack.c.l.b16 %v1543
  %v5527 = vunpack.c.l.b16 %v1544
  %v5528 = vunpack.c.l.b16 %v1545
  %v5529 = vunpack.c.l.b16 %v1546
  %v5530 = vunpack.c.l.b16 %v1547
  %v5531 = vunpack.c.l.b16 %v1548
  %v5532 = vunpack.c.l.b16 %v1549
  %v5533 = vunpack.c.l.b16 %v1550
  %v5534 = vunpack.c.l.b16 %v1551
  %v5535 = vunpack.c.l.b16 %v1552
  %v5536 = vunpack.c.l.b16 %v1553
  %v5537 = vunpack.c.l.b16 %v1554
  %v5538 = vunpack.c.l.b16 %v1555
  %v5539 = vunpack.c.l.b16 %v1556
  %v5540 = vunpack.c.l.b16 %v1557
  %v5541 = vunpack.c.l.b16 %v1558
  %v5542 = vunpack.c.l.b16 %v1559
  %v5543 = vunpack.c.l.b16 %v1560
  %v5544 = vunpack.c.l.b16 %v1561
  %v5545 = vunpack.c.l.b16 %v1562
  %v5546 = vunpack.c.l.b16 %v1563
  %v5547 = vunpack.c.l.b16 %v1564
  %v5548 = vunpack.c.l.b16 %v1565
  %v5549 = vunpack.c.l.b16 %v1566
  %v5550 = vunpack.c.l.b16 %v1567
  %v5551 = vunpack.c.l.b16 %v1568
  %v5552 = vunpack.c.l.b16 %v1569
  %v5553 = vunpack.c.l.b16 %v1570
  %v5554 = vunpack.c.l.b16 %v1571
  %v5555 = vunpack.c.l.b16 %v1572
  %v5556 = vunpack.c.l.b16 %v1573
  %v5557 = vunpack.c.l.b16 %v1574
  %v5558 = vunpack.c.l.b16 %v1575
  %v5559 = vunpack.c.l.b16 %v1576
  %v5560 = vunpack.c.l.b16 %v1577
  %v5561 = vunpack.c.l.b16 %v1578
  %v5562 = vunpack.c.l.b16 %v1579
  %v5563 = vunpack.c.l.b16 %v1580
  %v5564 = vunpack.c.l.b16 %v1581
  %v5565 = vunpack.c.l.b16 %v1582
  %v5566 = vunpack.c.l.b16 %v1583
  %v5567 = vunpack.c.l.b16 %v1584
  %v5568 = vunpack.c.l.b16 %v1585
  %v5569 = vunpack.c.l.b16 %v1586
  %v5570 = vunpack.c.l.b16 %v1587
  %v5571 = vunpack.c.l.b16 %v1588
  %v5572 = vunpack.c.l.b16 %v1589
  %v5573 = vunpack.c.l.b16 %v1590
  %v5574 = vunpack.c.l.b16 %v1591
  %v5575 = vunpack.c.l.b16 %v1592
  %v5576 = vunpack.c.l.b16 %v1593
  %v5577 = vunpack.c.l.b16 %v1594
  %v5578 = vunpack.c.l.b16 %v1595
  %v5579 = vunpack.c.l.b16 %v1596
  %v5580 = vunpack.c.l.b16 %v1597
  %v5581 = vunpack.c.l.b16 %v1598
  %v5582 = vunpack.c.l.b16 %v1599
  %v5583 = vunpack.c.l.b16 %v1600
  %v5584 = vunpack.c.l.b16 %v1601
  %v5585 = vunpack.c.l.b16 %v1602
  %v5586 = vunpack.c.l.b16 %v1603
  %v5587 = vunpack.c.l.b16 %v1604
  %v5588 = vunpack.c.l.b16 %v1605
  %v5589 = vunpack.c.l.b16 %v1606
  %v5590 = vunpack.c.l.b16 %v1607
  %v5591 = vunpack.c.l.b16 %v1608
  %v5592 = vunpack.c.l.b16 %v1609
  %v5593 = vunpack.c.l.b16 %v1610
  %v5594 = vunpack.c.l.b16 %v1611
  %v5595 = vunpack.c.l.b16 %v1612
  %v5596 = vunpack.c.l.b16 %v1613
  %v5597 = vunpack.c.l.b16 %v1614
  %v5598 = vunpack.c.l.b16 %v1615
  %v5599 = vunpack.c.l.b16 %v1616
  %v5600 = vunpack.c.l.b16 %v1617
  %v5601 = vunpack.c.l.b16 %v1618
  %v5602 = vunpack.c.l.b16 %v1619
  %v5603 = vunpack.c.l.b16 %v1620
  %v5604 = vunpack.c.l.b16 %v1621
  %v5605 = vunpack.c.l.b16 %v1622
  %v5606 = vunpack.c.l.b16 %v1623
  %v5607 = vunpack.c.l.b16 %v1624
  %v5608 = vunpack.c.l.b16 %v1625
  %v5609 = vunpack.c.l.b16 %v1626
  %v5610 = vunpack.c.l.b16 %v1627
  %v5611 = vunpack.c.l.b16 %v1628
  %v5612 = vunpack.c.l.b16 %v1629
  %v5613 = vunpack.c.l.b16 %v1630
  %v5614 = vunpack.c.l.b16 %v1631
  %v5615 = vunpack.c.l.b16 %v1632
  %v5616 = vunpack.c.l.b16 %v1633
  %v5617 = vunpack.c.l.b16 %v1634
  %v5618 = vunpack.c.l.b16 %v1635
  %v5619 = vunpack.c.l.b16 %v1636
  %v5620 = vunpack.c.l.b16 %v1637
  %v5621 = vunpack.c.l.b16 %v1638
  %v5622 = vunpack.c.l.b16 %v1639
  %v5623 = vunpack.c.l.b16 %v1640
  %v5624 = vunpack.c.l.b16 %v1641
  %v5625 = vunpack.c.l.b16 %v1642
  %v5626 = vunpack.c.l.b16 %v1643
  %v5627 = vunpack.c.l.b16 %v1644
  %v5628 = vunpack.c.l.b16 %v1645
  %v5629 = vunpack.c.l.b16 %v1646
  %v5630 = vunpack.c.l.b16 %v1647
  %v5631 = vunpack.c.l.b16 %v1648
  %v5632 = vunpack.c.l.b16 %v1649
  %v5633 = vunpack.c.l.b16 %v1650
  %v5634 = vunpack.c.l.b16 %v1651
  %v5635 = vunpack.c.l.b16 %v1652
  %v5636 = vunpack.c.l.b16 %v1653
  %v5637 = vunpack.c.l.b16 %v1654
  %v5638 = vunpack.c.l.b16 %v1655
  %v5639 = vunpack.c.l.b16 %v1656
  %v5640 = vunpack.c.l.b16 %v1657
  %v5641 = vunpack.c.l.b16 %v1658
  %v5642 = vunpack.c.l.b16 %v1659
  %v5643 = vunpack.c.l.b16 %v1660
  %v5644 = vunpack.c.l.b16 %v1661
  %v5645 = vunpack.c.l.b16 %v1662
  %v5646 = vunpack.c.l.b16 %v1663
  %v5647 = vunpack.c.l.b16 %v1664
  %v5648 = vunpack.c.l.b16 %v1665
  %v5649 = vunpack.c.l.b16 %v1666
  %v5650 = vunpack.c.l.b16 %v1667
  %v5651 = vunpack.c.l.b16 %v1668
  %v5652 = vunpack.c.l.b16 %v1669
  %v5653 = vunpack.c.l.b16 %v1670
  %v5654 = vunpack.c.l.b16 %v1671
  %v5655 = vunpack.c.l.b16 %v1672
  %v5656 = vunpack.c.l.b16 %v1673
  %v5657 = vunpack.c.l.b16 %v1674
  %v5658 = vunpack.c.l.b16 %v1675
  %v5659 = vunpack.c.l.b16 %v1676
  %v5660 = vunpack.c.l.b16 %v1677
  %v5661 = vunpack.c.l.b16 %v1678
  %v5662 = vunpack.c.l.b16 %v1679
  %v5663 = vunpack.c.l.b16 %v1680
  %v5664 = vunpack.c.l.b16 %v1681
  %v5665 = vunpack.c.l.b16 %v1682
  %v5666 = vunpack.c.l.b16 %v1683
  %v5667 = vunpack.c.l.b16 %v1684
  %v5668 = vunpack.c.l.b16 %v1685
  %v5669 = vunpack.c.l.b16 %v1686
  %v5670 = vunpack.c.l.b16 %v1687
  %v5671 = vunpack.c.l.b16 %v1688
  %v5672 = vunpack.c.l.b16 %v1689
  %v5673 = vunpack.c.l.b16 %v1690
  %v5674 = vunpack.c.l.b16 %v1691
  %v5675 = vunpack.c.l.b16 %v1692
  %v5676 = vunpack.c.l.b16 %v1693
  %v5677 = vunpack.c.l.b16 %v1694
  %v5678 = vunpack.c.l.b16 %v1695
  %v5679 = vunpack.c.l.b16 %v1696
  %v5680 = vunpack.c.l.b16 %v1697
  %v5681 = vunpack.c.l.b16 %v1698
  %v5682 = vunpack.c.l.b16 %v1699
  %v5683 = vunpack.c.l.b16 %v1700
  %v5684 = vunpack.c.l.b16 %v1701
  %v5685 = vunpack.c.l.b16 %v1702
  %v5686 = vunpack.c.l.b16 %v1703
  %v5687 = vunpack.c.l.b16 %v1704
  %v5688 = vunpack.c.l.b16 %v1705
  %v5689 = vunpack.c.l.b16 %v1706
  %v5690 = vunpack.c.l.b16 %v1707
  %v5691 = vunpack.c.l.b16 %v1708
  %v5692 = vunpack.c.l.b16 %v1709
  %v5693 = vunpack.c.l.b16 %v1710
  %v5694 = vunpack.c.l.b16 %v1711
  %v5695 = vunpack.c.l.b16 %v1712
  %v5696 = vunpack.c.l.b16 %v1713
  %v5697 = vunpack.c.l.b16 %v1714
  %v5698 = vunpack.c.l.b16 %v1715
  %v5699 = vunpack.c.l.b16 %v1716
  %v5700 = vunpack.c.l.b16 %v1717
  %v5701 = vunpack.c.l.b16 %v1718
  %v5702 = vunpack.c.l.b16 %v1719
  %v5703 = vunpack.c.l.b16 %v1720
  %v5704 = vunpack.c.l.b16 %v1721
  %v5705 = vunpack.c.l.b16 %v1722
  %v5706 = vunpack.c.l.b16 %v1723
  %v5707 = vunpack.c.l.b16 %v1724
  %v5708 = vunpack.c.l.b16 %v1725
  %v5709 = vunpack.c.l.b16 %v1726
  %v5710 = vunpack.c.l.b16 %v1727
  %v5711 = vunpack.c.l.b16 %v1728
  %v5712 = vunpack.c.l.b16 %v1729
  %v5713 = vunpack.c.l.b16 %v1730
  %v5714 = vunpack.c.l.b16 %v1731
  %v5715 = vunpack.c.l.b16 %v1732
  %v5716 = vunpack.c.l.b16 %v1733
  %v5717 = vunpack.c.l.b16 %v1734
  %v5718 = vunpack.c.l.b16 %v1735
  %v5719 = vunpack.c.l.b16 %v1736
  %v5720 = vunpack.c.l.b16 %v1737
  %v5721 = vunpack.c.l.b16 %v1738
  %v5722 = vunpack.c.l.b16 %v1739
  %v5723 = vunpack.c.l.b16 %v1740
  %v5724 = vunpack.c.l.b16 %v1741
  %v5725 = vunpack.c.l.b16 %v1742
  %v5726 = vunpack.c.l.b16 %v1743
  %v5727 = vunpack.c.l.b16 %v1744
  %v5728 = vunpack.c.l.b16 %v1745
  %v5729 = vunpack.c.l.b16 %v1746
  %v5730 = vunpack.c.l.b16 %v1747
  %v5731 = vunpack.c.l.b16 %v1748
  %v5732 = vunpack.c.l.b16 %v1749
  %v5733 = vunpack.c.l.b16 %v1750
  %v5734 = vunpack.c.l.b16 %v1751
  %v5735 = vunpack.c.l.b16 %v1752
  %v5736 = vunpack.c.l.b16 %v1753
  %v5737 = vunpack.c.l.b16 %v1754
  %v5738 = vunpack.c.l.b16 %v1755
  %v5739 = vunpack.c.l.b16 %v1756
  %v5740 = vunpack.c.l.b16 %v1757
  %v5741 = vunpack.c.l.b16 %v1758
  %v5742 = vunpack.c.l.b16 %v1759
  %v5743 = vunpack.c.l.b16 %v1760
  %v5744 = vunpack.c.l.b16 %v1761
  %v5745 = vunpack.c.l.b16 %v1762
  %v5746 = vunpack.c.l.b16 %v1763
  %v5747 = vunpack.c.l.b16 %v1764
  %v5748 = vunpack.c.l.b16 %v1765
  %v5749 = vunpack.c.l.b16 %v1766
  %v5750 = vunpack.c.l.b16 %v1767
  %v5751 = vunpack.c.l.b16 %v1768
  %v5752 = vunpack.c.l.b16 %v1769
  %v5753 = vunpack.c.l.b16 %v1770
  %v5754 = vunpack.c.l.b16 %v1771
  %v5755 = vunpack.c.l.b16 %v1772
  %v5756 = vunpack.c.l.b16 %v1773
  %v5757 = vunpack.c.l.b16 %v1774
  %v5758 = vunpack.c.l.b16 %v1775
  %v5759 = vunpack.c.l.b16 %v1776
  %v5760 = vunpack.c.l.b16 %v1777
  %v5761 = vunpack.c.l.b16 %v1778
  %v5762 = vunpack.c.l.b16 %v1779
  %v5763 = vunpack.c.l.b16 %v1780
  %v5764 = vunpack.c.l.b16 %v1781
  %v5765 = vunpack.c.l.b16 %v1782
  %v5766 = vunpack.c.l.b16 %v1783
  %v5767 = vunpack.c.l.b16 %v1784
  %v5768 = vunpack.c.l.b16 %v1785
  %v5769 = vunpack.c.l.b16 %v1786
  %v5770 = vunpack.c.l.b16 %v1787
  %v5771 = vunpack.c.l.b16 %v1788
  %v5772 = vunpack.c.l.b16 %v1789
  %v5773 = vunpack.c.l.b16 %v1790
  %v5774 = vunpack.c.l.b16 %v1791
  %v5775 = vunpack.c.l.b16 %v1792
  %v5776 = vunpack.c.l.b16 %v1793
  %v5777 = vunpack.c.l.b16 %v1794
  %v5778 = vunpack.c.l.b16 %v1795
  %v5779 = vunpack.c.l.b16 %v1796
  %v5780 = vunpack.c.l.b16 %v1797
  %v5781 = vunpack.c.l.b16 %v1798
  %v5782 = vunpack.c.l.b16 %v1799
  %v5783 = vunpack.c.l.b16 %v1800
  %v5784 = vunpack.c.l.b16 %v1801
  %v5785 = vunpack.c.l.b16 %v1802
  %v5786 = vunpack.c.l.b16 %v1803
  %v5787 = vunpack.c.l.b16 %v1804
  %v5788 = vunpack.c.l.b16 %v1805
  %v5789 = vunpack.c.l.b16 %v1806
  %v5790 = vunpack.c.l.b16 %v1807
  %v5791 = vunpack.c.l.b16 %v1808
  %v5792 = vunpack.c.l.b16 %v1809
  %v5793 = vunpack.c.l.b16 %v1810
  %v5794 = vunpack.c.l.b16 %v1811
  %v5795 = vunpack.c.l.b16 %v1812
  %v5796 = vunpack.c.l.b16 %v1813
  %v5797 = vunpack.c.l.b16 %v1814
  %v5798 = vunpack.c.l.b16 %v1815
  %v5799 = vunpack.c.l.b16 %v1816
  %v5800 = vunpack.c.l.b16 %v1817
  %v5801 = vunpack.c.l.b16 %v1818
  %v5802 = vunpack.c.l.b16 %v1819
  %v5803 = vunpack.c.l.b16 %v1820
  %v5804 = vunpack.c.l.b16 %v1821
  %v5805 = vunpack.c.l.b16 %v1822
  %v5806 = vunpack.c.l.b16 %v1823
  %v5807 = vunpack.c.l.b16 %v1824
  %v5808 = vunpack.c.l.b16 %v1825
  %v5809 = vunpack.c.l.b16 %v1826
  %v5810 = vunpack.c.l.b16 %v1827
  %v5811 = vunpack.c.l.b16 %v1828
  %v5812 = vunpack.c.l.b16 %v1829
  %v5813 = vunpack.c.l.b16 %v1830
  %v5814 = vunpack.c.l.b16 %v1831
  %v5815 = vunpack.c.l.b16 %v1832
  %v5816 = vunpack.c.l.b16 %v1833
  %v5817 = vunpack.c.l.b16 %v1834
  %v5818 = vunpack.c.l.b16 %v1835
  %v5819 = vunpack.c.l.b16 %v1836
  %v5820 = vunpack.c.l.b16 %v1837
  %v5821 = vunpack.c.l.b16 %v1838
  %v5822 = vunpack.c.l.b16 %v1839
  %v5823 = vunpack.c.l.b16 %v1840
  %v5824 = vunpack.c.l.b16 %v1841
  %v5825 = vunpack.c.l.b16 %v1842
  %v5826 = vunpack.c.l.b16 %v1843
  %v5827 = vunpack.c.l.b16 %v1844
  %v5828 = vunpack.c.l.b16 %v1845
  %v5829 = vunpack.c.l.b16 %v1846
  %v5830 = vunpack.c.l.b16 %v1847
  %v5831 = vunpack.c.l.b16 %v1848
  %v5832 = vunpack.c.l.b16 %v1849
  %v5833 = vunpack.c.l.b16 %v1850
  %v5834 = vunpack.c.l.b16 %v1851
  %v5835 = vunpack.c.l.b16 %v1852
  %v5836 = vunpack.c.l.b16 %v1853
  %v5837 = vunpack.c.l.b16 %v1854
  %v5838 = vunpack.c.l.b16 %v1855
  %v5839 = vunpack.c.l.b16 %v1856
  %v5840 = vunpack.c.l.b16 %v1857
  %v5841 = vunpack.c.l.b16 %v1858
  %v5842 = vunpack.c.l.b16 %v1859
  %v5843 = vunpack.c.l.b16 %v1860
  %v5844 = vunpack.c.l.b16 %v1861
  %v5845 = vunpack.c.l.b16 %v1862
  %v5846 = vunpack.c.l.b16 %v1863
  %v5847 = vunpack.c.l.b16 %v1864
  %v5848 = vunpack.c.l.b16 %v1865
  %v5849 = vunpack.c.l.b16 %v1866
  %v5850 = vunpack.c.l.b16 %v1867
  %v5851 = vunpack.c.l.b16 %v1868
  %v5852 = vpack.c.b16 %v4061, %v4060
  %v5853 = vpack.c.b16 %v4063, %v4062
  %v5854 = vpack.c.b16 %v4065, %v4064
  %v5855 = vpack.c.b16 %v4067, %v4066
  %v5856 = vpack.c.b16 %v4069, %v4068
  %v5857 = vpack.c.b16 %v4071, %v4070
  %v5858 = vpack.c.b16 %v4073, %v4072
  %v5859 = vpack.c.b16 %v4075, %v4074
  %v5860 = vpack.c.b16 %v4077, %v4076
  %v5861 = vpack.c.b16 %v4079, %v4078
  %v5862 = vpack.c.b16 %v4081, %v4080
  %v5863 = vpack.c.b16 %v4083, %v4082
  %v5864 = vpack.c.b16 %v4085, %v4084
  %v5865 = vpack.c.b16 %v4087, %v4086
  %v5866 = vpack.c.b16 %v4089, %v4088
  %v5867 = vpack.c.b16 %v4091, %v4090
  %v5868 = vpack.c.b16 %v4093, %v4092
  %v5869 = vpack.c.b16 %v4095, %v4094
  %v5870 = vpack.c.b16 %v4097, %v4096
  %v5871 = vpack.c.b16 %v4099, %v4098
  %v5872 = vpack.c.b16 %v4101, %v4100
  %v5873 = vpack.c.b16 %v4103, %v4102
  %v5874 = vpack.c.b16 %v4105, %v4104
  %v5875 = vpack.c.b16 %v4107, %v4106
  %v5876 = vpack.c.b16 %v4109, %v4108
  %v5877 = vpack.c.b16 %v4111, %v4110
  %v5878 = vpack.c.b16 %v4113, %v4112
  %v5879 = vpack.c.b16 %v4115, %v4114
  %v5880 = vpack.c.b16 %v4117, %v4116
  %v5881 = vpack.c.b16 %v4119, %v4118
  %v5882 = vpack.c.b16 %v4121, %v4120
  %v5883 = vpack.c.b16 %v4123, %v4122
  %v5884 = vpack.c.b16 %v4125, %v4124
  %v5885 = vpack.c.b16 %v4127, %v4126
  %v5886 = vpack.c.b16 %v4129, %v4128
  %v5887 = vpack.c.b16 %v4131, %v4130
  %v5888 = vpack.c.b16 %v4133, %v4132
  %v5889 = vpack.c.b16 %v4135, %v4134
  %v5890 = vpack.c.b16 %v4137, %v4136
  %v5891 = vpack.c.b16 %v4139, %v4138
  %v5892 = vpack.c.b16 %v4141, %v4140
  %v5893 = vpack.c.b16 %v4143, %v4142
  %v5894 = vpack.c.b16 %v4145, %v4144
  %v5895 = vpack.c.b16 %v4147, %v4146
  %v5896 = vpack.c.b16 %v4149, %v4148
  %v5897 = vpack.c.b16 %v4151, %v4150
  %v5898 = vpack.c.b16 %v4153, %v4152
  %v5899 = vpack.c.b16 %v4155, %v4154
  %v5900 = vpack.c.b16 %v4157, %v4156
  %v5901 = vpack.c.b16 %v4159, %v4158
  %v5902 = vpack.c.b16 %v4161, %v4160
  %v5903 = vpack.c.b16 %v4163, %v4162
  %v5904 = vpack.c.b16 %v4165, %v4164
  %v5905 = vpack.c.b16 %v4167, %v4166
  %v5906 = vpack.c.b16 %v4169, %v4168
  %v5907 = vpack.c.b16 %v4171, %v4170
  %v5908 = vpack.c.b16 %v4173, %v4172
  %v5909 = vpack.c.b16 %v4175, %v4174
  %v5910 = vpack.c.b16 %v4177, %v4176
  %v5911 = vpack.c.b16 %v4179, %v4178
  %v5912 = vpack.c.b16 %v4181, %v4180
  %v5913 = vpack.c.b16 %v4183, %v4182
  %v5914 = vpack.c.b16 %v4185, %v4184
  %v5915 = vpack.c.b16 %v4187, %v4186
  %v5916 = vpack.c.b16 %v4189, %v4188
  %v5917 = vpack.c.b16 %v4191, %v4190
  %v5918 = vpack.c.b16 %v4193, %v4192
  %v5919 = vpack.c.b16 %v4195, %v4194
  %v5920 = vpack.c.b16 %v4197, %v4196
  %v5921 = vpack.c.b16 %v4199, %v4198
  %v5922 = vpack.c.b16 %v4201, %v4200
  %v5923 = vpack.c.b16 %v4203, %v4202
  %v5924 = vpack.c.b16 %v4205, %v4204
  %v5925 = vpack.c.b16 %v4207, %v4206
  %v5926 = vpack.c.b16 %v4209, %v4208
  %v5927 = vpack.c.b16 %v4211, %v4210
  %v5928 = vpack.c.b16 %v4213, %v4212
  %v5929 = vpack.c.b16 %v4215, %v4214
  %v5930 = vpack.c.b16 %v4217, %v4216
  %v5931 = vpack.c.b16 %v4219, %v4218
  %v5932 = vpack.c.b16 %v4221, %v4220
  %v5933 = vpack.c.b16 %v4223, %v4222
  %v5934 = vpack.c.b16 %v4225, %v4224
  %v5935 = vpack.c.b16 %v4227, %v4226
  %v5936 = vpack.c.b16 %v4229, %v4228
  %v5937 = vpack.c.b16 %v4231, %v4230
  %v5938 = vpack.c.b16 %v4233, %v4232
  %v5939 = vpack.c.b16 %v4235, %v4234
  %v5940 = vpack.c.b16 %v4237, %v4236
  %v5941 = vpack.c.b16 %v4239, %v4238
  %v5942 = vpack.c.b16 %v4241, %v4240
  %v5943 = vpack.c.b16 %v4243, %v4242
  %v5944 = vpack.c.b16 %v4245, %v4244
  %v5945 = vpack.c.b16 %v4247, %v4246
  %v5946 = vpack.c.b16 %v4249, %v4248
  %v5947 = vpack.c.b16 %v4251, %v4250
  %v5948 = vpack.c.b16 %v4253, %v4252
  %v5949 = vpack.c.b16 %v4255, %v4254
  %v5950 = vpack.c.b16 %v4257, %v4256
  %v5951 = vpack.c.b16 %v4259, %v4258
  %v5952 = vpack.c.b16 %v4261, %v4260
  %v5953 = vpack.c.b16 %v4263, %v4262
  %v5954 = vpack.c.b16 %v4265, %v4264
  %v5955 = vpack.c.b16 %v4267, %v4266
  %v5956 = vpack.c.b16 %v4269, %v4268
  %v5957 = vpack.c.b16 %v4271, %v4270
  %v5958 = vpack.c.b16 %v4273, %v4272
  %v5959 = vpack.c.b16 %v4275, %v4274
  %v5960 = vpack.c.b16 %v4277, %v4276
  %v5961 = vpack.c.b16 %v4279, %v4278
  %v5962 = vpack.c.b16 %v4281, %v4280
  %v5963 = vpack.c.b16 %v4283, %v4282
  %v5964 = vpack.c.b16 %v4285, %v4284
  %v5965 = vpack.c.b16 %v4287, %v4286
  %v5966 = vpack.c.b16 %v4289, %v4288
  %v5967 = vpack.c.b16 %v4291, %v4290
  %v5968 = vpack.c.b16 %v4293, %v4292
  %v5969 = vpack.c.b16 %v4295, %v4294
  %v5970 = vpack.c.b16 %v4297, %v4296
  %v5971 = vpack.c.b16 %v4299, %v4298
  %v5972 = vpack.c.b16 %v4301, %v4300
  %v5973 = vpack.c.b16 %v4303, %v4302
  %v5974 = vpack.c.b16 %v4305, %v4304
  %v5975 = vpack.c.b16 %v4307, %v4306
  %v5976 = vpack.c.b16 %v4309, %v4308
  %v5977 = vpack.c.b16 %v4311, %v4310
  %v5978 = vpack.c.b16 %v4313, %v4312
  %v5979 = vpack.c.b16 %v4315, %v4314
  %v5980 = vpack.c.b16 %v4317, %v4316
  %v5981 = vpack.c.b16 %v4319, %v4318
  %v5982 = vpack.c.b16 %v4321, %v4320
  %v5983 = vpack.c.b16 %v4323, %v4322
  %v5984 = vpack.c.b16 %v4325, %v4324
  %v5985 = vpack.c.b16 %v4327, %v4326
  %v5986 = vpack.c.b16 %v4329, %v4328
  %v5987 = vpack.c.b16 %v4331, %v4330
  %v5988 = vpack.c.b16 %v4333, %v4332
  %v5989 = vpack.c.b16 %v4335, %v4334
  %v5990 = vpack.c.b16 %v4337, %v4336
  %v5991 = vpack.c.b16 %v4339, %v4338
  %v5992 = vpack.c.b16 %v4341, %v4340
  %v5993 = vpack.c.b16 %v4343, %v4342
  %v5994 = vpack.c.b16 %v4345, %v4344
  %v5995 = vpack.c.b16 %v4347, %v4346
  %v5996 = vpack.c.b16 %v4349, %v4348
  %v5997 = vpack.c.b16 %v4351, %v4350
  %v5998 = vpack.c.b16 %v4353, %v4352
  %v5999 = vpack.c.b16 %v4355, %v4354
  %v6000 = vpack.c.b16 %v4357, %v4356
  %v6001 = vpack.c.b16 %v4359, %v4358
  %v6002 = vpack.c.b16 %v4361, %v4360
  %v6003 = vpack.c.b16 %v4363, %v4362
  %v6004 = vpack.c.b16 %v4365, %v4364
  %v6005 = vpack.c.b16 %v4367, %v4366
  %v6006 = vpack.c.b16 %v4369, %v4368
  %v6007 = vpack.c.b16 %v4371, %v4370
  %v6008 = vpack.c.b16 %v4373, %v4372
  %v6009 = vpack.c.b16 %v4375, %v4374
  %v6010 = vpack.c.b16 %v4377, %v4376
  %v6011 = vpack.c.b16 %v4379, %v4378
  %v6012 = vpack.c.b16 %v4381, %v4380
  %v6013 = vpack.c.b16 %v4383, %v4382
  %v6014 = vpack.c.b16 %v4385, %v4384
  %v6015 = vpack.c.b16 %v4387, %v4386
  %v6016 = vpack.c.b16 %v4389, %v4388
  %v6017 = vpack.c.b16 %v4391, %v4390
  %v6018 = vpack.c.b16 %v4393, %v4392
  %v6019 = vpack.c.b16 %v4395, %v4394
  %v6020 = vpack.c.b16 %v4397, %v4396
  %v6021 = vpack.c.b16 %v4399, %v4398
  %v6022 = vpack.c.b16 %v4401, %v4400
  %v6023 = vpack.c.b16 %v4403, %v4402
  %v6024 = vpack.c.b16 %v4405, %v4404
  %v6025 = vpack.c.b16 %v4407, %v4406
  %v6026 = vpack.c.b16 %v4409, %v4408
  %v6027 = vpack.c.b16 %v4411, %v4410
  %v6028 = vpack.c.b16 %v4413, %v4412
  %v6029 = vpack.c.b16 %v4415, %v4414
  %v6030 = vpack.c.b16 %v4417, %v4416
  %v6031 = vpack.c.b16 %v4419, %v4418
  %v6032 = vpack.c.b16 %v4421, %v4420
  %v6033 = vpack.c.b16 %v4423, %v4422
  %v6034 = vpack.c.b16 %v4425, %v4424
  %v6035 = vpack.c.b16 %v4427, %v4426
  %v6036 = vpack.c.b16 %v4429, %v4428
  %v6037 = vpack.c.b16 %v4431, %v4430
  %v6038 = vpack.c.b16 %v4433, %v4432
  %v6039 = vpack.c.b16 %v4435, %v4434
  %v6040 = vpack.c.b16 %v4437, %v4436
  %v6041 = vpack.c.b16 %v4439, %v4438
  %v6042 = vpack.c.b16 %v4441, %v4440
  %v6043 = vpack.c.b16 %v4443, %v4442
  %v6044 = vpack.c.b16 %v4445, %v4444
  %v6045 = vpack.c.b16 %v4447, %v4446
  %v6046 = vpack.c.b16 %v4449, %v4448
  %v6047 = vpack.c.b16 %v4451, %v4450
  %v6048 = vpack.c.b16 %v4453, %v4452
  %v6049 = vpack.c.b16 %v4455, %v4454
  %v6050 = vpack.c.b16 %v4457, %v4456
  %v6051 = vpack.c.b16 %v4459, %v4458
  %v6052 = vpack.c.b16 %v4461, %v4460
  %v6053 = vpack.c.b16 %v4463, %v4462
  %v6054 = vpack.c.b16 %v4465, %v4464
  %v6055 = vpack.c.b16 %v4467, %v4466
  %v6056 = vpack.c.b16 %v4469, %v4468
  %v6057 = vpack.c.b16 %v4471, %v4470
  %v6058 = vpack.c.b16 %v4473, %v4472
  %v6059 = vpack.c.b16 %v4475, %v4474
  %v6060 = vpack.c.b16 %v4477, %v4476
  %v6061 = vpack.c.b16 %v4479, %v4478
  %v6062 = vpack.c.b16 %v4481, %v4480
  %v6063 = vpack.c.b16 %v4483, %v4482
  %v6064 = vpack.c.b16 %v4485, %v4484
  %v6065 = vpack.c.b16 %v4487, %v4486
  %v6066 = vpack.c.b16 %v4489, %v4488
  %v6067 = vpack.c.b16 %v4491, %v4490
  %v6068 = vpack.c.b16 %v4493, %v4492
  %v6069 = vpack.c.b16 %v4495, %v4494
  %v6070 = vpack.c.b16 %v4497, %v4496
  %v6071 = vpack.c.b16 %v4499, %v4498
  %v6072 = vpack.c.b16 %v4501, %v4500
  %v6073 = vpack.c.b16 %v4503, %v4502
  %v6074 = vpack.c.b16 %v4505, %v4504
  %v6075 = vpack.c.b16 %v4507, %v4506
  %v6076 = vpack.c.b16 %v4509, %v4508
  %v6077 = vpack.c.b16 %v4511, %v4510
  %v6078 = vpack.c.b16 %v4513, %v4512
  %v6079 = vpack.c.b16 %v4515, %v4514
  %v6080 = vpack.c.b16 %v4517, %v4516
  %v6081 = vpack.c.b16 %v4519, %v4518
  %v6082 = vpack.c.b16 %v4521, %v4520
  %v6083 = vpack.c.b16 %v4523, %v4522
  %v6084 = vpack.c.b16 %v4525, %v4524
  %v6085 = vpack.c.b16 %v4527, %v4526
  %v6086 = vpack.c.b16 %v4529, %v4528
  %v6087 = vpack.c.b16 %v4531, %v4530
  %v6088 = vpack.c.b16 %v4533, %v4532
  %v6089 = vpack.c.b16 %v4535, %v4534
  %v6090 = vpack.c.b16 %v4537, %v4536
  %v6091 = vpack.c.b16 %v4539, %v4538
  %v6092 = vpack.c.b16 %v4541, %v4540
  %v6093 = vpack.c.b16 %v4543, %v4542
  %v6094 = vpack.c.b16 %v4545, %v4544
  %v6095 = vpack.c.b16 %v4547, %v4546
  %v6096 = vpack.c.b16 %v4549, %v4548
  %v6097 = vpack.c.b16 %v4551, %v4550
  %v6098 = vpack.c.b16 %v4553, %v4552
  %v6099 = vpack.c.b16 %v4555, %v4554
  %v6100 = vpack.c.b16 %v4557, %v4556
  %v6101 = vpack.c.b16 %v4559, %v4558
  %v6102 = vpack.c.b16 %v4561, %v4560
  %v6103 = vpack.c.b16 %v4563, %v4562
  %v6104 = vpack.c.b16 %v4565, %v4564
  %v6105 = vpack.c.b16 %v4567, %v4566
  %v6106 = vpack.c.b16 %v4569, %v4568
  %v6107 = vpack.c.b16 %v4571, %v4570
  %v6108 = vpack.c.b16 %v4573, %v4572
  %v6109 = vpack.c.b16 %v4575, %v4574
  %v6110 = vpack.c.b16 %v4577, %v4576
  %v6111 = vpack.c.b16 %v4579, %v4578
  %v6112 = vpack.c.b16 %v4581, %v4580
  %v6113 = vpack.c.b16 %v4583, %v4582
  %v6114 = vpack.c.b16 %v4585, %v4584
  %v6115 = vpack.c.b16 %v4587, %v4586
  %v6116 = vpack.c.b16 %v4589, %v4588
  %v6117 = vpack.c.b16 %v4591, %v4590
  %v6118 = vpack.c.b16 %v4593, %v4592
  %v6119 = vpack.c.b16 %v4595, %v4594
  %v6120 = vpack.c.b16 %v4597, %v4596
  %v6121 = vpack.c.b16 %v4599, %v4598
  %v6122 = vpack.c.b16 %v4601, %v4600
  %v6123 = vpack.c.b16 %v4603, %v4602
  %v6124 = vpack.c.b16 %v4605, %v4604
  %v6125 = vpack.c.b16 %v4607, %v4606
  %v6126 = vpack.c.b16 %v4609, %v4608
  %v6127 = vpack.c.b16 %v4611, %v4610
  %v6128 = vpack.c.b16 %v4613, %v4612
  %v6129 = vpack.c.b16 %v4615, %v4614
  %v6130 = vpack.c.b16 %v4617, %v4616
  %v6131 = vpack.c.b16 %v4619, %v4618
  %v6132 = vpack.c.b16 %v4621, %v4620
  %v6133 = vpack.c.b16 %v4623, %v4622
  %v6134 = vpack.c.b16 %v4625, %v4624
  %v6135 = vpack.c.b16 %v4627, %v4626
  %v6136 = vpack.c.b16 %v4629, %v4628
  %v6137 = vpack.c.b16 %v4631, %v4630
  %v6138 = vpack.c.b16 %v4633, %v4632
  %v6139 = vpack.c.b16 %v4635, %v4634
  %v6140 = vpack.c.b16 %v4637, %v4636
  %v6141 = vpack.c.b16 %v4639, %v4638
  %v6142 = vpack.c.b16 %v4641, %v4640
  %v6143 = vpack.c.b16 %v4643, %v4642
  %v6144 = vpack.c.b16 %v4645, %v4644
  %v6145 = vpack.c.b16 %v4647, %v4646
  %v6146 = vpack.c.b16 %v4649, %v4648
  %v6147 = vpack.c.b16 %v4651, %v4650
  %v6148 = vpack.c.b16 %v4653, %v4652
  %v6149 = vpack.c.b16 %v4655, %v4654
  %v6150 = vpack.c.b16 %v4657, %v4656
  %v6151 = vpack.c.b16 %v4659, %v4658
  %v6152 = vpack.c.b16 %v4661, %v4660
  %v6153 = vpack.c.b16 %v4663, %v4662
  %v6154 = vpack.c.b16 %v4665, %v4664
  %v6155 = vpack.c.b16 %v4667, %v4666
  %v6156 = vpack.c.b16 %v4669, %v4668
  %v6157 = vpack.c.b16 %v4671, %v4670
  %v6158 = vpack.c.b16 %v4673, %v4672
  %v6159 = vpack.c.b16 %v4675, %v4674
  %v6160 = vpack.c.b16 %v4677, %v4676
  %v6161 = vpack.c.b16 %v4679, %v4678
  %v6162 = vpack.c.b16 %v4681, %v4680
  %v6163 = vpack.c.b16 %v4683, %v4682
  %v6164 = vpack.c.b16 %v4685, %v4684
  %v6165 = vpack.c.b16 %v4687, %v4686
  %v6166 = vpack.c.b16 %v4689, %v4688
  %v6167 = vpack.c.b16 %v4691, %v4690
  %v6168 = vpack.c.b16 %v4693, %v4692
  %v6169 = vpack.c.b16 %v4695, %v4694
  %v6170 = vpack.c.b16 %v4697, %v4696
  %v6171 = vpack.c.b16 %v4699, %v4698
  %v6172 = vpack.c.b16 %v4701, %v4700
  %v6173 = vpack.c.b16 %v4703, %v4702
  %v6174 = vpack.c.b16 %v4705, %v4704
  %v6175 = vpack.c.b16 %v4707, %v4706
  %v6176 = vpack.c.b16 %v4709, %v4708
  %v6177 = vpack.c.b16 %v4711, %v4710
  %v6178 = vpack.c.b16 %v4713, %v4712
  %v6179 = vpack.c.b16 %v4715, %v4714
  %v6180 = vpack.c.b16 %v4717, %v4716
  %v6181 = vpack.c.b16 %v4719, %v4718
  %v6182 = vpack.c.b16 %v4721, %v4720
  %v6183 = vpack.c.b16 %v4723, %v4722
  %v6184 = vpack.c.b16 %v4725, %v4724
  %v6185 = vpack.c.b16 %v4727, %v4726
  %v6186 = vpack.c.b16 %v4729, %v4728
  %v6187 = vpack.c.b16 %v4731, %v4730
  %v6188 = vpack.c.b16 %v4733, %v4732
  %v6189 = vpack.c.b16 %v4735, %v4734
  %v6190 = vpack.c.b16 %v4737, %v4736
  %v6191 = vpack.c.b16 %v4739, %v4738
  %v6192 = vpack.c.b16 %v4741, %v4740
  %v6193 = vpack.c.b16 %v4743, %v4742
  %v6194 = vpack.c.b16 %v4745, %v4744
  %v6195 = vpack.c.b16 %v4747, %v4746
  %v6196 = vpack.c.b16 %v4749, %v4748
  %v6197 = vpack.c.b16 %v4751, %v4750
  %v6198 = vpack.c.b16 %v4753, %v4752
  %v6199 = vpack.c.b16 %v4755, %v4754
  %v6200 = vpack.c.b16 %v4757, %v4756
  %v6201 = vpack.c.b16 %v4759, %v4758
  %v6202 = vpack.c.b16 %v4761, %v4760
  %v6203 = vpack.c.b16 %v4763, %v4762
  %v6204 = vpack.c.b16 %v4765, %v4764
  %v6205 = vpack.c.b16 %v4767, %v4766
  %v6206 = vpack.c.b16 %v4769, %v4768
  %v6207 = vpack.c.b16 %v4771, %v4770
  %v6208 = vpack.c.b16 %v4773, %v4772
  %v6209 = vpack.c.b16 %v4775, %v4774
  %v6210 = vpack.c.b16 %v4777, %v4776
  %v6211 = vpack.c.b16 %v4779, %v4778
  %v6212 = vpack.c.b16 %v4781, %v4780
  %v6213 = vpack.c.b16 %v4783, %v4782
  %v6214 = vpack.c.b16 %v4785, %v4784
  %v6215 = vpack.c.b16 %v4787, %v4786
  %v6216 = vpack.c.b16 %v4789, %v4788
  %v6217 = vpack.c.b16 %v4791, %v4790
  %v6218 = vpack.c.b16 %v4793, %v4792
  %v6219 = vpack.c.b16 %v4795, %v4794
  %v6220 = vpack.c.b16 %v4797, %v4796
  %v6221 = vpack.c.b16 %v4799, %v4798
  %v6222 = vpack.c.b16 %v4801, %v4800
  %v6223 = vpack.c.b16 %v4803, %v4802
  %v6224 = vpack.c.b16 %v4805, %v4804
  %v6225 = vpack.c.b16 %v4807, %v4806
  %v6226 = vpack.c.b16 %v4809, %v4808
  %v6227 = vpack.c.b16 %v4811, %v4810
  %v6228 = vpack.c.b16 %v4813, %v4812
  %v6229 = vpack.c.b16 %v4815, %v4814
  %v6230 = vpack.c.b16 %v4817, %v4816
  %v6231 = vpack.c.b16 %v4819, %v4818
  %v6232 = vpack.c.b16 %v4821, %v4820
  %v6233 = vpack.c.b16 %v4823, %v4822
  %v6234 = vpack.c.b16 %v4825, %v4824
  %v6235 = vpack.c.b16 %v4827, %v4826
  %v6236 = vpack.c.b16 %v4829, %v4828
  %v6237 = vpack.c.b16 %v4831, %v4830
  %v6238 = vpack.c.b16 %v4833, %v4832
  %v6239 = vpack.c.b16 %v4835, %v4834
  %v6240 = vpack.c.b16 %v4837, %v4836
  %v6241 = vpack.c.b16 %v4839, %v4838
  %v6242 = vpack.c.b16 %v4841, %v4840
  %v6243 = vpack.c.b16 %v4843, %v4842
  %v6244 = vpack.c.b16 %v4845, %v4844
  %v6245 = vpack.c.b16 %v4847, %v4846
  %v6246 = vpack.c.b16 %v4849, %v4848
  %v6247 = vpack.c.b16 %v4851, %v4850
  %v6248 = vpack.c.b16 %v4853, %v4852
  %v6249 = vpack.c.b16 %v4855, %v4854
  %v6250 = vpack.c.b16 %v4857, %v4856
  %v6251 = vpack.c.b16 %v4859, %v4858
  %v6252 = vpack.c.b16 %v4861, %v4860
  %v6253 = vpack.c.b16 %v4863, %v4862
  %v6254 = vpack.c.b16 %v4865, %v4864
  %v6255 = vpack.c.b16 %v4867, %v4866
  %v6256 = vpack.c.b16 %v4869, %v4868
  %v6257 = vpack.c.b16 %v4871, %v4870
  %v6258 = vpack.c.b16 %v4873, %v4872
  %v6259 = vpack.c.b16 %v4875, %v4874
  %v6260 = vpack.c.b16 %v4877, %v4876
  %v6261 = vpack.c.b16 %v4879, %v4878
  %v6262 = vpack.c.b16 %v4881, %v4880
  %v6263 = vpack.c.b16 %v4883, %v4882
  %v6264 = vpack.c.b16 %v4885, %v4884
  %v6265 = vpack.c.b16 %v4887, %v4886
  %v6266 = vpack.c.b16 %v4889, %v4888
  %v6267 = vpack.c.b16 %v4891, %v4890
  %v6268 = vpack.c.b16 %v4893, %v4892
  %v6269 = vpack.c.b16 %v4895, %v4894
  %v6270 = vpack.c.b16 %v4897, %v4896
  %v6271 = vpack.c.b16 %v4899, %v4898
  %v6272 = vpack.c.b16 %v4901, %v4900
  %v6273 = vpack.c.b16 %v4903, %v4902
  %v6274 = vpack.c.b16 %v4905, %v4904
  %v6275 = vpack.c.b16 %v4907, %v4906
  %v6276 = vpack.c.b16 %v4909, %v4908
  %v6277 = vpack.c.b16 %v4911, %v4910
  %v6278 = vpack.c.b16 %v4913, %v4912
  %v6279 = vpack.c.b16 %v4915, %v4914
  %v6280 = vpack.c.b16 %v4917, %v4916
  %v6281 = vpack.c.b16 %v4919, %v4918
  %v6282 = vpack.c.b16 %v4921, %v4920
  %v6283 = vpack.c.b16 %v4923, %v4922
  %v6284 = vpack.c.b16 %v4925, %v4924
  %v6285 = vpack.c.b16 %v4927, %v4926
  %v6286 = vpack.c.b16 %v4929, %v4928
  %v6287 = vpack.c.b16 %v4931, %v4930
  %v6288 = vpack.c.b16 %v4933, %v4932
  %v6289 = vpack.c.b16 %v4935, %v4934
  %v6290 = vpack.c.b16 %v4937, %v4936
  %v6291 = vpack.c.b16 %v4939, %v4938
  %v6292 = vpack.c.b16 %v4941, %v4940
  %v6293 = vpack.c.b16 %v4943, %v4942
  %v6294 = vpack.c.b16 %v4945, %v4944
  %v6295 = vpack.c.b16 %v4947, %v4946
  %v6296 = vpack.c.b16 %v4949, %v4948
  %v6297 = vpack.c.b16 %v4951, %v4950
  %v6298 = vpack.c.b16 %v4953, %v4952
  %v6299 = vpack.c.b16 %v4955, %v4954
  %v6300 = vpack.c.b16 %v4957, %v4956
  %v6301 = vpack.c.b16 %v4959, %v4958
  %v6302 = vpack.c.b16 %v4961, %v4960
  %v6303 = vpack.c.b16 %v4963, %v4962
  %v6304 = vpack.c.b16 %v4965, %v4964
  %v6305 = vpack.c.b16 %v4967, %v4966
  %v6306 = vpack.c.b16 %v4969, %v4968
  %v6307 = vpack.c.b16 %v4971, %v4970
  %v6308 = vpack.c.b16 %v4973, %v4972
  %v6309 = vpack.c.b16 %v4975, %v4974
  %v6310 = vpack.c.b16 %v4977, %v4976
  %v6311 = vpack.c.b16 %v4979, %v4978
  %v6312 = vpack.c.b16 %v4981, %v4980
  %v6313 = vpack.c.b16 %v4983, %v4982
  %v6314 = vpack.c.b16 %v4985, %v4984
  %v6315 = vpack.c.b16 %v4987, %v4986
  %v6316 = vpack.c.b16 %v4989, %v4988
  %v6317 = vpack.c.b16 %v4991, %v4990
  %v6318 = vpack.c.b16 %v4993, %v4992
  %v6319 = vpack.c.b16 %v4995, %v4994
  %v6320 = vpack.c.b16 %v4997, %v4996
  %v6321 = vpack.c.b16 %v4999, %v4998
  %v6322 = vpack.c.b16 %v5001, %v5000
  %v6323 = vpack.c.b16 %v5003, %v5002
  %v6324 = vpack.c.b16 %v5005, %v5004
  %v6325 = vpack.c.b16 %v5007, %v5006
  %v6326 = vpack.c.b16 %v5009, %v5008
  %v6327 = vpack.c.b16 %v5011, %v5010
  %v6328 = vpack.c.b16 %v5013, %v5012
  %v6329 = vpack.c.b16 %v5015, %v5014
  %v6330 = vpack.c.b16 %v5017, %v5016
  %v6331 = vpack.c.b16 %v5019, %v5018
  %v6332 = vpack.c.b16 %v5021, %v5020
  %v6333 = vpack.c.b16 %v5023, %v5022
  %v6334 = vpack.c.b16 %v5025, %v5024
  %v6335 = vpack.c.b16 %v5027, %v5026
  %v6336 = vpack.c.b16 %v5029, %v5028
  %v6337 = vpack.c.b16 %v5031, %v5030
  %v6338 = vpack.c.b16 %v5033, %v5032
  %v6339 = vpack.c.b16 %v5035, %v5034
  %v6340 = vpack.c.b16 %v5037, %v5036
  %v6341 = vpack.c.b16 %v5039, %v5038
  %v6342 = vpack.c.b16 %v5041, %v5040
  %v6343 = vpack.c.b16 %v5043, %v5042
  %v6344 = vpack.c.b16 %v5045, %v5044
  %v6345 = vpack.c.b16 %v5047, %v5046
  %v6346 = vpack.c.b16 %v5049, %v5048
  %v6347 = vpack.c.b16 %v5051, %v5050
  %v6348 = vpack.c.b16 %v5053, %v5052
  %v6349 = vpack.c.b16 %v5055, %v5054
  %v6350 = vpack.c.b16 %v5057, %v5056
  %v6351 = vpack.c.b16 %v5059, %v5058
  %v6352 = vpack.c.b16 %v5061, %v5060
  %v6353 = vpack.c.b16 %v5063, %v5062
  %v6354 = vpack.c.b16 %v5065, %v5064
  %v6355 = vpack.c.b16 %v5067, %v5066
  %v6356 = vpack.c.b16 %v5069, %v5068
  %v6357 = vpack.c.b16 %v5071, %v5070
  %v6358 = vpack.c.b16 %v5073, %v5072
  %v6359 = vpack.c.b16 %v5075, %v5074
  %v6360 = vpack.c.b16 %v5077, %v5076
  %v6361 = vpack.c.b16 %v5079, %v5078
  %v6362 = vpack.c.b16 %v5081, %v5080
  %v6363 = vpack.c.b16 %v5083, %v5082
  %v6364 = vpack.c.b16 %v5085, %v5084
  %v6365 = vpack.c.b16 %v5087, %v5086
  %v6366 = vpack.c.b16 %v5089, %v5088
  %v6367 = vpack.c.b16 %v5091, %v5090
  %v6368 = vpack.c.b16 %v5093, %v5092
  %v6369 = vpack.c.b16 %v5095, %v5094
  %v6370 = vpack.c.b16 %v5097, %v5096
  %v6371 = vpack.c.b16 %v5099, %v5098
  %v6372 = vpack.c.b16 %v5101, %v5100
  %v6373 = vpack.c.b16 %v5103, %v5102
  %v6374 = vpack.c.b16 %v5105, %v5104
  %v6375 = vpack.c.b16 %v5107, %v5106
  %v6376 = vpack.c.b16 %v5109, %v5108
  %v6377 = vpack.c.b16 %v5111, %v5110
  %v6378 = vpack.c.b16 %v5113, %v5112
  %v6379 = vpack.c.b16 %v5115, %v5114
  %v6380 = vpack.c.b16 %v5117, %v5116
  %v6381 = vpack.c.b16 %v5119, %v5118
  %v6382 = vpack.c.b16 %v5121, %v5120
  %v6383 = vpack.c.b16 %v5123, %v5122
  %v6384 = vpack.c.b16 %v5125, %v5124
  %v6385 = vpack.c.b16 %v5127, %v5126
  %v6386 = vpack.c.b16 %v5129, %v5128
  %v6387 = vpack.c.b16 %v5131, %v5130
  %v6388 = vpack.c.b16 %v5133, %v5132
  %v6389 = vpack.c.b16 %v5135, %v5134
  %v6390 = vpack.c.b16 %v5137, %v5136
  %v6391 = vpack.c.b16 %v5139, %v5138
  %v6392 = vpack.c.b16 %v5141, %v5140
  %v6393 = vpack.c.b16 %v5143, %v5142
  %v6394 = vpack.c.b16 %v5145, %v5144
  %v6395 = vpack.c.b16 %v5147, %v5146
  %v6396 = vpack.c.b16 %v5149, %v5148
  %v6397 = vpack.c.b16 %v5151, %v5150
  %v6398 = vpack.c.b16 %v5153, %v5152
  %v6399 = vpack.c.b16 %v5155, %v5154
  %v6400 = vpack.c.b16 %v5157, %v5156
  %v6401 = vpack.c.b16 %v5159, %v5158
  %v6402 = vpack.c.b16 %v5161, %v5160
  %v6403 = vpack.c.b16 %v5163, %v5162
  %v6404 = vpack.c.b16 %v5165, %v5164
  %v6405 = vpack.c.b16 %v5167, %v5166
  %v6406 = vpack.c.b16 %v5169, %v5168
  %v6407 = vpack.c.b16 %v5171, %v5170
  %v6408 = vpack.c.b16 %v5173, %v5172
  %v6409 = vpack.c.b16 %v5175, %v5174
  %v6410 = vpack.c.b16 %v5177, %v5176
  %v6411 = vpack.c.b16 %v5179, %v5178
  %v6412 = vpack.c.b16 %v5181, %v5180
  %v6413 = vpack.c.b16 %v5183, %v5182
  %v6414 = vpack.c.b16 %v5185, %v5184
  %v6415 = vpack.c.b16 %v5187, %v5186
  %v6416 = vpack.c.b16 %v5189, %v5188
  %v6417 = vpack.c.b16 %v5191, %v5190
  %v6418 = vpack.c.b16 %v5193, %v5192
  %v6419 = vpack.c.b16 %v5195, %v5194
  %v6420 = vpack.c.b16 %v5197, %v5196
  %v6421 = vpack.c.b16 %v5199, %v5198
  %v6422 = vpack.c.b16 %v5201, %v5200
  %v6423 = vpack.c.b16 %v5203, %v5202
  %v6424 = vpack.c.b16 %v5205, %v5204
  %v6425 = vpack.c.b16 %v5207, %v5206
  %v6426 = vpack.c.b16 %v5209, %v5208
  %v6427 = vpack.c.b16 %v5211, %v5210
  %v6428 = vpack.c.b16 %v5213, %v5212
  %v6429 = vpack.c.b16 %v5215, %v5214
  %v6430 = vpack.c.b16 %v5217, %v5216
  %v6431 = vpack.c.b16 %v5219, %v5218
  %v6432 = vpack.c.b16 %v5221, %v5220
  %v6433 = vpack.c.b16 %v5223, %v5222
  %v6434 = vpack.c.b16 %v5225, %v5224
  %v6435 = vpack.c.b16 %v5227, %v5226
  %v6436 = vpack.c.b16 %v5229, %v5228
  %v6437 = vpack.c.b16 %v5231, %v5230
  %v6438 = vpack.c.b16 %v5233, %v5232
  %v6439 = vpack.c.b16 %v5235, %v5234
  %v6440 = vpack.c.b16 %v5237, %v5236
  %v6441 = vpack.c.b16 %v5239, %v5238
  %v6442 = vpack.c.b16 %v5241, %v5240
  %v6443 = vpack.c.b16 %v5243, %v5242
  %v6444 = vpack.c.b16 %v5245, %v5244
  %v6445 = vpack.c.b16 %v5247, %v5246
  %v6446 = vpack.c.b16 %v5249, %v5248
  %v6447 = vpack.c.b16 %v5251, %v5250
  %v6448 = vpack.c.b16 %v5253, %v5252
  %v6449 = vpack.c.b16 %v5255, %v5254
  %v6450 = vpack.c.b16 %v5257, %v5256
  %v6451 = vpack.c.b16 %v5259, %v5258
  %v6452 = vpack.c.b16 %v5261, %v5260
  %v6453 = vpack.c.b16 %v5263, %v5262
  %v6454 = vpack.c.b16 %v5265, %v5264
  %v6455 = vpack.c.b16 %v5267, %v5266
  %v6456 = vpack.c.b16 %v5269, %v5268
  %v6457 = vpack.c.b16 %v5271, %v5270
  %v6458 = vpack.c.b16 %v5273, %v5272
  %v6459 = vpack.c.b16 %v5275, %v5274
  %v6460 = vpack.c.b16 %v5277, %v5276
  %v6461 = vpack.c.b16 %v5279, %v5278
  %v6462 = vpack.c.b16 %v5281, %v5280
  %v6463 = vpack.c.b16 %v5283, %v5282
  %v6464 = vpack.c.b16 %v5285, %v5284
  %v6465 = vpack.c.b16 %v5287, %v5286
  %v6466 = vpack.c.b16 %v5289, %v5288
  %v6467 = vpack.c.b16 %v5291, %v5290
  %v6468 = vpack.c.b16 %v5293, %v5292
  %v6469 = vpack.c.b16 %v5295, %v5294
  %v6470 = vpack.c.b16 %v5297, %v5296
  %v6471 = vpack.c.b16 %v5299, %v5298
  %v6472 = vpack.c.b16 %v5301, %v5300
  %v6473 = vpack.c.b16 %v5303, %v5302
  %v6474 = vpack.c.b16 %v5305, %v5304
  %v6475 = vpack.c.b16 %v5307, %v5306
  %v6476 = vpack.c.b16 %v5309, %v5308
  %v6477 = vpack.c.b16 %v5311, %v5310
  %v6478 = vpack.c.b16 %v5313, %v5312
  %v6479 = vpack.c.b16 %v5315, %v5314
  %v6480 = vpack.c.b16 %v5317, %v5316
  %v6481 = vpack.c.b16 %v5319, %v5318
  %v6482 = vpack.c.b16 %v5321, %v5320
  %v6483 = vpack.c.b16 %v5323, %v5322
  %v6484 = vpack.c.b16 %v5325, %v5324
  %v6485 = vpack.c.b16 %v5327, %v5326
  %v6486 = vpack.c.b16 %v5329, %v5328
  %v6487 = vpack.c.b16 %v5331, %v5330
  %v6488 = vpack.c.b16 %v5333, %v5332
  %v6489 = vpack.c.b16 %v5335, %v5334
  %v6490 = vpack.c.b16 %v5337, %v5336
  %v6491 = vpack.c.b16 %v5339, %v5338
  %v6492 = vpack.c.b16 %v5341, %v5340
  %v6493 = vpack.c.b16 %v5343, %v5342
  %v6494 = vpack.c.b16 %v5345, %v5344
  %v6495 = vpack.c.b16 %v5347, %v5346
  %v6496 = vpack.c.b16 %v5349, %v5348
  %v6497 = vpack.c.b16 %v5351, %v5350
  %v6498 = vpack.c.b16 %v5353, %v5352
  %v6499 = vpack.c.b16 %v5355, %v5354
  %v6500 = vpack.c.b16 %v5357, %v5356
  %v6501 = vpack.c.b16 %v5359, %v5358
  %v6502 = vpack.c.b16 %v5361, %v5360
  %v6503 = vpack.c.b16 %v5363, %v5362
  %v6504 = vpack.c.b16 %v5365, %v5364
  %v6505 = vpack.c.b16 %v5367, %v5366
  %v6506 = vpack.c.b16 %v5369, %v5368
  %v6507 = vpack.c.b16 %v5371, %v5370
  %v6508 = vpack.c.b16 %v5373, %v5372
  %v6509 = vpack.c.b16 %v5375, %v5374
  %v6510 = vpack.c.b16 %v5377, %v5376
  %v6511 = vpack.c.b16 %v5379, %v5378
  %v6512 = vpack.c.b16 %v5381, %v5380
  %v6513 = vpack.c.b16 %v5383, %v5382
  %v6514 = vpack.c.b16 %v5385, %v5384
  %v6515 = vpack.c.b16 %v5387, %v5386
  %v6516 = vpack.c.b16 %v5389, %v5388
  %v6517 = vpack.c.b16 %v5391, %v5390
  %v6518 = vpack.c.b16 %v5393, %v5392
  %v6519 = vpack.c.b16 %v5395, %v5394
  %v6520 = vpack.c.b16 %v5397, %v5396
  %v6521 = vpack.c.b16 %v5399, %v5398
  %v6522 = vpack.c.b16 %v5401, %v5400
  %v6523 = vpack.c.b16 %v5403, %v5402
  %v6524 = vpack.c.b16 %v5405, %v5404
  %v6525 = vpack.c.b16 %v5407, %v5406
  %v6526 = vpack.c.b16 %v5409, %v5408
  %v6527 = vpack.c.b16 %v5411, %v5410
  %v6528 = vpack.c.b16 %v5413, %v5412
  %v6529 = vpack.c.b16 %v5415, %v5414
  %v6530 = vpack.c.b16 %v5417, %v5416
  %v6531 = vpack.c.b16 %v5419, %v5418
  %v6532 = vpack.c.b16 %v5421, %v5420
  %v6533 = vpack.c.b16 %v5423, %v5422
  %v6534 = vpack.c.b16 %v5425, %v5424
  %v6535 = vpack.c.b16 %v5427, %v5426
  %v6536 = vpack.c.b16 %v5429, %v5428
  %v6537 = vpack.c.b16 %v5431, %v5430
  %v6538 = vpack.c.b16 %v5433, %v5432
  %v6539 = vpack.c.b16 %v5435, %v5434
  %v6540 = vpack.c.b16 %v5437, %v5436
  %v6541 = vpack.c.b16 %v5439, %v5438
  %v6542 = vpack.c.b16 %v5441, %v5440
  %v6543 = vpack.c.b16 %v5443, %v5442
  %v6544 = vpack.c.b16 %v5445, %v5444
  %v6545 = vpack.c.b16 %v5447, %v5446
  %v6546 = vpack.c.b16 %v5449, %v5448
  %v6547 = vpack.c.b16 %v5451, %v5450
  %v6548 = vpack.c.b16 %v5453, %v5452
  %v6549 = vpack.c.b16 %v5455, %v5454
  %v6550 = vpack.c.b16 %v5457, %v5456
  %v6551 = vpack.c.b16 %v5459, %v5458
  %v6552 = vpack.c.b16 %v5461, %v5460
  %v6553 = vpack.c.b16 %v5463, %v5462
  %v6554 = vpack.c.b16 %v5465, %v5464
  %v6555 = vpack.c.b16 %v5467, %v5466
  %v6556 = vpack.c.b16 %v5469, %v5468
  %v6557 = vpack.c.b16 %v5471, %v5470
  %v6558 = vpack.c.b16 %v5473, %v5472
  %v6559 = vpack.c.b16 %v5475, %v5474
  %v6560 = vpack.c.b16 %v5477, %v5476
  %v6561 = vpack.c.b16 %v5479, %v5478
  %v6562 = vpack.c.b16 %v5481, %v5480
  %v6563 = vpack.c.b16 %v5483, %v5482
  %v6564 = vpack.c.b16 %v5485, %v5484
  %v6565 = vpack.c.b16 %v5487, %v5486
  %v6566 = vpack.c.b16 %v5489, %v5488
  %v6567 = vpack.c.b16 %v5491, %v5490
  %v6568 = vpack.c.b16 %v5493, %v5492
  %v6569 = vpack.c.b16 %v5495, %v5494
  %v6570 = vpack.c.b16 %v5497, %v5496
  %v6571 = vpack.c.b16 %v5499, %v5498
  %v6572 = vpack.c.b16 %v5501, %v5500
  %v6573 = vpack.c.b16 %v5503, %v5502
  %v6574 = vpack.c.b16 %v5505, %v5504
  %v6575 = vpack.c.b16 %v5507, %v5506
  %v6576 = vpack.c.b16 %v5509, %v5508
  %v6577 = vpack.c.b16 %v5511, %v5510
  %v6578 = vpack.c.b16 %v5513, %v5512
  %v6579 = vpack.c.b16 %v5515, %v5514
  %v6580 = vpack.c.b16 %v5517, %v5516
  %v6581 = vpack.c.b16 %v5519, %v5518
  %v6582 = vpack.c.b16 %v5521, %v5520
  %v6583 = vpack.c.b16 %v5523, %v5522
  %v6584 = vpack.c.b16 %v5525, %v5524
  %v6585 = vpack.c.b16 %v5527, %v5526
  %v6586 = vpack.c.b16 %v5529, %v5528
  %v6587 = vpack.c.b16 %v5531, %v5530
  %v6588 = vpack.c.b16 %v5533, %v5532
  %v6589 = vpack.c.b16 %v5535, %v5534
  %v6590 = vpack.c.b16 %v5537, %v5536
  %v6591 = vpack.c.b16 %v5539, %v5538
  %v6592 = vpack.c.b16 %v5541, %v5540
  %v6593 = vpack.c.b16 %v5543, %v5542
  %v6594 = vpack.c.b16 %v5545, %v5544
  %v6595 = vpack.c.b16 %v5547, %v5546
  %v6596 = vpack.c.b16 %v5549, %v5548
  %v6597 = vpack.c.b16 %v5551, %v5550
  %v6598 = vpack.c.b16 %v5553, %v5552
  %v6599 = vpack.c.b16 %v5555, %v5554
  %v6600 = vpack.c.b16 %v5557, %v5556
  %v6601 = vpack.c.b16 %v5559, %v5558
  %v6602 = vpack.c.b16 %v5561, %v5560
  %v6603 = vpack.c.b16 %v5563, %v5562
  %v6604 = vpack.c.b16 %v5565, %v5564
  %v6605 = vpack.c.b16 %v5567, %v5566
  %v6606 = vpack.c.b16 %v5569, %v5568
  %v6607 = vpack.c.b16 %v5571, %v5570
  %v6608 = vpack.c.b16 %v5573, %v5572
  %v6609 = vpack.c.b16 %v5575, %v5574
  %v6610 = vpack.c.b16 %v5577, %v5576
  %v6611 = vpack.c.b16 %v5579, %v5578
  %v6612 = vpack.c.b16 %v5581, %v5580
  %v6613 = vpack.c.b16 %v5583, %v5582
  %v6614 = vpack.c.b16 %v5585, %v5584
  %v6615 = vpack.c.b16 %v5587, %v5586
  %v6616 = vpack.c.b16 %v5589, %v5588
  %v6617 = vpack.c.b16 %v5591, %v5590
  %v6618 = vpack.c.b16 %v5593, %v5592
  %v6619 = vpack.c.b16 %v5595, %v5594
  %v6620 = vpack.c.b16 %v5597, %v5596
  %v6621 = vpack.c.b16 %v5599, %v5598
  %v6622 = vpack.c.b16 %v5601, %v5600
  %v6623 = vpack.c.b16 %v5603, %v5602
  %v6624 = vpack.c.b16 %v5605, %v5604
  %v6625 = vpack.c.b16 %v5607, %v5606
  %v6626 = vpack.c.b16 %v5609, %v5608
  %v6627 = vpack.c.b16 %v5611, %v5610
  %v6628 = vpack.c.b16 %v5613, %v5612
  %v6629 = vpack.c.b16 %v5615, %v5614
  %v6630 = vpack.c.b16 %v5617, %v5616
  %v6631 = vpack.c.b16 %v5619, %v5618
  %v6632 = vpack.c.b16 %v5621, %v5620
  %v6633 = vpack.c.b16 %v5623, %v5622
  %v6634 = vpack.c.b16 %v5625, %v5624
  %v6635 = vpack.c.b16 %v5627, %v5626
  %v6636 = vpack.c.b16 %v5629, %v5628
  %v6637 = vpack.c.b16 %v5631, %v5630
  %v6638 = vpack.c.b16 %v5633, %v5632
  %v6639 = vpack.c.b16 %v5635, %v5634
  %v6640 = vpack.c.b16 %v5637, %v5636
  %v6641 = vpack.c.b16 %v5639, %v5638
  %v6642 = vpack.c.b16 %v5641, %v5640
  %v6643 = vpack.c.b16 %v5643, %v5642
  %v6644 = vpack.c.b16 %v5645, %v5644
  %v6645 = vpack.c.b16 %v5647, %v5646
  %v6646 = vpack.c.b16 %v5649, %v5648
  %v6647 = vpack.c.b16 %v5651, %v5650
  %v6648 = vpack.c.b16 %v5653, %v5652
  %v6649 = vpack.c.b16 %v5655, %v5654
  %v6650 = vpack.c.b16 %v5657, %v5656
  %v6651 = vpack.c.b16 %v5659, %v5658
  %v6652 = vpack.c.b16 %v5661, %v5660
  %v6653 = vpack.c.b16 %v5663, %v5662
  %v6654 = vpack.c.b16 %v5665, %v5664
  %v6655 = vpack.c.b16 %v5667, %v5666
  %v6656 = vpack.c.b16 %v5669, %v5668
  %v6657 = vpack.c.b16 %v5671, %v5670
  %v6658 = vpack.c.b16 %v5673, %v5672
  %v6659 = vpack.c.b16 %v5675, %v5674
  %v6660 = vpack.c.b16 %v5677, %v5676
  %v6661 = vpack.c.b16 %v5679, %v5678
  %v6662 = vpack.c.b16 %v5681, %v5680
  %v6663 = vpack.c.b16 %v5683, %v5682
  %v6664 = vpack.c.b16 %v5685, %v5684
  %v6665 = vpack.c.b16 %v5687, %v5686
  %v6666 = vpack.c.b16 %v5689, %v5688
  %v6667 = vpack.c.b16 %v5691, %v5690
  %v6668 = vpack.c.b16 %v5693, %v5692
  %v6669 = vpack.c.b16 %v5695, %v5694
  %v6670 = vpack.c.b16 %v5697, %v5696
  %v6671 = vpack.c.b16 %v5699, %v5698
  %v6672 = vpack.c.b16 %v5701, %v5700
  %v6673 = vpack.c.b16 %v5703, %v5702
  %v6674 = vpack.c.b16 %v5705, %v5704
  %v6675 = vpack.c.b16 %v5707, %v5706
  %v6676 = vpack.c.b16 %v5709, %v5708
  %v6677 = vpack.c.b16 %v5711, %v5710
  %v6678 = vpack.c.b16 %v5713, %v5712
  %v6679 = vpack.c.b16 %v5715, %v5714
  %v6680 = vpack.c.b16 %v5717, %v5716
  %v6681 = vpack.c.b16 %v5719, %v5718
  %v6682 = vpack.c.b16 %v5721, %v5720
  %v6683 = vpack.c.b16 %v5723, %v5722
  %v6684 = vpack.c.b16 %v5725, %v5724
  %v6685 = vpack.c.b16 %v5727, %v5726
  %v6686 = vpack.c.b16 %v5729, %v5728
  %v6687 = vpack.c.b16 %v5731, %v5730
  %v6688 = vpack.c.b16 %v5733, %v5732
  %v6689 = vpack.c.b16 %v5735, %v5734
  %v6690 = vpack.c.b16 %v5737, %v5736
  %v6691 = vpack.c.b16 %v5739, %v5738
  %v6692 = vpack.c.b16 %v5741, %v5740
  %v6693 = vpack.c.b16 %v5743, %v5742
  %v6694 = vpack.c.b16 %v5745, %v5744
  %v6695 = vpack.c.b16 %v5747, %v5746
  %v6696 = vpack.c.b16 %v5749, %v5748
  %v6697 = vpack.c.b16 %v5751, %v5750
  %v6698 = vpack.c.b16 %v5753, %v5752
  %v6699 = vpack.c.b16 %v5755, %v5754
  %v6700 = vpack.c.b16 %v5757, %v5756
  %v6701 = vpack.c.b16 %v5759, %v5758
  %v6702 = vpack.c.b16 %v5761, %v5760
  %v6703 = vpack.c.b16 %v5763, %v5762
  %v6704 = vpack.c.b16 %v5765, %v5764
  %v6705 = vpack.c.b16 %v5767, %v5766
  %v6706 = vpack.c.b16 %v5769, %v5768
  %v6707 = vpack.c.b16 %v5771, %v5770
  %v6708 = vpack.c.b16 %v5773, %v5772
  %v6709 = vpack.c.b16 %v5775, %v5774
  %v6710 = vpack.c.b16 %v5777, %v5776
  %v6711 = vpack.c.b16 %v5779, %v5778
  %v6712 = vpack.c.b16 %v5781, %v5780
  %v6713 = vpack.c.b16 %v5783, %v5782
  %v6714 = vpack.c.b16 %v5785, %v5784
  %v6715 = vpack.c.b16 %v5787, %v5786
  %v6716 = vpack.c.b16 %v5789, %v5788
  %v6717 = vpack.c.b16 %v5791, %v5790
  %v6718 = vpack.c.b16 %v5793, %v5792
  %v6719 = vpack.c.b16 %v5795, %v5794
  %v6720 = vpack.c.b16 %v5797, %v5796
  %v6721 = vpack.c.b16 %v5799, %v5798
  %v6722 = vpack.c.b16 %v5801, %v5800
  %v6723 = vpack.c.b16 %v5803, %v5802
  %v6724 = vpack.c.b16 %v5805, %v5804
  %v6725 = vpack.c.b16 %v5807, %v5806
  %v6726 = vpack.c.b16 %v5809, %v5808
  %v6727 = vpack.c.b16 %v5811, %v5810
  %v6728 = vpack.c.b16 %v5813, %v5812
  %v6729 = vpack.c.b16 %v5815, %v5814
  %v6730 = vpack.c.b16 %v5817, %v5816
  %v6731 = vpack.c.b16 %v5819, %v5818
  %v6732 = vpack.c.b16 %v5821, %v5820
  %v6733 = vpack.c.b16 %v5823, %v5822
  %v6734 = vpack.c.b16 %v5825, %v5824
  %v6735 = vpack.c.b16 %v5827, %v5826
  %v6736 = vpack.c.b16 %v5829, %v5828
  %v6737 = vpack.c.b16 %v5831, %v5830
  %v6738 = vpack.c.b16 %v5833, %v5832
  %v6739 = vpack.c.b16 %v5835, %v5834
  %v6740 = vpack.c.b16 %v5837, %v5836
  %v6741 = vpack.c.b16 %v5839, %v5838
  %v6742 = vpack.c.b16 %v5841, %v5840
  %v6743 = vpack.c.b16 %v5843, %v5842
  %v6744 = vpack.c.b16 %v5845, %v5844
  %v6745 = vpack.c.b16 %v5847, %v5846
  %v6746 = vpack.c.b16 %v5849, %v5848
  %v6747 = vpack.c.b16 %v5851, %v5850
  %7644 = vmatprep.subr.bf16.mxu0 0
  %7645 = vmatpush1.bf16.msra.mxu0 %v5852
  %7646 = vmatprep.subr.bf16.mxu0 0
  %7647 = vmatpush1.bf16.msra.mxu0 %v5853
  %7648 = vmatprep.subr.bf16.mxu0 0
  %7649 = vmatpush1.bf16.msra.mxu0 %v5854
  %7650 = vmatprep.subr.bf16.mxu0 0
  %7651 = vmatpush1.bf16.msra.mxu0 %v5855
  %7652 = vmatprep.subr.bf16.mxu0 0
  %7653 = vmatpush1.bf16.msra.mxu0 %v5856
  %7654 = vmatprep.subr.bf16.mxu0 0
  %7655 = vmatpush1.bf16.msra.mxu0 %v5857
  %7656 = vmatprep.subr.bf16.mxu0 0
  %7657 = vmatpush1.bf16.msra.mxu0 %v5858
  %7658 = vmatprep.subr.bf16.mxu0 0
  %7659 = vmatpush1.bf16.msra.mxu0 %v5859
  %7660 = vmatprep.subr.bf16.mxu0 0
  %7661 = vmatpush1.bf16.msra.mxu0 %v5860
  %7662 = vmatprep.subr.bf16.mxu0 0
  %7663 = vmatpush1.bf16.msra.mxu0 %v5861
  %7664 = vmatprep.subr.bf16.mxu0 0
  %7665 = vmatpush1.bf16.msra.mxu0 %v5862
  %7666 = vmatprep.subr.bf16.mxu0 0
  %7667 = vmatpush1.bf16.msra.mxu0 %v5863
  %7668 = vmatprep.subr.bf16.mxu0 0
  %7669 = vmatpush1.bf16.msra.mxu0 %v5864
  %7670 = vmatprep.subr.bf16.mxu0 0
  %7671 = vmatpush1.bf16.msra.mxu0 %v5865
  %7672 = vmatprep.subr.bf16.mxu0 0
  %7673 = vmatpush1.bf16.msra.mxu0 %v5866
  %7674 = vmatprep.subr.bf16.mxu0 0
  %7675 = vmatpush1.bf16.msra.mxu0 %v5867
  %7676 = vmatprep.mubr.bf16.mxu0 %v2045
  %7677 = vmatmul.mubr.bf16.gmra.mrb[0].mxu0 %v2044
  %v7678 = vpop.f32.mrb[0].mxu0
  %v7679 = vadd.f32 %v1874, %v7678
  %v7680 = vpop.f32.mrb[0].mxu0
  %v7681 = vpop.f32.mrb[0].mxu0
  %v7682 = vpop.f32.mrb[0].mxu0
  %7683 = vdwg.mxu0
  %7684 = vmatprep.subr.bf16.mxu0 0
  %7685 = vmatpush1.bf16.msra.mxu0 %v5868
  %7686 = vmatprep.subr.bf16.mxu0 0
  %7687 = vmatpush1.bf16.msra.mxu0 %v5869
  %7688 = vmatprep.subr.bf16.mxu0 0
  %7689 = vmatpush1.bf16.msra.mxu0 %v5870
  %7690 = vmatprep.subr.bf16.mxu0 0
  %7691 = vmatpush1.bf16.msra.mxu0 %v5871
  %7692 = vmatprep.subr.bf16.mxu0 0
  %7693 = vmatpush1.bf16.msra.mxu0 %v5872
  %7694 = vmatprep.subr.bf16.mxu0 0
  %7695 = vmatpush1.bf16.msra.mxu0 %v5873
  %7696 = vmatprep.subr.bf16.mxu0 0
  %7697 = vmatpush1.bf16.msra.mxu0 %v5874
  %7698 = vmatprep.subr.bf16.mxu0 0
  %7699 = vmatpush1.bf16.msra.mxu0 %v5875
  %7700 = vmatprep.subr.bf16.mxu0 0
  %7701 = vmatpush1.bf16.msra.mxu0 %v5876
  %7702 = vmatprep.subr.bf16.mxu0 0
  %7703 = vmatpush1.bf16.msra.mxu0 %v5877
  %7704 = vmatprep.subr.bf16.mxu0 0
  %7705 = vmatpush1.bf16.msra.mxu0 %v5878
  %7706 = vmatprep.subr.bf16.mxu0 0
  %7707 = vmatpush1.bf16.msra.mxu0 %v5879
  %7708 = vmatprep.subr.bf16.mxu0 0
  %7709 = vmatpush1.bf16.msra.mxu0 %v5880
  %7710 = vmatprep.subr.bf16.mxu0 0
  %7711 = vmatpush1.bf16.msra.mxu0 %v5881
  %7712 = vmatprep.subr.bf16.mxu0 0
  %7713 = vmatpush1.bf16.msra.mxu0 %v5882
  %7714 = vmatprep.subr.bf16.mxu0 0
  %7715 = vmatpush1.bf16.msra.mxu0 %v5883
  %7716 = vmatprep.mubr.bf16.mxu0 %v2047
  %7717 = vmatmul.mubr.bf16.gmra.mrb[0].mxu0 %v2046
  %v7718 = vpop.f32.mrb[0].mxu0
  %v7719 = vadd.f32 %v7679, %v7718
  %v7720 = vpop.f32.mrb[0].mxu0
  %v7721 = vpop.f32.mrb[0].mxu0
  %v7722 = vpop.f32.mrb[0].mxu0
  %7723 = vdwg.mxu0
  %7724 = vmatprep.subr.bf16.mxu0 0
  %7725 = vmatpush1.bf16.msra.mxu0 %v5884
  %7726 = vmatprep.subr.bf16.mxu0 0
  %7727 = vmatpush1.bf16.msra.mxu0 %v5885
  %7728 = vmatprep.subr.bf16.mxu0 0
  %7729 = vmatpush1.bf16.msra.mxu0 %v5886
  %7730 = vmatprep.subr.bf16.mxu0 0
  %7731 = vmatpush1.bf16.msra.mxu0 %v5887
  %7732 = vmatprep.subr.bf16.mxu0 0
  %7733 = vmatpush1.bf16.msra.mxu0 %v5888
  %7734 = vmatprep.subr.bf16.mxu0 0
  %7735 = vmatpush1.bf16.msra.mxu0 %v5889
  %7736 = vmatprep.subr.bf16.mxu0 0
  %7737 = vmatpush1.bf16.msra.mxu0 %v5890
  %7738 = vmatprep.subr.bf16.mxu0 0
  %7739 = vmatpush1.bf16.msra.mxu0 %v5891
  %7740 = vmatprep.subr.bf16.mxu0 0
  %7741 = vmatpush1.bf16.msra.mxu0 %v5892
  %7742 = vmatprep.subr.bf16.mxu0 0
  %7743 = vmatpush1.bf16.msra.mxu0 %v5893
  %7744 = vmatprep.subr.bf16.mxu0 0
  %7745 = vmatpush1.bf16.msra.mxu0 %v5894
  %7746 = vmatprep.subr.bf16.mxu0 0
  %7747 = vmatpush1.bf16.msra.mxu0 %v5895
  %7748 = vmatprep.subr.bf16.mxu0 0
  %7749 = vmatpush1.bf16.msra.mxu0 %v5896
  %7750 = vmatprep.subr.bf16.mxu0 0
  %7751 = vmatpush1.bf16.msra.mxu0 %v5897
  %7752 = vmatprep.subr.bf16.mxu0 0
  %7753 = vmatpush1.bf16.msra.mxu0 %v5898
  %7754 = vmatprep.subr.bf16.mxu0 0
  %7755 = vmatpush1.bf16.msra.mxu0 %v5899
  %7756 = vmatprep.mubr.bf16.mxu0 %v2049
  %7757 = vmatmul.mubr.bf16.gmra.mrb[0].mxu0 %v2048
  %v7758 = vpop.f32.mrb[0].mxu0
  %v7759 = vadd.f32 %v7719, %v7758
  %v7760 = vpop.f32.mrb[0].mxu0
  %v7761 = vpop.f32.mrb[0].mxu0
  %v7762 = vpop.f32.mrb[0].mxu0
  %7763 = vdwg.mxu0
  %7764 = vmatprep.subr.bf16.mxu0 0
  %7765 = vmatpush1.bf16.msra.mxu0 %v5900
  %7766 = vmatprep.subr.bf16.mxu0 0
  %7767 = vmatpush1.bf16.msra.mxu0 %v5901
  %7768 = vmatprep.subr.bf16.mxu0 0
  %7769 = vmatpush1.bf16.msra.mxu0 %v5902
  %7770 = vmatprep.subr.bf16.mxu0 0
  %7771 = vmatpush1.bf16.msra.mxu0 %v5903
  %7772 = vmatprep.subr.bf16.mxu0 0
  %7773 = vmatpush1.bf16.msra.mxu0 %v5904
  %7774 = vmatprep.subr.bf16.mxu0 0
  %7775 = vmatpush1.bf16.msra.mxu0 %v5905
  %7776 = vmatprep.subr.bf16.mxu0 0
  %7777 = vmatpush1.bf16.msra.mxu0 %v5906
  %7778 = vmatprep.subr.bf16.mxu0 0
  %7779 = vmatpush1.bf16.msra.mxu0 %v5907
  %7780 = vmatprep.subr.bf16.mxu0 0
  %7781 = vmatpush1.bf16.msra.mxu0 %v5908
  %7782 = vmatprep.subr.bf16.mxu0 0
  %7783 = vmatpush1.bf16.msra.mxu0 %v5909
  %7784 = vmatprep.subr.bf16.mxu0 0
  %7785 = vmatpush1.bf16.msra.mxu0 %v5910
  %7786 = vmatprep.subr.bf16.mxu0 0
  %7787 = vmatpush1.bf16.msra.mxu0 %v5911
  %7788 = vmatprep.subr.bf16.mxu0 0
  %7789 = vmatpush1.bf16.msra.mxu0 %v5912
  %7790 = vmatprep.subr.bf16.mxu0 0
  %7791 = vmatpush1.bf16.msra.mxu0 %v5913
  %7792 = vmatprep.subr.bf16.mxu0 0
  %7793 = vmatpush1.bf16.msra.mxu0 %v5914
  %7794 = vmatprep.subr.bf16.mxu0 0
  %7795 = vmatpush1.bf16.msra.mxu0 %v5915
  %7796 = vmatprep.mubr.bf16.mxu0 %v2051
  %7797 = vmatmul.mubr.bf16.gmra.mrb[0].mxu0 %v2050
  %v7798 = vpop.f32.mrb[0].mxu0
  %v7799 = vadd.f32 %v7759, %v7798
  %v7800 = vpop.f32.mrb[0].mxu0
  %v7801 = vpop.f32.mrb[0].mxu0
  %v7802 = vpop.f32.mrb[0].mxu0
  %7803 = vdwg.mxu0
  %7804 = vmatprep.subr.bf16.mxu0 0
  %7805 = vmatpush1.bf16.msra.mxu0 %v5916
  %7806 = vmatprep.subr.bf16.mxu0 0
  %7807 = vmatpush1.bf16.msra.mxu0 %v5917
  %7808 = vmatprep.subr.bf16.mxu0 0
  %7809 = vmatpush1.bf16.msra.mxu0 %v5918
  %7810 = vmatprep.subr.bf16.mxu0 0
  %7811 = vmatpush1.bf16.msra.mxu0 %v5919
  %7812 = vmatprep.subr.bf16.mxu0 0
  %7813 = vmatpush1.bf16.msra.mxu0 %v5920
  %7814 = vmatprep.subr.bf16.mxu0 0
  %7815 = vmatpush1.bf16.msra.mxu0 %v5921
  %7816 = vmatprep.subr.bf16.mxu0 0
  %7817 = vmatpush1.bf16.msra.mxu0 %v5922
  %7818 = vmatprep.subr.bf16.mxu0 0
  %7819 = vmatpush1.bf16.msra.mxu0 %v5923
  %7820 = vmatprep.subr.bf16.mxu0 0
  %7821 = vmatpush1.bf16.msra.mxu0 %v5924
  %7822 = vmatprep.subr.bf16.mxu0 0
  %7823 = vmatpush1.bf16.msra.mxu0 %v5925
  %7824 = vmatprep.subr.bf16.mxu0 0
  %7825 = vmatpush1.bf16.msra.mxu0 %v5926
  %7826 = vmatprep.subr.bf16.mxu0 0
  %7827 = vmatpush1.bf16.msra.mxu0 %v5927
  %7828 = vmatprep.subr.bf16.mxu0 0
  %7829 = vmatpush1.bf16.msra.mxu0 %v5928
  %7830 = vmatprep.subr.bf16.mxu0 0
  %7831 = vmatpush1.bf16.msra.mxu0 %v5929
  %7832 = vmatprep.subr.bf16.mxu0 0
  %7833 = vmatpush1.bf16.msra.mxu0 %v5930
  %7834 = vmatprep.subr.bf16.mxu0 0
  %7835 = vmatpush1.bf16.msra.mxu0 %v5931
  %7836 = vmatprep.mubr.bf16.mxu0 %v2053
  %7837 = vmatmul.mubr.bf16.gmra.mrb[0].mxu0 %v2052
  %v7838 = vpop.f32.mrb[0].mxu0
  %v7839 = vadd.f32 %v7799, %v7838
  %v7840 = vpop.f32.mrb[0].mxu0
  %v7841 = vpop.f32.mrb[0].mxu0
  %v7842 = vpop.f32.mrb[0].mxu0
  %7843 = vdwg.mxu0
  %7844 = vmatprep.subr.bf16.mxu0 0
  %7845 = vmatpush1.bf16.msra.mxu0 %v5932
  %7846 = vmatprep.subr.bf16.mxu0 0
  %7847 = vmatpush1.bf16.msra.mxu0 %v5933
  %7848 = vmatprep.subr.bf16.mxu0 0
  %7849 = vmatpush1.bf16.msra.mxu0 %v5934
  %7850 = vmatprep.subr.bf16.mxu0 0
  %7851 = vmatpush1.bf16.msra.mxu0 %v5935
  %7852 = vmatprep.subr.bf16.mxu0 0
  %7853 = vmatpush1.bf16.msra.mxu0 %v5936
  %7854 = vmatprep.subr.bf16.mxu0 0
  %7855 = vmatpush1.bf16.msra.mxu0 %v5937
  %7856 = vmatprep.subr.bf16.mxu0 0
  %7857 = vmatpush1.bf16.msra.mxu0 %v5938
  %7858 = vmatprep.subr.bf16.mxu0 0
  %7859 = vmatpush1.bf16.msra.mxu0 %v5939
  %7860 = vmatprep.subr.bf16.mxu0 0
  %7861 = vmatpush1.bf16.msra.mxu0 %v5940
  %7862 = vmatprep.subr.bf16.mxu0 0
  %7863 = vmatpush1.bf16.msra.mxu0 %v5941
  %7864 = vmatprep.subr.bf16.mxu0 0
  %7865 = vmatpush1.bf16.msra.mxu0 %v5942
  %7866 = vmatprep.subr.bf16.mxu0 0
  %7867 = vmatpush1.bf16.msra.mxu0 %v5943
  %7868 = vmatprep.subr.bf16.mxu0 0
  %7869 = vmatpush1.bf16.msra.mxu0 %v5944
  %7870 = vmatprep.subr.bf16.mxu0 0
  %7871 = vmatpush1.bf16.msra.mxu0 %v5945
  %7872 = vmatprep.subr.bf16.mxu0 0
  %7873 = vmatpush1.bf16.msra.mxu0 %v5946
  %7874 = vmatprep.subr.bf16.mxu0 0
  %7875 = vmatpush1.bf16.msra.mxu0 %v5947
  %7876 = vmatprep.mubr.bf16.mxu0 %v2055
  %7877 = vmatmul.mubr.bf16.gmra.mrb[0].mxu0 %v2054
  %v7878 = vpop.f32.mrb[0].mxu0
  %v7879 = vadd.f32 %v7839, %v7878
  %v7880 = vpop.f32.mrb[0].mxu0
  %v7881 = vpop.f32.mrb[0].mxu0
  %v7882 = vpop.f32.mrb[0].mxu0
  %7883 = vdwg.mxu0
  %7884 = vmatprep.subr.bf16.mxu0 0
  %7885 = vmatpush1.bf16.msra.mxu0 %v5948
  %7886 = vmatprep.subr.bf16.mxu0 0
  %7887 = vmatpush1.bf16.msra.mxu0 %v5949
  %7888 = vmatprep.subr.bf16.mxu0 0
  %7889 = vmatpush1.bf16.msra.mxu0 %v5950
  %7890 = vmatprep.subr.bf16.mxu0 0
  %7891 = vmatpush1.bf16.msra.mxu0 %v5951
  %7892 = vmatprep.subr.bf16.mxu0 0
  %7893 = vmatpush1.bf16.msra.mxu0 %v5952
  %7894 = vmatprep.subr.bf16.mxu0 0
  %7895 = vmatpush1.bf16.msra.mxu0 %v5953
  %7896 = vmatprep.subr.bf16.mxu0 0
  %7897 = vmatpush1.bf16.msra.mxu0 %v5954
  %7898 = vmatprep.subr.bf16.mxu0 0
  %7899 = vmatpush1.bf16.msra.mxu0 %v5955
  %7900 = vmatprep.subr.bf16.mxu0 0
  %7901 = vmatpush1.bf16.msra.mxu0 %v5956
  %7902 = vmatprep.subr.bf16.mxu0 0
  %7903 = vmatpush1.bf16.msra.mxu0 %v5957
  %7904 = vmatprep.subr.bf16.mxu0 0
  %7905 = vmatpush1.bf16.msra.mxu0 %v5958
  %7906 = vmatprep.subr.bf16.mxu0 0
  %7907 = vmatpush1.bf16.msra.mxu0 %v5959
  %7908 = vmatprep.subr.bf16.mxu0 0
  %7909 = vmatpush1.bf16.msra.mxu0 %v5960
  %7910 = vmatprep.subr.bf16.mxu0 0
  %7911 = vmatpush1.bf16.msra.mxu0 %v5961
  %7912 = vmatprep.subr.bf16.mxu0 0
  %7913 = vmatpush1.bf16.msra.mxu0 %v5962
  %7914 = vmatprep.subr.bf16.mxu0 0
  %7915 = vmatpush1.bf16.msra.mxu0 %v5963
  %7916 = vmatprep.mubr.bf16.mxu0 %v2057
  %7917 = vmatmul.mubr.bf16.gmra.mrb[0].mxu0 %v2056
  %v7918 = vpop.f32.mrb[0].mxu0
  %v7919 = vadd.f32 %v7879, %v7918
  %v7920 = vpop.f32.mrb[0].mxu0
  %v7921 = vpop.f32.mrb[0].mxu0
  %v7922 = vpop.f32.mrb[0].mxu0
  %7923 = vdwg.mxu0
  %7924 = vmatprep.subr.bf16.mxu0 0
  %7925 = vmatpush1.bf16.msra.mxu0 %v5964
  %7926 = vmatprep.subr.bf16.mxu0 0
  %7927 = vmatpush1.bf16.msra.mxu0 %v5965
  %7928 = vmatprep.subr.bf16.mxu0 0
  %7929 = vmatpush1.bf16.msra.mxu0 %v5966
  %7930 = vmatprep.subr.bf16.mxu0 0
  %7931 = vmatpush1.bf16.msra.mxu0 %v5967
  %7932 = vmatprep.subr.bf16.mxu0 0
  %7933 = vmatpush1.bf16.msra.mxu0 %v5968
  %7934 = vmatprep.subr.bf16.mxu0 0
  %7935 = vmatpush1.bf16.msra.mxu0 %v5969
  %7936 = vmatprep.subr.bf16.mxu0 0
  %7937 = vmatpush1.bf16.msra.mxu0 %v5970
  %7938 = vmatprep.subr.bf16.mxu0 0
  %7939 = vmatpush1.bf16.msra.mxu0 %v5971
  %7940 = vmatprep.subr.bf16.mxu0 0
  %7941 = vmatpush1.bf16.msra.mxu0 %v5972
  %7942 = vmatprep.subr.bf16.mxu0 0
  %7943 = vmatpush1.bf16.msra.mxu0 %v5973
  %7944 = vmatprep.subr.bf16.mxu0 0
  %7945 = vmatpush1.bf16.msra.mxu0 %v5974
  %7946 = vmatprep.subr.bf16.mxu0 0
  %7947 = vmatpush1.bf16.msra.mxu0 %v5975
  %7948 = vmatprep.subr.bf16.mxu0 0
  %7949 = vmatpush1.bf16.msra.mxu0 %v5976
  %7950 = vmatprep.subr.bf16.mxu0 0
  %7951 = vmatpush1.bf16.msra.mxu0 %v5977
  %7952 = vmatprep.subr.bf16.mxu0 0
  %7953 = vmatpush1.bf16.msra.mxu0 %v5978
  %7954 = vmatprep.subr.bf16.mxu0 0
  %7955 = vmatpush1.bf16.msra.mxu0 %v5979
  %7956 = vmatprep.mubr.bf16.mxu0 %v2059
  %7957 = vmatmul.mubr.bf16.gmra.mrb[0].mxu0 %v2058
  %v7958 = vpop.f32.mrb[0].mxu0
  %v7959 = vadd.f32 %v7919, %v7958
  %v7960 = vpop.f32.mrb[0].mxu0
  %v7961 = vpop.f32.mrb[0].mxu0
  %v7962 = vpop.f32.mrb[0].mxu0
  %7963 = vdwg.mxu0
  %7964 = vmatprep.subr.bf16.mxu0 0
  %7965 = vmatpush1.bf16.msra.mxu0 %v5980
  %7966 = vmatprep.subr.bf16.mxu0 0
  %7967 = vmatpush1.bf16.msra.mxu0 %v5981
  %7968 = vmatprep.subr.bf16.mxu0 0
  %7969 = vmatpush1.bf16.msra.mxu0 %v5982
  %7970 = vmatprep.subr.bf16.mxu0 0
  %7971 = vmatpush1.bf16.msra.mxu0 %v5983
  %7972 = vmatprep.subr.bf16.mxu0 0
  %7973 = vmatpush1.bf16.msra.mxu0 %v5984
  %7974 = vmatprep.subr.bf16.mxu0 0
  %7975 = vmatpush1.bf16.msra.mxu0 %v5985
  %7976 = vmatprep.subr.bf16.mxu0 0
  %7977 = vmatpush1.bf16.msra.mxu0 %v5986
  %7978 = vmatprep.subr.bf16.mxu0 0
  %7979 = vmatpush1.bf16.msra.mxu0 %v5987
  %7980 = vmatprep.subr.bf16.mxu0 0
  %7981 = vmatpush1.bf16.msra.mxu0 %v5988
  %7982 = vmatprep.subr.bf16.mxu0 0
  %7983 = vmatpush1.bf16.msra.mxu0 %v5989
  %7984 = vmatprep.subr.bf16.mxu0 0
  %7985 = vmatpush1.bf16.msra.mxu0 %v5990
  %7986 = vmatprep.subr.bf16.mxu0 0
  %7987 = vmatpush1.bf16.msra.mxu0 %v5991
  %7988 = vmatprep.subr.bf16.mxu0 0
  %7989 = vmatpush1.bf16.msra.mxu0 %v5992
  %7990 = vmatprep.subr.bf16.mxu0 0
  %7991 = vmatpush1.bf16.msra.mxu0 %v5993
  %7992 = vmatprep.subr.bf16.mxu0 0
  %7993 = vmatpush1.bf16.msra.mxu0 %v5994
  %7994 = vmatprep.subr.bf16.mxu0 0
  %7995 = vmatpush1.bf16.msra.mxu0 %v5995
  %7996 = vmatprep.mubr.bf16.mxu0 %v2061
  %7997 = vmatmul.mubr.bf16.gmra.mrb[0].mxu0 %v2060
  %v7998 = vpop.f32.mrb[0].mxu0
  %v7999 = vadd.f32 %v7959, %v7998
  %v8000 = vpop.f32.mrb[0].mxu0
  %v8001 = vpop.f32.mrb[0].mxu0
  %v8002 = vpop.f32.mrb[0].mxu0
  %8003 = vdwg.mxu0
  %8004 = vmatprep.subr.bf16.mxu0 0
  %8005 = vmatpush1.bf16.msra.mxu0 %v5996
  %8006 = vmatprep.subr.bf16.mxu0 0
  %8007 = vmatpush1.bf16.msra.mxu0 %v5997
  %8008 = vmatprep.subr.bf16.mxu0 0
  %8009 = vmatpush1.bf16.msra.mxu0 %v5998
  %8010 = vmatprep.subr.bf16.mxu0 0
  %8011 = vmatpush1.bf16.msra.mxu0 %v5999
  %8012 = vmatprep.subr.bf16.mxu0 0
  %8013 = vmatpush1.bf16.msra.mxu0 %v6000
  %8014 = vmatprep.subr.bf16.mxu0 0
  %8015 = vmatpush1.bf16.msra.mxu0 %v6001
  %8016 = vmatprep.subr.bf16.mxu0 0
  %8017 = vmatpush1.bf16.msra.mxu0 %v6002
  %8018 = vmatprep.subr.bf16.mxu0 0
  %8019 = vmatpush1.bf16.msra.mxu0 %v6003
  %8020 = vmatprep.subr.bf16.mxu0 0
  %8021 = vmatpush1.bf16.msra.mxu0 %v6004
  %8022 = vmatprep.subr.bf16.mxu0 0
  %8023 = vmatpush1.bf16.msra.mxu0 %v6005
  %8024 = vmatprep.subr.bf16.mxu0 0
  %8025 = vmatpush1.bf16.msra.mxu0 %v6006
  %8026 = vmatprep.subr.bf16.mxu0 0
  %8027 = vmatpush1.bf16.msra.mxu0 %v6007
  %8028 = vmatprep.subr.bf16.mxu0 0
  %8029 = vmatpush1.bf16.msra.mxu0 %v6008
  %8030 = vmatprep.subr.bf16.mxu0 0
  %8031 = vmatpush1.bf16.msra.mxu0 %v6009
  %8032 = vmatprep.subr.bf16.mxu0 0
  %8033 = vmatpush1.bf16.msra.mxu0 %v6010
  %8034 = vmatprep.subr.bf16.mxu0 0
  %8035 = vmatpush1.bf16.msra.mxu0 %v6011
  %8036 = vmatprep.mubr.bf16.mxu0 %v2063
  %8037 = vmatmul.mubr.bf16.gmra.mrb[0].mxu0 %v2062
  %v8038 = vpop.f32.mrb[0].mxu0
  %v8039 = vadd.f32 %v7999, %v8038
  %v8040 = vpop.f32.mrb[0].mxu0
  %v8041 = vpop.f32.mrb[0].mxu0
  %v8042 = vpop.f32.mrb[0].mxu0
  %8043 = vdwg.mxu0
  %8044 = vmatprep.subr.bf16.mxu0 0
  %8045 = vmatpush1.bf16.msra.mxu0 %v6012
  %8046 = vmatprep.subr.bf16.mxu0 0
  %8047 = vmatpush1.bf16.msra.mxu0 %v6013
  %8048 = vmatprep.subr.bf16.mxu0 0
  %8049 = vmatpush1.bf16.msra.mxu0 %v6014
  %8050 = vmatprep.subr.bf16.mxu0 0
  %8051 = vmatpush1.bf16.msra.mxu0 %v6015
  %8052 = vmatprep.subr.bf16.mxu0 0
  %8053 = vmatpush1.bf16.msra.mxu0 %v6016
  %8054 = vmatprep.subr.bf16.mxu0 0
  %8055 = vmatpush1.bf16.msra.mxu0 %v6017
  %8056 = vmatprep.subr.bf16.mxu0 0
  %8057 = vmatpush1.bf16.msra.mxu0 %v6018
  %8058 = vmatprep.subr.bf16.mxu0 0
  %8059 = vmatpush1.bf16.msra.mxu0 %v6019
  %8060 = vmatprep.subr.bf16.mxu0 0
  %8061 = vmatpush1.bf16.msra.mxu0 %v6020
  %8062 = vmatprep.subr.bf16.mxu0 0
  %8063 = vmatpush1.bf16.msra.mxu0 %v6021
  %8064 = vmatprep.subr.bf16.mxu0 0
  %8065 = vmatpush1.bf16.msra.mxu0 %v6022
  %8066 = vmatprep.subr.bf16.mxu0 0
  %8067 = vmatpush1.bf16.msra.mxu0 %v6023
  %8068 = vmatprep.subr.bf16.mxu0 0
  %8069 = vmatpush1.bf16.msra.mxu0 %v6024
  %8070 = vmatprep.subr.bf16.mxu0 0
  %8071 = vmatpush1.bf16.msra.mxu0 %v6025
  %8072 = vmatprep.subr.bf16.mxu0 0
  %8073 = vmatpush1.bf16.msra.mxu0 %v6026
  %8074 = vmatprep.subr.bf16.mxu0 0
  %8075 = vmatpush1.bf16.msra.mxu0 %v6027
  %8076 = vmatprep.mubr.bf16.mxu0 %v2065
  %8077 = vmatmul.mubr.bf16.gmra.mrb[0].mxu0 %v2064
  %v8078 = vpop.f32.mrb[0].mxu0
  %v8079 = vadd.f32 %v8039, %v8078
  %v8080 = vpop.f32.mrb[0].mxu0
  %v8081 = vpop.f32.mrb[0].mxu0
  %v8082 = vpop.f32.mrb[0].mxu0
  %8083 = vdwg.mxu0
  %8084 = vmatprep.subr.bf16.mxu0 0
  %8085 = vmatpush1.bf16.msra.mxu0 %v6028
  %8086 = vmatprep.subr.bf16.mxu0 0
  %8087 = vmatpush1.bf16.msra.mxu0 %v6029
  %8088 = vmatprep.subr.bf16.mxu0 0
  %8089 = vmatpush1.bf16.msra.mxu0 %v6030
  %8090 = vmatprep.subr.bf16.mxu0 0
  %8091 = vmatpush1.bf16.msra.mxu0 %v6031
  %8092 = vmatprep.subr.bf16.mxu0 0
  %8093 = vmatpush1.bf16.msra.mxu0 %v6032
  %8094 = vmatprep.subr.bf16.mxu0 0
  %8095 = vmatpush1.bf16.msra.mxu0 %v6033
  %8096 = vmatprep.subr.bf16.mxu0 0
  %8097 = vmatpush1.bf16.msra.mxu0 %v6034
  %8098 = vmatprep.subr.bf16.mxu0 0
  %8099 = vmatpush1.bf16.msra.mxu0 %v6035
  %8100 = vmatprep.subr.bf16.mxu0 0
  %8101 = vmatpush1.bf16.msra.mxu0 %v6036
  %8102 = vmatprep.subr.bf16.mxu0 0
  %8103 = vmatpush1.bf16.msra.mxu0 %v6037
  %8104 = vmatprep.subr.bf16.mxu0 0
  %8105 = vmatpush1.bf16.msra.mxu0 %v6038
  %8106 = vmatprep.subr.bf16.mxu0 0
  %8107 = vmatpush1.bf16.msra.mxu0 %v6039
  %8108 = vmatprep.subr.bf16.mxu0 0
  %8109 = vmatpush1.bf16.msra.mxu0 %v6040
  %8110 = vmatprep.subr.bf16.mxu0 0
  %8111 = vmatpush1.bf16.msra.mxu0 %v6041
  %8112 = vmatprep.subr.bf16.mxu0 0
  %8113 = vmatpush1.bf16.msra.mxu0 %v6042
  %8114 = vmatprep.subr.bf16.mxu0 0
  %8115 = vmatpush1.bf16.msra.mxu0 %v6043
  %8116 = vmatprep.mubr.bf16.mxu0 %v2067
  %8117 = vmatmul.mubr.bf16.gmra.mrb[0].mxu0 %v2066
  %v8118 = vpop.f32.mrb[0].mxu0
  %v8119 = vadd.f32 %v8079, %v8118
  %v8120 = vpop.f32.mrb[0].mxu0
  %v8121 = vpop.f32.mrb[0].mxu0
  %v8122 = vpop.f32.mrb[0].mxu0
  %8123 = vdwg.mxu0
  %8124 = vmatprep.subr.bf16.mxu0 0
  %8125 = vmatpush1.bf16.msra.mxu0 %v6044
  %8126 = vmatprep.subr.bf16.mxu0 0
  %8127 = vmatpush1.bf16.msra.mxu0 %v6045
  %8128 = vmatprep.subr.bf16.mxu0 0
  %8129 = vmatpush1.bf16.msra.mxu0 %v6046
  %8130 = vmatprep.subr.bf16.mxu0 0
  %8131 = vmatpush1.bf16.msra.mxu0 %v6047
  %8132 = vmatprep.subr.bf16.mxu0 0
  %8133 = vmatpush1.bf16.msra.mxu0 %v6048
  %8134 = vmatprep.subr.bf16.mxu0 0
  %8135 = vmatpush1.bf16.msra.mxu0 %v6049
  %8136 = vmatprep.subr.bf16.mxu0 0
  %8137 = vmatpush1.bf16.msra.mxu0 %v6050
  %8138 = vmatprep.subr.bf16.mxu0 0
  %8139 = vmatpush1.bf16.msra.mxu0 %v6051
  %8140 = vmatprep.subr.bf16.mxu0 0
  %8141 = vmatpush1.bf16.msra.mxu0 %v6052
  %8142 = vmatprep.subr.bf16.mxu0 0
  %8143 = vmatpush1.bf16.msra.mxu0 %v6053
  %8144 = vmatprep.subr.bf16.mxu0 0
  %8145 = vmatpush1.bf16.msra.mxu0 %v6054
  %8146 = vmatprep.subr.bf16.mxu0 0
  %8147 = vmatpush1.bf16.msra.mxu0 %v6055
  %8148 = vmatprep.subr.bf16.mxu0 0
  %8149 = vmatpush1.bf16.msra.mxu0 %v6056
  %8150 = vmatprep.subr.bf16.mxu0 0
  %8151 = vmatpush1.bf16.msra.mxu0 %v6057
  %8152 = vmatprep.subr.bf16.mxu0 0
  %8153 = vmatpush1.bf16.msra.mxu0 %v6058
  %8154 = vmatprep.subr.bf16.mxu0 0
  %8155 = vmatpush1.bf16.msra.mxu0 %v6059
  %8156 = vmatprep.mubr.bf16.mxu0 %v2069
  %8157 = vmatmul.mubr.bf16.gmra.mrb[0].mxu0 %v2068
  %v8158 = vpop.f32.mrb[0].mxu0
  %v8159 = vadd.f32 %v8119, %v8158
  %v8160 = vpop.f32.mrb[0].mxu0
  %v8161 = vpop.f32.mrb[0].mxu0
  %v8162 = vpop.f32.mrb[0].mxu0
  %8163 = vdwg.mxu0
  %8164 = vmatprep.subr.bf16.mxu0 0
  %8165 = vmatpush1.bf16.msra.mxu0 %v6060
  %8166 = vmatprep.subr.bf16.mxu0 0
  %8167 = vmatpush1.bf16.msra.mxu0 %v6061
  %8168 = vmatprep.subr.bf16.mxu0 0
  %8169 = vmatpush1.bf16.msra.mxu0 %v6062
  %8170 = vmatprep.subr.bf16.mxu0 0
  %8171 = vmatpush1.bf16.msra.mxu0 %v6063
  %8172 = vmatprep.subr.bf16.mxu0 0
  %8173 = vmatpush1.bf16.msra.mxu0 %v6064
  %8174 = vmatprep.subr.bf16.mxu0 0
  %8175 = vmatpush1.bf16.msra.mxu0 %v6065
  %8176 = vmatprep.subr.bf16.mxu0 0
  %8177 = vmatpush1.bf16.msra.mxu0 %v6066
  %8178 = vmatprep.subr.bf16.mxu0 0
  %8179 = vmatpush1.bf16.msra.mxu0 %v6067
  %8180 = vmatprep.subr.bf16.mxu0 0
  %8181 = vmatpush1.bf16.msra.mxu0 %v6068
  %8182 = vmatprep.subr.bf16.mxu0 0
  %8183 = vmatpush1.bf16.msra.mxu0 %v6069
  %8184 = vmatprep.subr.bf16.mxu0 0
  %8185 = vmatpush1.bf16.msra.mxu0 %v6070
  %8186 = vmatprep.subr.bf16.mxu0 0
  %8187 = vmatpush1.bf16.msra.mxu0 %v6071
  %8188 = vmatprep.subr.bf16.mxu0 0
  %8189 = vmatpush1.bf16.msra.mxu0 %v6072
  %8190 = vmatprep.subr.bf16.mxu0 0
  %8191 = vmatpush1.bf16.msra.mxu0 %v6073
  %8192 = vmatprep.subr.bf16.mxu0 0
  %8193 = vmatpush1.bf16.msra.mxu0 %v6074
  %8194 = vmatprep.subr.bf16.mxu0 0
  %8195 = vmatpush1.bf16.msra.mxu0 %v6075
  %8196 = vmatprep.mubr.bf16.mxu0 %v2071
  %8197 = vmatmul.mubr.bf16.gmra.mrb[0].mxu0 %v2070
  %v8198 = vpop.f32.mrb[0].mxu0
  %v8199 = vadd.f32 %v8159, %v8198
  %v8200 = vpop.f32.mrb[0].mxu0
  %v8201 = vpop.f32.mrb[0].mxu0
  %v8202 = vpop.f32.mrb[0].mxu0
  %8203 = vdwg.mxu0
  %8204 = vmatprep.subr.bf16.mxu0 0
  %8205 = vmatpush1.bf16.msra.mxu0 %v6076
  %8206 = vmatprep.subr.bf16.mxu0 0
  %8207 = vmatpush1.bf16.msra.mxu0 %v6077
  %8208 = vmatprep.subr.bf16.mxu0 0
  %8209 = vmatpush1.bf16.msra.mxu0 %v6078
  %8210 = vmatprep.subr.bf16.mxu0 0
  %8211 = vmatpush1.bf16.msra.mxu0 %v6079
  %8212 = vmatprep.subr.bf16.mxu0 0
  %8213 = vmatpush1.bf16.msra.mxu0 %v6080
  %8214 = vmatprep.subr.bf16.mxu0 0
  %8215 = vmatpush1.bf16.msra.mxu0 %v6081
  %8216 = vmatprep.subr.bf16.mxu0 0
  %8217 = vmatpush1.bf16.msra.mxu0 %v6082
  %8218 = vmatprep.subr.bf16.mxu0 0
  %8219 = vmatpush1.bf16.msra.mxu0 %v6083
  %8220 = vmatprep.subr.bf16.mxu0 0
  %8221 = vmatpush1.bf16.msra.mxu0 %v6084
  %8222 = vmatprep.subr.bf16.mxu0 0
  %8223 = vmatpush1.bf16.msra.mxu0 %v6085
  %8224 = vmatprep.subr.bf16.mxu0 0
  %8225 = vmatpush1.bf16.msra.mxu0 %v6086
  %8226 = vmatprep.subr.bf16.mxu0 0
  %8227 = vmatpush1.bf16.msra.mxu0 %v6087
  %8228 = vmatprep.subr.bf16.mxu0 0
  %8229 = vmatpush1.bf16.msra.mxu0 %v6088
  %8230 = vmatprep.subr.bf16.mxu0 0
  %8231 = vmatpush1.bf16.msra.mxu0 %v6089
  %8232 = vmatprep.subr.bf16.mxu0 0
  %8233 = vmatpush1.bf16.msra.mxu0 %v6090
  %8234 = vmatprep.subr.bf16.mxu0 0
  %8235 = vmatpush1.bf16.msra.mxu0 %v6091
  %8236 = vmatprep.mubr.bf16.mxu0 %v2073
  %8237 = vmatmul.mubr.bf16.gmra.mrb[0].mxu0 %v2072
  %v8238 = vpop.f32.mrb[0].mxu0
  %v8239 = vadd.f32 %v8199, %v8238
  %v8240 = vpop.f32.mrb[0].mxu0
  %v8241 = vpop.f32.mrb[0].mxu0
  %v8242 = vpop.f32.mrb[0].mxu0
  %8243 = vdwg.mxu0
  %8244 = vmatprep.subr.bf16.mxu0 0
  %8245 = vmatpush1.bf16.msra.mxu0 %v6092
  %8246 = vmatprep.subr.bf16.mxu0 0
  %8247 = vmatpush1.bf16.msra.mxu0 %v6093
  %8248 = vmatprep.subr.bf16.mxu0 0
  %8249 = vmatpush1.bf16.msra.mxu0 %v6094
  %8250 = vmatprep.subr.bf16.mxu0 0
  %8251 = vmatpush1.bf16.msra.mxu0 %v6095
  %8252 = vmatprep.subr.bf16.mxu0 0
  %8253 = vmatpush1.bf16.msra.mxu0 %v6096
  %8254 = vmatprep.subr.bf16.mxu0 0
  %8255 = vmatpush1.bf16.msra.mxu0 %v6097
  %8256 = vmatprep.subr.bf16.mxu0 0
  %8257 = vmatpush1.bf16.msra.mxu0 %v6098
  %8258 = vmatprep.subr.bf16.mxu0 0
  %8259 = vmatpush1.bf16.msra.mxu0 %v6099
  %8260 = vmatprep.subr.bf16.mxu0 0
  %8261 = vmatpush1.bf16.msra.mxu0 %v6100
  %8262 = vmatprep.subr.bf16.mxu0 0
  %8263 = vmatpush1.bf16.msra.mxu0 %v6101
  %8264 = vmatprep.subr.bf16.mxu0 0
  %8265 = vmatpush1.bf16.msra.mxu0 %v6102
  %8266 = vmatprep.subr.bf16.mxu0 0
  %8267 = vmatpush1.bf16.msra.mxu0 %v6103
  %8268 = vmatprep.subr.bf16.mxu0 0
  %8269 = vmatpush1.bf16.msra.mxu0 %v6104
  %8270 = vmatprep.subr.bf16.mxu0 0
  %8271 = vmatpush1.bf16.msra.mxu0 %v6105
  %8272 = vmatprep.subr.bf16.mxu0 0
  %8273 = vmatpush1.bf16.msra.mxu0 %v6106
  %8274 = vmatprep.subr.bf16.mxu0 0
  %8275 = vmatpush1.bf16.msra.mxu0 %v6107
  %8276 = vmatprep.mubr.bf16.mxu0 %v2075
  %8277 = vmatmul.mubr.bf16.gmra.mrb[0].mxu0 %v2074
  %v8278 = vpop.f32.mrb[0].mxu0
  %v8279 = vadd.f32 %v8239, %v8278
  %v8280 = vpop.f32.mrb[0].mxu0
  %v8281 = vpop.f32.mrb[0].mxu0
  %v8282 = vpop.f32.mrb[0].mxu0
  %8283 = vdwg.mxu0
  %8284 = vmatprep.subr.bf16.mxu0 0
  %8285 = vmatpush1.bf16.msra.mxu0 %v6108
  %8286 = vmatprep.subr.bf16.mxu0 0
  %8287 = vmatpush1.bf16.msra.mxu0 %v6109
  %8288 = vmatprep.subr.bf16.mxu0 0
  %8289 = vmatpush1.bf16.msra.mxu0 %v6110
  %8290 = vmatprep.subr.bf16.mxu0 0
  %8291 = vmatpush1.bf16.msra.mxu0 %v6111
  %8292 = vmatprep.subr.bf16.mxu0 0
  %8293 = vmatpush1.bf16.msra.mxu0 %v6112
  %8294 = vmatprep.subr.bf16.mxu0 0
  %8295 = vmatpush1.bf16.msra.mxu0 %v6113
  %8296 = vmatprep.subr.bf16.mxu0 0
  %8297 = vmatpush1.bf16.msra.mxu0 %v6114
  %8298 = vmatprep.subr.bf16.mxu0 0
  %8299 = vmatpush1.bf16.msra.mxu0 %v6115
  %8300 = vmatprep.subr.bf16.mxu0 0
  %8301 = vmatpush1.bf16.msra.mxu0 %v6116
  %8302 = vmatprep.subr.bf16.mxu0 0
  %8303 = vmatpush1.bf16.msra.mxu0 %v6117
  %8304 = vmatprep.subr.bf16.mxu0 0
  %8305 = vmatpush1.bf16.msra.mxu0 %v6118
  %8306 = vmatprep.subr.bf16.mxu0 0
  %8307 = vmatpush1.bf16.msra.mxu0 %v6119
  %8308 = vmatprep.subr.bf16.mxu0 0
  %8309 = vmatpush1.bf16.msra.mxu0 %v6120
  %8310 = vmatprep.subr.bf16.mxu0 0
  %8311 = vmatpush1.bf16.msra.mxu0 %v6121
  %8312 = vmatprep.subr.bf16.mxu0 0
  %8313 = vmatpush1.bf16.msra.mxu0 %v6122
  %8314 = vmatprep.subr.bf16.mxu0 0
  %8315 = vmatpush1.bf16.msra.mxu0 %v6123
  %8316 = vmatprep.mubr.bf16.mxu0 %v2077
  %8317 = vmatmul.mubr.bf16.gmra.mrb[0].mxu0 %v2076
  %v8318 = vpop.f32.mrb[0].mxu0
  %v8319 = vadd.f32 %v8279, %v8318
  %v8320 = vpop.f32.mrb[0].mxu0
  %v8321 = vpop.f32.mrb[0].mxu0
  %v8322 = vpop.f32.mrb[0].mxu0
  %8323 = vdwg.mxu0
  %8324 = vmatprep.subr.bf16.mxu0 0
  %8325 = vmatpush1.bf16.msra.mxu0 %v6124
  %8326 = vmatprep.subr.bf16.mxu0 0
  %8327 = vmatpush1.bf16.msra.mxu0 %v6125
  %8328 = vmatprep.subr.bf16.mxu0 0
  %8329 = vmatpush1.bf16.msra.mxu0 %v6126
  %8330 = vmatprep.subr.bf16.mxu0 0
  %8331 = vmatpush1.bf16.msra.mxu0 %v6127
  %8332 = vmatprep.subr.bf16.mxu0 0
  %8333 = vmatpush1.bf16.msra.mxu0 %v6128
  %8334 = vmatprep.subr.bf16.mxu0 0
  %8335 = vmatpush1.bf16.msra.mxu0 %v6129
  %8336 = vmatprep.subr.bf16.mxu0 0
  %8337 = vmatpush1.bf16.msra.mxu0 %v6130
  %8338 = vmatprep.subr.bf16.mxu0 0
  %8339 = vmatpush1.bf16.msra.mxu0 %v6131
  %8340 = vmatprep.subr.bf16.mxu0 0
  %8341 = vmatpush1.bf16.msra.mxu0 %v6132
  %8342 = vmatprep.subr.bf16.mxu0 0
  %8343 = vmatpush1.bf16.msra.mxu0 %v6133
  %8344 = vmatprep.subr.bf16.mxu0 0
  %8345 = vmatpush1.bf16.msra.mxu0 %v6134
  %8346 = vmatprep.subr.bf16.mxu0 0
  %8347 = vmatpush1.bf16.msra.mxu0 %v6135
  %8348 = vmatprep.subr.bf16.mxu0 0
  %8349 = vmatpush1.bf16.msra.mxu0 %v6136
  %8350 = vmatprep.subr.bf16.mxu0 0
  %8351 = vmatpush1.bf16.msra.mxu0 %v6137
  %8352 = vmatprep.subr.bf16.mxu0 0
  %8353 = vmatpush1.bf16.msra.mxu0 %v6138
  %8354 = vmatprep.subr.bf16.mxu0 0
  %8355 = vmatpush1.bf16.msra.mxu0 %v6139
  %8356 = vmatprep.mubr.bf16.mxu0 %v2079
  %8357 = vmatmul.mubr.bf16.gmra.mrb[0].mxu0 %v2078
  %v8358 = vpop.f32.mrb[0].mxu0
  %v8359 = vadd.f32 %v8319, %v8358
  %v8360 = vpop.f32.mrb[0].mxu0
  %v8361 = vpop.f32.mrb[0].mxu0
  %v8362 = vpop.f32.mrb[0].mxu0
  %8363 = vdwg.mxu0
  %8364 = vmatprep.subr.bf16.mxu0 0
  %8365 = vmatpush1.bf16.msra.mxu0 %v6140
  %8366 = vmatprep.subr.bf16.mxu0 0
  %8367 = vmatpush1.bf16.msra.mxu0 %v6141
  %8368 = vmatprep.subr.bf16.mxu0 0
  %8369 = vmatpush1.bf16.msra.mxu0 %v6142
  %8370 = vmatprep.subr.bf16.mxu0 0
  %8371 = vmatpush1.bf16.msra.mxu0 %v6143
  %8372 = vmatprep.subr.bf16.mxu0 0
  %8373 = vmatpush1.bf16.msra.mxu0 %v6144
  %8374 = vmatprep.subr.bf16.mxu0 0
  %8375 = vmatpush1.bf16.msra.mxu0 %v6145
  %8376 = vmatprep.subr.bf16.mxu0 0
  %8377 = vmatpush1.bf16.msra.mxu0 %v6146
  %8378 = vmatprep.subr.bf16.mxu0 0
  %8379 = vmatpush1.bf16.msra.mxu0 %v6147
  %8380 = vmatprep.subr.bf16.mxu0 0
  %8381 = vmatpush1.bf16.msra.mxu0 %v6148
  %8382 = vmatprep.subr.bf16.mxu0 0
  %8383 = vmatpush1.bf16.msra.mxu0 %v6149
  %8384 = vmatprep.subr.bf16.mxu0 0
  %8385 = vmatpush1.bf16.msra.mxu0 %v6150
  %8386 = vmatprep.subr.bf16.mxu0 0
  %8387 = vmatpush1.bf16.msra.mxu0 %v6151
  %8388 = vmatprep.subr.bf16.mxu0 0
  %8389 = vmatpush1.bf16.msra.mxu0 %v6152
  %8390 = vmatprep.subr.bf16.mxu0 0
  %8391 = vmatpush1.bf16.msra.mxu0 %v6153
  %8392 = vmatprep.subr.bf16.mxu0 0
  %8393 = vmatpush1.bf16.msra.mxu0 %v6154
  %8394 = vmatprep.subr.bf16.mxu0 0
  %8395 = vmatpush1.bf16.msra.mxu0 %v6155
  %8396 = vmatprep.mubr.bf16.mxu0 %v2081
  %8397 = vmatmul.mubr.bf16.gmra.mrb[0].mxu0 %v2080
  %v8398 = vpop.f32.mrb[0].mxu0
  %v8399 = vadd.f32 %v8359, %v8398
  %v8400 = vpop.f32.mrb[0].mxu0
  %v8401 = vpop.f32.mrb[0].mxu0
  %v8402 = vpop.f32.mrb[0].mxu0
  %8403 = vdwg.mxu0
  %8404 = vmatprep.subr.bf16.mxu0 0
  %8405 = vmatpush1.bf16.msra.mxu0 %v6156
  %8406 = vmatprep.subr.bf16.mxu0 0
  %8407 = vmatpush1.bf16.msra.mxu0 %v6157
  %8408 = vmatprep.subr.bf16.mxu0 0
  %8409 = vmatpush1.bf16.msra.mxu0 %v6158
  %8410 = vmatprep.subr.bf16.mxu0 0
  %8411 = vmatpush1.bf16.msra.mxu0 %v6159
  %8412 = vmatprep.subr.bf16.mxu0 0
  %8413 = vmatpush1.bf16.msra.mxu0 %v6160
  %8414 = vmatprep.subr.bf16.mxu0 0
  %8415 = vmatpush1.bf16.msra.mxu0 %v6161
  %8416 = vmatprep.subr.bf16.mxu0 0
  %8417 = vmatpush1.bf16.msra.mxu0 %v6162
  %8418 = vmatprep.subr.bf16.mxu0 0
  %8419 = vmatpush1.bf16.msra.mxu0 %v6163
  %8420 = vmatprep.subr.bf16.mxu0 0
  %8421 = vmatpush1.bf16.msra.mxu0 %v6164
  %8422 = vmatprep.subr.bf16.mxu0 0
  %8423 = vmatpush1.bf16.msra.mxu0 %v6165
  %8424 = vmatprep.subr.bf16.mxu0 0
  %8425 = vmatpush1.bf16.msra.mxu0 %v6166
  %8426 = vmatprep.subr.bf16.mxu0 0
  %8427 = vmatpush1.bf16.msra.mxu0 %v6167
  %8428 = vmatprep.subr.bf16.mxu0 0
  %8429 = vmatpush1.bf16.msra.mxu0 %v6168
  %8430 = vmatprep.subr.bf16.mxu0 0
  %8431 = vmatpush1.bf16.msra.mxu0 %v6169
  %8432 = vmatprep.subr.bf16.mxu0 0
  %8433 = vmatpush1.bf16.msra.mxu0 %v6170
  %8434 = vmatprep.subr.bf16.mxu0 0
  %8435 = vmatpush1.bf16.msra.mxu0 %v6171
  %8436 = vmatprep.mubr.bf16.mxu0 %v2083
  %8437 = vmatmul.mubr.bf16.gmra.mrb[0].mxu0 %v2082
  %v8438 = vpop.f32.mrb[0].mxu0
  %v8439 = vadd.f32 %v8399, %v8438
  %v8440 = vpop.f32.mrb[0].mxu0
  %v8441 = vpop.f32.mrb[0].mxu0
  %v8442 = vpop.f32.mrb[0].mxu0
  %8443 = vdwg.mxu0
  %8444 = vmatprep.subr.bf16.mxu0 0
  %8445 = vmatpush1.bf16.msra.mxu0 %v6172
  %8446 = vmatprep.subr.bf16.mxu0 0
  %8447 = vmatpush1.bf16.msra.mxu0 %v6173
  %8448 = vmatprep.subr.bf16.mxu0 0
  %8449 = vmatpush1.bf16.msra.mxu0 %v6174
  %8450 = vmatprep.subr.bf16.mxu0 0
  %8451 = vmatpush1.bf16.msra.mxu0 %v6175
  %8452 = vmatprep.subr.bf16.mxu0 0
  %8453 = vmatpush1.bf16.msra.mxu0 %v6176
  %8454 = vmatprep.subr.bf16.mxu0 0
  %8455 = vmatpush1.bf16.msra.mxu0 %v6177
  %8456 = vmatprep.subr.bf16.mxu0 0
  %8457 = vmatpush1.bf16.msra.mxu0 %v6178
  %8458 = vmatprep.subr.bf16.mxu0 0
  %8459 = vmatpush1.bf16.msra.mxu0 %v6179
  %8460 = vmatprep.subr.bf16.mxu0 0
  %8461 = vmatpush1.bf16.msra.mxu0 %v6180
  %8462 = vmatprep.subr.bf16.mxu0 0
  %8463 = vmatpush1.bf16.msra.mxu0 %v6181
  %8464 = vmatprep.subr.bf16.mxu0 0
  %8465 = vmatpush1.bf16.msra.mxu0 %v6182
  %8466 = vmatprep.subr.bf16.mxu0 0
  %8467 = vmatpush1.bf16.msra.mxu0 %v6183
  %8468 = vmatprep.subr.bf16.mxu0 0
  %8469 = vmatpush1.bf16.msra.mxu0 %v6184
  %8470 = vmatprep.subr.bf16.mxu0 0
  %8471 = vmatpush1.bf16.msra.mxu0 %v6185
  %8472 = vmatprep.subr.bf16.mxu0 0
  %8473 = vmatpush1.bf16.msra.mxu0 %v6186
  %8474 = vmatprep.subr.bf16.mxu0 0
  %8475 = vmatpush1.bf16.msra.mxu0 %v6187
  %8476 = vmatprep.mubr.bf16.mxu0 %v2085
  %8477 = vmatmul.mubr.bf16.gmra.mrb[0].mxu0 %v2084
  %v8478 = vpop.f32.mrb[0].mxu0
  %v8479 = vadd.f32 %v8439, %v8478
  %v8480 = vpop.f32.mrb[0].mxu0
  %v8481 = vpop.f32.mrb[0].mxu0
  %v8482 = vpop.f32.mrb[0].mxu0
  %8483 = vdwg.mxu0
  %8484 = vmatprep.subr.bf16.mxu0 0
  %8485 = vmatpush1.bf16.msra.mxu0 %v6188
  %8486 = vmatprep.subr.bf16.mxu0 0
  %8487 = vmatpush1.bf16.msra.mxu0 %v6189
  %8488 = vmatprep.subr.bf16.mxu0 0
  %8489 = vmatpush1.bf16.msra.mxu0 %v6190
  %8490 = vmatprep.subr.bf16.mxu0 0
  %8491 = vmatpush1.bf16.msra.mxu0 %v6191
  %8492 = vmatprep.subr.bf16.mxu0 0
  %8493 = vmatpush1.bf16.msra.mxu0 %v6192
  %8494 = vmatprep.subr.bf16.mxu0 0
  %8495 = vmatpush1.bf16.msra.mxu0 %v6193
  %8496 = vmatprep.subr.bf16.mxu0 0
  %8497 = vmatpush1.bf16.msra.mxu0 %v6194
  %8498 = vmatprep.subr.bf16.mxu0 0
  %8499 = vmatpush1.bf16.msra.mxu0 %v6195
  %8500 = vmatprep.subr.bf16.mxu0 0
  %8501 = vmatpush1.bf16.msra.mxu0 %v6196
  %8502 = vmatprep.subr.bf16.mxu0 0
  %8503 = vmatpush1.bf16.msra.mxu0 %v6197
  %8504 = vmatprep.subr.bf16.mxu0 0
  %8505 = vmatpush1.bf16.msra.mxu0 %v6198
  %8506 = vmatprep.subr.bf16.mxu0 0
  %8507 = vmatpush1.bf16.msra.mxu0 %v6199
  %8508 = vmatprep.subr.bf16.mxu0 0
  %8509 = vmatpush1.bf16.msra.mxu0 %v6200
  %8510 = vmatprep.subr.bf16.mxu0 0
  %8511 = vmatpush1.bf16.msra.mxu0 %v6201
  %8512 = vmatprep.subr.bf16.mxu0 0
  %8513 = vmatpush1.bf16.msra.mxu0 %v6202
  %8514 = vmatprep.subr.bf16.mxu0 0
  %8515 = vmatpush1.bf16.msra.mxu0 %v6203
  %8516 = vmatprep.mubr.bf16.mxu0 %v2087
  %8517 = vmatmul.mubr.bf16.gmra.mrb[0].mxu0 %v2086
  %v8518 = vpop.f32.mrb[0].mxu0
  %v8519 = vadd.f32 %v8479, %v8518
  %v8520 = vpop.f32.mrb[0].mxu0
  %v8521 = vpop.f32.mrb[0].mxu0
  %v8522 = vpop.f32.mrb[0].mxu0
  %8523 = vdwg.mxu0
  %8524 = vmatprep.subr.bf16.mxu0 0
  %8525 = vmatpush1.bf16.msra.mxu0 %v6204
  %8526 = vmatprep.subr.bf16.mxu0 0
  %8527 = vmatpush1.bf16.msra.mxu0 %v6205
  %8528 = vmatprep.subr.bf16.mxu0 0
  %8529 = vmatpush1.bf16.msra.mxu0 %v6206
  %8530 = vmatprep.subr.bf16.mxu0 0
  %8531 = vmatpush1.bf16.msra.mxu0 %v6207
  %8532 = vmatprep.subr.bf16.mxu0 0
  %8533 = vmatpush1.bf16.msra.mxu0 %v6208
  %8534 = vmatprep.subr.bf16.mxu0 0
  %8535 = vmatpush1.bf16.msra.mxu0 %v6209
  %8536 = vmatprep.subr.bf16.mxu0 0
  %8537 = vmatpush1.bf16.msra.mxu0 %v6210
  %8538 = vmatprep.subr.bf16.mxu0 0
  %8539 = vmatpush1.bf16.msra.mxu0 %v6211
  %8540 = vmatprep.subr.bf16.mxu0 0
  %8541 = vmatpush1.bf16.msra.mxu0 %v6212
  %8542 = vmatprep.subr.bf16.mxu0 0
  %8543 = vmatpush1.bf16.msra.mxu0 %v6213
  %8544 = vmatprep.subr.bf16.mxu0 0
  %8545 = vmatpush1.bf16.msra.mxu0 %v6214
  %8546 = vmatprep.subr.bf16.mxu0 0
  %8547 = vmatpush1.bf16.msra.mxu0 %v6215
  %8548 = vmatprep.subr.bf16.mxu0 0
  %8549 = vmatpush1.bf16.msra.mxu0 %v6216
  %8550 = vmatprep.subr.bf16.mxu0 0
  %8551 = vmatpush1.bf16.msra.mxu0 %v6217
  %8552 = vmatprep.subr.bf16.mxu0 0
  %8553 = vmatpush1.bf16.msra.mxu0 %v6218
  %8554 = vmatprep.subr.bf16.mxu0 0
  %8555 = vmatpush1.bf16.msra.mxu0 %v6219
  %8556 = vmatprep.mubr.bf16.mxu0 %v2089
  %8557 = vmatmul.mubr.bf16.gmra.mrb[0].mxu0 %v2088
  %v8558 = vpop.f32.mrb[0].mxu0
  %v8559 = vadd.f32 %v8519, %v8558
  %v8560 = vpop.f32.mrb[0].mxu0
  %v8561 = vpop.f32.mrb[0].mxu0
  %v8562 = vpop.f32.mrb[0].mxu0
  %8563 = vdwg.mxu0
  %8564 = vmatprep.subr.bf16.mxu0 0
  %8565 = vmatpush1.bf16.msra.mxu0 %v6220
  %8566 = vmatprep.subr.bf16.mxu0 0
  %8567 = vmatpush1.bf16.msra.mxu0 %v6221
  %8568 = vmatprep.subr.bf16.mxu0 0
  %8569 = vmatpush1.bf16.msra.mxu0 %v6222
  %8570 = vmatprep.subr.bf16.mxu0 0
  %8571 = vmatpush1.bf16.msra.mxu0 %v6223
  %8572 = vmatprep.subr.bf16.mxu0 0
  %8573 = vmatpush1.bf16.msra.mxu0 %v6224
  %8574 = vmatprep.subr.bf16.mxu0 0
  %8575 = vmatpush1.bf16.msra.mxu0 %v6225
  %8576 = vmatprep.subr.bf16.mxu0 0
  %8577 = vmatpush1.bf16.msra.mxu0 %v6226
  %8578 = vmatprep.subr.bf16.mxu0 0
  %8579 = vmatpush1.bf16.msra.mxu0 %v6227
  %8580 = vmatprep.subr.bf16.mxu0 0
  %8581 = vmatpush1.bf16.msra.mxu0 %v6228
  %8582 = vmatprep.subr.bf16.mxu0 0
  %8583 = vmatpush1.bf16.msra.mxu0 %v6229
  %8584 = vmatprep.subr.bf16.mxu0 0
  %8585 = vmatpush1.bf16.msra.mxu0 %v6230
  %8586 = vmatprep.subr.bf16.mxu0 0
  %8587 = vmatpush1.bf16.msra.mxu0 %v6231
  %8588 = vmatprep.subr.bf16.mxu0 0
  %8589 = vmatpush1.bf16.msra.mxu0 %v6232
  %8590 = vmatprep.subr.bf16.mxu0 0
  %8591 = vmatpush1.bf16.msra.mxu0 %v6233
  %8592 = vmatprep.subr.bf16.mxu0 0
  %8593 = vmatpush1.bf16.msra.mxu0 %v6234
  %8594 = vmatprep.subr.bf16.mxu0 0
  %8595 = vmatpush1.bf16.msra.mxu0 %v6235
  %8596 = vmatprep.mubr.bf16.mxu0 %v2091
  %8597 = vmatmul.mubr.bf16.gmra.mrb[0].mxu0 %v2090
  %v8598 = vpop.f32.mrb[0].mxu0
  %v8599 = vadd.f32 %v8559, %v8598
  %v8600 = vpop.f32.mrb[0].mxu0
  %v8601 = vpop.f32.mrb[0].mxu0
  %v8602 = vpop.f32.mrb[0].mxu0
  %8603 = vdwg.mxu0
  %8604 = vmatprep.subr.bf16.mxu0 0
  %8605 = vmatpush1.bf16.msra.mxu0 %v6236
  %8606 = vmatprep.subr.bf16.mxu0 0
  %8607 = vmatpush1.bf16.msra.mxu0 %v6237
  %8608 = vmatprep.subr.bf16.mxu0 0
  %8609 = vmatpush1.bf16.msra.mxu0 %v6238
  %8610 = vmatprep.subr.bf16.mxu0 0
  %8611 = vmatpush1.bf16.msra.mxu0 %v6239
  %8612 = vmatprep.subr.bf16.mxu0 0
  %8613 = vmatpush1.bf16.msra.mxu0 %v6240
  %8614 = vmatprep.subr.bf16.mxu0 0
  %8615 = vmatpush1.bf16.msra.mxu0 %v6241
  %8616 = vmatprep.subr.bf16.mxu0 0
  %8617 = vmatpush1.bf16.msra.mxu0 %v6242
  %8618 = vmatprep.subr.bf16.mxu0 0
  %8619 = vmatpush1.bf16.msra.mxu0 %v6243
  %8620 = vmatprep.subr.bf16.mxu0 0
  %8621 = vmatpush1.bf16.msra.mxu0 %v6244
  %8622 = vmatprep.subr.bf16.mxu0 0
  %8623 = vmatpush1.bf16.msra.mxu0 %v6245
  %8624 = vmatprep.subr.bf16.mxu0 0
  %8625 = vmatpush1.bf16.msra.mxu0 %v6246
  %8626 = vmatprep.subr.bf16.mxu0 0
  %8627 = vmatpush1.bf16.msra.mxu0 %v6247
  %8628 = vmatprep.subr.bf16.mxu0 0
  %8629 = vmatpush1.bf16.msra.mxu0 %v6248
  %8630 = vmatprep.subr.bf16.mxu0 0
  %8631 = vmatpush1.bf16.msra.mxu0 %v6249
  %8632 = vmatprep.subr.bf16.mxu0 0
  %8633 = vmatpush1.bf16.msra.mxu0 %v6250
  %8634 = vmatprep.subr.bf16.mxu0 0
  %8635 = vmatpush1.bf16.msra.mxu0 %v6251
  %8636 = vmatprep.mubr.bf16.mxu0 %v2093
  %8637 = vmatmul.mubr.bf16.gmra.mrb[0].mxu0 %v2092
  %v8638 = vpop.f32.mrb[0].mxu0
  %v8639 = vadd.f32 %v8599, %v8638
  %v8640 = vpop.f32.mrb[0].mxu0
  %v8641 = vpop.f32.mrb[0].mxu0
  %v8642 = vpop.f32.mrb[0].mxu0
  %8643 = vdwg.mxu0
  %8644 = vmatprep.subr.bf16.mxu0 0
  %8645 = vmatpush1.bf16.msra.mxu0 %v6252
  %8646 = vmatprep.subr.bf16.mxu0 0
  %8647 = vmatpush1.bf16.msra.mxu0 %v6253
  %8648 = vmatprep.subr.bf16.mxu0 0
  %8649 = vmatpush1.bf16.msra.mxu0 %v6254
  %8650 = vmatprep.subr.bf16.mxu0 0
  %8651 = vmatpush1.bf16.msra.mxu0 %v6255
  %8652 = vmatprep.subr.bf16.mxu0 0
  %8653 = vmatpush1.bf16.msra.mxu0 %v6256
  %8654 = vmatprep.subr.bf16.mxu0 0
  %8655 = vmatpush1.bf16.msra.mxu0 %v6257
  %8656 = vmatprep.subr.bf16.mxu0 0
  %8657 = vmatpush1.bf16.msra.mxu0 %v6258
  %8658 = vmatprep.subr.bf16.mxu0 0
  %8659 = vmatpush1.bf16.msra.mxu0 %v6259
  %8660 = vmatprep.subr.bf16.mxu0 0
  %8661 = vmatpush1.bf16.msra.mxu0 %v6260
  %8662 = vmatprep.subr.bf16.mxu0 0
  %8663 = vmatpush1.bf16.msra.mxu0 %v6261
  %8664 = vmatprep.subr.bf16.mxu0 0
  %8665 = vmatpush1.bf16.msra.mxu0 %v6262
  %8666 = vmatprep.subr.bf16.mxu0 0
  %8667 = vmatpush1.bf16.msra.mxu0 %v6263
  %8668 = vmatprep.subr.bf16.mxu0 0
  %8669 = vmatpush1.bf16.msra.mxu0 %v6264
  %8670 = vmatprep.subr.bf16.mxu0 0
  %8671 = vmatpush1.bf16.msra.mxu0 %v6265
  %8672 = vmatprep.subr.bf16.mxu0 0
  %8673 = vmatpush1.bf16.msra.mxu0 %v6266
  %8674 = vmatprep.subr.bf16.mxu0 0
  %8675 = vmatpush1.bf16.msra.mxu0 %v6267
  %8676 = vmatprep.mubr.bf16.mxu0 %v2095
  %8677 = vmatmul.mubr.bf16.gmra.mrb[0].mxu0 %v2094
  %v8678 = vpop.f32.mrb[0].mxu0
  %v8679 = vadd.f32 %v8639, %v8678
  %v8680 = vpop.f32.mrb[0].mxu0
  %v8681 = vpop.f32.mrb[0].mxu0
  %v8682 = vpop.f32.mrb[0].mxu0
  %8683 = vdwg.mxu0
  %8684 = vmatprep.subr.bf16.mxu0 0
  %8685 = vmatpush1.bf16.msra.mxu0 %v6268
  %8686 = vmatprep.subr.bf16.mxu0 0
  %8687 = vmatpush1.bf16.msra.mxu0 %v6269
  %8688 = vmatprep.subr.bf16.mxu0 0
  %8689 = vmatpush1.bf16.msra.mxu0 %v6270
  %8690 = vmatprep.subr.bf16.mxu0 0
  %8691 = vmatpush1.bf16.msra.mxu0 %v6271
  %8692 = vmatprep.subr.bf16.mxu0 0
  %8693 = vmatpush1.bf16.msra.mxu0 %v6272
  %8694 = vmatprep.subr.bf16.mxu0 0
  %8695 = vmatpush1.bf16.msra.mxu0 %v6273
  %8696 = vmatprep.subr.bf16.mxu0 0
  %8697 = vmatpush1.bf16.msra.mxu0 %v6274
  %8698 = vmatprep.subr.bf16.mxu0 0
  %8699 = vmatpush1.bf16.msra.mxu0 %v6275
  %8700 = vmatprep.subr.bf16.mxu0 0
  %8701 = vmatpush1.bf16.msra.mxu0 %v6276
  %8702 = vmatprep.subr.bf16.mxu0 0
  %8703 = vmatpush1.bf16.msra.mxu0 %v6277
  %8704 = vmatprep.subr.bf16.mxu0 0
  %8705 = vmatpush1.bf16.msra.mxu0 %v6278
  %8706 = vmatprep.subr.bf16.mxu0 0
  %8707 = vmatpush1.bf16.msra.mxu0 %v6279
  %8708 = vmatprep.subr.bf16.mxu0 0
  %8709 = vmatpush1.bf16.msra.mxu0 %v6280
  %8710 = vmatprep.subr.bf16.mxu0 0
  %8711 = vmatpush1.bf16.msra.mxu0 %v6281
  %8712 = vmatprep.subr.bf16.mxu0 0
  %8713 = vmatpush1.bf16.msra.mxu0 %v6282
  %8714 = vmatprep.subr.bf16.mxu0 0
  %8715 = vmatpush1.bf16.msra.mxu0 %v6283
  %8716 = vmatprep.mubr.bf16.mxu0 %v2097
  %8717 = vmatmul.mubr.bf16.gmra.mrb[0].mxu0 %v2096
  %v8718 = vpop.f32.mrb[0].mxu0
  %v8719 = vadd.f32 %v8679, %v8718
  %v8720 = vpop.f32.mrb[0].mxu0
  %v8721 = vpop.f32.mrb[0].mxu0
  %v8722 = vpop.f32.mrb[0].mxu0
  %8723 = vdwg.mxu0
  %8724 = vmatprep.subr.bf16.mxu0 0
  %8725 = vmatpush1.bf16.msra.mxu0 %v6284
  %8726 = vmatprep.subr.bf16.mxu0 0
  %8727 = vmatpush1.bf16.msra.mxu0 %v6285
  %8728 = vmatprep.subr.bf16.mxu0 0
  %8729 = vmatpush1.bf16.msra.mxu0 %v6286
  %8730 = vmatprep.subr.bf16.mxu0 0
  %8731 = vmatpush1.bf16.msra.mxu0 %v6287
  %8732 = vmatprep.subr.bf16.mxu0 0
  %8733 = vmatpush1.bf16.msra.mxu0 %v6288
  %8734 = vmatprep.subr.bf16.mxu0 0
  %8735 = vmatpush1.bf16.msra.mxu0 %v6289
  %8736 = vmatprep.subr.bf16.mxu0 0
  %8737 = vmatpush1.bf16.msra.mxu0 %v6290
  %8738 = vmatprep.subr.bf16.mxu0 0
  %8739 = vmatpush1.bf16.msra.mxu0 %v6291
  %8740 = vmatprep.subr.bf16.mxu0 0
  %8741 = vmatpush1.bf16.msra.mxu0 %v6292
  %8742 = vmatprep.subr.bf16.mxu0 0
  %8743 = vmatpush1.bf16.msra.mxu0 %v6293
  %8744 = vmatprep.subr.bf16.mxu0 0
  %8745 = vmatpush1.bf16.msra.mxu0 %v6294
  %8746 = vmatprep.subr.bf16.mxu0 0
  %8747 = vmatpush1.bf16.msra.mxu0 %v6295
  %8748 = vmatprep.subr.bf16.mxu0 0
  %8749 = vmatpush1.bf16.msra.mxu0 %v6296
  %8750 = vmatprep.subr.bf16.mxu0 0
  %8751 = vmatpush1.bf16.msra.mxu0 %v6297
  %8752 = vmatprep.subr.bf16.mxu0 0
  %8753 = vmatpush1.bf16.msra.mxu0 %v6298
  %8754 = vmatprep.subr.bf16.mxu0 0
  %8755 = vmatpush1.bf16.msra.mxu0 %v6299
  %8756 = vmatprep.mubr.bf16.mxu0 %v2099
  %8757 = vmatmul.mubr.bf16.gmra.mrb[0].mxu0 %v2098
  %v8758 = vpop.f32.mrb[0].mxu0
  %v8759 = vadd.f32 %v8719, %v8758
  %v8760 = vpop.f32.mrb[0].mxu0
  %v8761 = vpop.f32.mrb[0].mxu0
  %v8762 = vpop.f32.mrb[0].mxu0
  %8763 = vdwg.mxu0
  %8764 = vmatprep.subr.bf16.mxu0 0
  %8765 = vmatpush1.bf16.msra.mxu0 %v6300
  %8766 = vmatprep.subr.bf16.mxu0 0
  %8767 = vmatpush1.bf16.msra.mxu0 %v6301
  %8768 = vmatprep.subr.bf16.mxu0 0
  %8769 = vmatpush1.bf16.msra.mxu0 %v6302
  %8770 = vmatprep.subr.bf16.mxu0 0
  %8771 = vmatpush1.bf16.msra.mxu0 %v6303
  %8772 = vmatprep.subr.bf16.mxu0 0
  %8773 = vmatpush1.bf16.msra.mxu0 %v6304
  %8774 = vmatprep.subr.bf16.mxu0 0
  %8775 = vmatpush1.bf16.msra.mxu0 %v6305
  %8776 = vmatprep.subr.bf16.mxu0 0
  %8777 = vmatpush1.bf16.msra.mxu0 %v6306
  %8778 = vmatprep.subr.bf16.mxu0 0
  %8779 = vmatpush1.bf16.msra.mxu0 %v6307
  %8780 = vmatprep.subr.bf16.mxu0 0
  %8781 = vmatpush1.bf16.msra.mxu0 %v6308
  %8782 = vmatprep.subr.bf16.mxu0 0
  %8783 = vmatpush1.bf16.msra.mxu0 %v6309
  %8784 = vmatprep.subr.bf16.mxu0 0
  %8785 = vmatpush1.bf16.msra.mxu0 %v6310
  %8786 = vmatprep.subr.bf16.mxu0 0
  %8787 = vmatpush1.bf16.msra.mxu0 %v6311
  %8788 = vmatprep.subr.bf16.mxu0 0
  %8789 = vmatpush1.bf16.msra.mxu0 %v6312
  %8790 = vmatprep.subr.bf16.mxu0 0
  %8791 = vmatpush1.bf16.msra.mxu0 %v6313
  %8792 = vmatprep.subr.bf16.mxu0 0
  %8793 = vmatpush1.bf16.msra.mxu0 %v6314
  %8794 = vmatprep.subr.bf16.mxu0 0
  %8795 = vmatpush1.bf16.msra.mxu0 %v6315
  %8796 = vmatprep.mubr.bf16.mxu0 %v2101
  %8797 = vmatmul.mubr.bf16.gmra.mrb[0].mxu0 %v2100
  %v8798 = vpop.f32.mrb[0].mxu0
  %v8799 = vadd.f32 %v8759, %v8798
  %v8800 = vpop.f32.mrb[0].mxu0
  %v8801 = vpop.f32.mrb[0].mxu0
  %v8802 = vpop.f32.mrb[0].mxu0
  %8803 = vdwg.mxu0
  %8804 = vmatprep.subr.bf16.mxu0 0
  %8805 = vmatpush1.bf16.msra.mxu0 %v6316
  %8806 = vmatprep.subr.bf16.mxu0 0
  %8807 = vmatpush1.bf16.msra.mxu0 %v6317
  %8808 = vmatprep.subr.bf16.mxu0 0
  %8809 = vmatpush1.bf16.msra.mxu0 %v6318
  %8810 = vmatprep.subr.bf16.mxu0 0
  %8811 = vmatpush1.bf16.msra.mxu0 %v6319
  %8812 = vmatprep.subr.bf16.mxu0 0
  %8813 = vmatpush1.bf16.msra.mxu0 %v6320
  %8814 = vmatprep.subr.bf16.mxu0 0
  %8815 = vmatpush1.bf16.msra.mxu0 %v6321
  %8816 = vmatprep.subr.bf16.mxu0 0
  %8817 = vmatpush1.bf16.msra.mxu0 %v6322
  %8818 = vmatprep.subr.bf16.mxu0 0
  %8819 = vmatpush1.bf16.msra.mxu0 %v6323
  %8820 = vmatprep.subr.bf16.mxu0 0
  %8821 = vmatpush1.bf16.msra.mxu0 %v6324
  %8822 = vmatprep.subr.bf16.mxu0 0
  %8823 = vmatpush1.bf16.msra.mxu0 %v6325
  %8824 = vmatprep.subr.bf16.mxu0 0
  %8825 = vmatpush1.bf16.msra.mxu0 %v6326
  %8826 = vmatprep.subr.bf16.mxu0 0
  %8827 = vmatpush1.bf16.msra.mxu0 %v6327
  %8828 = vmatprep.subr.bf16.mxu0 0
  %8829 = vmatpush1.bf16.msra.mxu0 %v6328
  %8830 = vmatprep.subr.bf16.mxu0 0
  %8831 = vmatpush1.bf16.msra.mxu0 %v6329
  %8832 = vmatprep.subr.bf16.mxu0 0
  %8833 = vmatpush1.bf16.msra.mxu0 %v6330
  %8834 = vmatprep.subr.bf16.mxu0 0
  %8835 = vmatpush1.bf16.msra.mxu0 %v6331
  %8836 = vmatprep.mubr.bf16.mxu0 %v2103
  %8837 = vmatmul.mubr.bf16.gmra.mrb[0].mxu0 %v2102
  %v8838 = vpop.f32.mrb[0].mxu0
  %v8839 = vadd.f32 %v8799, %v8838
  %v8840 = vpop.f32.mrb[0].mxu0
  %v8841 = vpop.f32.mrb[0].mxu0
  %v8842 = vpop.f32.mrb[0].mxu0
  %8843 = vdwg.mxu0
  %8844 = vmatprep.subr.bf16.mxu0 0
  %8845 = vmatpush1.bf16.msra.mxu0 %v6332
  %8846 = vmatprep.subr.bf16.mxu0 0
  %8847 = vmatpush1.bf16.msra.mxu0 %v6333
  %8848 = vmatprep.subr.bf16.mxu0 0
  %8849 = vmatpush1.bf16.msra.mxu0 %v6334
  %8850 = vmatprep.subr.bf16.mxu0 0
  %8851 = vmatpush1.bf16.msra.mxu0 %v6335
  %8852 = vmatprep.subr.bf16.mxu0 0
  %8853 = vmatpush1.bf16.msra.mxu0 %v6336
  %8854 = vmatprep.subr.bf16.mxu0 0
  %8855 = vmatpush1.bf16.msra.mxu0 %v6337
  %8856 = vmatprep.subr.bf16.mxu0 0
  %8857 = vmatpush1.bf16.msra.mxu0 %v6338
  %8858 = vmatprep.subr.bf16.mxu0 0
  %8859 = vmatpush1.bf16.msra.mxu0 %v6339
  %8860 = vmatprep.subr.bf16.mxu0 0
  %8861 = vmatpush1.bf16.msra.mxu0 %v6340
  %8862 = vmatprep.subr.bf16.mxu0 0
  %8863 = vmatpush1.bf16.msra.mxu0 %v6341
  %8864 = vmatprep.subr.bf16.mxu0 0
  %8865 = vmatpush1.bf16.msra.mxu0 %v6342
  %8866 = vmatprep.subr.bf16.mxu0 0
  %8867 = vmatpush1.bf16.msra.mxu0 %v6343
  %8868 = vmatprep.subr.bf16.mxu0 0
  %8869 = vmatpush1.bf16.msra.mxu0 %v6344
  %8870 = vmatprep.subr.bf16.mxu0 0
  %8871 = vmatpush1.bf16.msra.mxu0 %v6345
  %8872 = vmatprep.subr.bf16.mxu0 0
  %8873 = vmatpush1.bf16.msra.mxu0 %v6346
  %8874 = vmatprep.subr.bf16.mxu0 0
  %8875 = vmatpush1.bf16.msra.mxu0 %v6347
  %8876 = vmatprep.mubr.bf16.mxu0 %v2105
  %8877 = vmatmul.mubr.bf16.gmra.mrb[0].mxu0 %v2104
  %v8878 = vpop.f32.mrb[0].mxu0
  %v8879 = vadd.f32 %v8839, %v8878
  %v8880 = vpop.f32.mrb[0].mxu0
  %v8881 = vpop.f32.mrb[0].mxu0
  %v8882 = vpop.f32.mrb[0].mxu0
  %8883 = vdwg.mxu0
  %8884 = vmatprep.subr.bf16.mxu0 0
  %8885 = vmatpush1.bf16.msra.mxu0 %v6348
  %8886 = vmatprep.subr.bf16.mxu0 0
  %8887 = vmatpush1.bf16.msra.mxu0 %v6349
  %8888 = vmatprep.subr.bf16.mxu0 0
  %8889 = vmatpush1.bf16.msra.mxu0 %v6350
  %8890 = vmatprep.subr.bf16.mxu0 0
  %8891 = vmatpush1.bf16.msra.mxu0 %v6351
  %8892 = vmatprep.subr.bf16.mxu0 0
  %8893 = vmatpush1.bf16.msra.mxu0 %v6352
  %8894 = vmatprep.subr.bf16.mxu0 0
  %8895 = vmatpush1.bf16.msra.mxu0 %v6353
  %8896 = vmatprep.subr.bf16.mxu0 0
  %8897 = vmatpush1.bf16.msra.mxu0 %v6354
  %8898 = vmatprep.subr.bf16.mxu0 0
  %8899 = vmatpush1.bf16.msra.mxu0 %v6355
  %8900 = vmatprep.subr.bf16.mxu0 0
  %8901 = vmatpush1.bf16.msra.mxu0 %v6356
  %8902 = vmatprep.subr.bf16.mxu0 0
  %8903 = vmatpush1.bf16.msra.mxu0 %v6357
  %8904 = vmatprep.subr.bf16.mxu0 0
  %8905 = vmatpush1.bf16.msra.mxu0 %v6358
  %8906 = vmatprep.subr.bf16.mxu0 0
  %8907 = vmatpush1.bf16.msra.mxu0 %v6359
  %8908 = vmatprep.subr.bf16.mxu0 0
  %8909 = vmatpush1.bf16.msra.mxu0 %v6360
  %8910 = vmatprep.subr.bf16.mxu0 0
  %8911 = vmatpush1.bf16.msra.mxu0 %v6361
  %8912 = vmatprep.subr.bf16.mxu0 0
  %8913 = vmatpush1.bf16.msra.mxu0 %v6362
  %8914 = vmatprep.subr.bf16.mxu0 0
  %8915 = vmatpush1.bf16.msra.mxu0 %v6363
  %8916 = vmatprep.mubr.bf16.mxu0 %v2107
  %8917 = vmatmul.mubr.bf16.gmra.mrb[0].mxu0 %v2106
  %v8918 = vpop.f32.mrb[0].mxu0
  %v8919 = vadd.f32 %v8879, %v8918
  %v8920 = vpop.f32.mrb[0].mxu0
  %v8921 = vpop.f32.mrb[0].mxu0
  %v8922 = vpop.f32.mrb[0].mxu0
  %8923 = vdwg.mxu0
  %8924 = vmatprep.subr.bf16.mxu0 0
  %8925 = vmatpush1.bf16.msra.mxu0 %v6364
  %8926 = vmatprep.subr.bf16.mxu0 0
  %8927 = vmatpush1.bf16.msra.mxu0 %v6365
  %8928 = vmatprep.subr.bf16.mxu0 0
  %8929 = vmatpush1.bf16.msra.mxu0 %v6366
  %8930 = vmatprep.subr.bf16.mxu0 0
  %8931 = vmatpush1.bf16.msra.mxu0 %v6367
  %8932 = vmatprep.subr.bf16.mxu0 0
  %8933 = vmatpush1.bf16.msra.mxu0 %v6368
  %8934 = vmatprep.subr.bf16.mxu0 0
  %8935 = vmatpush1.bf16.msra.mxu0 %v6369
  %8936 = vmatprep.subr.bf16.mxu0 0
  %8937 = vmatpush1.bf16.msra.mxu0 %v6370
  %8938 = vmatprep.subr.bf16.mxu0 0
  %8939 = vmatpush1.bf16.msra.mxu0 %v6371
  %8940 = vmatprep.subr.bf16.mxu0 0
  %8941 = vmatpush1.bf16.msra.mxu0 %v6372
  %8942 = vmatprep.subr.bf16.mxu0 0
  %8943 = vmatpush1.bf16.msra.mxu0 %v6373
  %8944 = vmatprep.subr.bf16.mxu0 0
  %8945 = vmatpush1.bf16.msra.mxu0 %v6374
  %8946 = vmatprep.subr.bf16.mxu0 0
  %8947 = vmatpush1.bf16.msra.mxu0 %v6375
  %8948 = vmatprep.subr.bf16.mxu0 0
  %8949 = vmatpush1.bf16.msra.mxu0 %v6376
  %8950 = vmatprep.subr.bf16.mxu0 0
  %8951 = vmatpush1.bf16.msra.mxu0 %v6377
  %8952 = vmatprep.subr.bf16.mxu0 0
  %8953 = vmatpush1.bf16.msra.mxu0 %v6378
  %8954 = vmatprep.subr.bf16.mxu0 0
  %8955 = vmatpush1.bf16.msra.mxu0 %v6379
  %8956 = vmatprep.mubr.bf16.mxu0 %v2109
  %8957 = vmatmul.mubr.bf16.gmra.mrb[0].mxu0 %v2108
  %v8958 = vpop.f32.mrb[0].mxu0
  %v8959 = vadd.f32 %v8919, %v8958
  %v8960 = vpop.f32.mrb[0].mxu0
  %v8961 = vpop.f32.mrb[0].mxu0
  %v8962 = vpop.f32.mrb[0].mxu0
  %8963 = vdwg.mxu0
  %8964 = vmatprep.subr.bf16.mxu0 0
  %8965 = vmatpush1.bf16.msra.mxu0 %v6380
  %8966 = vmatprep.subr.bf16.mxu0 0
  %8967 = vmatpush1.bf16.msra.mxu0 %v6381
  %8968 = vmatprep.subr.bf16.mxu0 0
  %8969 = vmatpush1.bf16.msra.mxu0 %v6382
  %8970 = vmatprep.subr.bf16.mxu0 0
  %8971 = vmatpush1.bf16.msra.mxu0 %v6383
  %8972 = vmatprep.subr.bf16.mxu0 0
  %8973 = vmatpush1.bf16.msra.mxu0 %v6384
  %8974 = vmatprep.subr.bf16.mxu0 0
  %8975 = vmatpush1.bf16.msra.mxu0 %v6385
  %8976 = vmatprep.subr.bf16.mxu0 0
  %8977 = vmatpush1.bf16.msra.mxu0 %v6386
  %8978 = vmatprep.subr.bf16.mxu0 0
  %8979 = vmatpush1.bf16.msra.mxu0 %v6387
  %8980 = vmatprep.subr.bf16.mxu0 0
  %8981 = vmatpush1.bf16.msra.mxu0 %v6388
  %8982 = vmatprep.subr.bf16.mxu0 0
  %8983 = vmatpush1.bf16.msra.mxu0 %v6389
  %8984 = vmatprep.subr.bf16.mxu0 0
  %8985 = vmatpush1.bf16.msra.mxu0 %v6390
  %8986 = vmatprep.subr.bf16.mxu0 0
  %8987 = vmatpush1.bf16.msra.mxu0 %v6391
  %8988 = vmatprep.subr.bf16.mxu0 0
  %8989 = vmatpush1.bf16.msra.mxu0 %v6392
  %8990 = vmatprep.subr.bf16.mxu0 0
  %8991 = vmatpush1.bf16.msra.mxu0 %v6393
  %8992 = vmatprep.subr.bf16.mxu0 0
  %8993 = vmatpush1.bf16.msra.mxu0 %v6394
  %8994 = vmatprep.subr.bf16.mxu0 0
  %8995 = vmatpush1.bf16.msra.mxu0 %v6395
  %8996 = vmatprep.mubr.bf16.mxu0 %v2111
  %8997 = vmatmul.mubr.bf16.gmra.mrb[0].mxu0 %v2110
  %v8998 = vpop.f32.mrb[0].mxu0
  %v8999 = vadd.f32 %v8959, %v8998
  %v9000 = vpop.f32.mrb[0].mxu0
  %v9001 = vpop.f32.mrb[0].mxu0
  %v9002 = vpop.f32.mrb[0].mxu0
  %9003 = vdwg.mxu0
  %9004 = vmatprep.subr.bf16.mxu0 0
  %9005 = vmatpush1.bf16.msra.mxu0 %v6396
  %9006 = vmatprep.subr.bf16.mxu0 0
  %9007 = vmatpush1.bf16.msra.mxu0 %v6397
  %9008 = vmatprep.subr.bf16.mxu0 0
  %9009 = vmatpush1.bf16.msra.mxu0 %v6398
  %9010 = vmatprep.subr.bf16.mxu0 0
  %9011 = vmatpush1.bf16.msra.mxu0 %v6399
  %9012 = vmatprep.subr.bf16.mxu0 0
  %9013 = vmatpush1.bf16.msra.mxu0 %v6400
  %9014 = vmatprep.subr.bf16.mxu0 0
  %9015 = vmatpush1.bf16.msra.mxu0 %v6401
  %9016 = vmatprep.subr.bf16.mxu0 0
  %9017 = vmatpush1.bf16.msra.mxu0 %v6402
  %9018 = vmatprep.subr.bf16.mxu0 0
  %9019 = vmatpush1.bf16.msra.mxu0 %v6403
  %9020 = vmatprep.subr.bf16.mxu0 0
  %9021 = vmatpush1.bf16.msra.mxu0 %v6404
  %9022 = vmatprep.subr.bf16.mxu0 0
  %9023 = vmatpush1.bf16.msra.mxu0 %v6405
  %9024 = vmatprep.subr.bf16.mxu0 0
  %9025 = vmatpush1.bf16.msra.mxu0 %v6406
  %9026 = vmatprep.subr.bf16.mxu0 0
  %9027 = vmatpush1.bf16.msra.mxu0 %v6407
  %9028 = vmatprep.subr.bf16.mxu0 0
  %9029 = vmatpush1.bf16.msra.mxu0 %v6408
  %9030 = vmatprep.subr.bf16.mxu0 0
  %9031 = vmatpush1.bf16.msra.mxu0 %v6409
  %9032 = vmatprep.subr.bf16.mxu0 0
  %9033 = vmatpush1.bf16.msra.mxu0 %v6410
  %9034 = vmatprep.subr.bf16.mxu0 0
  %9035 = vmatpush1.bf16.msra.mxu0 %v6411
  %9036 = vmatprep.mubr.bf16.mxu0 %v2113
  %9037 = vmatmul.mubr.bf16.gmra.mrb[0].mxu0 %v2112
  %v9038 = vpop.f32.mrb[0].mxu0
  %v9039 = vadd.f32 %v8999, %v9038
  %v9040 = vpop.f32.mrb[0].mxu0
  %v9041 = vpop.f32.mrb[0].mxu0
  %v9042 = vpop.f32.mrb[0].mxu0
  %9043 = vdwg.mxu0
  %9044 = vmatprep.subr.bf16.mxu0 0
  %9045 = vmatpush1.bf16.msra.mxu0 %v6412
  %9046 = vmatprep.subr.bf16.mxu0 0
  %9047 = vmatpush1.bf16.msra.mxu0 %v6413
  %9048 = vmatprep.subr.bf16.mxu0 0
  %9049 = vmatpush1.bf16.msra.mxu0 %v6414
  %9050 = vmatprep.subr.bf16.mxu0 0
  %9051 = vmatpush1.bf16.msra.mxu0 %v6415
  %9052 = vmatprep.subr.bf16.mxu0 0
  %9053 = vmatpush1.bf16.msra.mxu0 %v6416
  %9054 = vmatprep.subr.bf16.mxu0 0
  %9055 = vmatpush1.bf16.msra.mxu0 %v6417
  %9056 = vmatprep.subr.bf16.mxu0 0
  %9057 = vmatpush1.bf16.msra.mxu0 %v6418
  %9058 = vmatprep.subr.bf16.mxu0 0
  %9059 = vmatpush1.bf16.msra.mxu0 %v6419
  %9060 = vmatprep.subr.bf16.mxu0 0
  %9061 = vmatpush1.bf16.msra.mxu0 %v6420
  %9062 = vmatprep.subr.bf16.mxu0 0
  %9063 = vmatpush1.bf16.msra.mxu0 %v6421
  %9064 = vmatprep.subr.bf16.mxu0 0
  %9065 = vmatpush1.bf16.msra.mxu0 %v6422
  %9066 = vmatprep.subr.bf16.mxu0 0
  %9067 = vmatpush1.bf16.msra.mxu0 %v6423
  %9068 = vmatprep.subr.bf16.mxu0 0
  %9069 = vmatpush1.bf16.msra.mxu0 %v6424
  %9070 = vmatprep.subr.bf16.mxu0 0
  %9071 = vmatpush1.bf16.msra.mxu0 %v6425
  %9072 = vmatprep.subr.bf16.mxu0 0
  %9073 = vmatpush1.bf16.msra.mxu0 %v6426
  %9074 = vmatprep.subr.bf16.mxu0 0
  %9075 = vmatpush1.bf16.msra.mxu0 %v6427
  %9076 = vmatprep.mubr.bf16.mxu0 %v2115
  %9077 = vmatmul.mubr.bf16.gmra.mrb[0].mxu0 %v2114
  %v9078 = vpop.f32.mrb[0].mxu0
  %v9079 = vadd.f32 %v9039, %v9078
  %v9080 = vpop.f32.mrb[0].mxu0
  %v9081 = vpop.f32.mrb[0].mxu0
  %v9082 = vpop.f32.mrb[0].mxu0
  %9083 = vdwg.mxu0
  %9084 = vmatprep.subr.bf16.mxu0 0
  %9085 = vmatpush1.bf16.msra.mxu0 %v6428
  %9086 = vmatprep.subr.bf16.mxu0 0
  %9087 = vmatpush1.bf16.msra.mxu0 %v6429
  %9088 = vmatprep.subr.bf16.mxu0 0
  %9089 = vmatpush1.bf16.msra.mxu0 %v6430
  %9090 = vmatprep.subr.bf16.mxu0 0
  %9091 = vmatpush1.bf16.msra.mxu0 %v6431
  %9092 = vmatprep.subr.bf16.mxu0 0
  %9093 = vmatpush1.bf16.msra.mxu0 %v6432
  %9094 = vmatprep.subr.bf16.mxu0 0
  %9095 = vmatpush1.bf16.msra.mxu0 %v6433
  %9096 = vmatprep.subr.bf16.mxu0 0
  %9097 = vmatpush1.bf16.msra.mxu0 %v6434
  %9098 = vmatprep.subr.bf16.mxu0 0
  %9099 = vmatpush1.bf16.msra.mxu0 %v6435
  %9100 = vmatprep.subr.bf16.mxu0 0
  %9101 = vmatpush1.bf16.msra.mxu0 %v6436
  %9102 = vmatprep.subr.bf16.mxu0 0
  %9103 = vmatpush1.bf16.msra.mxu0 %v6437
  %9104 = vmatprep.subr.bf16.mxu0 0
  %9105 = vmatpush1.bf16.msra.mxu0 %v6438
  %9106 = vmatprep.subr.bf16.mxu0 0
  %9107 = vmatpush1.bf16.msra.mxu0 %v6439
  %9108 = vmatprep.subr.bf16.mxu0 0
  %9109 = vmatpush1.bf16.msra.mxu0 %v6440
  %9110 = vmatprep.subr.bf16.mxu0 0
  %9111 = vmatpush1.bf16.msra.mxu0 %v6441
  %9112 = vmatprep.subr.bf16.mxu0 0
  %9113 = vmatpush1.bf16.msra.mxu0 %v6442
  %9114 = vmatprep.subr.bf16.mxu0 0
  %9115 = vmatpush1.bf16.msra.mxu0 %v6443
  %9116 = vmatprep.mubr.bf16.mxu0 %v2117
  %9117 = vmatmul.mubr.bf16.gmra.mrb[0].mxu0 %v2116
  %v9118 = vpop.f32.mrb[0].mxu0
  %v9119 = vadd.f32 %v9079, %v9118
  %v9120 = vpop.f32.mrb[0].mxu0
  %v9121 = vpop.f32.mrb[0].mxu0
  %v9122 = vpop.f32.mrb[0].mxu0
  %9123 = vdwg.mxu0
  %9124 = vmatprep.subr.bf16.mxu0 0
  %9125 = vmatpush1.bf16.msra.mxu0 %v6444
  %9126 = vmatprep.subr.bf16.mxu0 0
  %9127 = vmatpush1.bf16.msra.mxu0 %v6445
  %9128 = vmatprep.subr.bf16.mxu0 0
  %9129 = vmatpush1.bf16.msra.mxu0 %v6446
  %9130 = vmatprep.subr.bf16.mxu0 0
  %9131 = vmatpush1.bf16.msra.mxu0 %v6447
  %9132 = vmatprep.subr.bf16.mxu0 0
  %9133 = vmatpush1.bf16.msra.mxu0 %v6448
  %9134 = vmatprep.subr.bf16.mxu0 0
  %9135 = vmatpush1.bf16.msra.mxu0 %v6449
  %9136 = vmatprep.subr.bf16.mxu0 0
  %9137 = vmatpush1.bf16.msra.mxu0 %v6450
  %9138 = vmatprep.subr.bf16.mxu0 0
  %9139 = vmatpush1.bf16.msra.mxu0 %v6451
  %9140 = vmatprep.subr.bf16.mxu0 0
  %9141 = vmatpush1.bf16.msra.mxu0 %v6452
  %9142 = vmatprep.subr.bf16.mxu0 0
  %9143 = vmatpush1.bf16.msra.mxu0 %v6453
  %9144 = vmatprep.subr.bf16.mxu0 0
  %9145 = vmatpush1.bf16.msra.mxu0 %v6454
  %9146 = vmatprep.subr.bf16.mxu0 0
  %9147 = vmatpush1.bf16.msra.mxu0 %v6455
  %9148 = vmatprep.subr.bf16.mxu0 0
  %9149 = vmatpush1.bf16.msra.mxu0 %v6456
  %9150 = vmatprep.subr.bf16.mxu0 0
  %9151 = vmatpush1.bf16.msra.mxu0 %v6457
  %9152 = vmatprep.subr.bf16.mxu0 0
  %9153 = vmatpush1.bf16.msra.mxu0 %v6458
  %9154 = vmatprep.subr.bf16.mxu0 0
  %9155 = vmatpush1.bf16.msra.mxu0 %v6459
  %9156 = vmatprep.mubr.bf16.mxu0 %v2119
  %9157 = vmatmul.mubr.bf16.gmra.mrb[0].mxu0 %v2118
  %v9158 = vpop.f32.mrb[0].mxu0
  %v9159 = vadd.f32 %v9119, %v9158
  %v9160 = vpop.f32.mrb[0].mxu0
  %v9161 = vpop.f32.mrb[0].mxu0
  %v9162 = vpop.f32.mrb[0].mxu0
  %9163 = vdwg.mxu0
  %9164 = vmatprep.subr.bf16.mxu0 0
  %9165 = vmatpush1.bf16.msra.mxu0 %v6460
  %9166 = vmatprep.subr.bf16.mxu0 0
  %9167 = vmatpush1.bf16.msra.mxu0 %v6461
  %9168 = vmatprep.subr.bf16.mxu0 0
  %9169 = vmatpush1.bf16.msra.mxu0 %v6462
  %9170 = vmatprep.subr.bf16.mxu0 0
  %9171 = vmatpush1.bf16.msra.mxu0 %v6463
  %9172 = vmatprep.subr.bf16.mxu0 0
  %9173 = vmatpush1.bf16.msra.mxu0 %v6464
  %9174 = vmatprep.subr.bf16.mxu0 0
  %9175 = vmatpush1.bf16.msra.mxu0 %v6465
  %9176 = vmatprep.subr.bf16.mxu0 0
  %9177 = vmatpush1.bf16.msra.mxu0 %v6466
  %9178 = vmatprep.subr.bf16.mxu0 0
  %9179 = vmatpush1.bf16.msra.mxu0 %v6467
  %9180 = vmatprep.subr.bf16.mxu0 0
  %9181 = vmatpush1.bf16.msra.mxu0 %v6468
  %9182 = vmatprep.subr.bf16.mxu0 0
  %9183 = vmatpush1.bf16.msra.mxu0 %v6469
  %9184 = vmatprep.subr.bf16.mxu0 0
  %9185 = vmatpush1.bf16.msra.mxu0 %v6470
  %9186 = vmatprep.subr.bf16.mxu0 0
  %9187 = vmatpush1.bf16.msra.mxu0 %v6471
  %9188 = vmatprep.subr.bf16.mxu0 0
  %9189 = vmatpush1.bf16.msra.mxu0 %v6472
  %9190 = vmatprep.subr.bf16.mxu0 0
  %9191 = vmatpush1.bf16.msra.mxu0 %v6473
  %9192 = vmatprep.subr.bf16.mxu0 0
  %9193 = vmatpush1.bf16.msra.mxu0 %v6474
  %9194 = vmatprep.subr.bf16.mxu0 0
  %9195 = vmatpush1.bf16.msra.mxu0 %v6475
  %9196 = vmatprep.mubr.bf16.mxu0 %v2121
  %9197 = vmatmul.mubr.bf16.gmra.mrb[0].mxu0 %v2120
  %v9198 = vpop.f32.mrb[0].mxu0
  %v9199 = vadd.f32 %v9159, %v9198
  %v9200 = vpop.f32.mrb[0].mxu0
  %v9201 = vpop.f32.mrb[0].mxu0
  %v9202 = vpop.f32.mrb[0].mxu0
  %9203 = vdwg.mxu0
  %9204 = vmatprep.subr.bf16.mxu0 0
  %9205 = vmatpush1.bf16.msra.mxu0 %v6476
  %9206 = vmatprep.subr.bf16.mxu0 0
  %9207 = vmatpush1.bf16.msra.mxu0 %v6477
  %9208 = vmatprep.subr.bf16.mxu0 0
  %9209 = vmatpush1.bf16.msra.mxu0 %v6478
  %9210 = vmatprep.subr.bf16.mxu0 0
  %9211 = vmatpush1.bf16.msra.mxu0 %v6479
  %9212 = vmatprep.subr.bf16.mxu0 0
  %9213 = vmatpush1.bf16.msra.mxu0 %v6480
  %9214 = vmatprep.subr.bf16.mxu0 0
  %9215 = vmatpush1.bf16.msra.mxu0 %v6481
  %9216 = vmatprep.subr.bf16.mxu0 0
  %9217 = vmatpush1.bf16.msra.mxu0 %v6482
  %9218 = vmatprep.subr.bf16.mxu0 0
  %9219 = vmatpush1.bf16.msra.mxu0 %v6483
  %9220 = vmatprep.subr.bf16.mxu0 0
  %9221 = vmatpush1.bf16.msra.mxu0 %v6484
  %9222 = vmatprep.subr.bf16.mxu0 0
  %9223 = vmatpush1.bf16.msra.mxu0 %v6485
  %9224 = vmatprep.subr.bf16.mxu0 0
  %9225 = vmatpush1.bf16.msra.mxu0 %v6486
  %9226 = vmatprep.subr.bf16.mxu0 0
  %9227 = vmatpush1.bf16.msra.mxu0 %v6487
  %9228 = vmatprep.subr.bf16.mxu0 0
  %9229 = vmatpush1.bf16.msra.mxu0 %v6488
  %9230 = vmatprep.subr.bf16.mxu0 0
  %9231 = vmatpush1.bf16.msra.mxu0 %v6489
  %9232 = vmatprep.subr.bf16.mxu0 0
  %9233 = vmatpush1.bf16.msra.mxu0 %v6490
  %9234 = vmatprep.subr.bf16.mxu0 0
  %9235 = vmatpush1.bf16.msra.mxu0 %v6491
  %9236 = vmatprep.mubr.bf16.mxu0 %v2123
  %9237 = vmatmul.mubr.bf16.gmra.mrb[0].mxu0 %v2122
  %v9238 = vpop.f32.mrb[0].mxu0
  %v9239 = vadd.f32 %v9199, %v9238
  %v9240 = vpop.f32.mrb[0].mxu0
  %v9241 = vpop.f32.mrb[0].mxu0
  %v9242 = vpop.f32.mrb[0].mxu0
  %9243 = vdwg.mxu0
  %9244 = vmatprep.subr.bf16.mxu0 0
  %9245 = vmatpush1.bf16.msra.mxu0 %v6492
  %9246 = vmatprep.subr.bf16.mxu0 0
  %9247 = vmatpush1.bf16.msra.mxu0 %v6493
  %9248 = vmatprep.subr.bf16.mxu0 0
  %9249 = vmatpush1.bf16.msra.mxu0 %v6494
  %9250 = vmatprep.subr.bf16.mxu0 0
  %9251 = vmatpush1.bf16.msra.mxu0 %v6495
  %9252 = vmatprep.subr.bf16.mxu0 0
  %9253 = vmatpush1.bf16.msra.mxu0 %v6496
  %9254 = vmatprep.subr.bf16.mxu0 0
  %9255 = vmatpush1.bf16.msra.mxu0 %v6497
  %9256 = vmatprep.subr.bf16.mxu0 0
  %9257 = vmatpush1.bf16.msra.mxu0 %v6498
  %9258 = vmatprep.subr.bf16.mxu0 0
  %9259 = vmatpush1.bf16.msra.mxu0 %v6499
  %9260 = vmatprep.subr.bf16.mxu0 0
  %9261 = vmatpush1.bf16.msra.mxu0 %v6500
  %9262 = vmatprep.subr.bf16.mxu0 0
  %9263 = vmatpush1.bf16.msra.mxu0 %v6501
  %9264 = vmatprep.subr.bf16.mxu0 0
  %9265 = vmatpush1.bf16.msra.mxu0 %v6502
  %9266 = vmatprep.subr.bf16.mxu0 0
  %9267 = vmatpush1.bf16.msra.mxu0 %v6503
  %9268 = vmatprep.subr.bf16.mxu0 0
  %9269 = vmatpush1.bf16.msra.mxu0 %v6504
  %9270 = vmatprep.subr.bf16.mxu0 0
  %9271 = vmatpush1.bf16.msra.mxu0 %v6505
  %9272 = vmatprep.subr.bf16.mxu0 0
  %9273 = vmatpush1.bf16.msra.mxu0 %v6506
  %9274 = vmatprep.subr.bf16.mxu0 0
  %9275 = vmatpush1.bf16.msra.mxu0 %v6507
  %9276 = vmatprep.mubr.bf16.mxu0 %v2125
  %9277 = vmatmul.mubr.bf16.gmra.mrb[0].mxu0 %v2124
  %v9278 = vpop.f32.mrb[0].mxu0
  %v9279 = vadd.f32 %v9239, %v9278
  %v9280 = vpop.f32.mrb[0].mxu0
  %v9281 = vpop.f32.mrb[0].mxu0
  %v9282 = vpop.f32.mrb[0].mxu0
  %9283 = vdwg.mxu0
  %9284 = vmatprep.subr.bf16.mxu0 0
  %9285 = vmatpush1.bf16.msra.mxu0 %v6508
  %9286 = vmatprep.subr.bf16.mxu0 0
  %9287 = vmatpush1.bf16.msra.mxu0 %v6509
  %9288 = vmatprep.subr.bf16.mxu0 0
  %9289 = vmatpush1.bf16.msra.mxu0 %v6510
  %9290 = vmatprep.subr.bf16.mxu0 0
  %9291 = vmatpush1.bf16.msra.mxu0 %v6511
  %9292 = vmatprep.subr.bf16.mxu0 0
  %9293 = vmatpush1.bf16.msra.mxu0 %v6512
  %9294 = vmatprep.subr.bf16.mxu0 0
  %9295 = vmatpush1.bf16.msra.mxu0 %v6513
  %9296 = vmatprep.subr.bf16.mxu0 0
  %9297 = vmatpush1.bf16.msra.mxu0 %v6514
  %9298 = vmatprep.subr.bf16.mxu0 0
  %9299 = vmatpush1.bf16.msra.mxu0 %v6515
  %9300 = vmatprep.subr.bf16.mxu0 0
  %9301 = vmatpush1.bf16.msra.mxu0 %v6516
  %9302 = vmatprep.subr.bf16.mxu0 0
  %9303 = vmatpush1.bf16.msra.mxu0 %v6517
  %9304 = vmatprep.subr.bf16.mxu0 0
  %9305 = vmatpush1.bf16.msra.mxu0 %v6518
  %9306 = vmatprep.subr.bf16.mxu0 0
  %9307 = vmatpush1.bf16.msra.mxu0 %v6519
  %9308 = vmatprep.subr.bf16.mxu0 0
  %9309 = vmatpush1.bf16.msra.mxu0 %v6520
  %9310 = vmatprep.subr.bf16.mxu0 0
  %9311 = vmatpush1.bf16.msra.mxu0 %v6521
  %9312 = vmatprep.subr.bf16.mxu0 0
  %9313 = vmatpush1.bf16.msra.mxu0 %v6522
  %9314 = vmatprep.subr.bf16.mxu0 0
  %9315 = vmatpush1.bf16.msra.mxu0 %v6523
  %9316 = vmatprep.mubr.bf16.mxu0 %v2127
  %9317 = vmatmul.mubr.bf16.gmra.mrb[0].mxu0 %v2126
  %v9318 = vpop.f32.mrb[0].mxu0
  %v9319 = vadd.f32 %v9279, %v9318
  %v9320 = vpop.f32.mrb[0].mxu0
  %v9321 = vpop.f32.mrb[0].mxu0
  %v9322 = vpop.f32.mrb[0].mxu0
  %9323 = vdwg.mxu0
  %9324 = vmatprep.subr.bf16.mxu0 0
  %9325 = vmatpush1.bf16.msra.mxu0 %v6524
  %9326 = vmatprep.subr.bf16.mxu0 0
  %9327 = vmatpush1.bf16.msra.mxu0 %v6525
  %9328 = vmatprep.subr.bf16.mxu0 0
  %9329 = vmatpush1.bf16.msra.mxu0 %v6526
  %9330 = vmatprep.subr.bf16.mxu0 0
  %9331 = vmatpush1.bf16.msra.mxu0 %v6527
  %9332 = vmatprep.subr.bf16.mxu0 0
  %9333 = vmatpush1.bf16.msra.mxu0 %v6528
  %9334 = vmatprep.subr.bf16.mxu0 0
  %9335 = vmatpush1.bf16.msra.mxu0 %v6529
  %9336 = vmatprep.subr.bf16.mxu0 0
  %9337 = vmatpush1.bf16.msra.mxu0 %v6530
  %9338 = vmatprep.subr.bf16.mxu0 0
  %9339 = vmatpush1.bf16.msra.mxu0 %v6531
  %9340 = vmatprep.subr.bf16.mxu0 0
  %9341 = vmatpush1.bf16.msra.mxu0 %v6532
  %9342 = vmatprep.subr.bf16.mxu0 0
  %9343 = vmatpush1.bf16.msra.mxu0 %v6533
  %9344 = vmatprep.subr.bf16.mxu0 0
  %9345 = vmatpush1.bf16.msra.mxu0 %v6534
  %9346 = vmatprep.subr.bf16.mxu0 0
  %9347 = vmatpush1.bf16.msra.mxu0 %v6535
  %9348 = vmatprep.subr.bf16.mxu0 0
  %9349 = vmatpush1.bf16.msra.mxu0 %v6536
  %9350 = vmatprep.subr.bf16.mxu0 0
  %9351 = vmatpush1.bf16.msra.mxu0 %v6537
  %9352 = vmatprep.subr.bf16.mxu0 0
  %9353 = vmatpush1.bf16.msra.mxu0 %v6538
  %9354 = vmatprep.subr.bf16.mxu0 0
  %9355 = vmatpush1.bf16.msra.mxu0 %v6539
  %9356 = vmatprep.mubr.bf16.mxu0 %v2129
  %9357 = vmatmul.mubr.bf16.gmra.mrb[0].mxu0 %v2128
  %v9358 = vpop.f32.mrb[0].mxu0
  %v9359 = vadd.f32 %v9319, %v9358
  %v9360 = vpop.f32.mrb[0].mxu0
  %v9361 = vpop.f32.mrb[0].mxu0
  %v9362 = vpop.f32.mrb[0].mxu0
  %9363 = vdwg.mxu0
  %9364 = vmatprep.subr.bf16.mxu0 0
  %9365 = vmatpush1.bf16.msra.mxu0 %v6540
  %9366 = vmatprep.subr.bf16.mxu0 0
  %9367 = vmatpush1.bf16.msra.mxu0 %v6541
  %9368 = vmatprep.subr.bf16.mxu0 0
  %9369 = vmatpush1.bf16.msra.mxu0 %v6542
  %9370 = vmatprep.subr.bf16.mxu0 0
  %9371 = vmatpush1.bf16.msra.mxu0 %v6543
  %9372 = vmatprep.subr.bf16.mxu0 0
  %9373 = vmatpush1.bf16.msra.mxu0 %v6544
  %9374 = vmatprep.subr.bf16.mxu0 0
  %9375 = vmatpush1.bf16.msra.mxu0 %v6545
  %9376 = vmatprep.subr.bf16.mxu0 0
  %9377 = vmatpush1.bf16.msra.mxu0 %v6546
  %9378 = vmatprep.subr.bf16.mxu0 0
  %9379 = vmatpush1.bf16.msra.mxu0 %v6547
  %9380 = vmatprep.subr.bf16.mxu0 0
  %9381 = vmatpush1.bf16.msra.mxu0 %v6548
  %9382 = vmatprep.subr.bf16.mxu0 0
  %9383 = vmatpush1.bf16.msra.mxu0 %v6549
  %9384 = vmatprep.subr.bf16.mxu0 0
  %9385 = vmatpush1.bf16.msra.mxu0 %v6550
  %9386 = vmatprep.subr.bf16.mxu0 0
  %9387 = vmatpush1.bf16.msra.mxu0 %v6551
  %9388 = vmatprep.subr.bf16.mxu0 0
  %9389 = vmatpush1.bf16.msra.mxu0 %v6552
  %9390 = vmatprep.subr.bf16.mxu0 0
  %9391 = vmatpush1.bf16.msra.mxu0 %v6553
  %9392 = vmatprep.subr.bf16.mxu0 0
  %9393 = vmatpush1.bf16.msra.mxu0 %v6554
  %9394 = vmatprep.subr.bf16.mxu0 0
  %9395 = vmatpush1.bf16.msra.mxu0 %v6555
  %9396 = vmatprep.mubr.bf16.mxu0 %v2131
  %9397 = vmatmul.mubr.bf16.gmra.mrb[0].mxu0 %v2130
  %v9398 = vpop.f32.mrb[0].mxu0
  %v9399 = vadd.f32 %v9359, %v9398
  %v9400 = vpop.f32.mrb[0].mxu0
  %v9401 = vpop.f32.mrb[0].mxu0
  %v9402 = vpop.f32.mrb[0].mxu0
  %9403 = vdwg.mxu0
  %9404 = vmatprep.subr.bf16.mxu0 0
  %9405 = vmatpush1.bf16.msra.mxu0 %v6556
  %9406 = vmatprep.subr.bf16.mxu0 0
  %9407 = vmatpush1.bf16.msra.mxu0 %v6557
  %9408 = vmatprep.subr.bf16.mxu0 0
  %9409 = vmatpush1.bf16.msra.mxu0 %v6558
  %9410 = vmatprep.subr.bf16.mxu0 0
  %9411 = vmatpush1.bf16.msra.mxu0 %v6559
  %9412 = vmatprep.subr.bf16.mxu0 0
  %9413 = vmatpush1.bf16.msra.mxu0 %v6560
  %9414 = vmatprep.subr.bf16.mxu0 0
  %9415 = vmatpush1.bf16.msra.mxu0 %v6561
  %9416 = vmatprep.subr.bf16.mxu0 0
  %9417 = vmatpush1.bf16.msra.mxu0 %v6562
  %9418 = vmatprep.subr.bf16.mxu0 0
  %9419 = vmatpush1.bf16.msra.mxu0 %v6563
  %9420 = vmatprep.subr.bf16.mxu0 0
  %9421 = vmatpush1.bf16.msra.mxu0 %v6564
  %9422 = vmatprep.subr.bf16.mxu0 0
  %9423 = vmatpush1.bf16.msra.mxu0 %v6565
  %9424 = vmatprep.subr.bf16.mxu0 0
  %9425 = vmatpush1.bf16.msra.mxu0 %v6566
  %9426 = vmatprep.subr.bf16.mxu0 0
  %9427 = vmatpush1.bf16.msra.mxu0 %v6567
  %9428 = vmatprep.subr.bf16.mxu0 0
  %9429 = vmatpush1.bf16.msra.mxu0 %v6568
  %9430 = vmatprep.subr.bf16.mxu0 0
  %9431 = vmatpush1.bf16.msra.mxu0 %v6569
  %9432 = vmatprep.subr.bf16.mxu0 0
  %9433 = vmatpush1.bf16.msra.mxu0 %v6570
  %9434 = vmatprep.subr.bf16.mxu0 0
  %9435 = vmatpush1.bf16.msra.mxu0 %v6571
  %9436 = vmatprep.mubr.bf16.mxu0 %v2133
  %9437 = vmatmul.mubr.bf16.gmra.mrb[0].mxu0 %v2132
  %v9438 = vpop.f32.mrb[0].mxu0
  %v9439 = vadd.f32 %v9399, %v9438
  %v9440 = vpop.f32.mrb[0].mxu0
  %v9441 = vpop.f32.mrb[0].mxu0
  %v9442 = vpop.f32.mrb[0].mxu0
  %9443 = vdwg.mxu0
  %9444 = vmatprep.subr.bf16.mxu0 0
  %9445 = vmatpush1.bf16.msra.mxu0 %v6572
  %9446 = vmatprep.subr.bf16.mxu0 0
  %9447 = vmatpush1.bf16.msra.mxu0 %v6573
  %9448 = vmatprep.subr.bf16.mxu0 0
  %9449 = vmatpush1.bf16.msra.mxu0 %v6574
  %9450 = vmatprep.subr.bf16.mxu0 0
  %9451 = vmatpush1.bf16.msra.mxu0 %v6575
  %9452 = vmatprep.subr.bf16.mxu0 0
  %9453 = vmatpush1.bf16.msra.mxu0 %v6576
  %9454 = vmatprep.subr.bf16.mxu0 0
  %9455 = vmatpush1.bf16.msra.mxu0 %v6577
  %9456 = vmatprep.subr.bf16.mxu0 0
  %9457 = vmatpush1.bf16.msra.mxu0 %v6578
  %9458 = vmatprep.subr.bf16.mxu0 0
  %9459 = vmatpush1.bf16.msra.mxu0 %v6579
  %9460 = vmatprep.subr.bf16.mxu0 0
  %9461 = vmatpush1.bf16.msra.mxu0 %v6580
  %9462 = vmatprep.subr.bf16.mxu0 0
  %9463 = vmatpush1.bf16.msra.mxu0 %v6581
  %9464 = vmatprep.subr.bf16.mxu0 0
  %9465 = vmatpush1.bf16.msra.mxu0 %v6582
  %9466 = vmatprep.subr.bf16.mxu0 0
  %9467 = vmatpush1.bf16.msra.mxu0 %v6583
  %9468 = vmatprep.subr.bf16.mxu0 0
  %9469 = vmatpush1.bf16.msra.mxu0 %v6584
  %9470 = vmatprep.subr.bf16.mxu0 0
  %9471 = vmatpush1.bf16.msra.mxu0 %v6585
  %9472 = vmatprep.subr.bf16.mxu0 0
  %9473 = vmatpush1.bf16.msra.mxu0 %v6586
  %9474 = vmatprep.subr.bf16.mxu0 0
  %9475 = vmatpush1.bf16.msra.mxu0 %v6587
  %9476 = vmatprep.mubr.bf16.mxu0 %v2135
  %9477 = vmatmul.mubr.bf16.gmra.mrb[0].mxu0 %v2134
  %v9478 = vpop.f32.mrb[0].mxu0
  %v9479 = vadd.f32 %v9439, %v9478
  %v9480 = vpop.f32.mrb[0].mxu0
  %v9481 = vpop.f32.mrb[0].mxu0
  %v9482 = vpop.f32.mrb[0].mxu0
  %9483 = vdwg.mxu0
  %9484 = vmatprep.subr.bf16.mxu0 0
  %9485 = vmatpush1.bf16.msra.mxu0 %v6588
  %9486 = vmatprep.subr.bf16.mxu0 0
  %9487 = vmatpush1.bf16.msra.mxu0 %v6589
  %9488 = vmatprep.subr.bf16.mxu0 0
  %9489 = vmatpush1.bf16.msra.mxu0 %v6590
  %9490 = vmatprep.subr.bf16.mxu0 0
  %9491 = vmatpush1.bf16.msra.mxu0 %v6591
  %9492 = vmatprep.subr.bf16.mxu0 0
  %9493 = vmatpush1.bf16.msra.mxu0 %v6592
  %9494 = vmatprep.subr.bf16.mxu0 0
  %9495 = vmatpush1.bf16.msra.mxu0 %v6593
  %9496 = vmatprep.subr.bf16.mxu0 0
  %9497 = vmatpush1.bf16.msra.mxu0 %v6594
  %9498 = vmatprep.subr.bf16.mxu0 0
  %9499 = vmatpush1.bf16.msra.mxu0 %v6595
  %9500 = vmatprep.subr.bf16.mxu0 0
  %9501 = vmatpush1.bf16.msra.mxu0 %v6596
  %9502 = vmatprep.subr.bf16.mxu0 0
  %9503 = vmatpush1.bf16.msra.mxu0 %v6597
  %9504 = vmatprep.subr.bf16.mxu0 0
  %9505 = vmatpush1.bf16.msra.mxu0 %v6598
  %9506 = vmatprep.subr.bf16.mxu0 0
  %9507 = vmatpush1.bf16.msra.mxu0 %v6599
  %9508 = vmatprep.subr.bf16.mxu0 0
  %9509 = vmatpush1.bf16.msra.mxu0 %v6600
  %9510 = vmatprep.subr.bf16.mxu0 0
  %9511 = vmatpush1.bf16.msra.mxu0 %v6601
  %9512 = vmatprep.subr.bf16.mxu0 0
  %9513 = vmatpush1.bf16.msra.mxu0 %v6602
  %9514 = vmatprep.subr.bf16.mxu0 0
  %9515 = vmatpush1.bf16.msra.mxu0 %v6603
  %9516 = vmatprep.mubr.bf16.mxu0 %v2137
  %9517 = vmatmul.mubr.bf16.gmra.mrb[0].mxu0 %v2136
  %v9518 = vpop.f32.mrb[0].mxu0
  %v9519 = vadd.f32 %v9479, %v9518
  %v9520 = vpop.f32.mrb[0].mxu0
  %v9521 = vpop.f32.mrb[0].mxu0
  %v9522 = vpop.f32.mrb[0].mxu0
  %9523 = vdwg.mxu0
  %9524 = vmatprep.subr.bf16.mxu0 0
  %9525 = vmatpush1.bf16.msra.mxu0 %v6604
  %9526 = vmatprep.subr.bf16.mxu0 0
  %9527 = vmatpush1.bf16.msra.mxu0 %v6605
  %9528 = vmatprep.subr.bf16.mxu0 0
  %9529 = vmatpush1.bf16.msra.mxu0 %v6606
  %9530 = vmatprep.subr.bf16.mxu0 0
  %9531 = vmatpush1.bf16.msra.mxu0 %v6607
  %9532 = vmatprep.subr.bf16.mxu0 0
  %9533 = vmatpush1.bf16.msra.mxu0 %v6608
  %9534 = vmatprep.subr.bf16.mxu0 0
  %9535 = vmatpush1.bf16.msra.mxu0 %v6609
  %9536 = vmatprep.subr.bf16.mxu0 0
  %9537 = vmatpush1.bf16.msra.mxu0 %v6610
  %9538 = vmatprep.subr.bf16.mxu0 0
  %9539 = vmatpush1.bf16.msra.mxu0 %v6611
  %9540 = vmatprep.subr.bf16.mxu0 0
  %9541 = vmatpush1.bf16.msra.mxu0 %v6612
  %9542 = vmatprep.subr.bf16.mxu0 0
  %9543 = vmatpush1.bf16.msra.mxu0 %v6613
  %9544 = vmatprep.subr.bf16.mxu0 0
  %9545 = vmatpush1.bf16.msra.mxu0 %v6614
  %9546 = vmatprep.subr.bf16.mxu0 0
  %9547 = vmatpush1.bf16.msra.mxu0 %v6615
  %9548 = vmatprep.subr.bf16.mxu0 0
  %9549 = vmatpush1.bf16.msra.mxu0 %v6616
  %9550 = vmatprep.subr.bf16.mxu0 0
  %9551 = vmatpush1.bf16.msra.mxu0 %v6617
  %9552 = vmatprep.subr.bf16.mxu0 0
  %9553 = vmatpush1.bf16.msra.mxu0 %v6618
  %9554 = vmatprep.subr.bf16.mxu0 0
  %9555 = vmatpush1.bf16.msra.mxu0 %v6619
  %9556 = vmatprep.mubr.bf16.mxu0 %v2139
  %9557 = vmatmul.mubr.bf16.gmra.mrb[0].mxu0 %v2138
  %v9558 = vpop.f32.mrb[0].mxu0
  %v9559 = vadd.f32 %v9519, %v9558
  %v9560 = vpop.f32.mrb[0].mxu0
  %v9561 = vpop.f32.mrb[0].mxu0
  %v9562 = vpop.f32.mrb[0].mxu0
  %9563 = vdwg.mxu0
  %9564 = vmatprep.subr.bf16.mxu0 0
  %9565 = vmatpush1.bf16.msra.mxu0 %v6620
  %9566 = vmatprep.subr.bf16.mxu0 0
  %9567 = vmatpush1.bf16.msra.mxu0 %v6621
  %9568 = vmatprep.subr.bf16.mxu0 0
  %9569 = vmatpush1.bf16.msra.mxu0 %v6622
  %9570 = vmatprep.subr.bf16.mxu0 0
  %9571 = vmatpush1.bf16.msra.mxu0 %v6623
  %9572 = vmatprep.subr.bf16.mxu0 0
  %9573 = vmatpush1.bf16.msra.mxu0 %v6624
  %9574 = vmatprep.subr.bf16.mxu0 0
  %9575 = vmatpush1.bf16.msra.mxu0 %v6625
  %9576 = vmatprep.subr.bf16.mxu0 0
  %9577 = vmatpush1.bf16.msra.mxu0 %v6626
  %9578 = vmatprep.subr.bf16.mxu0 0
  %9579 = vmatpush1.bf16.msra.mxu0 %v6627
  %9580 = vmatprep.subr.bf16.mxu0 0
  %9581 = vmatpush1.bf16.msra.mxu0 %v6628
  %9582 = vmatprep.subr.bf16.mxu0 0
  %9583 = vmatpush1.bf16.msra.mxu0 %v6629
  %9584 = vmatprep.subr.bf16.mxu0 0
  %9585 = vmatpush1.bf16.msra.mxu0 %v6630
  %9586 = vmatprep.subr.bf16.mxu0 0
  %9587 = vmatpush1.bf16.msra.mxu0 %v6631
  %9588 = vmatprep.subr.bf16.mxu0 0
  %9589 = vmatpush1.bf16.msra.mxu0 %v6632
  %9590 = vmatprep.subr.bf16.mxu0 0
  %9591 = vmatpush1.bf16.msra.mxu0 %v6633
  %9592 = vmatprep.subr.bf16.mxu0 0
  %9593 = vmatpush1.bf16.msra.mxu0 %v6634
  %9594 = vmatprep.subr.bf16.mxu0 0
  %9595 = vmatpush1.bf16.msra.mxu0 %v6635
  %9596 = vmatprep.mubr.bf16.mxu0 %v2141
  %9597 = vmatmul.mubr.bf16.gmra.mrb[0].mxu0 %v2140
  %v9598 = vpop.f32.mrb[0].mxu0
  %v9599 = vadd.f32 %v9559, %v9598
  %v9600 = vpop.f32.mrb[0].mxu0
  %v9601 = vpop.f32.mrb[0].mxu0
  %v9602 = vpop.f32.mrb[0].mxu0
  %9603 = vdwg.mxu0
  %9604 = vmatprep.subr.bf16.mxu0 0
  %9605 = vmatpush1.bf16.msra.mxu0 %v6636
  %9606 = vmatprep.subr.bf16.mxu0 0
  %9607 = vmatpush1.bf16.msra.mxu0 %v6637
  %9608 = vmatprep.subr.bf16.mxu0 0
  %9609 = vmatpush1.bf16.msra.mxu0 %v6638
  %9610 = vmatprep.subr.bf16.mxu0 0
  %9611 = vmatpush1.bf16.msra.mxu0 %v6639
  %9612 = vmatprep.subr.bf16.mxu0 0
  %9613 = vmatpush1.bf16.msra.mxu0 %v6640
  %9614 = vmatprep.subr.bf16.mxu0 0
  %9615 = vmatpush1.bf16.msra.mxu0 %v6641
  %9616 = vmatprep.subr.bf16.mxu0 0
  %9617 = vmatpush1.bf16.msra.mxu0 %v6642
  %9618 = vmatprep.subr.bf16.mxu0 0
  %9619 = vmatpush1.bf16.msra.mxu0 %v6643
  %9620 = vmatprep.subr.bf16.mxu0 0
  %9621 = vmatpush1.bf16.msra.mxu0 %v6644
  %9622 = vmatprep.subr.bf16.mxu0 0
  %9623 = vmatpush1.bf16.msra.mxu0 %v6645
  %9624 = vmatprep.subr.bf16.mxu0 0
  %9625 = vmatpush1.bf16.msra.mxu0 %v6646
  %9626 = vmatprep.subr.bf16.mxu0 0
  %9627 = vmatpush1.bf16.msra.mxu0 %v6647
  %9628 = vmatprep.subr.bf16.mxu0 0
  %9629 = vmatpush1.bf16.msra.mxu0 %v6648
  %9630 = vmatprep.subr.bf16.mxu0 0
  %9631 = vmatpush1.bf16.msra.mxu0 %v6649
  %9632 = vmatprep.subr.bf16.mxu0 0
  %9633 = vmatpush1.bf16.msra.mxu0 %v6650
  %9634 = vmatprep.subr.bf16.mxu0 0
  %9635 = vmatpush1.bf16.msra.mxu0 %v6651
  %9636 = vmatprep.mubr.bf16.mxu0 %v2143
  %9637 = vmatmul.mubr.bf16.gmra.mrb[0].mxu0 %v2142
  %v9638 = vpop.f32.mrb[0].mxu0
  %v9639 = vadd.f32 %v9599, %v9638
  %v9640 = vpop.f32.mrb[0].mxu0
  %v9641 = vpop.f32.mrb[0].mxu0
  %v9642 = vpop.f32.mrb[0].mxu0
  %9643 = vdwg.mxu0
  %9644 = vmatprep.subr.bf16.mxu0 0
  %9645 = vmatpush1.bf16.msra.mxu0 %v6652
  %9646 = vmatprep.subr.bf16.mxu0 0
  %9647 = vmatpush1.bf16.msra.mxu0 %v6653
  %9648 = vmatprep.subr.bf16.mxu0 0
  %9649 = vmatpush1.bf16.msra.mxu0 %v6654
  %9650 = vmatprep.subr.bf16.mxu0 0
  %9651 = vmatpush1.bf16.msra.mxu0 %v6655
  %9652 = vmatprep.subr.bf16.mxu0 0
  %9653 = vmatpush1.bf16.msra.mxu0 %v6656
  %9654 = vmatprep.subr.bf16.mxu0 0
  %9655 = vmatpush1.bf16.msra.mxu0 %v6657
  %9656 = vmatprep.subr.bf16.mxu0 0
  %9657 = vmatpush1.bf16.msra.mxu0 %v6658
  %9658 = vmatprep.subr.bf16.mxu0 0
  %9659 = vmatpush1.bf16.msra.mxu0 %v6659
  %9660 = vmatprep.subr.bf16.mxu0 0
  %9661 = vmatpush1.bf16.msra.mxu0 %v6660
  %9662 = vmatprep.subr.bf16.mxu0 0
  %9663 = vmatpush1.bf16.msra.mxu0 %v6661
  %9664 = vmatprep.subr.bf16.mxu0 0
  %9665 = vmatpush1.bf16.msra.mxu0 %v6662
  %9666 = vmatprep.subr.bf16.mxu0 0
  %9667 = vmatpush1.bf16.msra.mxu0 %v6663
  %9668 = vmatprep.subr.bf16.mxu0 0
  %9669 = vmatpush1.bf16.msra.mxu0 %v6664
  %9670 = vmatprep.subr.bf16.mxu0 0
  %9671 = vmatpush1.bf16.msra.mxu0 %v6665
  %9672 = vmatprep.subr.bf16.mxu0 0
  %9673 = vmatpush1.bf16.msra.mxu0 %v6666
  %9674 = vmatprep.subr.bf16.mxu0 0
  %9675 = vmatpush1.bf16.msra.mxu0 %v6667
  %9676 = vmatprep.mubr.bf16.mxu0 %v2145
  %9677 = vmatmul.mubr.bf16.gmra.mrb[0].mxu0 %v2144
  %v9678 = vpop.f32.mrb[0].mxu0
  %v9679 = vadd.f32 %v9639, %v9678
  %v9680 = vpop.f32.mrb[0].mxu0
  %v9681 = vpop.f32.mrb[0].mxu0
  %v9682 = vpop.f32.mrb[0].mxu0
  %9683 = vdwg.mxu0
  %9684 = vmatprep.subr.bf16.mxu0 0
  %9685 = vmatpush1.bf16.msra.mxu0 %v6668
  %9686 = vmatprep.subr.bf16.mxu0 0
  %9687 = vmatpush1.bf16.msra.mxu0 %v6669
  %9688 = vmatprep.subr.bf16.mxu0 0
  %9689 = vmatpush1.bf16.msra.mxu0 %v6670
  %9690 = vmatprep.subr.bf16.mxu0 0
  %9691 = vmatpush1.bf16.msra.mxu0 %v6671
  %9692 = vmatprep.subr.bf16.mxu0 0
  %9693 = vmatpush1.bf16.msra.mxu0 %v6672
  %9694 = vmatprep.subr.bf16.mxu0 0
  %9695 = vmatpush1.bf16.msra.mxu0 %v6673
  %9696 = vmatprep.subr.bf16.mxu0 0
  %9697 = vmatpush1.bf16.msra.mxu0 %v6674
  %9698 = vmatprep.subr.bf16.mxu0 0
  %9699 = vmatpush1.bf16.msra.mxu0 %v6675
  %9700 = vmatprep.subr.bf16.mxu0 0
  %9701 = vmatpush1.bf16.msra.mxu0 %v6676
  %9702 = vmatprep.subr.bf16.mxu0 0
  %9703 = vmatpush1.bf16.msra.mxu0 %v6677
  %9704 = vmatprep.subr.bf16.mxu0 0
  %9705 = vmatpush1.bf16.msra.mxu0 %v6678
  %9706 = vmatprep.subr.bf16.mxu0 0
  %9707 = vmatpush1.bf16.msra.mxu0 %v6679
  %9708 = vmatprep.subr.bf16.mxu0 0
  %9709 = vmatpush1.bf16.msra.mxu0 %v6680
  %9710 = vmatprep.subr.bf16.mxu0 0
  %9711 = vmatpush1.bf16.msra.mxu0 %v6681
  %9712 = vmatprep.subr.bf16.mxu0 0
  %9713 = vmatpush1.bf16.msra.mxu0 %v6682
  %9714 = vmatprep.subr.bf16.mxu0 0
  %9715 = vmatpush1.bf16.msra.mxu0 %v6683
  %9716 = vmatprep.mubr.bf16.mxu0 %v2147
  %9717 = vmatmul.mubr.bf16.gmra.mrb[0].mxu0 %v2146
  %v9718 = vpop.f32.mrb[0].mxu0
  %v9719 = vadd.f32 %v9679, %v9718
  %v9720 = vpop.f32.mrb[0].mxu0
  %v9721 = vpop.f32.mrb[0].mxu0
  %v9722 = vpop.f32.mrb[0].mxu0
  %9723 = vdwg.mxu0
  %9724 = vmatprep.subr.bf16.mxu0 0
  %9725 = vmatpush1.bf16.msra.mxu0 %v6684
  %9726 = vmatprep.subr.bf16.mxu0 0
  %9727 = vmatpush1.bf16.msra.mxu0 %v6685
  %9728 = vmatprep.subr.bf16.mxu0 0
  %9729 = vmatpush1.bf16.msra.mxu0 %v6686
  %9730 = vmatprep.subr.bf16.mxu0 0
  %9731 = vmatpush1.bf16.msra.mxu0 %v6687
  %9732 = vmatprep.subr.bf16.mxu0 0
  %9733 = vmatpush1.bf16.msra.mxu0 %v6688
  %9734 = vmatprep.subr.bf16.mxu0 0
  %9735 = vmatpush1.bf16.msra.mxu0 %v6689
  %9736 = vmatprep.subr.bf16.mxu0 0
  %9737 = vmatpush1.bf16.msra.mxu0 %v6690
  %9738 = vmatprep.subr.bf16.mxu0 0
  %9739 = vmatpush1.bf16.msra.mxu0 %v6691
  %9740 = vmatprep.subr.bf16.mxu0 0
  %9741 = vmatpush1.bf16.msra.mxu0 %v6692
  %9742 = vmatprep.subr.bf16.mxu0 0
  %9743 = vmatpush1.bf16.msra.mxu0 %v6693
  %9744 = vmatprep.subr.bf16.mxu0 0
  %9745 = vmatpush1.bf16.msra.mxu0 %v6694
  %9746 = vmatprep.subr.bf16.mxu0 0
  %9747 = vmatpush1.bf16.msra.mxu0 %v6695
  %9748 = vmatprep.subr.bf16.mxu0 0
  %9749 = vmatpush1.bf16.msra.mxu0 %v6696
  %9750 = vmatprep.subr.bf16.mxu0 0
  %9751 = vmatpush1.bf16.msra.mxu0 %v6697
  %9752 = vmatprep.subr.bf16.mxu0 0
  %9753 = vmatpush1.bf16.msra.mxu0 %v6698
  %9754 = vmatprep.subr.bf16.mxu0 0
  %9755 = vmatpush1.bf16.msra.mxu0 %v6699
  %9756 = vmatprep.mubr.bf16.mxu0 %v2149
  %9757 = vmatmul.mubr.bf16.gmra.mrb[0].mxu0 %v2148
  %v9758 = vpop.f32.mrb[0].mxu0
  %v9759 = vadd.f32 %v9719, %v9758
  %v9760 = vpop.f32.mrb[0].mxu0
  %v9761 = vpop.f32.mrb[0].mxu0
  %v9762 = vpop.f32.mrb[0].mxu0
  %9763 = vdwg.mxu0
  %9764 = vmatprep.subr.bf16.mxu0 0
  %9765 = vmatpush1.bf16.msra.mxu0 %v6700
  %9766 = vmatprep.subr.bf16.mxu0 0
  %9767 = vmatpush1.bf16.msra.mxu0 %v6701
  %9768 = vmatprep.subr.bf16.mxu0 0
  %9769 = vmatpush1.bf16.msra.mxu0 %v6702
  %9770 = vmatprep.subr.bf16.mxu0 0
  %9771 = vmatpush1.bf16.msra.mxu0 %v6703
  %9772 = vmatprep.subr.bf16.mxu0 0
  %9773 = vmatpush1.bf16.msra.mxu0 %v6704
  %9774 = vmatprep.subr.bf16.mxu0 0
  %9775 = vmatpush1.bf16.msra.mxu0 %v6705
  %9776 = vmatprep.subr.bf16.mxu0 0
  %9777 = vmatpush1.bf16.msra.mxu0 %v6706
  %9778 = vmatprep.subr.bf16.mxu0 0
  %9779 = vmatpush1.bf16.msra.mxu0 %v6707
  %9780 = vmatprep.subr.bf16.mxu0 0
  %9781 = vmatpush1.bf16.msra.mxu0 %v6708
  %9782 = vmatprep.subr.bf16.mxu0 0
  %9783 = vmatpush1.bf16.msra.mxu0 %v6709
  %9784 = vmatprep.subr.bf16.mxu0 0
  %9785 = vmatpush1.bf16.msra.mxu0 %v6710
  %9786 = vmatprep.subr.bf16.mxu0 0
  %9787 = vmatpush1.bf16.msra.mxu0 %v6711
  %9788 = vmatprep.subr.bf16.mxu0 0
  %9789 = vmatpush1.bf16.msra.mxu0 %v6712
  %9790 = vmatprep.subr.bf16.mxu0 0
  %9791 = vmatpush1.bf16.msra.mxu0 %v6713
  %9792 = vmatprep.subr.bf16.mxu0 0
  %9793 = vmatpush1.bf16.msra.mxu0 %v6714
  %9794 = vmatprep.subr.bf16.mxu0 0
  %9795 = vmatpush1.bf16.msra.mxu0 %v6715
  %9796 = vmatprep.mubr.bf16.mxu0 %v2151
  %9797 = vmatmul.mubr.bf16.gmra.mrb[0].mxu0 %v2150
  %v9798 = vpop.f32.mrb[0].mxu0
  %v9799 = vadd.f32 %v9759, %v9798
  %v9800 = vpop.f32.mrb[0].mxu0
  %v9801 = vpop.f32.mrb[0].mxu0
  %v9802 = vpop.f32.mrb[0].mxu0
  %9803 = vdwg.mxu0
  %9804 = vmatprep.subr.bf16.mxu0 0
  %9805 = vmatpush1.bf16.msra.mxu0 %v6716
  %9806 = vmatprep.subr.bf16.mxu0 0
  %9807 = vmatpush1.bf16.msra.mxu0 %v6717
  %9808 = vmatprep.subr.bf16.mxu0 0
  %9809 = vmatpush1.bf16.msra.mxu0 %v6718
  %9810 = vmatprep.subr.bf16.mxu0 0
  %9811 = vmatpush1.bf16.msra.mxu0 %v6719
  %9812 = vmatprep.subr.bf16.mxu0 0
  %9813 = vmatpush1.bf16.msra.mxu0 %v6720
  %9814 = vmatprep.subr.bf16.mxu0 0
  %9815 = vmatpush1.bf16.msra.mxu0 %v6721
  %9816 = vmatprep.subr.bf16.mxu0 0
  %9817 = vmatpush1.bf16.msra.mxu0 %v6722
  %9818 = vmatprep.subr.bf16.mxu0 0
  %9819 = vmatpush1.bf16.msra.mxu0 %v6723
  %9820 = vmatprep.subr.bf16.mxu0 0
  %9821 = vmatpush1.bf16.msra.mxu0 %v6724
  %9822 = vmatprep.subr.bf16.mxu0 0
  %9823 = vmatpush1.bf16.msra.mxu0 %v6725
  %9824 = vmatprep.subr.bf16.mxu0 0
  %9825 = vmatpush1.bf16.msra.mxu0 %v6726
  %9826 = vmatprep.subr.bf16.mxu0 0
  %9827 = vmatpush1.bf16.msra.mxu0 %v6727
  %9828 = vmatprep.subr.bf16.mxu0 0
  %9829 = vmatpush1.bf16.msra.mxu0 %v6728
  %9830 = vmatprep.subr.bf16.mxu0 0
  %9831 = vmatpush1.bf16.msra.mxu0 %v6729
  %9832 = vmatprep.subr.bf16.mxu0 0
  %9833 = vmatpush1.bf16.msra.mxu0 %v6730
  %9834 = vmatprep.subr.bf16.mxu0 0
  %9835 = vmatpush1.bf16.msra.mxu0 %v6731
  %9836 = vmatprep.mubr.bf16.mxu0 %v2153
  %9837 = vmatmul.mubr.bf16.gmra.mrb[0].mxu0 %v2152
  %v9838 = vpop.f32.mrb[0].mxu0
  %v9839 = vadd.f32 %v9799, %v9838
  %v9840 = vpop.f32.mrb[0].mxu0
  %v9841 = vpop.f32.mrb[0].mxu0
  %v9842 = vpop.f32.mrb[0].mxu0
  %9843 = vdwg.mxu0
  %9844 = vmatprep.subr.bf16.mxu0 0
  %9845 = vmatpush1.bf16.msra.mxu0 %v6732
  %9846 = vmatprep.subr.bf16.mxu0 0
  %9847 = vmatpush1.bf16.msra.mxu0 %v6733
  %9848 = vmatprep.subr.bf16.mxu0 0
  %9849 = vmatpush1.bf16.msra.mxu0 %v6734
  %9850 = vmatprep.subr.bf16.mxu0 0
  %9851 = vmatpush1.bf16.msra.mxu0 %v6735
  %9852 = vmatprep.subr.bf16.mxu0 0
  %9853 = vmatpush1.bf16.msra.mxu0 %v6736
  %9854 = vmatprep.subr.bf16.mxu0 0
  %9855 = vmatpush1.bf16.msra.mxu0 %v6737
  %9856 = vmatprep.subr.bf16.mxu0 0
  %9857 = vmatpush1.bf16.msra.mxu0 %v6738
  %9858 = vmatprep.subr.bf16.mxu0 0
  %9859 = vmatpush1.bf16.msra.mxu0 %v6739
  %9860 = vmatprep.subr.bf16.mxu0 0
  %9861 = vmatpush1.bf16.msra.mxu0 %v6740
  %9862 = vmatprep.subr.bf16.mxu0 0
  %9863 = vmatpush1.bf16.msra.mxu0 %v6741
  %9864 = vmatprep.subr.bf16.mxu0 0
  %9865 = vmatpush1.bf16.msra.mxu0 %v6742
  %9866 = vmatprep.subr.bf16.mxu0 0
  %9867 = vmatpush1.bf16.msra.mxu0 %v6743
  %9868 = vmatprep.subr.bf16.mxu0 0
  %9869 = vmatpush1.bf16.msra.mxu0 %v6744
  %9870 = vmatprep.subr.bf16.mxu0 0
  %9871 = vmatpush1.bf16.msra.mxu0 %v6745
  %9872 = vmatprep.subr.bf16.mxu0 0
  %9873 = vmatpush1.bf16.msra.mxu0 %v6746
  %9874 = vmatprep.subr.bf16.mxu0 0
  %9875 = vmatpush1.bf16.msra.mxu0 %v6747
  %9876 = vmatprep.mubr.bf16.mxu0 %v2155
  %9877 = vmatmul.mubr.bf16.gmra.mrb[0].mxu0 %v2154
  %v9878 = vpop.f32.mrb[0].mxu0
  %v9879 = vadd.f32 %v9839, %v9878
  %v9880 = vpop.f32.mrb[0].mxu0
  %v9881 = vpop.f32.mrb[0].mxu0
  %v9882 = vpop.f32.mrb[0].mxu0
  %9883 = vdwg.mxu0
  %v9884 = vmax.f32 %v9879, 0.0
  %v9885 = vld [vmem:[%s3] sm:$0xff]
  %v9886 = vld [vmem:[%s3 + $0x8] sm:$0xff]
  %v9887 = vld [vmem:[%s3 + $0x10] sm:$0xff]
  %v9888 = vld [vmem:[%s3 + $0x18] sm:$0xff]
  %v9889 = vld [vmem:[%s3 + $0x20] sm:$0xff]
  %v9890 = vld [vmem:[%s3 + $0x28] sm:$0xff]
  %v9891 = vld [vmem:[%s3 + $0x30] sm:$0xff]
  %v9892 = vld [vmem:[%s3 + $0x38] sm:$0xff]
  %v9893 = vld [vmem:[%s3 + $0x40] sm:$0xff]
  %v9894 = vld [vmem:[%s3 + $0x48] sm:$0xff]
  %v9895 = vld [vmem:[%s3 + $0x50] sm:$0xff]
  %v9896 = vld [vmem:[%s3 + $0x58] sm:$0xff]
  %v9897 = vld [vmem:[%s3 + $0x60] sm:$0xff]
  %v9898 = vld [vmem:[%s3 + $0x68] sm:$0xff]
  %v9899 = vld [vmem:[%s3 + $0x70] sm:$0xff]
  %v9900 = vld [vmem:[%s3 + $0x78] sm:$0xff]
  %v9901 = vld [vmem:[%s4] sm:$0x1]
  %v9903 = vlaneseq
  %v9904 = vshrl.u32 %v9903, 7
  %v9905 = vsub.s32 0, %v9904
  %v9906 = vrot.slane %v9901, %v9905
  %9908 = vmatprep.subr.mxu0 0.0
  %9909 = vmatpush1.msra.mxu0 %v9885
  %9910 = vmatprep.subr.mxu0 0.0
  %9911 = vmatpush1.msra.mxu0 %v9886
  %9912 = vmatprep.subr.mxu0 0.0
  %9913 = vmatpush1.msra.mxu0 %v9887
  %9914 = vmatprep.subr.mxu0 0.0
  %9915 = vmatpush1.msra.mxu0 %v9888
  %9916 = vmatprep.subr.mxu0 0.0
  %9917 = vmatpush1.msra.mxu0 %v9889
  %9918 = vmatprep.subr.mxu0 0.0
  %9919 = vmatpush1.msra.mxu0 %v9890
  %9920 = vmatprep.subr.mxu0 0.0
  %9921 = vmatpush1.msra.mxu0 %v9891
  %9922 = vmatprep.subr.mxu0 0.0
  %9923 = vmatpush1.msra.mxu0 %v9892
  %9924 = vmatprep.subr.mxu0 0.0
  %9925 = vmatpush1.msra.mxu0 %v9893
  %9926 = vmatprep.subr.mxu0 0.0
  %9927 = vmatpush1.msra.mxu0 %v9894
  %9928 = vmatprep.subr.mxu0 0.0
  %9929 = vmatpush1.msra.mxu0 %v9895
  %9930 = vmatprep.subr.mxu0 0.0
  %9931 = vmatpush1.msra.mxu0 %v9896
  %9932 = vmatprep.subr.mxu0 0.0
  %9933 = vmatpush1.msra.mxu0 %v9897
  %9934 = vmatprep.subr.mxu0 0.0
  %9935 = vmatpush1.msra.mxu0 %v9898
  %9936 = vmatprep.subr.mxu0 0.0
  %9937 = vmatpush1.msra.mxu0 %v9899
  %9938 = vmatprep.subr.mxu0 0.0
  %9939 = vmatpush1.msra.mxu0 %v9900
  %9940 = vmatprep.subr.mxu0 0.0
  %9941 = vmatpush1.msra.mxu0 0.0
  %9942 = vmatprep.subr.mxu0 0.0
  %9943 = vmatpush1.msra.mxu0 0.0
  %9944 = vmatprep.subr.mxu0 0.0
  %9945 = vmatpush1.msra.mxu0 0.0
  %9946 = vmatprep.subr.mxu0 0.0
  %9947 = vmatpush1.msra.mxu0 0.0
  %9948 = vmatprep.subr.mxu0 0.0
  %9949 = vmatpush1.msra.mxu0 0.0
  %9950 = vmatprep.subr.mxu0 0.0
  %9951 = vmatpush1.msra.mxu0 0.0
  %9952 = vmatprep.subr.mxu0 0.0
  %9953 = vmatpush1.msra.mxu0 0.0
  %9954 = vmatprep.subr.mxu0 0.0
  %9955 = vmatpush1.msra.mxu0 0.0
  %9956 = vmatprep.subr.mxu0 0.0
  %9957 = vmatpush1.msra.mxu0 0.0
  %9958 = vmatprep.subr.mxu0 0.0
  %9959 = vmatpush1.msra.mxu0 0.0
  %9960 = vmatprep.subr.mxu0 0.0
  %9961 = vmatpush1.msra.mxu0 0.0
  %9962 = vmatprep.subr.mxu0 0.0
  %9963 = vmatpush1.msra.mxu0 0.0
  %9964 = vmatprep.subr.mxu0 0.0
  %9965 = vmatpush1.msra.mxu0 0.0
  %9966 = vmatprep.subr.mxu0 0.0
  %9967 = vmatpush1.msra.mxu0 0.0
  %9968 = vmatprep.subr.mxu0 0.0
  %9969 = vmatpush1.msra.mxu0 0.0
  %9970 = vmatprep.subr.mxu0 0.0
  %9971 = vmatpush1.msra.mxu0 0.0
  %9972 = vmatprep.mubr.f32.mxu0 0.0
  %9973 = vmatmul.mubr.f32.gmra.mrb[0].mxu0 %v9884
  %v9974 = vpop.f32.mrb[0].mxu0
  %v9975 = vadd.f32 %v9906, %v9974
  %v9976 = vpop.f32.mrb[0].mxu0
  %9977 = vdwg.mxu0
  %9978 = vst [vmem:[%s5] sm:$0xff] %v9975
  // Predicated region
  $region22: #{cnn_forward.3} parent=0 // pred_check
    _
  $region23: #{cnn_forward.3} parent=0 // pred_check_branch
    %9980 = sbr.rel (0) target = $region25
  $region24: #{cnn_forward.3} parent=0 // pred_region
    _
  $region25: #{cnn_forward.3} parent=0 // pred_fallthru
    _
  // Predicated region
  $region26: #{cnn_forward.3} parent=0 // pred_check
    _
  $region27: #{cnn_forward.3} parent=0 // pred_check_branch
    %9982 = sbr.rel (0) target = $region29
  $region28: #{cnn_forward.3} parent=0 // pred_region
    _
  $region29: #{cnn_forward.3} parent=0 // pred_fallthru
    _

</llo_original>
